<compile_context>
chip_gen: v7x
topology: tpu7x:2x2x1
jax: 0.10.0
libtpu: 0.0.40
codegen_flags: <defaults>
</compile_context>

<pallas_src>
import functools

import jax
import jax.numpy as jnp
from jax.experimental import pallas as pl
from jax.experimental.pallas import tpu as pltpu


# ---------------------------------------------------------------------------
# Fused kernel: erosion + split + conv_c + conv_e + sigmoid + both blends
# ---------------------------------------------------------------------------
def _fused_final_atten_kernel(wc_ref, bc_ref, we_ref, be_ref,          # SMEM
                              mask_ref, x_ref, z_ref,                  # VMEM in
                              outc_ref, attc_ref, oute_ref, atte_ref,  # VMEM out
                              minf_ref, mcp_ref, mep_ref,              # scratch
                              *, H, W, C_in, C_out, K):
    f32 = jnp.float32
    p = (K - 1) // 2

    m = mask_ref[0].astype(f32)                          # (C_in, H, W)

    # ---- erosion: min-pool K x K, stride 1, "same" (+inf border) ----------
    if K > 1:
        minf_ref[...] = jnp.full(minf_ref.shape, jnp.inf, f32)
        minf_ref[:, p:p + H, p:p + W] = m
        me = minf_ref[:, 0:H, 0:W]
        for dy in range(K):
            for dx in range(K):
                if dy == 0 and dx == 0:
                    continue
                me = jnp.minimum(me, minf_ref[:, dy:dy + H, dx:dx + W])
    else:
        me = m
    mc = m - me

    # ---- zero-padded planes for the two 3x3 "same" convolutions -----------
    mcp_ref[...] = jnp.zeros(mcp_ref.shape, f32)
    mep_ref[...] = jnp.zeros(mep_ref.shape, f32)
    mcp_ref[:, 1:1 + H, 1:1 + W] = mc
    mep_ref[:, 1:1 + H, 1:1 + W] = me

    # ---- 3x3 conv, both branches, (dy, dx, ci) outer / co inner ------------
    acc_c = [jnp.full((H, W), bc_ref[co], f32) for co in range(C_out)]
    acc_e = [jnp.full((H, W), be_ref[co], f32) for co in range(C_out)]
    for dy in range(3):
        for dx in range(3):
            for ci in range(C_in):
                plane_c = mcp_ref[ci, dy:dy + H, dx:dx + W]   # loaded once
                plane_e = mep_ref[ci, dy:dy + H, dx:dx + W]   # loaded once
                base = ((dy * 3 + dx) * C_in + ci) * C_out
                for co in range(C_out):
                    acc_c[co] = acc_c[co] + wc_ref[base + co] * plane_c
                    acc_e[co] = acc_e[co] + we_ref[base + co] * plane_e

    # ---- sigmoid + blend + store -------------------------------------------
    for co in range(C_out):
        xp = x_ref[0, co].astype(f32)
        zp = z_ref[0, co].astype(f32)
        a_c = jax.nn.sigmoid(acc_c[co])
        a_e = jax.nn.sigmoid(acc_e[co])
        attc_ref[0, co] = a_c.astype(attc_ref.dtype)
        atte_ref[0, co] = a_e.astype(atte_ref.dtype)
        outc_ref[0, co] = (a_c * xp + (1.0 - a_c) * zp).astype(outc_ref.dtype)
        oute_ref[0, co] = (a_e * xp + (1.0 - a_e) * zp).astype(oute_ref.dtype)


# ---------------------------------------------------------------------------
# Wrapper: one pallas_call, grid over batch
# ---------------------------------------------------------------------------
def final_atten_forward(params, z, mask, x, ksize):
    N, C, H, W = mask.shape
    assert z.shape == mask.shape == x.shape
    assert jnp.issubdtype(mask.dtype, jnp.floating), "mask must be floating"
    assert ksize == 1 or ksize % 2 == 1, "only odd ksize matches PyTorch shapes"
    p = (ksize - 1) // 2

    def flat_w(w):  # OIHW -> (kh, kw, ci, co) flat, f32
        return jnp.transpose(w, (2, 3, 1, 0)).reshape(-1).astype(jnp.float32)

    wc = flat_w(params["circle_w"])
    bc = params["circle_b"].astype(jnp.float32)
    we = flat_w(params["e_w"])
    be = params["e_b"].astype(jnp.float32)
    O = params["circle_w"].shape[0]

    # VMEM budget: 3 inputs + 4 outputs, double-buffered, + scratch, + headroom.
    itemsize = jnp.dtype(x.dtype).itemsize
    blk = C * H * W * itemsize
    scratch_bytes = 4 * (C * (H + 2 * p) * (W + 2 * p) + 2 * C * (H + 2) * (W + 2))
    vmem_need = 2 * (3 + 4) * blk + scratch_bytes
    vmem_limit = int(min(max(4 * vmem_need, 32 * 1024 * 1024), 100 * 1024 * 1024))

    kernel = functools.partial(_fused_final_atten_kernel,
                               H=H, W=W, C_in=C, C_out=O, K=ksize)

    def img_spec(ch):
        return pl.BlockSpec((1, ch, H, W), lambda n: (n, 0, 0, 0))

    def smem_spec():
        return pl.BlockSpec(memory_space=pltpu.MemorySpace.SMEM)

    out_c, att_c, out_e, att_e = pl.pallas_call(
        kernel,
        out_shape=tuple(jax.ShapeDtypeStruct((N, O, H, W), x.dtype)
                        for _ in range(4)),
        grid=(N,),
        in_specs=[smem_spec(), smem_spec(), smem_spec(), smem_spec(),
                  img_spec(C), img_spec(C), img_spec(C)],
        out_specs=tuple(img_spec(O) for _ in range(4)),
        scratch_shapes=[
            pltpu.VMEM((C, H + 2 * p, W + 2 * p), jnp.float32),  # +inf border
            pltpu.VMEM((C, H + 2, W + 2), jnp.float32),          # mask_c, 0 pad
            pltpu.VMEM((C, H + 2, W + 2), jnp.float32),          # mask_e, 0 pad
        ],
        compiler_params=pltpu.CompilerParams(
            dimension_semantics=("parallel",),   # v7x: 2 TCs split the batch
            vmem_limit_bytes=vmem_limit),
    )(wc, bc, we, be, mask, x, z)

    # PyTorch `circle_m + e_m` is tuple concatenation.
    return (out_c, att_c, out_e, att_e)


# ---------------------------------------------------------------------------
# Pure-JAX reference (validation only)
# ---------------------------------------------------------------------------
def _ref_forward(params, z, mask, x, ksize):
    if ksize > 1:
        p = (ksize - 1) // 2
        pooled = jax.lax.reduce_window(
            -mask, -jnp.inf, jax.lax.max,
            (1, 1, ksize, ksize), (1, 1, 1, 1),
            [(0, 0), (0, 0), (p, p), (p, p)])
        mask_e = -pooled
    else:
        mask_e = mask
    mask_c = mask - mask_e

    def brm(w, b, m):
        logits = jax.lax.conv_general_dilated(
            m, w, (1, 1), ((1, 1), (1, 1)),
            dimension_numbers=("NCHW", "OIHW", "NCHW")) + b[None, :, None, None]
        att = jax.nn.sigmoid(logits)
        return att * x + (1.0 - att) * z, att

    oc, ac = brm(params["circle_w"], params["circle_b"], mask_c)
    oe, ae = brm(params["e_w"], params["e_b"], mask_e)
    return (oc, ac, oe, ae)


if __name__ == "__main__":
    N, C, H, W = 2, 4, 16, 16
    ksize = 3

    key = jax.random.PRNGKey(0)
    kcw, kcb, kew, keb, kz, km, kx = jax.random.split(key, 7)
    params = {
        "circle_w": 0.1 * jax.random.normal(kcw, (C, C, 3, 3), jnp.float32),
        "circle_b": 0.1 * jax.random.normal(kcb, (C,), jnp.float32),
        "e_w":      0.1 * jax.random.normal(kew, (C, C, 3, 3), jnp.float32),
        "e_b":      0.1 * jax.random.normal(keb, (C,), jnp.float32),
    }
    z    = jax.random.normal(kz, (N, C, H, W), jnp.float32)
    mask = jax.random.uniform(km, (N, C, H, W), jnp.float32)
    x    = jax.random.normal(kx, (N, C, H, W), jnp.float32)

    fwd = jax.jit(final_atten_forward, static_argnames="ksize")
    outs = fwd(params, z, mask, x, ksize=ksize)
    outs = jax.block_until_ready(outs)

    refs = _ref_forward(params, z, mask, x, ksize)
    for got, ref in zip(outs, refs):
        assert got.shape == ref.shape and got.dtype == ref.dtype
        assert jnp.max(jnp.abs(got - ref)) < 1e-4

    print("KERNEL_OK")
</pallas_src>

<mosaic_0001>
module attributes {stable_mosaic.version = 11 : i64} {
  func.func @_fused_final_atten_kernel(%arg0: i32, %arg1: memref<144xf32, #tpu.memory_space<smem>>, %arg2: memref<4xf32, #tpu.memory_space<smem>>, %arg3: memref<144xf32, #tpu.memory_space<smem>>, %arg4: memref<4xf32, #tpu.memory_space<smem>>, %arg5: memref<1x4x16x16xf32, #tpu.memory_space<vmem>>, %arg6: memref<1x4x16x16xf32, #tpu.memory_space<vmem>>, %arg7: memref<1x4x16x16xf32, #tpu.memory_space<vmem>>, %arg8: memref<1x4x16x16xf32, #tpu.memory_space<vmem>>, %arg9: memref<1x4x16x16xf32, #tpu.memory_space<vmem>>, %arg10: memref<1x4x16x16xf32, #tpu.memory_space<vmem>>, %arg11: memref<1x4x16x16xf32, #tpu.memory_space<vmem>>, %arg12: memref<4x18x18xf32, #tpu.memory_space<vmem>>, %arg13: memref<4x18x18xf32, #tpu.memory_space<vmem>>, %arg14: memref<4x18x18xf32, #tpu.memory_space<vmem>>) attributes {dimension_semantics = [#tpu.dimension_semantics<parallel>], iteration_bounds = array<i64: 2>, scalar_prefetch = 0 : i64, scratch_operands = 3 : i64, tpu.core_type = #tpu.core_type<tc>, window_params = [{transform_indices = @transform_0, window_bounds = array<i64: 144>}, {transform_indices = @transform_1, window_bounds = array<i64: 4>}, {transform_indices = @transform_2, window_bounds = array<i64: 144>}, {transform_indices = @transform_3, window_bounds = array<i64: 4>}, {transform_indices = @transform_4, window_bounds = array<i64: 1, 4, 16, 16>}, {transform_indices = @transform_5, window_bounds = array<i64: 1, 4, 16, 16>}, {transform_indices = @transform_6, window_bounds = array<i64: 1, 4, 16, 16>}, {transform_indices = @transform_7, window_bounds = array<i64: 1, 4, 16, 16>}, {transform_indices = @transform_8, window_bounds = array<i64: 1, 4, 16, 16>}, {transform_indices = @transform_9, window_bounds = array<i64: 1, 4, 16, 16>}, {transform_indices = @transform_10, window_bounds = array<i64: 1, 4, 16, 16>}]} {
    %c0 = arith.constant 0 : index
    %c0_0 = arith.constant 0 : index
    %c0_1 = arith.constant 0 : index
    %c0_2 = arith.constant 0 : index
    %0 = vector.load %arg5[%c0, %c0_0, %c0_1, %c0_2] : memref<1x4x16x16xf32, #tpu.memory_space<vmem>>, vector<1x4x16x16xf32>
    %1 = vector.shape_cast %0 : vector<1x4x16x16xf32> to vector<4x16x16xf32>
    %cst = arith.constant 0x7F800000 : f32
    %2 = vector.broadcast %cst : f32 to vector<4x18x18xf32>
    %c0_3 = arith.constant 0 : index
    %c0_4 = arith.constant 0 : index
    %c0_5 = arith.constant 0 : index
    %3 = vector.load %arg12[%c0_3, %c0_4, %c0_5] : memref<4x18x18xf32, #tpu.memory_space<vmem>>, vector<4x18x18xf32>
    tpu.vector_store %arg12[%c0_3, %c0_4, %c0_5], %2 {strides = array<i32>} : memref<4x18x18xf32, #tpu.memory_space<vmem>>, vector<4x18x18xf32>,
    %c0_6 = arith.constant 0 : index
    %c1 = arith.constant 1 : index
    %c1_7 = arith.constant 1 : index
    %4 = vector.load %arg12[%c0_6, %c1, %c1_7] : memref<4x18x18xf32, #tpu.memory_space<vmem>>, vector<4x16x16xf32>
    tpu.vector_store %arg12[%c0_6, %c1, %c1_7], %1 {strides = array<i32>} : memref<4x18x18xf32, #tpu.memory_space<vmem>>, vector<4x16x16xf32>,
    %c0_8 = arith.constant 0 : index
    %c0_9 = arith.constant 0 : index
    %c0_10 = arith.constant 0 : index
    %5 = vector.load %arg12[%c0_8, %c0_9, %c0_10] : memref<4x18x18xf32, #tpu.memory_space<vmem>>, vector<4x16x16xf32>
    %c0_11 = arith.constant 0 : index
    %c0_12 = arith.constant 0 : index
    %c1_13 = arith.constant 1 : index
    %6 = vector.load %arg12[%c0_11, %c0_12, %c1_13] : memref<4x18x18xf32, #tpu.memory_space<vmem>>, vector<4x16x16xf32>
    %7 = arith.minimumf %5, %6 : vector<4x16x16xf32>
    %c0_14 = arith.constant 0 : index
    %c0_15 = arith.constant 0 : index
    %c2 = arith.constant 2 : index
    %8 = vector.load %arg12[%c0_14, %c0_15, %c2] : memref<4x18x18xf32, #tpu.memory_space<vmem>>, vector<4x16x16xf32>
    %9 = arith.minimumf %7, %8 : vector<4x16x16xf32>
    %c0_16 = arith.constant 0 : index
    %c1_17 = arith.constant 1 : index
    %c0_18 = arith.constant 0 : index
    %10 = vector.load %arg12[%c0_16, %c1_17, %c0_18] : memref<4x18x18xf32, #tpu.memory_space<vmem>>, vector<4x16x16xf32>
    %11 = arith.minimumf %9, %10 : vector<4x16x16xf32>
    %c0_19 = arith.constant 0 : index
    %c1_20 = arith.constant 1 : index
    %c1_21 = arith.constant 1 : index
    %12 = vector.load %arg12[%c0_19, %c1_20, %c1_21] : memref<4x18x18xf32, #tpu.memory_space<vmem>>, vector<4x16x16xf32>
    %13 = arith.minimumf %11, %12 : vector<4x16x16xf32>
    %c0_22 = arith.constant 0 : index
    %c1_23 = arith.constant 1 : index
    %c2_24 = arith.constant 2 : index
    %14 = vector.load %arg12[%c0_22, %c1_23, %c2_24] : memref<4x18x18xf32, #tpu.memory_space<vmem>>, vector<4x16x16xf32>
    %15 = arith.minimumf %13, %14 : vector<4x16x16xf32>
    %c0_25 = arith.constant 0 : index
    %c2_26 = arith.constant 2 : index
    %c0_27 = arith.constant 0 : index
    %16 = vector.load %arg12[%c0_25, %c2_26, %c0_27] : memref<4x18x18xf32, #tpu.memory_space<vmem>>, vector<4x16x16xf32>
    %17 = arith.minimumf %15, %16 : vector<4x16x16xf32>
    %c0_28 = arith.constant 0 : index
    %c2_29 = arith.constant 2 : index
    %c1_30 = arith.constant 1 : index
    %18 = vector.load %arg12[%c0_28, %c2_29, %c1_30] : memref<4x18x18xf32, #tpu.memory_space<vmem>>, vector<4x16x16xf32>
    %19 = arith.minimumf %17, %18 : vector<4x16x16xf32>
    %c0_31 = arith.constant 0 : index
    %c2_32 = arith.constant 2 : index
    %c2_33 = arith.constant 2 : index
    %20 = vector.load %arg12[%c0_31, %c2_32, %c2_33] : memref<4x18x18xf32, #tpu.memory_space<vmem>>, vector<4x16x16xf32>
    %21 = arith.minimumf %19, %20 : vector<4x16x16xf32>
    %22 = arith.subf %1, %21 : vector<4x16x16xf32>
    %cst_34 = arith.constant 0.000000e+00 : f32
    %23 = vector.broadcast %cst_34 : f32 to vector<4x18x18xf32>
    %c0_35 = arith.constant 0 : index
    %c0_36 = arith.constant 0 : index
    %c0_37 = arith.constant 0 : index
    %24 = vector.load %arg13[%c0_35, %c0_36, %c0_37] : memref<4x18x18xf32, #tpu.memory_space<vmem>>, vector<4x18x18xf32>
    tpu.vector_store %arg13[%c0_35, %c0_36, %c0_37], %23 {strides = array<i32>} : memref<4x18x18xf32, #tpu.memory_space<vmem>>, vector<4x18x18xf32>,
    %cst_38 = arith.constant 0.000000e+00 : f32
    %25 = vector.broadcast %cst_38 : f32 to vector<4x18x18xf32>
    %c0_39 = arith.constant 0 : index
    %c0_40 = arith.constant 0 : index
    %c0_41 = arith.constant 0 : index
    %26 = vector.load %arg14[%c0_39, %c0_40, %c0_41] : memref<4x18x18xf32, #tpu.memory_space<vmem>>, vector<4x18x18xf32>
    tpu.vector_store %arg14[%c0_39, %c0_40, %c0_41], %25 {strides = array<i32>} : memref<4x18x18xf32, #tpu.memory_space<vmem>>, vector<4x18x18xf32>,
    %c0_42 = arith.constant 0 : index
    %c1_43 = arith.constant 1 : index
    %c1_44 = arith.constant 1 : index
    %27 = vector.load %arg13[%c0_42, %c1_43, %c1_44] : memref<4x18x18xf32, #tpu.memory_space<vmem>>, vector<4x16x16xf32>
    tpu.vector_store %arg13[%c0_42, %c1_43, %c1_44], %22 {strides = array<i32>} : memref<4x18x18xf32, #tpu.memory_space<vmem>>, vector<4x16x16xf32>,
    %c0_45 = arith.constant 0 : index
    %c1_46 = arith.constant 1 : index
    %c1_47 = arith.constant 1 : index
    %28 = vector.load %arg14[%c0_45, %c1_46, %c1_47] : memref<4x18x18xf32, #tpu.memory_space<vmem>>, vector<4x16x16xf32>
    tpu.vector_store %arg14[%c0_45, %c1_46, %c1_47], %21 {strides = array<i32>} : memref<4x18x18xf32, #tpu.memory_space<vmem>>, vector<4x16x16xf32>,
    %c0_48 = arith.constant 0 : index
    %29 = memref.load %arg2[%c0_48] : memref<4xf32, #tpu.memory_space<smem>>
    %30 = vector.broadcast %29 : f32 to vector<16x16xf32>
    %c1_49 = arith.constant 1 : index
    %31 = memref.load %arg2[%c1_49] : memref<4xf32, #tpu.memory_space<smem>>
    %32 = vector.broadcast %31 : f32 to vector<16x16xf32>
    %c2_50 = arith.constant 2 : index
    %33 = memref.load %arg2[%c2_50] : memref<4xf32, #tpu.memory_space<smem>>
    %34 = vector.broadcast %33 : f32 to vector<16x16xf32>
    %c3 = arith.constant 3 : index
    %35 = memref.load %arg2[%c3] : memref<4xf32, #tpu.memory_space<smem>>
    %36 = vector.broadcast %35 : f32 to vector<16x16xf32>
    %c0_51 = arith.constant 0 : index
    %37 = memref.load %arg4[%c0_51] : memref<4xf32, #tpu.memory_space<smem>>
    %38 = vector.broadcast %37 : f32 to vector<16x16xf32>
    %c1_52 = arith.constant 1 : index
    %39 = memref.load %arg4[%c1_52] : memref<4xf32, #tpu.memory_space<smem>>
    %40 = vector.broadcast %39 : f32 to vector<16x16xf32>
    %c2_53 = arith.constant 2 : index
    %41 = memref.load %arg4[%c2_53] : memref<4xf32, #tpu.memory_space<smem>>
    %42 = vector.broadcast %41 : f32 to vector<16x16xf32>
    %c3_54 = arith.constant 3 : index
    %43 = memref.load %arg4[%c3_54] : memref<4xf32, #tpu.memory_space<smem>>
    %44 = vector.broadcast %43 : f32 to vector<16x16xf32>
    %c0_55 = arith.constant 0 : index
    %c0_56 = arith.constant 0 : index
    %c0_57 = arith.constant 0 : index
    %45 = vector.load %arg13[%c0_55, %c0_56, %c0_57] : memref<4x18x18xf32, #tpu.memory_space<vmem>>, vector<1x16x16xf32>
    %46 = vector.shape_cast %45 : vector<1x16x16xf32> to vector<16x16xf32>
    %c0_58 = arith.constant 0 : index
    %c0_59 = arith.constant 0 : index
    %c0_60 = arith.constant 0 : index
    %47 = vector.load %arg14[%c0_58, %c0_59, %c0_60] : memref<4x18x18xf32, #tpu.memory_space<vmem>>, vector<1x16x16xf32>
    %48 = vector.shape_cast %47 : vector<1x16x16xf32> to vector<16x16xf32>
    %c0_61 = arith.constant 0 : index
    %49 = memref.load %arg1[%c0_61] : memref<144xf32, #tpu.memory_space<smem>>
    %50 = vector.broadcast %49 : f32 to vector<16x16xf32>
    %51 = arith.mulf %50, %46 : vector<16x16xf32>
    %52 = arith.addf %30, %51 : vector<16x16xf32>
    %c0_62 = arith.constant 0 : index
    %53 = memref.load %arg3[%c0_62] : memref<144xf32, #tpu.memory_space<smem>>
    %54 = vector.broadcast %53 : f32 to vector<16x16xf32>
    %55 = arith.mulf %54, %48 : vector<16x16xf32>
    %56 = arith.addf %38, %55 : vector<16x16xf32>
    %c1_63 = arith.constant 1 : index
    %57 = memref.load %arg1[%c1_63] : memref<144xf32, #tpu.memory_space<smem>>
    %58 = vector.broadcast %57 : f32 to vector<16x16xf32>
    %59 = arith.mulf %58, %46 : vector<16x16xf32>
    %60 = arith.addf %32, %59 : vector<16x16xf32>
    %c1_64 = arith.constant 1 : index
    %61 = memref.load %arg3[%c1_64] : memref<144xf32, #tpu.memory_space<smem>>
    %62 = vector.broadcast %61 : f32 to vector<16x16xf32>
    %63 = arith.mulf %62, %48 : vector<16x16xf32>
    %64 = arith.addf %40, %63 : vector<16x16xf32>
    %c2_65 = arith.constant 2 : index
    %65 = memref.load %arg1[%c2_65] : memref<144xf32, #tpu.memory_space<smem>>
    %66 = vector.broadcast %65 : f32 to vector<16x16xf32>
    %67 = arith.mulf %66, %46 : vector<16x16xf32>
    %68 = arith.addf %34, %67 : vector<16x16xf32>
    %c2_66 = arith.constant 2 : index
    %69 = memref.load %arg3[%c2_66] : memref<144xf32, #tpu.memory_space<smem>>
    %70 = vector.broadcast %69 : f32 to vector<16x16xf32>
    %71 = arith.mulf %70, %48 : vector<16x16xf32>
    %72 = arith.addf %42, %71 : vector<16x16xf32>
    %c3_67 = arith.constant 3 : index
    %73 = memref.load %arg1[%c3_67] : memref<144xf32, #tpu.memory_space<smem>>
    %74 = vector.broadcast %73 : f32 to vector<16x16xf32>
    %75 = arith.mulf %74, %46 : vector<16x16xf32>
    %76 = arith.addf %36, %75 : vector<16x16xf32>
    %c3_68 = arith.constant 3 : index
    %77 = memref.load %arg3[%c3_68] : memref<144xf32, #tpu.memory_space<smem>>
    %78 = vector.broadcast %77 : f32 to vector<16x16xf32>
    %79 = arith.mulf %78, %48 : vector<16x16xf32>
    %80 = arith.addf %44, %79 : vector<16x16xf32>
    %c1_69 = arith.constant 1 : index
    %c0_70 = arith.constant 0 : index
    %c0_71 = arith.constant 0 : index
    %81 = vector.load %arg13[%c1_69, %c0_70, %c0_71] : memref<4x18x18xf32, #tpu.memory_space<vmem>>, vector<1x16x16xf32>
    %82 = vector.shape_cast %81 : vector<1x16x16xf32> to vector<16x16xf32>
    %c1_72 = arith.constant 1 : index
    %c0_73 = arith.constant 0 : index
    %c0_74 = arith.constant 0 : index
    %83 = vector.load %arg14[%c1_72, %c0_73, %c0_74] : memref<4x18x18xf32, #tpu.memory_space<vmem>>, vector<1x16x16xf32>
    %84 = vector.shape_cast %83 : vector<1x16x16xf32> to vector<16x16xf32>
    %c4 = arith.constant 4 : index
    %85 = memref.load %arg1[%c4] : memref<144xf32, #tpu.memory_space<smem>>
    %86 = vector.broadcast %85 : f32 to vector<16x16xf32>
    %87 = arith.mulf %86, %82 : vector<16x16xf32>
    %88 = arith.addf %52, %87 : vector<16x16xf32>
    %c4_75 = arith.constant 4 : index
    %89 = memref.load %arg3[%c4_75] : memref<144xf32, #tpu.memory_space<smem>>
    %90 = vector.broadcast %89 : f32 to vector<16x16xf32>
    %91 = arith.mulf %90, %84 : vector<16x16xf32>
    %92 = arith.addf %56, %91 : vector<16x16xf32>
    %c5 = arith.constant 5 : index
    %93 = memref.load %arg1[%c5] : memref<144xf32, #tpu.memory_space<smem>>
    %94 = vector.broadcast %93 : f32 to vector<16x16xf32>
    %95 = arith.mulf %94, %82 : vector<16x16xf32>
    %96 = arith.addf %60, %95 : vector<16x16xf32>
    %c5_76 = arith.constant 5 : index
    %97 = memref.load %arg3[%c5_76] : memref<144xf32, #tpu.memory_space<smem>>
    %98 = vector.broadcast %97 : f32 to vector<16x16xf32>
    %99 = arith.mulf %98, %84 : vector<16x16xf32>
    %100 = arith.addf %64, %99 : vector<16x16xf32>
    %c6 = arith.constant 6 : index
    %101 = memref.load %arg1[%c6] : memref<144xf32, #tpu.memory_space<smem>>
    %102 = vector.broadcast %101 : f32 to vector<16x16xf32>
    %103 = arith.mulf %102, %82 : vector<16x16xf32>
    %104 = arith.addf %68, %103 : vector<16x16xf32>
    %c6_77 = arith.constant 6 : index
    %105 = memref.load %arg3[%c6_77] : memref<144xf32, #tpu.memory_space<smem>>
    %106 = vector.broadcast %105 : f32 to vector<16x16xf32>
    %107 = arith.mulf %106, %84 : vector<16x16xf32>
    %108 = arith.addf %72, %107 : vector<16x16xf32>
    %c7 = arith.constant 7 : index
    %109 = memref.load %arg1[%c7] : memref<144xf32, #tpu.memory_space<smem>>
    %110 = vector.broadcast %109 : f32 to vector<16x16xf32>
    %111 = arith.mulf %110, %82 : vector<16x16xf32>
    %112 = arith.addf %76, %111 : vector<16x16xf32>
    %c7_78 = arith.constant 7 : index
    %113 = memref.load %arg3[%c7_78] : memref<144xf32, #tpu.memory_space<smem>>
    %114 = vector.broadcast %113 : f32 to vector<16x16xf32>
    %115 = arith.mulf %114, %84 : vector<16x16xf32>
    %116 = arith.addf %80, %115 : vector<16x16xf32>
    %c2_79 = arith.constant 2 : index
    %c0_80 = arith.constant 0 : index
    %c0_81 = arith.constant 0 : index
    %117 = vector.load %arg13[%c2_79, %c0_80, %c0_81] : memref<4x18x18xf32, #tpu.memory_space<vmem>>, vector<1x16x16xf32>
    %118 = vector.shape_cast %117 : vector<1x16x16xf32> to vector<16x16xf32>
    %c2_82 = arith.constant 2 : index
    %c0_83 = arith.constant 0 : index
    %c0_84 = arith.constant 0 : index
    %119 = vector.load %arg14[%c2_82, %c0_83, %c0_84] : memref<4x18x18xf32, #tpu.memory_space<vmem>>, vector<1x16x16xf32>
    %120 = vector.shape_cast %119 : vector<1x16x16xf32> to vector<16x16xf32>
    %c8 = arith.constant 8 : index
    %121 = memref.load %arg1[%c8] : memref<144xf32, #tpu.memory_space<smem>>
    %122 = vector.broadcast %121 : f32 to vector<16x16xf32>
    %123 = arith.mulf %122, %118 : vector<16x16xf32>
    %124 = arith.addf %88, %123 : vector<16x16xf32>
    %c8_85 = arith.constant 8 : index
    %125 = memref.load %arg3[%c8_85] : memref<144xf32, #tpu.memory_space<smem>>
    %126 = vector.broadcast %125 : f32 to vector<16x16xf32>
    %127 = arith.mulf %126, %120 : vector<16x16xf32>
    %128 = arith.addf %92, %127 : vector<16x16xf32>
    %c9 = arith.constant 9 : index
    %129 = memref.load %arg1[%c9] : memref<144xf32, #tpu.memory_space<smem>>
    %130 = vector.broadcast %129 : f32 to vector<16x16xf32>
    %131 = arith.mulf %130, %118 : vector<16x16xf32>
    %132 = arith.addf %96, %131 : vector<16x16xf32>
    %c9_86 = arith.constant 9 : index
    %133 = memref.load %arg3[%c9_86] : memref<144xf32, #tpu.memory_space<smem>>
    %134 = vector.broadcast %133 : f32 to vector<16x16xf32>
    %135 = arith.mulf %134, %120 : vector<16x16xf32>
    %136 = arith.addf %100, %135 : vector<16x16xf32>
    %c10 = arith.constant 10 : index
    %137 = memref.load %arg1[%c10] : memref<144xf32, #tpu.memory_space<smem>>
    %138 = vector.broadcast %137 : f32 to vector<16x16xf32>
    %139 = arith.mulf %138, %118 : vector<16x16xf32>
    %140 = arith.addf %104, %139 : vector<16x16xf32>
    %c10_87 = arith.constant 10 : index
    %141 = memref.load %arg3[%c10_87] : memref<144xf32, #tpu.memory_space<smem>>
    %142 = vector.broadcast %141 : f32 to vector<16x16xf32>
    %143 = arith.mulf %142, %120 : vector<16x16xf32>
    %144 = arith.addf %108, %143 : vector<16x16xf32>
    %c11 = arith.constant 11 : index
    %145 = memref.load %arg1[%c11] : memref<144xf32, #tpu.memory_space<smem>>
    %146 = vector.broadcast %145 : f32 to vector<16x16xf32>
    %147 = arith.mulf %146, %118 : vector<16x16xf32>
    %148 = arith.addf %112, %147 : vector<16x16xf32>
    %c11_88 = arith.constant 11 : index
    %149 = memref.load %arg3[%c11_88] : memref<144xf32, #tpu.memory_space<smem>>
    %150 = vector.broadcast %149 : f32 to vector<16x16xf32>
    %151 = arith.mulf %150, %120 : vector<16x16xf32>
    %152 = arith.addf %116, %151 : vector<16x16xf32>
    %c3_89 = arith.constant 3 : index
    %c0_90 = arith.constant 0 : index
    %c0_91 = arith.constant 0 : index
    %153 = vector.load %arg13[%c3_89, %c0_90, %c0_91] : memref<4x18x18xf32, #tpu.memory_space<vmem>>, vector<1x16x16xf32>
    %154 = vector.shape_cast %153 : vector<1x16x16xf32> to vector<16x16xf32>
    %c3_92 = arith.constant 3 : index
    %c0_93 = arith.constant 0 : index
    %c0_94 = arith.constant 0 : index
    %155 = vector.load %arg14[%c3_92, %c0_93, %c0_94] : memref<4x18x18xf32, #tpu.memory_space<vmem>>, vector<1x16x16xf32>
    %156 = vector.shape_cast %155 : vector<1x16x16xf32> to vector<16x16xf32>
    %c12 = arith.constant 12 : index
    %157 = memref.load %arg1[%c12] : memref<144xf32, #tpu.memory_space<smem>>
    %158 = vector.broadcast %157 : f32 to vector<16x16xf32>
    %159 = arith.mulf %158, %154 : vector<16x16xf32>
    %160 = arith.addf %124, %159 : vector<16x16xf32>
    %c12_95 = arith.constant 12 : index
    %161 = memref.load %arg3[%c12_95] : memref<144xf32, #tpu.memory_space<smem>>
    %162 = vector.broadcast %161 : f32 to vector<16x16xf32>
    %163 = arith.mulf %162, %156 : vector<16x16xf32>
    %164 = arith.addf %128, %163 : vector<16x16xf32>
    %c13 = arith.constant 13 : index
    %165 = memref.load %arg1[%c13] : memref<144xf32, #tpu.memory_space<smem>>
    %166 = vector.broadcast %165 : f32 to vector<16x16xf32>
    %167 = arith.mulf %166, %154 : vector<16x16xf32>
    %168 = arith.addf %132, %167 : vector<16x16xf32>
    %c13_96 = arith.constant 13 : index
    %169 = memref.load %arg3[%c13_96] : memref<144xf32, #tpu.memory_space<smem>>
    %170 = vector.broadcast %169 : f32 to vector<16x16xf32>
    %171 = arith.mulf %170, %156 : vector<16x16xf32>
    %172 = arith.addf %136, %171 : vector<16x16xf32>
    %c14 = arith.constant 14 : index
    %173 = memref.load %arg1[%c14] : memref<144xf32, #tpu.memory_space<smem>>
    %174 = vector.broadcast %173 : f32 to vector<16x16xf32>
    %175 = arith.mulf %174, %154 : vector<16x16xf32>
    %176 = arith.addf %140, %175 : vector<16x16xf32>
    %c14_97 = arith.constant 14 : index
    %177 = memref.load %arg3[%c14_97] : memref<144xf32, #tpu.memory_space<smem>>
    %178 = vector.broadcast %177 : f32 to vector<16x16xf32>
    %179 = arith.mulf %178, %156 : vector<16x16xf32>
    %180 = arith.addf %144, %179 : vector<16x16xf32>
    %c15 = arith.constant 15 : index
    %181 = memref.load %arg1[%c15] : memref<144xf32, #tpu.memory_space<smem>>
    %182 = vector.broadcast %181 : f32 to vector<16x16xf32>
    %183 = arith.mulf %182, %154 : vector<16x16xf32>
    %184 = arith.addf %148, %183 : vector<16x16xf32>
    %c15_98 = arith.constant 15 : index
    %185 = memref.load %arg3[%c15_98] : memref<144xf32, #tpu.memory_space<smem>>
    %186 = vector.broadcast %185 : f32 to vector<16x16xf32>
    %187 = arith.mulf %186, %156 : vector<16x16xf32>
    %188 = arith.addf %152, %187 : vector<16x16xf32>
    %c0_99 = arith.constant 0 : index
    %c0_100 = arith.constant 0 : index
    %c1_101 = arith.constant 1 : index
    %189 = vector.load %arg13[%c0_99, %c0_100, %c1_101] : memref<4x18x18xf32, #tpu.memory_space<vmem>>, vector<1x16x16xf32>
    %190 = vector.shape_cast %189 : vector<1x16x16xf32> to vector<16x16xf32>
    %c0_102 = arith.constant 0 : index
    %c0_103 = arith.constant 0 : index
    %c1_104 = arith.constant 1 : index
    %191 = vector.load %arg14[%c0_102, %c0_103, %c1_104] : memref<4x18x18xf32, #tpu.memory_space<vmem>>, vector<1x16x16xf32>
    %192 = vector.shape_cast %191 : vector<1x16x16xf32> to vector<16x16xf32>
    %c16 = arith.constant 16 : index
    %193 = memref.load %arg1[%c16] : memref<144xf32, #tpu.memory_space<smem>>
    %194 = vector.broadcast %193 : f32 to vector<16x16xf32>
    %195 = arith.mulf %194, %190 : vector<16x16xf32>
    %196 = arith.addf %160, %195 : vector<16x16xf32>
    %c16_105 = arith.constant 16 : index
    %197 = memref.load %arg3[%c16_105] : memref<144xf32, #tpu.memory_space<smem>>
    %198 = vector.broadcast %197 : f32 to vector<16x16xf32>
    %199 = arith.mulf %198, %192 : vector<16x16xf32>
    %200 = arith.addf %164, %199 : vector<16x16xf32>
    %c17 = arith.constant 17 : index
    %201 = memref.load %arg1[%c17] : memref<144xf32, #tpu.memory_space<smem>>
    %202 = vector.broadcast %201 : f32 to vector<16x16xf32>
    %203 = arith.mulf %202, %190 : vector<16x16xf32>
    %204 = arith.addf %168, %203 : vector<16x16xf32>
    %c17_106 = arith.constant 17 : index
    %205 = memref.load %arg3[%c17_106] : memref<144xf32, #tpu.memory_space<smem>>
    %206 = vector.broadcast %205 : f32 to vector<16x16xf32>
    %207 = arith.mulf %206, %192 : vector<16x16xf32>
    %208 = arith.addf %172, %207 : vector<16x16xf32>
    %c18 = arith.constant 18 : index
    %209 = memref.load %arg1[%c18] : memref<144xf32, #tpu.memory_space<smem>>
    %210 = vector.broadcast %209 : f32 to vector<16x16xf32>
    %211 = arith.mulf %210, %190 : vector<16x16xf32>
    %212 = arith.addf %176, %211 : vector<16x16xf32>
    %c18_107 = arith.constant 18 : index
    %213 = memref.load %arg3[%c18_107] : memref<144xf32, #tpu.memory_space<smem>>
    %214 = vector.broadcast %213 : f32 to vector<16x16xf32>
    %215 = arith.mulf %214, %192 : vector<16x16xf32>
    %216 = arith.addf %180, %215 : vector<16x16xf32>
    %c19 = arith.constant 19 : index
    %217 = memref.load %arg1[%c19] : memref<144xf32, #tpu.memory_space<smem>>
    %218 = vector.broadcast %217 : f32 to vector<16x16xf32>
    %219 = arith.mulf %218, %190 : vector<16x16xf32>
    %220 = arith.addf %184, %219 : vector<16x16xf32>
    %c19_108 = arith.constant 19 : index
    %221 = memref.load %arg3[%c19_108] : memref<144xf32, #tpu.memory_space<smem>>
    %222 = vector.broadcast %221 : f32 to vector<16x16xf32>
    %223 = arith.mulf %222, %192 : vector<16x16xf32>
    %224 = arith.addf %188, %223 : vector<16x16xf32>
    %c1_109 = arith.constant 1 : index
    %c0_110 = arith.constant 0 : index
    %c1_111 = arith.constant 1 : index
    %225 = vector.load %arg13[%c1_109, %c0_110, %c1_111] : memref<4x18x18xf32, #tpu.memory_space<vmem>>, vector<1x16x16xf32>
    %226 = vector.shape_cast %225 : vector<1x16x16xf32> to vector<16x16xf32>
    %c1_112 = arith.constant 1 : index
    %c0_113 = arith.constant 0 : index
    %c1_114 = arith.constant 1 : index
    %227 = vector.load %arg14[%c1_112, %c0_113, %c1_114] : memref<4x18x18xf32, #tpu.memory_space<vmem>>, vector<1x16x16xf32>
    %228 = vector.shape_cast %227 : vector<1x16x16xf32> to vector<16x16xf32>
    %c20 = arith.constant 20 : index
    %229 = memref.load %arg1[%c20] : memref<144xf32, #tpu.memory_space<smem>>
    %230 = vector.broadcast %229 : f32 to vector<16x16xf32>
    %231 = arith.mulf %230, %226 : vector<16x16xf32>
    %232 = arith.addf %196, %231 : vector<16x16xf32>
    %c20_115 = arith.constant 20 : index
    %233 = memref.load %arg3[%c20_115] : memref<144xf32, #tpu.memory_space<smem>>
    %234 = vector.broadcast %233 : f32 to vector<16x16xf32>
    %235 = arith.mulf %234, %228 : vector<16x16xf32>
    %236 = arith.addf %200, %235 : vector<16x16xf32>
    %c21 = arith.constant 21 : index
    %237 = memref.load %arg1[%c21] : memref<144xf32, #tpu.memory_space<smem>>
    %238 = vector.broadcast %237 : f32 to vector<16x16xf32>
    %239 = arith.mulf %238, %226 : vector<16x16xf32>
    %240 = arith.addf %204, %239 : vector<16x16xf32>
    %c21_116 = arith.constant 21 : index
    %241 = memref.load %arg3[%c21_116] : memref<144xf32, #tpu.memory_space<smem>>
    %242 = vector.broadcast %241 : f32 to vector<16x16xf32>
    %243 = arith.mulf %242, %228 : vector<16x16xf32>
    %244 = arith.addf %208, %243 : vector<16x16xf32>
    %c22 = arith.constant 22 : index
    %245 = memref.load %arg1[%c22] : memref<144xf32, #tpu.memory_space<smem>>
    %246 = vector.broadcast %245 : f32 to vector<16x16xf32>
    %247 = arith.mulf %246, %226 : vector<16x16xf32>
    %248 = arith.addf %212, %247 : vector<16x16xf32>
    %c22_117 = arith.constant 22 : index
    %249 = memref.load %arg3[%c22_117] : memref<144xf32, #tpu.memory_space<smem>>
    %250 = vector.broadcast %249 : f32 to vector<16x16xf32>
    %251 = arith.mulf %250, %228 : vector<16x16xf32>
    %252 = arith.addf %216, %251 : vector<16x16xf32>
    %c23 = arith.constant 23 : index
    %253 = memref.load %arg1[%c23] : memref<144xf32, #tpu.memory_space<smem>>
    %254 = vector.broadcast %253 : f32 to vector<16x16xf32>
    %255 = arith.mulf %254, %226 : vector<16x16xf32>
    %256 = arith.addf %220, %255 : vector<16x16xf32>
    %c23_118 = arith.constant 23 : index
    %257 = memref.load %arg3[%c23_118] : memref<144xf32, #tpu.memory_space<smem>>
    %258 = vector.broadcast %257 : f32 to vector<16x16xf32>
    %259 = arith.mulf %258, %228 : vector<16x16xf32>
    %260 = arith.addf %224, %259 : vector<16x16xf32>
    %c2_119 = arith.constant 2 : index
    %c0_120 = arith.constant 0 : index
    %c1_121 = arith.constant 1 : index
    %261 = vector.load %arg13[%c2_119, %c0_120, %c1_121] : memref<4x18x18xf32, #tpu.memory_space<vmem>>, vector<1x16x16xf32>
    %262 = vector.shape_cast %261 : vector<1x16x16xf32> to vector<16x16xf32>
    %c2_122 = arith.constant 2 : index
    %c0_123 = arith.constant 0 : index
    %c1_124 = arith.constant 1 : index
    %263 = vector.load %arg14[%c2_122, %c0_123, %c1_124] : memref<4x18x18xf32, #tpu.memory_space<vmem>>, vector<1x16x16xf32>
    %264 = vector.shape_cast %263 : vector<1x16x16xf32> to vector<16x16xf32>
    %c24 = arith.constant 24 : index
    %265 = memref.load %arg1[%c24] : memref<144xf32, #tpu.memory_space<smem>>
    %266 = vector.broadcast %265 : f32 to vector<16x16xf32>
    %267 = arith.mulf %266, %262 : vector<16x16xf32>
    %268 = arith.addf %232, %267 : vector<16x16xf32>
    %c24_125 = arith.constant 24 : index
    %269 = memref.load %arg3[%c24_125] : memref<144xf32, #tpu.memory_space<smem>>
    %270 = vector.broadcast %269 : f32 to vector<16x16xf32>
    %271 = arith.mulf %270, %264 : vector<16x16xf32>
    %272 = arith.addf %236, %271 : vector<16x16xf32>
    %c25 = arith.constant 25 : index
    %273 = memref.load %arg1[%c25] : memref<144xf32, #tpu.memory_space<smem>>
    %274 = vector.broadcast %273 : f32 to vector<16x16xf32>
    %275 = arith.mulf %274, %262 : vector<16x16xf32>
    %276 = arith.addf %240, %275 : vector<16x16xf32>
    %c25_126 = arith.constant 25 : index
    %277 = memref.load %arg3[%c25_126] : memref<144xf32, #tpu.memory_space<smem>>
    %278 = vector.broadcast %277 : f32 to vector<16x16xf32>
    %279 = arith.mulf %278, %264 : vector<16x16xf32>
    %280 = arith.addf %244, %279 : vector<16x16xf32>
    %c26 = arith.constant 26 : index
    %281 = memref.load %arg1[%c26] : memref<144xf32, #tpu.memory_space<smem>>
    %282 = vector.broadcast %281 : f32 to vector<16x16xf32>
    %283 = arith.mulf %282, %262 : vector<16x16xf32>
    %284 = arith.addf %248, %283 : vector<16x16xf32>
    %c26_127 = arith.constant 26 : index
    %285 = memref.load %arg3[%c26_127] : memref<144xf32, #tpu.memory_space<smem>>
    %286 = vector.broadcast %285 : f32 to vector<16x16xf32>
    %287 = arith.mulf %286, %264 : vector<16x16xf32>
    %288 = arith.addf %252, %287 : vector<16x16xf32>
    %c27 = arith.constant 27 : index
    %289 = memref.load %arg1[%c27] : memref<144xf32, #tpu.memory_space<smem>>
    %290 = vector.broadcast %289 : f32 to vector<16x16xf32>
    %291 = arith.mulf %290, %262 : vector<16x16xf32>
    %292 = arith.addf %256, %291 : vector<16x16xf32>
    %c27_128 = arith.constant 27 : index
    %293 = memref.load %arg3[%c27_128] : memref<144xf32, #tpu.memory_space<smem>>
    %294 = vector.broadcast %293 : f32 to vector<16x16xf32>
    %295 = arith.mulf %294, %264 : vector<16x16xf32>
    %296 = arith.addf %260, %295 : vector<16x16xf32>
    %c3_129 = arith.constant 3 : index
    %c0_130 = arith.constant 0 : index
    %c1_131 = arith.constant 1 : index
    %297 = vector.load %arg13[%c3_129, %c0_130, %c1_131] : memref<4x18x18xf32, #tpu.memory_space<vmem>>, vector<1x16x16xf32>
    %298 = vector.shape_cast %297 : vector<1x16x16xf32> to vector<16x16xf32>
    %c3_132 = arith.constant 3 : index
    %c0_133 = arith.constant 0 : index
    %c1_134 = arith.constant 1 : index
    %299 = vector.load %arg14[%c3_132, %c0_133, %c1_134] : memref<4x18x18xf32, #tpu.memory_space<vmem>>, vector<1x16x16xf32>
    %300 = vector.shape_cast %299 : vector<1x16x16xf32> to vector<16x16xf32>
    %c28 = arith.constant 28 : index
    %301 = memref.load %arg1[%c28] : memref<144xf32, #tpu.memory_space<smem>>
    %302 = vector.broadcast %301 : f32 to vector<16x16xf32>
    %303 = arith.mulf %302, %298 : vector<16x16xf32>
    %304 = arith.addf %268, %303 : vector<16x16xf32>
    %c28_135 = arith.constant 28 : index
    %305 = memref.load %arg3[%c28_135] : memref<144xf32, #tpu.memory_space<smem>>
    %306 = vector.broadcast %305 : f32 to vector<16x16xf32>
    %307 = arith.mulf %306, %300 : vector<16x16xf32>
    %308 = arith.addf %272, %307 : vector<16x16xf32>
    %c29 = arith.constant 29 : index
    %309 = memref.load %arg1[%c29] : memref<144xf32, #tpu.memory_space<smem>>
    %310 = vector.broadcast %309 : f32 to vector<16x16xf32>
    %311 = arith.mulf %310, %298 : vector<16x16xf32>
    %312 = arith.addf %276, %311 : vector<16x16xf32>
    %c29_136 = arith.constant 29 : index
    %313 = memref.load %arg3[%c29_136] : memref<144xf32, #tpu.memory_space<smem>>
    %314 = vector.broadcast %313 : f32 to vector<16x16xf32>
    %315 = arith.mulf %314, %300 : vector<16x16xf32>
    %316 = arith.addf %280, %315 : vector<16x16xf32>
    %c30 = arith.constant 30 : index
    %317 = memref.load %arg1[%c30] : memref<144xf32, #tpu.memory_space<smem>>
    %318 = vector.broadcast %317 : f32 to vector<16x16xf32>
    %319 = arith.mulf %318, %298 : vector<16x16xf32>
    %320 = arith.addf %284, %319 : vector<16x16xf32>
    %c30_137 = arith.constant 30 : index
    %321 = memref.load %arg3[%c30_137] : memref<144xf32, #tpu.memory_space<smem>>
    %322 = vector.broadcast %321 : f32 to vector<16x16xf32>
    %323 = arith.mulf %322, %300 : vector<16x16xf32>
    %324 = arith.addf %288, %323 : vector<16x16xf32>
    %c31 = arith.constant 31 : index
    %325 = memref.load %arg1[%c31] : memref<144xf32, #tpu.memory_space<smem>>
    %326 = vector.broadcast %325 : f32 to vector<16x16xf32>
    %327 = arith.mulf %326, %298 : vector<16x16xf32>
    %328 = arith.addf %292, %327 : vector<16x16xf32>
    %c31_138 = arith.constant 31 : index
    %329 = memref.load %arg3[%c31_138] : memref<144xf32, #tpu.memory_space<smem>>
    %330 = vector.broadcast %329 : f32 to vector<16x16xf32>
    %331 = arith.mulf %330, %300 : vector<16x16xf32>
    %332 = arith.addf %296, %331 : vector<16x16xf32>
    %c0_139 = arith.constant 0 : index
    %c0_140 = arith.constant 0 : index
    %c2_141 = arith.constant 2 : index
    %333 = vector.load %arg13[%c0_139, %c0_140, %c2_141] : memref<4x18x18xf32, #tpu.memory_space<vmem>>, vector<1x16x16xf32>
    %334 = vector.shape_cast %333 : vector<1x16x16xf32> to vector<16x16xf32>
    %c0_142 = arith.constant 0 : index
    %c0_143 = arith.constant 0 : index
    %c2_144 = arith.constant 2 : index
    %335 = vector.load %arg14[%c0_142, %c0_143, %c2_144] : memref<4x18x18xf32, #tpu.memory_space<vmem>>, vector<1x16x16xf32>
    %336 = vector.shape_cast %335 : vector<1x16x16xf32> to vector<16x16xf32>
    %c32 = arith.constant 32 : index
    %337 = memref.load %arg1[%c32] : memref<144xf32, #tpu.memory_space<smem>>
    %338 = vector.broadcast %337 : f32 to vector<16x16xf32>
    %339 = arith.mulf %338, %334 : vector<16x16xf32>
    %340 = arith.addf %304, %339 : vector<16x16xf32>
    %c32_145 = arith.constant 32 : index
    %341 = memref.load %arg3[%c32_145] : memref<144xf32, #tpu.memory_space<smem>>
    %342 = vector.broadcast %341 : f32 to vector<16x16xf32>
    %343 = arith.mulf %342, %336 : vector<16x16xf32>
    %344 = arith.addf %308, %343 : vector<16x16xf32>
    %c33 = arith.constant 33 : index
    %345 = memref.load %arg1[%c33] : memref<144xf32, #tpu.memory_space<smem>>
    %346 = vector.broadcast %345 : f32 to vector<16x16xf32>
    %347 = arith.mulf %346, %334 : vector<16x16xf32>
    %348 = arith.addf %312, %347 : vector<16x16xf32>
    %c33_146 = arith.constant 33 : index
    %349 = memref.load %arg3[%c33_146] : memref<144xf32, #tpu.memory_space<smem>>
    %350 = vector.broadcast %349 : f32 to vector<16x16xf32>
    %351 = arith.mulf %350, %336 : vector<16x16xf32>
    %352 = arith.addf %316, %351 : vector<16x16xf32>
    %c34 = arith.constant 34 : index
    %353 = memref.load %arg1[%c34] : memref<144xf32, #tpu.memory_space<smem>>
    %354 = vector.broadcast %353 : f32 to vector<16x16xf32>
    %355 = arith.mulf %354, %334 : vector<16x16xf32>
    %356 = arith.addf %320, %355 : vector<16x16xf32>
    %c34_147 = arith.constant 34 : index
    %357 = memref.load %arg3[%c34_147] : memref<144xf32, #tpu.memory_space<smem>>
    %358 = vector.broadcast %357 : f32 to vector<16x16xf32>
    %359 = arith.mulf %358, %336 : vector<16x16xf32>
    %360 = arith.addf %324, %359 : vector<16x16xf32>
    %c35 = arith.constant 35 : index
    %361 = memref.load %arg1[%c35] : memref<144xf32, #tpu.memory_space<smem>>
    %362 = vector.broadcast %361 : f32 to vector<16x16xf32>
    %363 = arith.mulf %362, %334 : vector<16x16xf32>
    %364 = arith.addf %328, %363 : vector<16x16xf32>
    %c35_148 = arith.constant 35 : index
    %365 = memref.load %arg3[%c35_148] : memref<144xf32, #tpu.memory_space<smem>>
    %366 = vector.broadcast %365 : f32 to vector<16x16xf32>
    %367 = arith.mulf %366, %336 : vector<16x16xf32>
    %368 = arith.addf %332, %367 : vector<16x16xf32>
    %c1_149 = arith.constant 1 : index
    %c0_150 = arith.constant 0 : index
    %c2_151 = arith.constant 2 : index
    %369 = vector.load %arg13[%c1_149, %c0_150, %c2_151] : memref<4x18x18xf32, #tpu.memory_space<vmem>>, vector<1x16x16xf32>
    %370 = vector.shape_cast %369 : vector<1x16x16xf32> to vector<16x16xf32>
    %c1_152 = arith.constant 1 : index
    %c0_153 = arith.constant 0 : index
    %c2_154 = arith.constant 2 : index
    %371 = vector.load %arg14[%c1_152, %c0_153, %c2_154] : memref<4x18x18xf32, #tpu.memory_space<vmem>>, vector<1x16x16xf32>
    %372 = vector.shape_cast %371 : vector<1x16x16xf32> to vector<16x16xf32>
    %c36 = arith.constant 36 : index
    %373 = memref.load %arg1[%c36] : memref<144xf32, #tpu.memory_space<smem>>
    %374 = vector.broadcast %373 : f32 to vector<16x16xf32>
    %375 = arith.mulf %374, %370 : vector<16x16xf32>
    %376 = arith.addf %340, %375 : vector<16x16xf32>
    %c36_155 = arith.constant 36 : index
    %377 = memref.load %arg3[%c36_155] : memref<144xf32, #tpu.memory_space<smem>>
    %378 = vector.broadcast %377 : f32 to vector<16x16xf32>
    %379 = arith.mulf %378, %372 : vector<16x16xf32>
    %380 = arith.addf %344, %379 : vector<16x16xf32>
    %c37 = arith.constant 37 : index
    %381 = memref.load %arg1[%c37] : memref<144xf32, #tpu.memory_space<smem>>
    %382 = vector.broadcast %381 : f32 to vector<16x16xf32>
    %383 = arith.mulf %382, %370 : vector<16x16xf32>
    %384 = arith.addf %348, %383 : vector<16x16xf32>
    %c37_156 = arith.constant 37 : index
    %385 = memref.load %arg3[%c37_156] : memref<144xf32, #tpu.memory_space<smem>>
    %386 = vector.broadcast %385 : f32 to vector<16x16xf32>
    %387 = arith.mulf %386, %372 : vector<16x16xf32>
    %388 = arith.addf %352, %387 : vector<16x16xf32>
    %c38 = arith.constant 38 : index
    %389 = memref.load %arg1[%c38] : memref<144xf32, #tpu.memory_space<smem>>
    %390 = vector.broadcast %389 : f32 to vector<16x16xf32>
    %391 = arith.mulf %390, %370 : vector<16x16xf32>
    %392 = arith.addf %356, %391 : vector<16x16xf32>
    %c38_157 = arith.constant 38 : index
    %393 = memref.load %arg3[%c38_157] : memref<144xf32, #tpu.memory_space<smem>>
    %394 = vector.broadcast %393 : f32 to vector<16x16xf32>
    %395 = arith.mulf %394, %372 : vector<16x16xf32>
    %396 = arith.addf %360, %395 : vector<16x16xf32>
    %c39 = arith.constant 39 : index
    %397 = memref.load %arg1[%c39] : memref<144xf32, #tpu.memory_space<smem>>
    %398 = vector.broadcast %397 : f32 to vector<16x16xf32>
    %399 = arith.mulf %398, %370 : vector<16x16xf32>
    %400 = arith.addf %364, %399 : vector<16x16xf32>
    %c39_158 = arith.constant 39 : index
    %401 = memref.load %arg3[%c39_158] : memref<144xf32, #tpu.memory_space<smem>>
    %402 = vector.broadcast %401 : f32 to vector<16x16xf32>
    %403 = arith.mulf %402, %372 : vector<16x16xf32>
    %404 = arith.addf %368, %403 : vector<16x16xf32>
    %c2_159 = arith.constant 2 : index
    %c0_160 = arith.constant 0 : index
    %c2_161 = arith.constant 2 : index
    %405 = vector.load %arg13[%c2_159, %c0_160, %c2_161] : memref<4x18x18xf32, #tpu.memory_space<vmem>>, vector<1x16x16xf32>
    %406 = vector.shape_cast %405 : vector<1x16x16xf32> to vector<16x16xf32>
    %c2_162 = arith.constant 2 : index
    %c0_163 = arith.constant 0 : index
    %c2_164 = arith.constant 2 : index
    %407 = vector.load %arg14[%c2_162, %c0_163, %c2_164] : memref<4x18x18xf32, #tpu.memory_space<vmem>>, vector<1x16x16xf32>
    %408 = vector.shape_cast %407 : vector<1x16x16xf32> to vector<16x16xf32>
    %c40 = arith.constant 40 : index
    %409 = memref.load %arg1[%c40] : memref<144xf32, #tpu.memory_space<smem>>
    %410 = vector.broadcast %409 : f32 to vector<16x16xf32>
    %411 = arith.mulf %410, %406 : vector<16x16xf32>
    %412 = arith.addf %376, %411 : vector<16x16xf32>
    %c40_165 = arith.constant 40 : index
    %413 = memref.load %arg3[%c40_165] : memref<144xf32, #tpu.memory_space<smem>>
    %414 = vector.broadcast %413 : f32 to vector<16x16xf32>
    %415 = arith.mulf %414, %408 : vector<16x16xf32>
    %416 = arith.addf %380, %415 : vector<16x16xf32>
    %c41 = arith.constant 41 : index
    %417 = memref.load %arg1[%c41] : memref<144xf32, #tpu.memory_space<smem>>
    %418 = vector.broadcast %417 : f32 to vector<16x16xf32>
    %419 = arith.mulf %418, %406 : vector<16x16xf32>
    %420 = arith.addf %384, %419 : vector<16x16xf32>
    %c41_166 = arith.constant 41 : index
    %421 = memref.load %arg3[%c41_166] : memref<144xf32, #tpu.memory_space<smem>>
    %422 = vector.broadcast %421 : f32 to vector<16x16xf32>
    %423 = arith.mulf %422, %408 : vector<16x16xf32>
    %424 = arith.addf %388, %423 : vector<16x16xf32>
    %c42 = arith.constant 42 : index
    %425 = memref.load %arg1[%c42] : memref<144xf32, #tpu.memory_space<smem>>
    %426 = vector.broadcast %425 : f32 to vector<16x16xf32>
    %427 = arith.mulf %426, %406 : vector<16x16xf32>
    %428 = arith.addf %392, %427 : vector<16x16xf32>
    %c42_167 = arith.constant 42 : index
    %429 = memref.load %arg3[%c42_167] : memref<144xf32, #tpu.memory_space<smem>>
    %430 = vector.broadcast %429 : f32 to vector<16x16xf32>
    %431 = arith.mulf %430, %408 : vector<16x16xf32>
    %432 = arith.addf %396, %431 : vector<16x16xf32>
    %c43 = arith.constant 43 : index
    %433 = memref.load %arg1[%c43] : memref<144xf32, #tpu.memory_space<smem>>
    %434 = vector.broadcast %433 : f32 to vector<16x16xf32>
    %435 = arith.mulf %434, %406 : vector<16x16xf32>
    %436 = arith.addf %400, %435 : vector<16x16xf32>
    %c43_168 = arith.constant 43 : index
    %437 = memref.load %arg3[%c43_168] : memref<144xf32, #tpu.memory_space<smem>>
    %438 = vector.broadcast %437 : f32 to vector<16x16xf32>
    %439 = arith.mulf %438, %408 : vector<16x16xf32>
    %440 = arith.addf %404, %439 : vector<16x16xf32>
    %c3_169 = arith.constant 3 : index
    %c0_170 = arith.constant 0 : index
    %c2_171 = arith.constant 2 : index
    %441 = vector.load %arg13[%c3_169, %c0_170, %c2_171] : memref<4x18x18xf32, #tpu.memory_space<vmem>>, vector<1x16x16xf32>
    %442 = vector.shape_cast %441 : vector<1x16x16xf32> to vector<16x16xf32>
    %c3_172 = arith.constant 3 : index
    %c0_173 = arith.constant 0 : index
    %c2_174 = arith.constant 2 : index
    %443 = vector.load %arg14[%c3_172, %c0_173, %c2_174] : memref<4x18x18xf32, #tpu.memory_space<vmem>>, vector<1x16x16xf32>
    %444 = vector.shape_cast %443 : vector<1x16x16xf32> to vector<16x16xf32>
    %c44 = arith.constant 44 : index
    %445 = memref.load %arg1[%c44] : memref<144xf32, #tpu.memory_space<smem>>
    %446 = vector.broadcast %445 : f32 to vector<16x16xf32>
    %447 = arith.mulf %446, %442 : vector<16x16xf32>
    %448 = arith.addf %412, %447 : vector<16x16xf32>
    %c44_175 = arith.constant 44 : index
    %449 = memref.load %arg3[%c44_175] : memref<144xf32, #tpu.memory_space<smem>>
    %450 = vector.broadcast %449 : f32 to vector<16x16xf32>
    %451 = arith.mulf %450, %444 : vector<16x16xf32>
    %452 = arith.addf %416, %451 : vector<16x16xf32>
    %c45 = arith.constant 45 : index
    %453 = memref.load %arg1[%c45] : memref<144xf32, #tpu.memory_space<smem>>
    %454 = vector.broadcast %453 : f32 to vector<16x16xf32>
    %455 = arith.mulf %454, %442 : vector<16x16xf32>
    %456 = arith.addf %420, %455 : vector<16x16xf32>
    %c45_176 = arith.constant 45 : index
    %457 = memref.load %arg3[%c45_176] : memref<144xf32, #tpu.memory_space<smem>>
    %458 = vector.broadcast %457 : f32 to vector<16x16xf32>
    %459 = arith.mulf %458, %444 : vector<16x16xf32>
    %460 = arith.addf %424, %459 : vector<16x16xf32>
    %c46 = arith.constant 46 : index
    %461 = memref.load %arg1[%c46] : memref<144xf32, #tpu.memory_space<smem>>
    %462 = vector.broadcast %461 : f32 to vector<16x16xf32>
    %463 = arith.mulf %462, %442 : vector<16x16xf32>
    %464 = arith.addf %428, %463 : vector<16x16xf32>
    %c46_177 = arith.constant 46 : index
    %465 = memref.load %arg3[%c46_177] : memref<144xf32, #tpu.memory_space<smem>>
    %466 = vector.broadcast %465 : f32 to vector<16x16xf32>
    %467 = arith.mulf %466, %444 : vector<16x16xf32>
    %468 = arith.addf %432, %467 : vector<16x16xf32>
    %c47 = arith.constant 47 : index
    %469 = memref.load %arg1[%c47] : memref<144xf32, #tpu.memory_space<smem>>
    %470 = vector.broadcast %469 : f32 to vector<16x16xf32>
    %471 = arith.mulf %470, %442 : vector<16x16xf32>
    %472 = arith.addf %436, %471 : vector<16x16xf32>
    %c47_178 = arith.constant 47 : index
    %473 = memref.load %arg3[%c47_178] : memref<144xf32, #tpu.memory_space<smem>>
    %474 = vector.broadcast %473 : f32 to vector<16x16xf32>
    %475 = arith.mulf %474, %444 : vector<16x16xf32>
    %476 = arith.addf %440, %475 : vector<16x16xf32>
    %c0_179 = arith.constant 0 : index
    %c1_180 = arith.constant 1 : index
    %c0_181 = arith.constant 0 : index
    %477 = vector.load %arg13[%c0_179, %c1_180, %c0_181] : memref<4x18x18xf32, #tpu.memory_space<vmem>>, vector<1x16x16xf32>
    %478 = vector.shape_cast %477 : vector<1x16x16xf32> to vector<16x16xf32>
    %c0_182 = arith.constant 0 : index
    %c1_183 = arith.constant 1 : index
    %c0_184 = arith.constant 0 : index
    %479 = vector.load %arg14[%c0_182, %c1_183, %c0_184] : memref<4x18x18xf32, #tpu.memory_space<vmem>>, vector<1x16x16xf32>
    %480 = vector.shape_cast %479 : vector<1x16x16xf32> to vector<16x16xf32>
    %c48 = arith.constant 48 : index
    %481 = memref.load %arg1[%c48] : memref<144xf32, #tpu.memory_space<smem>>
    %482 = vector.broadcast %481 : f32 to vector<16x16xf32>
    %483 = arith.mulf %482, %478 : vector<16x16xf32>
    %484 = arith.addf %448, %483 : vector<16x16xf32>
    %c48_185 = arith.constant 48 : index
    %485 = memref.load %arg3[%c48_185] : memref<144xf32, #tpu.memory_space<smem>>
    %486 = vector.broadcast %485 : f32 to vector<16x16xf32>
    %487 = arith.mulf %486, %480 : vector<16x16xf32>
    %488 = arith.addf %452, %487 : vector<16x16xf32>
    %c49 = arith.constant 49 : index
    %489 = memref.load %arg1[%c49] : memref<144xf32, #tpu.memory_space<smem>>
    %490 = vector.broadcast %489 : f32 to vector<16x16xf32>
    %491 = arith.mulf %490, %478 : vector<16x16xf32>
    %492 = arith.addf %456, %491 : vector<16x16xf32>
    %c49_186 = arith.constant 49 : index
    %493 = memref.load %arg3[%c49_186] : memref<144xf32, #tpu.memory_space<smem>>
    %494 = vector.broadcast %493 : f32 to vector<16x16xf32>
    %495 = arith.mulf %494, %480 : vector<16x16xf32>
    %496 = arith.addf %460, %495 : vector<16x16xf32>
    %c50 = arith.constant 50 : index
    %497 = memref.load %arg1[%c50] : memref<144xf32, #tpu.memory_space<smem>>
    %498 = vector.broadcast %497 : f32 to vector<16x16xf32>
    %499 = arith.mulf %498, %478 : vector<16x16xf32>
    %500 = arith.addf %464, %499 : vector<16x16xf32>
    %c50_187 = arith.constant 50 : index
    %501 = memref.load %arg3[%c50_187] : memref<144xf32, #tpu.memory_space<smem>>
    %502 = vector.broadcast %501 : f32 to vector<16x16xf32>
    %503 = arith.mulf %502, %480 : vector<16x16xf32>
    %504 = arith.addf %468, %503 : vector<16x16xf32>
    %c51 = arith.constant 51 : index
    %505 = memref.load %arg1[%c51] : memref<144xf32, #tpu.memory_space<smem>>
    %506 = vector.broadcast %505 : f32 to vector<16x16xf32>
    %507 = arith.mulf %506, %478 : vector<16x16xf32>
    %508 = arith.addf %472, %507 : vector<16x16xf32>
    %c51_188 = arith.constant 51 : index
    %509 = memref.load %arg3[%c51_188] : memref<144xf32, #tpu.memory_space<smem>>
    %510 = vector.broadcast %509 : f32 to vector<16x16xf32>
    %511 = arith.mulf %510, %480 : vector<16x16xf32>
    %512 = arith.addf %476, %511 : vector<16x16xf32>
    %c1_189 = arith.constant 1 : index
    %c1_190 = arith.constant 1 : index
    %c0_191 = arith.constant 0 : index
    %513 = vector.load %arg13[%c1_189, %c1_190, %c0_191] : memref<4x18x18xf32, #tpu.memory_space<vmem>>, vector<1x16x16xf32>
    %514 = vector.shape_cast %513 : vector<1x16x16xf32> to vector<16x16xf32>
    %c1_192 = arith.constant 1 : index
    %c1_193 = arith.constant 1 : index
    %c0_194 = arith.constant 0 : index
    %515 = vector.load %arg14[%c1_192, %c1_193, %c0_194] : memref<4x18x18xf32, #tpu.memory_space<vmem>>, vector<1x16x16xf32>
    %516 = vector.shape_cast %515 : vector<1x16x16xf32> to vector<16x16xf32>
    %c52 = arith.constant 52 : index
    %517 = memref.load %arg1[%c52] : memref<144xf32, #tpu.memory_space<smem>>
    %518 = vector.broadcast %517 : f32 to vector<16x16xf32>
    %519 = arith.mulf %518, %514 : vector<16x16xf32>
    %520 = arith.addf %484, %519 : vector<16x16xf32>
    %c52_195 = arith.constant 52 : index
    %521 = memref.load %arg3[%c52_195] : memref<144xf32, #tpu.memory_space<smem>>
    %522 = vector.broadcast %521 : f32 to vector<16x16xf32>
    %523 = arith.mulf %522, %516 : vector<16x16xf32>
    %524 = arith.addf %488, %523 : vector<16x16xf32>
    %c53 = arith.constant 53 : index
    %525 = memref.load %arg1[%c53] : memref<144xf32, #tpu.memory_space<smem>>
    %526 = vector.broadcast %525 : f32 to vector<16x16xf32>
    %527 = arith.mulf %526, %514 : vector<16x16xf32>
    %528 = arith.addf %492, %527 : vector<16x16xf32>
    %c53_196 = arith.constant 53 : index
    %529 = memref.load %arg3[%c53_196] : memref<144xf32, #tpu.memory_space<smem>>
    %530 = vector.broadcast %529 : f32 to vector<16x16xf32>
    %531 = arith.mulf %530, %516 : vector<16x16xf32>
    %532 = arith.addf %496, %531 : vector<16x16xf32>
    %c54 = arith.constant 54 : index
    %533 = memref.load %arg1[%c54] : memref<144xf32, #tpu.memory_space<smem>>
    %534 = vector.broadcast %533 : f32 to vector<16x16xf32>
    %535 = arith.mulf %534, %514 : vector<16x16xf32>
    %536 = arith.addf %500, %535 : vector<16x16xf32>
    %c54_197 = arith.constant 54 : index
    %537 = memref.load %arg3[%c54_197] : memref<144xf32, #tpu.memory_space<smem>>
    %538 = vector.broadcast %537 : f32 to vector<16x16xf32>
    %539 = arith.mulf %538, %516 : vector<16x16xf32>
    %540 = arith.addf %504, %539 : vector<16x16xf32>
    %c55 = arith.constant 55 : index
    %541 = memref.load %arg1[%c55] : memref<144xf32, #tpu.memory_space<smem>>
    %542 = vector.broadcast %541 : f32 to vector<16x16xf32>
    %543 = arith.mulf %542, %514 : vector<16x16xf32>
    %544 = arith.addf %508, %543 : vector<16x16xf32>
    %c55_198 = arith.constant 55 : index
    %545 = memref.load %arg3[%c55_198] : memref<144xf32, #tpu.memory_space<smem>>
    %546 = vector.broadcast %545 : f32 to vector<16x16xf32>
    %547 = arith.mulf %546, %516 : vector<16x16xf32>
    %548 = arith.addf %512, %547 : vector<16x16xf32>
    %c2_199 = arith.constant 2 : index
    %c1_200 = arith.constant 1 : index
    %c0_201 = arith.constant 0 : index
    %549 = vector.load %arg13[%c2_199, %c1_200, %c0_201] : memref<4x18x18xf32, #tpu.memory_space<vmem>>, vector<1x16x16xf32>
    %550 = vector.shape_cast %549 : vector<1x16x16xf32> to vector<16x16xf32>
    %c2_202 = arith.constant 2 : index
    %c1_203 = arith.constant 1 : index
    %c0_204 = arith.constant 0 : index
    %551 = vector.load %arg14[%c2_202, %c1_203, %c0_204] : memref<4x18x18xf32, #tpu.memory_space<vmem>>, vector<1x16x16xf32>
    %552 = vector.shape_cast %551 : vector<1x16x16xf32> to vector<16x16xf32>
    %c56 = arith.constant 56 : index
    %553 = memref.load %arg1[%c56] : memref<144xf32, #tpu.memory_space<smem>>
    %554 = vector.broadcast %553 : f32 to vector<16x16xf32>
    %555 = arith.mulf %554, %550 : vector<16x16xf32>
    %556 = arith.addf %520, %555 : vector<16x16xf32>
    %c56_205 = arith.constant 56 : index
    %557 = memref.load %arg3[%c56_205] : memref<144xf32, #tpu.memory_space<smem>>
    %558 = vector.broadcast %557 : f32 to vector<16x16xf32>
    %559 = arith.mulf %558, %552 : vector<16x16xf32>
    %560 = arith.addf %524, %559 : vector<16x16xf32>
    %c57 = arith.constant 57 : index
    %561 = memref.load %arg1[%c57] : memref<144xf32, #tpu.memory_space<smem>>
    %562 = vector.broadcast %561 : f32 to vector<16x16xf32>
    %563 = arith.mulf %562, %550 : vector<16x16xf32>
    %564 = arith.addf %528, %563 : vector<16x16xf32>
    %c57_206 = arith.constant 57 : index
    %565 = memref.load %arg3[%c57_206] : memref<144xf32, #tpu.memory_space<smem>>
    %566 = vector.broadcast %565 : f32 to vector<16x16xf32>
    %567 = arith.mulf %566, %552 : vector<16x16xf32>
    %568 = arith.addf %532, %567 : vector<16x16xf32>
    %c58 = arith.constant 58 : index
    %569 = memref.load %arg1[%c58] : memref<144xf32, #tpu.memory_space<smem>>
    %570 = vector.broadcast %569 : f32 to vector<16x16xf32>
    %571 = arith.mulf %570, %550 : vector<16x16xf32>
    %572 = arith.addf %536, %571 : vector<16x16xf32>
    %c58_207 = arith.constant 58 : index
    %573 = memref.load %arg3[%c58_207] : memref<144xf32, #tpu.memory_space<smem>>
    %574 = vector.broadcast %573 : f32 to vector<16x16xf32>
    %575 = arith.mulf %574, %552 : vector<16x16xf32>
    %576 = arith.addf %540, %575 : vector<16x16xf32>
    %c59 = arith.constant 59 : index
    %577 = memref.load %arg1[%c59] : memref<144xf32, #tpu.memory_space<smem>>
    %578 = vector.broadcast %577 : f32 to vector<16x16xf32>
    %579 = arith.mulf %578, %550 : vector<16x16xf32>
    %580 = arith.addf %544, %579 : vector<16x16xf32>
    %c59_208 = arith.constant 59 : index
    %581 = memref.load %arg3[%c59_208] : memref<144xf32, #tpu.memory_space<smem>>
    %582 = vector.broadcast %581 : f32 to vector<16x16xf32>
    %583 = arith.mulf %582, %552 : vector<16x16xf32>
    %584 = arith.addf %548, %583 : vector<16x16xf32>
    %c3_209 = arith.constant 3 : index
    %c1_210 = arith.constant 1 : index
    %c0_211 = arith.constant 0 : index
    %585 = vector.load %arg13[%c3_209, %c1_210, %c0_211] : memref<4x18x18xf32, #tpu.memory_space<vmem>>, vector<1x16x16xf32>
    %586 = vector.shape_cast %585 : vector<1x16x16xf32> to vector<16x16xf32>
    %c3_212 = arith.constant 3 : index
    %c1_213 = arith.constant 1 : index
    %c0_214 = arith.constant 0 : index
    %587 = vector.load %arg14[%c3_212, %c1_213, %c0_214] : memref<4x18x18xf32, #tpu.memory_space<vmem>>, vector<1x16x16xf32>
    %588 = vector.shape_cast %587 : vector<1x16x16xf32> to vector<16x16xf32>
    %c60 = arith.constant 60 : index
    %589 = memref.load %arg1[%c60] : memref<144xf32, #tpu.memory_space<smem>>
    %590 = vector.broadcast %589 : f32 to vector<16x16xf32>
    %591 = arith.mulf %590, %586 : vector<16x16xf32>
    %592 = arith.addf %556, %591 : vector<16x16xf32>
    %c60_215 = arith.constant 60 : index
    %593 = memref.load %arg3[%c60_215] : memref<144xf32, #tpu.memory_space<smem>>
    %594 = vector.broadcast %593 : f32 to vector<16x16xf32>
    %595 = arith.mulf %594, %588 : vector<16x16xf32>
    %596 = arith.addf %560, %595 : vector<16x16xf32>
    %c61 = arith.constant 61 : index
    %597 = memref.load %arg1[%c61] : memref<144xf32, #tpu.memory_space<smem>>
    %598 = vector.broadcast %597 : f32 to vector<16x16xf32>
    %599 = arith.mulf %598, %586 : vector<16x16xf32>
    %600 = arith.addf %564, %599 : vector<16x16xf32>
    %c61_216 = arith.constant 61 : index
    %601 = memref.load %arg3[%c61_216] : memref<144xf32, #tpu.memory_space<smem>>
    %602 = vector.broadcast %601 : f32 to vector<16x16xf32>
    %603 = arith.mulf %602, %588 : vector<16x16xf32>
    %604 = arith.addf %568, %603 : vector<16x16xf32>
    %c62 = arith.constant 62 : index
    %605 = memref.load %arg1[%c62] : memref<144xf32, #tpu.memory_space<smem>>
    %606 = vector.broadcast %605 : f32 to vector<16x16xf32>
    %607 = arith.mulf %606, %586 : vector<16x16xf32>
    %608 = arith.addf %572, %607 : vector<16x16xf32>
    %c62_217 = arith.constant 62 : index
    %609 = memref.load %arg3[%c62_217] : memref<144xf32, #tpu.memory_space<smem>>
    %610 = vector.broadcast %609 : f32 to vector<16x16xf32>
    %611 = arith.mulf %610, %588 : vector<16x16xf32>
    %612 = arith.addf %576, %611 : vector<16x16xf32>
    %c63 = arith.constant 63 : index
    %613 = memref.load %arg1[%c63] : memref<144xf32, #tpu.memory_space<smem>>
    %614 = vector.broadcast %613 : f32 to vector<16x16xf32>
    %615 = arith.mulf %614, %586 : vector<16x16xf32>
    %616 = arith.addf %580, %615 : vector<16x16xf32>
    %c63_218 = arith.constant 63 : index
    %617 = memref.load %arg3[%c63_218] : memref<144xf32, #tpu.memory_space<smem>>
    %618 = vector.broadcast %617 : f32 to vector<16x16xf32>
    %619 = arith.mulf %618, %588 : vector<16x16xf32>
    %620 = arith.addf %584, %619 : vector<16x16xf32>
    %c0_219 = arith.constant 0 : index
    %c1_220 = arith.constant 1 : index
    %c1_221 = arith.constant 1 : index
    %621 = vector.load %arg13[%c0_219, %c1_220, %c1_221] : memref<4x18x18xf32, #tpu.memory_space<vmem>>, vector<1x16x16xf32>
    %622 = vector.shape_cast %621 : vector<1x16x16xf32> to vector<16x16xf32>
    %c0_222 = arith.constant 0 : index
    %c1_223 = arith.constant 1 : index
    %c1_224 = arith.constant 1 : index
    %623 = vector.load %arg14[%c0_222, %c1_223, %c1_224] : memref<4x18x18xf32, #tpu.memory_space<vmem>>, vector<1x16x16xf32>
    %624 = vector.shape_cast %623 : vector<1x16x16xf32> to vector<16x16xf32>
    %c64 = arith.constant 64 : index
    %625 = memref.load %arg1[%c64] : memref<144xf32, #tpu.memory_space<smem>>
    %626 = vector.broadcast %625 : f32 to vector<16x16xf32>
    %627 = arith.mulf %626, %622 : vector<16x16xf32>
    %628 = arith.addf %592, %627 : vector<16x16xf32>
    %c64_225 = arith.constant 64 : index
    %629 = memref.load %arg3[%c64_225] : memref<144xf32, #tpu.memory_space<smem>>
    %630 = vector.broadcast %629 : f32 to vector<16x16xf32>
    %631 = arith.mulf %630, %624 : vector<16x16xf32>
    %632 = arith.addf %596, %631 : vector<16x16xf32>
    %c65 = arith.constant 65 : index
    %633 = memref.load %arg1[%c65] : memref<144xf32, #tpu.memory_space<smem>>
    %634 = vector.broadcast %633 : f32 to vector<16x16xf32>
    %635 = arith.mulf %634, %622 : vector<16x16xf32>
    %636 = arith.addf %600, %635 : vector<16x16xf32>
    %c65_226 = arith.constant 65 : index
    %637 = memref.load %arg3[%c65_226] : memref<144xf32, #tpu.memory_space<smem>>
    %638 = vector.broadcast %637 : f32 to vector<16x16xf32>
    %639 = arith.mulf %638, %624 : vector<16x16xf32>
    %640 = arith.addf %604, %639 : vector<16x16xf32>
    %c66 = arith.constant 66 : index
    %641 = memref.load %arg1[%c66] : memref<144xf32, #tpu.memory_space<smem>>
    %642 = vector.broadcast %641 : f32 to vector<16x16xf32>
    %643 = arith.mulf %642, %622 : vector<16x16xf32>
    %644 = arith.addf %608, %643 : vector<16x16xf32>
    %c66_227 = arith.constant 66 : index
    %645 = memref.load %arg3[%c66_227] : memref<144xf32, #tpu.memory_space<smem>>
    %646 = vector.broadcast %645 : f32 to vector<16x16xf32>
    %647 = arith.mulf %646, %624 : vector<16x16xf32>
    %648 = arith.addf %612, %647 : vector<16x16xf32>
    %c67 = arith.constant 67 : index
    %649 = memref.load %arg1[%c67] : memref<144xf32, #tpu.memory_space<smem>>
    %650 = vector.broadcast %649 : f32 to vector<16x16xf32>
    %651 = arith.mulf %650, %622 : vector<16x16xf32>
    %652 = arith.addf %616, %651 : vector<16x16xf32>
    %c67_228 = arith.constant 67 : index
    %653 = memref.load %arg3[%c67_228] : memref<144xf32, #tpu.memory_space<smem>>
    %654 = vector.broadcast %653 : f32 to vector<16x16xf32>
    %655 = arith.mulf %654, %624 : vector<16x16xf32>
    %656 = arith.addf %620, %655 : vector<16x16xf32>
    %c1_229 = arith.constant 1 : index
    %c1_230 = arith.constant 1 : index
    %c1_231 = arith.constant 1 : index
    %657 = vector.load %arg13[%c1_229, %c1_230, %c1_231] : memref<4x18x18xf32, #tpu.memory_space<vmem>>, vector<1x16x16xf32>
    %658 = vector.shape_cast %657 : vector<1x16x16xf32> to vector<16x16xf32>
    %c1_232 = arith.constant 1 : index
    %c1_233 = arith.constant 1 : index
    %c1_234 = arith.constant 1 : index
    %659 = vector.load %arg14[%c1_232, %c1_233, %c1_234] : memref<4x18x18xf32, #tpu.memory_space<vmem>>, vector<1x16x16xf32>
    %660 = vector.shape_cast %659 : vector<1x16x16xf32> to vector<16x16xf32>
    %c68 = arith.constant 68 : index
    %661 = memref.load %arg1[%c68] : memref<144xf32, #tpu.memory_space<smem>>
    %662 = vector.broadcast %661 : f32 to vector<16x16xf32>
    %663 = arith.mulf %662, %658 : vector<16x16xf32>
    %664 = arith.addf %628, %663 : vector<16x16xf32>
    %c68_235 = arith.constant 68 : index
    %665 = memref.load %arg3[%c68_235] : memref<144xf32, #tpu.memory_space<smem>>
    %666 = vector.broadcast %665 : f32 to vector<16x16xf32>
    %667 = arith.mulf %666, %660 : vector<16x16xf32>
    %668 = arith.addf %632, %667 : vector<16x16xf32>
    %c69 = arith.constant 69 : index
    %669 = memref.load %arg1[%c69] : memref<144xf32, #tpu.memory_space<smem>>
    %670 = vector.broadcast %669 : f32 to vector<16x16xf32>
    %671 = arith.mulf %670, %658 : vector<16x16xf32>
    %672 = arith.addf %636, %671 : vector<16x16xf32>
    %c69_236 = arith.constant 69 : index
    %673 = memref.load %arg3[%c69_236] : memref<144xf32, #tpu.memory_space<smem>>
    %674 = vector.broadcast %673 : f32 to vector<16x16xf32>
    %675 = arith.mulf %674, %660 : vector<16x16xf32>
    %676 = arith.addf %640, %675 : vector<16x16xf32>
    %c70 = arith.constant 70 : index
    %677 = memref.load %arg1[%c70] : memref<144xf32, #tpu.memory_space<smem>>
    %678 = vector.broadcast %677 : f32 to vector<16x16xf32>
    %679 = arith.mulf %678, %658 : vector<16x16xf32>
    %680 = arith.addf %644, %679 : vector<16x16xf32>
    %c70_237 = arith.constant 70 : index
    %681 = memref.load %arg3[%c70_237] : memref<144xf32, #tpu.memory_space<smem>>
    %682 = vector.broadcast %681 : f32 to vector<16x16xf32>
    %683 = arith.mulf %682, %660 : vector<16x16xf32>
    %684 = arith.addf %648, %683 : vector<16x16xf32>
    %c71 = arith.constant 71 : index
    %685 = memref.load %arg1[%c71] : memref<144xf32, #tpu.memory_space<smem>>
    %686 = vector.broadcast %685 : f32 to vector<16x16xf32>
    %687 = arith.mulf %686, %658 : vector<16x16xf32>
    %688 = arith.addf %652, %687 : vector<16x16xf32>
    %c71_238 = arith.constant 71 : index
    %689 = memref.load %arg3[%c71_238] : memref<144xf32, #tpu.memory_space<smem>>
    %690 = vector.broadcast %689 : f32 to vector<16x16xf32>
    %691 = arith.mulf %690, %660 : vector<16x16xf32>
    %692 = arith.addf %656, %691 : vector<16x16xf32>
    %c2_239 = arith.constant 2 : index
    %c1_240 = arith.constant 1 : index
    %c1_241 = arith.constant 1 : index
    %693 = vector.load %arg13[%c2_239, %c1_240, %c1_241] : memref<4x18x18xf32, #tpu.memory_space<vmem>>, vector<1x16x16xf32>
    %694 = vector.shape_cast %693 : vector<1x16x16xf32> to vector<16x16xf32>
    %c2_242 = arith.constant 2 : index
    %c1_243 = arith.constant 1 : index
    %c1_244 = arith.constant 1 : index
    %695 = vector.load %arg14[%c2_242, %c1_243, %c1_244] : memref<4x18x18xf32, #tpu.memory_space<vmem>>, vector<1x16x16xf32>
    %696 = vector.shape_cast %695 : vector<1x16x16xf32> to vector<16x16xf32>
    %c72 = arith.constant 72 : index
    %697 = memref.load %arg1[%c72] : memref<144xf32, #tpu.memory_space<smem>>
    %698 = vector.broadcast %697 : f32 to vector<16x16xf32>
    %699 = arith.mulf %698, %694 : vector<16x16xf32>
    %700 = arith.addf %664, %699 : vector<16x16xf32>
    %c72_245 = arith.constant 72 : index
    %701 = memref.load %arg3[%c72_245] : memref<144xf32, #tpu.memory_space<smem>>
    %702 = vector.broadcast %701 : f32 to vector<16x16xf32>
    %703 = arith.mulf %702, %696 : vector<16x16xf32>
    %704 = arith.addf %668, %703 : vector<16x16xf32>
    %c73 = arith.constant 73 : index
    %705 = memref.load %arg1[%c73] : memref<144xf32, #tpu.memory_space<smem>>
    %706 = vector.broadcast %705 : f32 to vector<16x16xf32>
    %707 = arith.mulf %706, %694 : vector<16x16xf32>
    %708 = arith.addf %672, %707 : vector<16x16xf32>
    %c73_246 = arith.constant 73 : index
    %709 = memref.load %arg3[%c73_246] : memref<144xf32, #tpu.memory_space<smem>>
    %710 = vector.broadcast %709 : f32 to vector<16x16xf32>
    %711 = arith.mulf %710, %696 : vector<16x16xf32>
    %712 = arith.addf %676, %711 : vector<16x16xf32>
    %c74 = arith.constant 74 : index
    %713 = memref.load %arg1[%c74] : memref<144xf32, #tpu.memory_space<smem>>
    %714 = vector.broadcast %713 : f32 to vector<16x16xf32>
    %715 = arith.mulf %714, %694 : vector<16x16xf32>
    %716 = arith.addf %680, %715 : vector<16x16xf32>
    %c74_247 = arith.constant 74 : index
    %717 = memref.load %arg3[%c74_247] : memref<144xf32, #tpu.memory_space<smem>>
    %718 = vector.broadcast %717 : f32 to vector<16x16xf32>
    %719 = arith.mulf %718, %696 : vector<16x16xf32>
    %720 = arith.addf %684, %719 : vector<16x16xf32>
    %c75 = arith.constant 75 : index
    %721 = memref.load %arg1[%c75] : memref<144xf32, #tpu.memory_space<smem>>
    %722 = vector.broadcast %721 : f32 to vector<16x16xf32>
    %723 = arith.mulf %722, %694 : vector<16x16xf32>
    %724 = arith.addf %688, %723 : vector<16x16xf32>
    %c75_248 = arith.constant 75 : index
    %725 = memref.load %arg3[%c75_248] : memref<144xf32, #tpu.memory_space<smem>>
    %726 = vector.broadcast %725 : f32 to vector<16x16xf32>
    %727 = arith.mulf %726, %696 : vector<16x16xf32>
    %728 = arith.addf %692, %727 : vector<16x16xf32>
    %c3_249 = arith.constant 3 : index
    %c1_250 = arith.constant 1 : index
    %c1_251 = arith.constant 1 : index
    %729 = vector.load %arg13[%c3_249, %c1_250, %c1_251] : memref<4x18x18xf32, #tpu.memory_space<vmem>>, vector<1x16x16xf32>
    %730 = vector.shape_cast %729 : vector<1x16x16xf32> to vector<16x16xf32>
    %c3_252 = arith.constant 3 : index
    %c1_253 = arith.constant 1 : index
    %c1_254 = arith.constant 1 : index
    %731 = vector.load %arg14[%c3_252, %c1_253, %c1_254] : memref<4x18x18xf32, #tpu.memory_space<vmem>>, vector<1x16x16xf32>
    %732 = vector.shape_cast %731 : vector<1x16x16xf32> to vector<16x16xf32>
    %c76 = arith.constant 76 : index
    %733 = memref.load %arg1[%c76] : memref<144xf32, #tpu.memory_space<smem>>
    %734 = vector.broadcast %733 : f32 to vector<16x16xf32>
    %735 = arith.mulf %734, %730 : vector<16x16xf32>
    %736 = arith.addf %700, %735 : vector<16x16xf32>
    %c76_255 = arith.constant 76 : index
    %737 = memref.load %arg3[%c76_255] : memref<144xf32, #tpu.memory_space<smem>>
    %738 = vector.broadcast %737 : f32 to vector<16x16xf32>
    %739 = arith.mulf %738, %732 : vector<16x16xf32>
    %740 = arith.addf %704, %739 : vector<16x16xf32>
    %c77 = arith.constant 77 : index
    %741 = memref.load %arg1[%c77] : memref<144xf32, #tpu.memory_space<smem>>
    %742 = vector.broadcast %741 : f32 to vector<16x16xf32>
    %743 = arith.mulf %742, %730 : vector<16x16xf32>
    %744 = arith.addf %708, %743 : vector<16x16xf32>
    %c77_256 = arith.constant 77 : index
    %745 = memref.load %arg3[%c77_256] : memref<144xf32, #tpu.memory_space<smem>>
    %746 = vector.broadcast %745 : f32 to vector<16x16xf32>
    %747 = arith.mulf %746, %732 : vector<16x16xf32>
    %748 = arith.addf %712, %747 : vector<16x16xf32>
    %c78 = arith.constant 78 : index
    %749 = memref.load %arg1[%c78] : memref<144xf32, #tpu.memory_space<smem>>
    %750 = vector.broadcast %749 : f32 to vector<16x16xf32>
    %751 = arith.mulf %750, %730 : vector<16x16xf32>
    %752 = arith.addf %716, %751 : vector<16x16xf32>
    %c78_257 = arith.constant 78 : index
    %753 = memref.load %arg3[%c78_257] : memref<144xf32, #tpu.memory_space<smem>>
    %754 = vector.broadcast %753 : f32 to vector<16x16xf32>
    %755 = arith.mulf %754, %732 : vector<16x16xf32>
    %756 = arith.addf %720, %755 : vector<16x16xf32>
    %c79 = arith.constant 79 : index
    %757 = memref.load %arg1[%c79] : memref<144xf32, #tpu.memory_space<smem>>
    %758 = vector.broadcast %757 : f32 to vector<16x16xf32>
    %759 = arith.mulf %758, %730 : vector<16x16xf32>
    %760 = arith.addf %724, %759 : vector<16x16xf32>
    %c79_258 = arith.constant 79 : index
    %761 = memref.load %arg3[%c79_258] : memref<144xf32, #tpu.memory_space<smem>>
    %762 = vector.broadcast %761 : f32 to vector<16x16xf32>
    %763 = arith.mulf %762, %732 : vector<16x16xf32>
    %764 = arith.addf %728, %763 : vector<16x16xf32>
    %c0_259 = arith.constant 0 : index
    %c1_260 = arith.constant 1 : index
    %c2_261 = arith.constant 2 : index
    %765 = vector.load %arg13[%c0_259, %c1_260, %c2_261] : memref<4x18x18xf32, #tpu.memory_space<vmem>>, vector<1x16x16xf32>
    %766 = vector.shape_cast %765 : vector<1x16x16xf32> to vector<16x16xf32>
    %c0_262 = arith.constant 0 : index
    %c1_263 = arith.constant 1 : index
    %c2_264 = arith.constant 2 : index
    %767 = vector.load %arg14[%c0_262, %c1_263, %c2_264] : memref<4x18x18xf32, #tpu.memory_space<vmem>>, vector<1x16x16xf32>
    %768 = vector.shape_cast %767 : vector<1x16x16xf32> to vector<16x16xf32>
    %c80 = arith.constant 80 : index
    %769 = memref.load %arg1[%c80] : memref<144xf32, #tpu.memory_space<smem>>
    %770 = vector.broadcast %769 : f32 to vector<16x16xf32>
    %771 = arith.mulf %770, %766 : vector<16x16xf32>
    %772 = arith.addf %736, %771 : vector<16x16xf32>
    %c80_265 = arith.constant 80 : index
    %773 = memref.load %arg3[%c80_265] : memref<144xf32, #tpu.memory_space<smem>>
    %774 = vector.broadcast %773 : f32 to vector<16x16xf32>
    %775 = arith.mulf %774, %768 : vector<16x16xf32>
    %776 = arith.addf %740, %775 : vector<16x16xf32>
    %c81 = arith.constant 81 : index
    %777 = memref.load %arg1[%c81] : memref<144xf32, #tpu.memory_space<smem>>
    %778 = vector.broadcast %777 : f32 to vector<16x16xf32>
    %779 = arith.mulf %778, %766 : vector<16x16xf32>
    %780 = arith.addf %744, %779 : vector<16x16xf32>
    %c81_266 = arith.constant 81 : index
    %781 = memref.load %arg3[%c81_266] : memref<144xf32, #tpu.memory_space<smem>>
    %782 = vector.broadcast %781 : f32 to vector<16x16xf32>
    %783 = arith.mulf %782, %768 : vector<16x16xf32>
    %784 = arith.addf %748, %783 : vector<16x16xf32>
    %c82 = arith.constant 82 : index
    %785 = memref.load %arg1[%c82] : memref<144xf32, #tpu.memory_space<smem>>
    %786 = vector.broadcast %785 : f32 to vector<16x16xf32>
    %787 = arith.mulf %786, %766 : vector<16x16xf32>
    %788 = arith.addf %752, %787 : vector<16x16xf32>
    %c82_267 = arith.constant 82 : index
    %789 = memref.load %arg3[%c82_267] : memref<144xf32, #tpu.memory_space<smem>>
    %790 = vector.broadcast %789 : f32 to vector<16x16xf32>
    %791 = arith.mulf %790, %768 : vector<16x16xf32>
    %792 = arith.addf %756, %791 : vector<16x16xf32>
    %c83 = arith.constant 83 : index
    %793 = memref.load %arg1[%c83] : memref<144xf32, #tpu.memory_space<smem>>
    %794 = vector.broadcast %793 : f32 to vector<16x16xf32>
    %795 = arith.mulf %794, %766 : vector<16x16xf32>
    %796 = arith.addf %760, %795 : vector<16x16xf32>
    %c83_268 = arith.constant 83 : index
    %797 = memref.load %arg3[%c83_268] : memref<144xf32, #tpu.memory_space<smem>>
    %798 = vector.broadcast %797 : f32 to vector<16x16xf32>
    %799 = arith.mulf %798, %768 : vector<16x16xf32>
    %800 = arith.addf %764, %799 : vector<16x16xf32>
    %c1_269 = arith.constant 1 : index
    %c1_270 = arith.constant 1 : index
    %c2_271 = arith.constant 2 : index
    %801 = vector.load %arg13[%c1_269, %c1_270, %c2_271] : memref<4x18x18xf32, #tpu.memory_space<vmem>>, vector<1x16x16xf32>
    %802 = vector.shape_cast %801 : vector<1x16x16xf32> to vector<16x16xf32>
    %c1_272 = arith.constant 1 : index
    %c1_273 = arith.constant 1 : index
    %c2_274 = arith.constant 2 : index
    %803 = vector.load %arg14[%c1_272, %c1_273, %c2_274] : memref<4x18x18xf32, #tpu.memory_space<vmem>>, vector<1x16x16xf32>
    %804 = vector.shape_cast %803 : vector<1x16x16xf32> to vector<16x16xf32>
    %c84 = arith.constant 84 : index
    %805 = memref.load %arg1[%c84] : memref<144xf32, #tpu.memory_space<smem>>
    %806 = vector.broadcast %805 : f32 to vector<16x16xf32>
    %807 = arith.mulf %806, %802 : vector<16x16xf32>
    %808 = arith.addf %772, %807 : vector<16x16xf32>
    %c84_275 = arith.constant 84 : index
    %809 = memref.load %arg3[%c84_275] : memref<144xf32, #tpu.memory_space<smem>>
    %810 = vector.broadcast %809 : f32 to vector<16x16xf32>
    %811 = arith.mulf %810, %804 : vector<16x16xf32>
    %812 = arith.addf %776, %811 : vector<16x16xf32>
    %c85 = arith.constant 85 : index
    %813 = memref.load %arg1[%c85] : memref<144xf32, #tpu.memory_space<smem>>
    %814 = vector.broadcast %813 : f32 to vector<16x16xf32>
    %815 = arith.mulf %814, %802 : vector<16x16xf32>
    %816 = arith.addf %780, %815 : vector<16x16xf32>
    %c85_276 = arith.constant 85 : index
    %817 = memref.load %arg3[%c85_276] : memref<144xf32, #tpu.memory_space<smem>>
    %818 = vector.broadcast %817 : f32 to vector<16x16xf32>
    %819 = arith.mulf %818, %804 : vector<16x16xf32>
    %820 = arith.addf %784, %819 : vector<16x16xf32>
    %c86 = arith.constant 86 : index
    %821 = memref.load %arg1[%c86] : memref<144xf32, #tpu.memory_space<smem>>
    %822 = vector.broadcast %821 : f32 to vector<16x16xf32>
    %823 = arith.mulf %822, %802 : vector<16x16xf32>
    %824 = arith.addf %788, %823 : vector<16x16xf32>
    %c86_277 = arith.constant 86 : index
    %825 = memref.load %arg3[%c86_277] : memref<144xf32, #tpu.memory_space<smem>>
    %826 = vector.broadcast %825 : f32 to vector<16x16xf32>
    %827 = arith.mulf %826, %804 : vector<16x16xf32>
    %828 = arith.addf %792, %827 : vector<16x16xf32>
    %c87 = arith.constant 87 : index
    %829 = memref.load %arg1[%c87] : memref<144xf32, #tpu.memory_space<smem>>
    %830 = vector.broadcast %829 : f32 to vector<16x16xf32>
    %831 = arith.mulf %830, %802 : vector<16x16xf32>
    %832 = arith.addf %796, %831 : vector<16x16xf32>
    %c87_278 = arith.constant 87 : index
    %833 = memref.load %arg3[%c87_278] : memref<144xf32, #tpu.memory_space<smem>>
    %834 = vector.broadcast %833 : f32 to vector<16x16xf32>
    %835 = arith.mulf %834, %804 : vector<16x16xf32>
    %836 = arith.addf %800, %835 : vector<16x16xf32>
    %c2_279 = arith.constant 2 : index
    %c1_280 = arith.constant 1 : index
    %c2_281 = arith.constant 2 : index
    %837 = vector.load %arg13[%c2_279, %c1_280, %c2_281] : memref<4x18x18xf32, #tpu.memory_space<vmem>>, vector<1x16x16xf32>
    %838 = vector.shape_cast %837 : vector<1x16x16xf32> to vector<16x16xf32>
    %c2_282 = arith.constant 2 : index
    %c1_283 = arith.constant 1 : index
    %c2_284 = arith.constant 2 : index
    %839 = vector.load %arg14[%c2_282, %c1_283, %c2_284] : memref<4x18x18xf32, #tpu.memory_space<vmem>>, vector<1x16x16xf32>
    %840 = vector.shape_cast %839 : vector<1x16x16xf32> to vector<16x16xf32>
    %c88 = arith.constant 88 : index
    %841 = memref.load %arg1[%c88] : memref<144xf32, #tpu.memory_space<smem>>
    %842 = vector.broadcast %841 : f32 to vector<16x16xf32>
    %843 = arith.mulf %842, %838 : vector<16x16xf32>
    %844 = arith.addf %808, %843 : vector<16x16xf32>
    %c88_285 = arith.constant 88 : index
    %845 = memref.load %arg3[%c88_285] : memref<144xf32, #tpu.memory_space<smem>>
    %846 = vector.broadcast %845 : f32 to vector<16x16xf32>
    %847 = arith.mulf %846, %840 : vector<16x16xf32>
    %848 = arith.addf %812, %847 : vector<16x16xf32>
    %c89 = arith.constant 89 : index
    %849 = memref.load %arg1[%c89] : memref<144xf32, #tpu.memory_space<smem>>
    %850 = vector.broadcast %849 : f32 to vector<16x16xf32>
    %851 = arith.mulf %850, %838 : vector<16x16xf32>
    %852 = arith.addf %816, %851 : vector<16x16xf32>
    %c89_286 = arith.constant 89 : index
    %853 = memref.load %arg3[%c89_286] : memref<144xf32, #tpu.memory_space<smem>>
    %854 = vector.broadcast %853 : f32 to vector<16x16xf32>
    %855 = arith.mulf %854, %840 : vector<16x16xf32>
    %856 = arith.addf %820, %855 : vector<16x16xf32>
    %c90 = arith.constant 90 : index
    %857 = memref.load %arg1[%c90] : memref<144xf32, #tpu.memory_space<smem>>
    %858 = vector.broadcast %857 : f32 to vector<16x16xf32>
    %859 = arith.mulf %858, %838 : vector<16x16xf32>
    %860 = arith.addf %824, %859 : vector<16x16xf32>
    %c90_287 = arith.constant 90 : index
    %861 = memref.load %arg3[%c90_287] : memref<144xf32, #tpu.memory_space<smem>>
    %862 = vector.broadcast %861 : f32 to vector<16x16xf32>
    %863 = arith.mulf %862, %840 : vector<16x16xf32>
    %864 = arith.addf %828, %863 : vector<16x16xf32>
    %c91 = arith.constant 91 : index
    %865 = memref.load %arg1[%c91] : memref<144xf32, #tpu.memory_space<smem>>
    %866 = vector.broadcast %865 : f32 to vector<16x16xf32>
    %867 = arith.mulf %866, %838 : vector<16x16xf32>
    %868 = arith.addf %832, %867 : vector<16x16xf32>
    %c91_288 = arith.constant 91 : index
    %869 = memref.load %arg3[%c91_288] : memref<144xf32, #tpu.memory_space<smem>>
    %870 = vector.broadcast %869 : f32 to vector<16x16xf32>
    %871 = arith.mulf %870, %840 : vector<16x16xf32>
    %872 = arith.addf %836, %871 : vector<16x16xf32>
    %c3_289 = arith.constant 3 : index
    %c1_290 = arith.constant 1 : index
    %c2_291 = arith.constant 2 : index
    %873 = vector.load %arg13[%c3_289, %c1_290, %c2_291] : memref<4x18x18xf32, #tpu.memory_space<vmem>>, vector<1x16x16xf32>
    %874 = vector.shape_cast %873 : vector<1x16x16xf32> to vector<16x16xf32>
    %c3_292 = arith.constant 3 : index
    %c1_293 = arith.constant 1 : index
    %c2_294 = arith.constant 2 : index
    %875 = vector.load %arg14[%c3_292, %c1_293, %c2_294] : memref<4x18x18xf32, #tpu.memory_space<vmem>>, vector<1x16x16xf32>
    %876 = vector.shape_cast %875 : vector<1x16x16xf32> to vector<16x16xf32>
    %c92 = arith.constant 92 : index
    %877 = memref.load %arg1[%c92] : memref<144xf32, #tpu.memory_space<smem>>
    %878 = vector.broadcast %877 : f32 to vector<16x16xf32>
    %879 = arith.mulf %878, %874 : vector<16x16xf32>
    %880 = arith.addf %844, %879 : vector<16x16xf32>
    %c92_295 = arith.constant 92 : index
    %881 = memref.load %arg3[%c92_295] : memref<144xf32, #tpu.memory_space<smem>>
    %882 = vector.broadcast %881 : f32 to vector<16x16xf32>
    %883 = arith.mulf %882, %876 : vector<16x16xf32>
    %884 = arith.addf %848, %883 : vector<16x16xf32>
    %c93 = arith.constant 93 : index
    %885 = memref.load %arg1[%c93] : memref<144xf32, #tpu.memory_space<smem>>
    %886 = vector.broadcast %885 : f32 to vector<16x16xf32>
    %887 = arith.mulf %886, %874 : vector<16x16xf32>
    %888 = arith.addf %852, %887 : vector<16x16xf32>
    %c93_296 = arith.constant 93 : index
    %889 = memref.load %arg3[%c93_296] : memref<144xf32, #tpu.memory_space<smem>>
    %890 = vector.broadcast %889 : f32 to vector<16x16xf32>
    %891 = arith.mulf %890, %876 : vector<16x16xf32>
    %892 = arith.addf %856, %891 : vector<16x16xf32>
    %c94 = arith.constant 94 : index
    %893 = memref.load %arg1[%c94] : memref<144xf32, #tpu.memory_space<smem>>
    %894 = vector.broadcast %893 : f32 to vector<16x16xf32>
    %895 = arith.mulf %894, %874 : vector<16x16xf32>
    %896 = arith.addf %860, %895 : vector<16x16xf32>
    %c94_297 = arith.constant 94 : index
    %897 = memref.load %arg3[%c94_297] : memref<144xf32, #tpu.memory_space<smem>>
    %898 = vector.broadcast %897 : f32 to vector<16x16xf32>
    %899 = arith.mulf %898, %876 : vector<16x16xf32>
    %900 = arith.addf %864, %899 : vector<16x16xf32>
    %c95 = arith.constant 95 : index
    %901 = memref.load %arg1[%c95] : memref<144xf32, #tpu.memory_space<smem>>
    %902 = vector.broadcast %901 : f32 to vector<16x16xf32>
    %903 = arith.mulf %902, %874 : vector<16x16xf32>
    %904 = arith.addf %868, %903 : vector<16x16xf32>
    %c95_298 = arith.constant 95 : index
    %905 = memref.load %arg3[%c95_298] : memref<144xf32, #tpu.memory_space<smem>>
    %906 = vector.broadcast %905 : f32 to vector<16x16xf32>
    %907 = arith.mulf %906, %876 : vector<16x16xf32>
    %908 = arith.addf %872, %907 : vector<16x16xf32>
    %c0_299 = arith.constant 0 : index
    %c2_300 = arith.constant 2 : index
    %c0_301 = arith.constant 0 : index
    %909 = vector.load %arg13[%c0_299, %c2_300, %c0_301] : memref<4x18x18xf32, #tpu.memory_space<vmem>>, vector<1x16x16xf32>
    %910 = vector.shape_cast %909 : vector<1x16x16xf32> to vector<16x16xf32>
    %c0_302 = arith.constant 0 : index
    %c2_303 = arith.constant 2 : index
    %c0_304 = arith.constant 0 : index
    %911 = vector.load %arg14[%c0_302, %c2_303, %c0_304] : memref<4x18x18xf32, #tpu.memory_space<vmem>>, vector<1x16x16xf32>
    %912 = vector.shape_cast %911 : vector<1x16x16xf32> to vector<16x16xf32>
    %c96 = arith.constant 96 : index
    %913 = memref.load %arg1[%c96] : memref<144xf32, #tpu.memory_space<smem>>
    %914 = vector.broadcast %913 : f32 to vector<16x16xf32>
    %915 = arith.mulf %914, %910 : vector<16x16xf32>
    %916 = arith.addf %880, %915 : vector<16x16xf32>
    %c96_305 = arith.constant 96 : index
    %917 = memref.load %arg3[%c96_305] : memref<144xf32, #tpu.memory_space<smem>>
    %918 = vector.broadcast %917 : f32 to vector<16x16xf32>
    %919 = arith.mulf %918, %912 : vector<16x16xf32>
    %920 = arith.addf %884, %919 : vector<16x16xf32>
    %c97 = arith.constant 97 : index
    %921 = memref.load %arg1[%c97] : memref<144xf32, #tpu.memory_space<smem>>
    %922 = vector.broadcast %921 : f32 to vector<16x16xf32>
    %923 = arith.mulf %922, %910 : vector<16x16xf32>
    %924 = arith.addf %888, %923 : vector<16x16xf32>
    %c97_306 = arith.constant 97 : index
    %925 = memref.load %arg3[%c97_306] : memref<144xf32, #tpu.memory_space<smem>>
    %926 = vector.broadcast %925 : f32 to vector<16x16xf32>
    %927 = arith.mulf %926, %912 : vector<16x16xf32>
    %928 = arith.addf %892, %927 : vector<16x16xf32>
    %c98 = arith.constant 98 : index
    %929 = memref.load %arg1[%c98] : memref<144xf32, #tpu.memory_space<smem>>
    %930 = vector.broadcast %929 : f32 to vector<16x16xf32>
    %931 = arith.mulf %930, %910 : vector<16x16xf32>
    %932 = arith.addf %896, %931 : vector<16x16xf32>
    %c98_307 = arith.constant 98 : index
    %933 = memref.load %arg3[%c98_307] : memref<144xf32, #tpu.memory_space<smem>>
    %934 = vector.broadcast %933 : f32 to vector<16x16xf32>
    %935 = arith.mulf %934, %912 : vector<16x16xf32>
    %936 = arith.addf %900, %935 : vector<16x16xf32>
    %c99 = arith.constant 99 : index
    %937 = memref.load %arg1[%c99] : memref<144xf32, #tpu.memory_space<smem>>
    %938 = vector.broadcast %937 : f32 to vector<16x16xf32>
    %939 = arith.mulf %938, %910 : vector<16x16xf32>
    %940 = arith.addf %904, %939 : vector<16x16xf32>
    %c99_308 = arith.constant 99 : index
    %941 = memref.load %arg3[%c99_308] : memref<144xf32, #tpu.memory_space<smem>>
    %942 = vector.broadcast %941 : f32 to vector<16x16xf32>
    %943 = arith.mulf %942, %912 : vector<16x16xf32>
    %944 = arith.addf %908, %943 : vector<16x16xf32>
    %c1_309 = arith.constant 1 : index
    %c2_310 = arith.constant 2 : index
    %c0_311 = arith.constant 0 : index
    %945 = vector.load %arg13[%c1_309, %c2_310, %c0_311] : memref<4x18x18xf32, #tpu.memory_space<vmem>>, vector<1x16x16xf32>
    %946 = vector.shape_cast %945 : vector<1x16x16xf32> to vector<16x16xf32>
    %c1_312 = arith.constant 1 : index
    %c2_313 = arith.constant 2 : index
    %c0_314 = arith.constant 0 : index
    %947 = vector.load %arg14[%c1_312, %c2_313, %c0_314] : memref<4x18x18xf32, #tpu.memory_space<vmem>>, vector<1x16x16xf32>
    %948 = vector.shape_cast %947 : vector<1x16x16xf32> to vector<16x16xf32>
    %c100 = arith.constant 100 : index
    %949 = memref.load %arg1[%c100] : memref<144xf32, #tpu.memory_space<smem>>
    %950 = vector.broadcast %949 : f32 to vector<16x16xf32>
    %951 = arith.mulf %950, %946 : vector<16x16xf32>
    %952 = arith.addf %916, %951 : vector<16x16xf32>
    %c100_315 = arith.constant 100 : index
    %953 = memref.load %arg3[%c100_315] : memref<144xf32, #tpu.memory_space<smem>>
    %954 = vector.broadcast %953 : f32 to vector<16x16xf32>
    %955 = arith.mulf %954, %948 : vector<16x16xf32>
    %956 = arith.addf %920, %955 : vector<16x16xf32>
    %c101 = arith.constant 101 : index
    %957 = memref.load %arg1[%c101] : memref<144xf32, #tpu.memory_space<smem>>
    %958 = vector.broadcast %957 : f32 to vector<16x16xf32>
    %959 = arith.mulf %958, %946 : vector<16x16xf32>
    %960 = arith.addf %924, %959 : vector<16x16xf32>
    %c101_316 = arith.constant 101 : index
    %961 = memref.load %arg3[%c101_316] : memref<144xf32, #tpu.memory_space<smem>>
    %962 = vector.broadcast %961 : f32 to vector<16x16xf32>
    %963 = arith.mulf %962, %948 : vector<16x16xf32>
    %964 = arith.addf %928, %963 : vector<16x16xf32>
    %c102 = arith.constant 102 : index
    %965 = memref.load %arg1[%c102] : memref<144xf32, #tpu.memory_space<smem>>
    %966 = vector.broadcast %965 : f32 to vector<16x16xf32>
    %967 = arith.mulf %966, %946 : vector<16x16xf32>
    %968 = arith.addf %932, %967 : vector<16x16xf32>
    %c102_317 = arith.constant 102 : index
    %969 = memref.load %arg3[%c102_317] : memref<144xf32, #tpu.memory_space<smem>>
    %970 = vector.broadcast %969 : f32 to vector<16x16xf32>
    %971 = arith.mulf %970, %948 : vector<16x16xf32>
    %972 = arith.addf %936, %971 : vector<16x16xf32>
    %c103 = arith.constant 103 : index
    %973 = memref.load %arg1[%c103] : memref<144xf32, #tpu.memory_space<smem>>
    %974 = vector.broadcast %973 : f32 to vector<16x16xf32>
    %975 = arith.mulf %974, %946 : vector<16x16xf32>
    %976 = arith.addf %940, %975 : vector<16x16xf32>
    %c103_318 = arith.constant 103 : index
    %977 = memref.load %arg3[%c103_318] : memref<144xf32, #tpu.memory_space<smem>>
    %978 = vector.broadcast %977 : f32 to vector<16x16xf32>
    %979 = arith.mulf %978, %948 : vector<16x16xf32>
    %980 = arith.addf %944, %979 : vector<16x16xf32>
    %c2_319 = arith.constant 2 : index
    %c2_320 = arith.constant 2 : index
    %c0_321 = arith.constant 0 : index
    %981 = vector.load %arg13[%c2_319, %c2_320, %c0_321] : memref<4x18x18xf32, #tpu.memory_space<vmem>>, vector<1x16x16xf32>
    %982 = vector.shape_cast %981 : vector<1x16x16xf32> to vector<16x16xf32>
    %c2_322 = arith.constant 2 : index
    %c2_323 = arith.constant 2 : index
    %c0_324 = arith.constant 0 : index
    %983 = vector.load %arg14[%c2_322, %c2_323, %c0_324] : memref<4x18x18xf32, #tpu.memory_space<vmem>>, vector<1x16x16xf32>
    %984 = vector.shape_cast %983 : vector<1x16x16xf32> to vector<16x16xf32>
    %c104 = arith.constant 104 : index
    %985 = memref.load %arg1[%c104] : memref<144xf32, #tpu.memory_space<smem>>
    %986 = vector.broadcast %985 : f32 to vector<16x16xf32>
    %987 = arith.mulf %986, %982 : vector<16x16xf32>
    %988 = arith.addf %952, %987 : vector<16x16xf32>
    %c104_325 = arith.constant 104 : index
    %989 = memref.load %arg3[%c104_325] : memref<144xf32, #tpu.memory_space<smem>>
    %990 = vector.broadcast %989 : f32 to vector<16x16xf32>
    %991 = arith.mulf %990, %984 : vector<16x16xf32>
    %992 = arith.addf %956, %991 : vector<16x16xf32>
    %c105 = arith.constant 105 : index
    %993 = memref.load %arg1[%c105] : memref<144xf32, #tpu.memory_space<smem>>
    %994 = vector.broadcast %993 : f32 to vector<16x16xf32>
    %995 = arith.mulf %994, %982 : vector<16x16xf32>
    %996 = arith.addf %960, %995 : vector<16x16xf32>
    %c105_326 = arith.constant 105 : index
    %997 = memref.load %arg3[%c105_326] : memref<144xf32, #tpu.memory_space<smem>>
    %998 = vector.broadcast %997 : f32 to vector<16x16xf32>
    %999 = arith.mulf %998, %984 : vector<16x16xf32>
    %1000 = arith.addf %964, %999 : vector<16x16xf32>
    %c106 = arith.constant 106 : index
    %1001 = memref.load %arg1[%c106] : memref<144xf32, #tpu.memory_space<smem>>
    %1002 = vector.broadcast %1001 : f32 to vector<16x16xf32>
    %1003 = arith.mulf %1002, %982 : vector<16x16xf32>
    %1004 = arith.addf %968, %1003 : vector<16x16xf32>
    %c106_327 = arith.constant 106 : index
    %1005 = memref.load %arg3[%c106_327] : memref<144xf32, #tpu.memory_space<smem>>
    %1006 = vector.broadcast %1005 : f32 to vector<16x16xf32>
    %1007 = arith.mulf %1006, %984 : vector<16x16xf32>
    %1008 = arith.addf %972, %1007 : vector<16x16xf32>
    %c107 = arith.constant 107 : index
    %1009 = memref.load %arg1[%c107] : memref<144xf32, #tpu.memory_space<smem>>
    %1010 = vector.broadcast %1009 : f32 to vector<16x16xf32>
    %1011 = arith.mulf %1010, %982 : vector<16x16xf32>
    %1012 = arith.addf %976, %1011 : vector<16x16xf32>
    %c107_328 = arith.constant 107 : index
    %1013 = memref.load %arg3[%c107_328] : memref<144xf32, #tpu.memory_space<smem>>
    %1014 = vector.broadcast %1013 : f32 to vector<16x16xf32>
    %1015 = arith.mulf %1014, %984 : vector<16x16xf32>
    %1016 = arith.addf %980, %1015 : vector<16x16xf32>
    %c3_329 = arith.constant 3 : index
    %c2_330 = arith.constant 2 : index
    %c0_331 = arith.constant 0 : index
    %1017 = vector.load %arg13[%c3_329, %c2_330, %c0_331] : memref<4x18x18xf32, #tpu.memory_space<vmem>>, vector<1x16x16xf32>
    %1018 = vector.shape_cast %1017 : vector<1x16x16xf32> to vector<16x16xf32>
    %c3_332 = arith.constant 3 : index
    %c2_333 = arith.constant 2 : index
    %c0_334 = arith.constant 0 : index
    %1019 = vector.load %arg14[%c3_332, %c2_333, %c0_334] : memref<4x18x18xf32, #tpu.memory_space<vmem>>, vector<1x16x16xf32>
    %1020 = vector.shape_cast %1019 : vector<1x16x16xf32> to vector<16x16xf32>
    %c108 = arith.constant 108 : index
    %1021 = memref.load %arg1[%c108] : memref<144xf32, #tpu.memory_space<smem>>
    %1022 = vector.broadcast %1021 : f32 to vector<16x16xf32>
    %1023 = arith.mulf %1022, %1018 : vector<16x16xf32>
    %1024 = arith.addf %988, %1023 : vector<16x16xf32>
    %c108_335 = arith.constant 108 : index
    %1025 = memref.load %arg3[%c108_335] : memref<144xf32, #tpu.memory_space<smem>>
    %1026 = vector.broadcast %1025 : f32 to vector<16x16xf32>
    %1027 = arith.mulf %1026, %1020 : vector<16x16xf32>
    %1028 = arith.addf %992, %1027 : vector<16x16xf32>
    %c109 = arith.constant 109 : index
    %1029 = memref.load %arg1[%c109] : memref<144xf32, #tpu.memory_space<smem>>
    %1030 = vector.broadcast %1029 : f32 to vector<16x16xf32>
    %1031 = arith.mulf %1030, %1018 : vector<16x16xf32>
    %1032 = arith.addf %996, %1031 : vector<16x16xf32>
    %c109_336 = arith.constant 109 : index
    %1033 = memref.load %arg3[%c109_336] : memref<144xf32, #tpu.memory_space<smem>>
    %1034 = vector.broadcast %1033 : f32 to vector<16x16xf32>
    %1035 = arith.mulf %1034, %1020 : vector<16x16xf32>
    %1036 = arith.addf %1000, %1035 : vector<16x16xf32>
    %c110 = arith.constant 110 : index
    %1037 = memref.load %arg1[%c110] : memref<144xf32, #tpu.memory_space<smem>>
    %1038 = vector.broadcast %1037 : f32 to vector<16x16xf32>
    %1039 = arith.mulf %1038, %1018 : vector<16x16xf32>
    %1040 = arith.addf %1004, %1039 : vector<16x16xf32>
    %c110_337 = arith.constant 110 : index
    %1041 = memref.load %arg3[%c110_337] : memref<144xf32, #tpu.memory_space<smem>>
    %1042 = vector.broadcast %1041 : f32 to vector<16x16xf32>
    %1043 = arith.mulf %1042, %1020 : vector<16x16xf32>
    %1044 = arith.addf %1008, %1043 : vector<16x16xf32>
    %c111 = arith.constant 111 : index
    %1045 = memref.load %arg1[%c111] : memref<144xf32, #tpu.memory_space<smem>>
    %1046 = vector.broadcast %1045 : f32 to vector<16x16xf32>
    %1047 = arith.mulf %1046, %1018 : vector<16x16xf32>
    %1048 = arith.addf %1012, %1047 : vector<16x16xf32>
    %c111_338 = arith.constant 111 : index
    %1049 = memref.load %arg3[%c111_338] : memref<144xf32, #tpu.memory_space<smem>>
    %1050 = vector.broadcast %1049 : f32 to vector<16x16xf32>
    %1051 = arith.mulf %1050, %1020 : vector<16x16xf32>
    %1052 = arith.addf %1016, %1051 : vector<16x16xf32>
    %c0_339 = arith.constant 0 : index
    %c2_340 = arith.constant 2 : index
    %c1_341 = arith.constant 1 : index
    %1053 = vector.load %arg13[%c0_339, %c2_340, %c1_341] : memref<4x18x18xf32, #tpu.memory_space<vmem>>, vector<1x16x16xf32>
    %1054 = vector.shape_cast %1053 : vector<1x16x16xf32> to vector<16x16xf32>
    %c0_342 = arith.constant 0 : index
    %c2_343 = arith.constant 2 : index
    %c1_344 = arith.constant 1 : index
    %1055 = vector.load %arg14[%c0_342, %c2_343, %c1_344] : memref<4x18x18xf32, #tpu.memory_space<vmem>>, vector<1x16x16xf32>
    %1056 = vector.shape_cast %1055 : vector<1x16x16xf32> to vector<16x16xf32>
    %c112 = arith.constant 112 : index
    %1057 = memref.load %arg1[%c112] : memref<144xf32, #tpu.memory_space<smem>>
    %1058 = vector.broadcast %1057 : f32 to vector<16x16xf32>
    %1059 = arith.mulf %1058, %1054 : vector<16x16xf32>
    %1060 = arith.addf %1024, %1059 : vector<16x16xf32>
    %c112_345 = arith.constant 112 : index
    %1061 = memref.load %arg3[%c112_345] : memref<144xf32, #tpu.memory_space<smem>>
    %1062 = vector.broadcast %1061 : f32 to vector<16x16xf32>
    %1063 = arith.mulf %1062, %1056 : vector<16x16xf32>
    %1064 = arith.addf %1028, %1063 : vector<16x16xf32>
    %c113 = arith.constant 113 : index
    %1065 = memref.load %arg1[%c113] : memref<144xf32, #tpu.memory_space<smem>>
    %1066 = vector.broadcast %1065 : f32 to vector<16x16xf32>
    %1067 = arith.mulf %1066, %1054 : vector<16x16xf32>
    %1068 = arith.addf %1032, %1067 : vector<16x16xf32>
    %c113_346 = arith.constant 113 : index
    %1069 = memref.load %arg3[%c113_346] : memref<144xf32, #tpu.memory_space<smem>>
    %1070 = vector.broadcast %1069 : f32 to vector<16x16xf32>
    %1071 = arith.mulf %1070, %1056 : vector<16x16xf32>
    %1072 = arith.addf %1036, %1071 : vector<16x16xf32>
    %c114 = arith.constant 114 : index
    %1073 = memref.load %arg1[%c114] : memref<144xf32, #tpu.memory_space<smem>>
    %1074 = vector.broadcast %1073 : f32 to vector<16x16xf32>
    %1075 = arith.mulf %1074, %1054 : vector<16x16xf32>
    %1076 = arith.addf %1040, %1075 : vector<16x16xf32>
    %c114_347 = arith.constant 114 : index
    %1077 = memref.load %arg3[%c114_347] : memref<144xf32, #tpu.memory_space<smem>>
    %1078 = vector.broadcast %1077 : f32 to vector<16x16xf32>
    %1079 = arith.mulf %1078, %1056 : vector<16x16xf32>
    %1080 = arith.addf %1044, %1079 : vector<16x16xf32>
    %c115 = arith.constant 115 : index
    %1081 = memref.load %arg1[%c115] : memref<144xf32, #tpu.memory_space<smem>>
    %1082 = vector.broadcast %1081 : f32 to vector<16x16xf32>
    %1083 = arith.mulf %1082, %1054 : vector<16x16xf32>
    %1084 = arith.addf %1048, %1083 : vector<16x16xf32>
    %c115_348 = arith.constant 115 : index
    %1085 = memref.load %arg3[%c115_348] : memref<144xf32, #tpu.memory_space<smem>>
    %1086 = vector.broadcast %1085 : f32 to vector<16x16xf32>
    %1087 = arith.mulf %1086, %1056 : vector<16x16xf32>
    %1088 = arith.addf %1052, %1087 : vector<16x16xf32>
    %c1_349 = arith.constant 1 : index
    %c2_350 = arith.constant 2 : index
    %c1_351 = arith.constant 1 : index
    %1089 = vector.load %arg13[%c1_349, %c2_350, %c1_351] : memref<4x18x18xf32, #tpu.memory_space<vmem>>, vector<1x16x16xf32>
    %1090 = vector.shape_cast %1089 : vector<1x16x16xf32> to vector<16x16xf32>
    %c1_352 = arith.constant 1 : index
    %c2_353 = arith.constant 2 : index
    %c1_354 = arith.constant 1 : index
    %1091 = vector.load %arg14[%c1_352, %c2_353, %c1_354] : memref<4x18x18xf32, #tpu.memory_space<vmem>>, vector<1x16x16xf32>
    %1092 = vector.shape_cast %1091 : vector<1x16x16xf32> to vector<16x16xf32>
    %c116 = arith.constant 116 : index
    %1093 = memref.load %arg1[%c116] : memref<144xf32, #tpu.memory_space<smem>>
    %1094 = vector.broadcast %1093 : f32 to vector<16x16xf32>
    %1095 = arith.mulf %1094, %1090 : vector<16x16xf32>
    %1096 = arith.addf %1060, %1095 : vector<16x16xf32>
    %c116_355 = arith.constant 116 : index
    %1097 = memref.load %arg3[%c116_355] : memref<144xf32, #tpu.memory_space<smem>>
    %1098 = vector.broadcast %1097 : f32 to vector<16x16xf32>
    %1099 = arith.mulf %1098, %1092 : vector<16x16xf32>
    %1100 = arith.addf %1064, %1099 : vector<16x16xf32>
    %c117 = arith.constant 117 : index
    %1101 = memref.load %arg1[%c117] : memref<144xf32, #tpu.memory_space<smem>>
    %1102 = vector.broadcast %1101 : f32 to vector<16x16xf32>
    %1103 = arith.mulf %1102, %1090 : vector<16x16xf32>
    %1104 = arith.addf %1068, %1103 : vector<16x16xf32>
    %c117_356 = arith.constant 117 : index
    %1105 = memref.load %arg3[%c117_356] : memref<144xf32, #tpu.memory_space<smem>>
    %1106 = vector.broadcast %1105 : f32 to vector<16x16xf32>
    %1107 = arith.mulf %1106, %1092 : vector<16x16xf32>
    %1108 = arith.addf %1072, %1107 : vector<16x16xf32>
    %c118 = arith.constant 118 : index
    %1109 = memref.load %arg1[%c118] : memref<144xf32, #tpu.memory_space<smem>>
    %1110 = vector.broadcast %1109 : f32 to vector<16x16xf32>
    %1111 = arith.mulf %1110, %1090 : vector<16x16xf32>
    %1112 = arith.addf %1076, %1111 : vector<16x16xf32>
    %c118_357 = arith.constant 118 : index
    %1113 = memref.load %arg3[%c118_357] : memref<144xf32, #tpu.memory_space<smem>>
    %1114 = vector.broadcast %1113 : f32 to vector<16x16xf32>
    %1115 = arith.mulf %1114, %1092 : vector<16x16xf32>
    %1116 = arith.addf %1080, %1115 : vector<16x16xf32>
    %c119 = arith.constant 119 : index
    %1117 = memref.load %arg1[%c119] : memref<144xf32, #tpu.memory_space<smem>>
    %1118 = vector.broadcast %1117 : f32 to vector<16x16xf32>
    %1119 = arith.mulf %1118, %1090 : vector<16x16xf32>
    %1120 = arith.addf %1084, %1119 : vector<16x16xf32>
    %c119_358 = arith.constant 119 : index
    %1121 = memref.load %arg3[%c119_358] : memref<144xf32, #tpu.memory_space<smem>>
    %1122 = vector.broadcast %1121 : f32 to vector<16x16xf32>
    %1123 = arith.mulf %1122, %1092 : vector<16x16xf32>
    %1124 = arith.addf %1088, %1123 : vector<16x16xf32>
    %c2_359 = arith.constant 2 : index
    %c2_360 = arith.constant 2 : index
    %c1_361 = arith.constant 1 : index
    %1125 = vector.load %arg13[%c2_359, %c2_360, %c1_361] : memref<4x18x18xf32, #tpu.memory_space<vmem>>, vector<1x16x16xf32>
    %1126 = vector.shape_cast %1125 : vector<1x16x16xf32> to vector<16x16xf32>
    %c2_362 = arith.constant 2 : index
    %c2_363 = arith.constant 2 : index
    %c1_364 = arith.constant 1 : index
    %1127 = vector.load %arg14[%c2_362, %c2_363, %c1_364] : memref<4x18x18xf32, #tpu.memory_space<vmem>>, vector<1x16x16xf32>
    %1128 = vector.shape_cast %1127 : vector<1x16x16xf32> to vector<16x16xf32>
    %c120 = arith.constant 120 : index
    %1129 = memref.load %arg1[%c120] : memref<144xf32, #tpu.memory_space<smem>>
    %1130 = vector.broadcast %1129 : f32 to vector<16x16xf32>
    %1131 = arith.mulf %1130, %1126 : vector<16x16xf32>
    %1132 = arith.addf %1096, %1131 : vector<16x16xf32>
    %c120_365 = arith.constant 120 : index
    %1133 = memref.load %arg3[%c120_365] : memref<144xf32, #tpu.memory_space<smem>>
    %1134 = vector.broadcast %1133 : f32 to vector<16x16xf32>
    %1135 = arith.mulf %1134, %1128 : vector<16x16xf32>
    %1136 = arith.addf %1100, %1135 : vector<16x16xf32>
    %c121 = arith.constant 121 : index
    %1137 = memref.load %arg1[%c121] : memref<144xf32, #tpu.memory_space<smem>>
    %1138 = vector.broadcast %1137 : f32 to vector<16x16xf32>
    %1139 = arith.mulf %1138, %1126 : vector<16x16xf32>
    %1140 = arith.addf %1104, %1139 : vector<16x16xf32>
    %c121_366 = arith.constant 121 : index
    %1141 = memref.load %arg3[%c121_366] : memref<144xf32, #tpu.memory_space<smem>>
    %1142 = vector.broadcast %1141 : f32 to vector<16x16xf32>
    %1143 = arith.mulf %1142, %1128 : vector<16x16xf32>
    %1144 = arith.addf %1108, %1143 : vector<16x16xf32>
    %c122 = arith.constant 122 : index
    %1145 = memref.load %arg1[%c122] : memref<144xf32, #tpu.memory_space<smem>>
    %1146 = vector.broadcast %1145 : f32 to vector<16x16xf32>
    %1147 = arith.mulf %1146, %1126 : vector<16x16xf32>
    %1148 = arith.addf %1112, %1147 : vector<16x16xf32>
    %c122_367 = arith.constant 122 : index
    %1149 = memref.load %arg3[%c122_367] : memref<144xf32, #tpu.memory_space<smem>>
    %1150 = vector.broadcast %1149 : f32 to vector<16x16xf32>
    %1151 = arith.mulf %1150, %1128 : vector<16x16xf32>
    %1152 = arith.addf %1116, %1151 : vector<16x16xf32>
    %c123 = arith.constant 123 : index
    %1153 = memref.load %arg1[%c123] : memref<144xf32, #tpu.memory_space<smem>>
    %1154 = vector.broadcast %1153 : f32 to vector<16x16xf32>
    %1155 = arith.mulf %1154, %1126 : vector<16x16xf32>
    %1156 = arith.addf %1120, %1155 : vector<16x16xf32>
    %c123_368 = arith.constant 123 : index
    %1157 = memref.load %arg3[%c123_368] : memref<144xf32, #tpu.memory_space<smem>>
    %1158 = vector.broadcast %1157 : f32 to vector<16x16xf32>
    %1159 = arith.mulf %1158, %1128 : vector<16x16xf32>
    %1160 = arith.addf %1124, %1159 : vector<16x16xf32>
    %c3_369 = arith.constant 3 : index
    %c2_370 = arith.constant 2 : index
    %c1_371 = arith.constant 1 : index
    %1161 = vector.load %arg13[%c3_369, %c2_370, %c1_371] : memref<4x18x18xf32, #tpu.memory_space<vmem>>, vector<1x16x16xf32>
    %1162 = vector.shape_cast %1161 : vector<1x16x16xf32> to vector<16x16xf32>
    %c3_372 = arith.constant 3 : index
    %c2_373 = arith.constant 2 : index
    %c1_374 = arith.constant 1 : index
    %1163 = vector.load %arg14[%c3_372, %c2_373, %c1_374] : memref<4x18x18xf32, #tpu.memory_space<vmem>>, vector<1x16x16xf32>
    %1164 = vector.shape_cast %1163 : vector<1x16x16xf32> to vector<16x16xf32>
    %c124 = arith.constant 124 : index
    %1165 = memref.load %arg1[%c124] : memref<144xf32, #tpu.memory_space<smem>>
    %1166 = vector.broadcast %1165 : f32 to vector<16x16xf32>
    %1167 = arith.mulf %1166, %1162 : vector<16x16xf32>
    %1168 = arith.addf %1132, %1167 : vector<16x16xf32>
    %c124_375 = arith.constant 124 : index
    %1169 = memref.load %arg3[%c124_375] : memref<144xf32, #tpu.memory_space<smem>>
    %1170 = vector.broadcast %1169 : f32 to vector<16x16xf32>
    %1171 = arith.mulf %1170, %1164 : vector<16x16xf32>
    %1172 = arith.addf %1136, %1171 : vector<16x16xf32>
    %c125 = arith.constant 125 : index
    %1173 = memref.load %arg1[%c125] : memref<144xf32, #tpu.memory_space<smem>>
    %1174 = vector.broadcast %1173 : f32 to vector<16x16xf32>
    %1175 = arith.mulf %1174, %1162 : vector<16x16xf32>
    %1176 = arith.addf %1140, %1175 : vector<16x16xf32>
    %c125_376 = arith.constant 125 : index
    %1177 = memref.load %arg3[%c125_376] : memref<144xf32, #tpu.memory_space<smem>>
    %1178 = vector.broadcast %1177 : f32 to vector<16x16xf32>
    %1179 = arith.mulf %1178, %1164 : vector<16x16xf32>
    %1180 = arith.addf %1144, %1179 : vector<16x16xf32>
    %c126 = arith.constant 126 : index
    %1181 = memref.load %arg1[%c126] : memref<144xf32, #tpu.memory_space<smem>>
    %1182 = vector.broadcast %1181 : f32 to vector<16x16xf32>
    %1183 = arith.mulf %1182, %1162 : vector<16x16xf32>
    %1184 = arith.addf %1148, %1183 : vector<16x16xf32>
    %c126_377 = arith.constant 126 : index
    %1185 = memref.load %arg3[%c126_377] : memref<144xf32, #tpu.memory_space<smem>>
    %1186 = vector.broadcast %1185 : f32 to vector<16x16xf32>
    %1187 = arith.mulf %1186, %1164 : vector<16x16xf32>
    %1188 = arith.addf %1152, %1187 : vector<16x16xf32>
    %c127 = arith.constant 127 : index
    %1189 = memref.load %arg1[%c127] : memref<144xf32, #tpu.memory_space<smem>>
    %1190 = vector.broadcast %1189 : f32 to vector<16x16xf32>
    %1191 = arith.mulf %1190, %1162 : vector<16x16xf32>
    %1192 = arith.addf %1156, %1191 : vector<16x16xf32>
    %c127_378 = arith.constant 127 : index
    %1193 = memref.load %arg3[%c127_378] : memref<144xf32, #tpu.memory_space<smem>>
    %1194 = vector.broadcast %1193 : f32 to vector<16x16xf32>
    %1195 = arith.mulf %1194, %1164 : vector<16x16xf32>
    %1196 = arith.addf %1160, %1195 : vector<16x16xf32>
    %c0_379 = arith.constant 0 : index
    %c2_380 = arith.constant 2 : index
    %c2_381 = arith.constant 2 : index
    %1197 = vector.load %arg13[%c0_379, %c2_380, %c2_381] : memref<4x18x18xf32, #tpu.memory_space<vmem>>, vector<1x16x16xf32>
    %1198 = vector.shape_cast %1197 : vector<1x16x16xf32> to vector<16x16xf32>
    %c0_382 = arith.constant 0 : index
    %c2_383 = arith.constant 2 : index
    %c2_384 = arith.constant 2 : index
    %1199 = vector.load %arg14[%c0_382, %c2_383, %c2_384] : memref<4x18x18xf32, #tpu.memory_space<vmem>>, vector<1x16x16xf32>
    %1200 = vector.shape_cast %1199 : vector<1x16x16xf32> to vector<16x16xf32>
    %c128 = arith.constant 128 : index
    %1201 = memref.load %arg1[%c128] : memref<144xf32, #tpu.memory_space<smem>>
    %1202 = vector.broadcast %1201 : f32 to vector<16x16xf32>
    %1203 = arith.mulf %1202, %1198 : vector<16x16xf32>
    %1204 = arith.addf %1168, %1203 : vector<16x16xf32>
    %c128_385 = arith.constant 128 : index
    %1205 = memref.load %arg3[%c128_385] : memref<144xf32, #tpu.memory_space<smem>>
    %1206 = vector.broadcast %1205 : f32 to vector<16x16xf32>
    %1207 = arith.mulf %1206, %1200 : vector<16x16xf32>
    %1208 = arith.addf %1172, %1207 : vector<16x16xf32>
    %c129 = arith.constant 129 : index
    %1209 = memref.load %arg1[%c129] : memref<144xf32, #tpu.memory_space<smem>>
    %1210 = vector.broadcast %1209 : f32 to vector<16x16xf32>
    %1211 = arith.mulf %1210, %1198 : vector<16x16xf32>
    %1212 = arith.addf %1176, %1211 : vector<16x16xf32>
    %c129_386 = arith.constant 129 : index
    %1213 = memref.load %arg3[%c129_386] : memref<144xf32, #tpu.memory_space<smem>>
    %1214 = vector.broadcast %1213 : f32 to vector<16x16xf32>
    %1215 = arith.mulf %1214, %1200 : vector<16x16xf32>
    %1216 = arith.addf %1180, %1215 : vector<16x16xf32>
    %c130 = arith.constant 130 : index
    %1217 = memref.load %arg1[%c130] : memref<144xf32, #tpu.memory_space<smem>>
    %1218 = vector.broadcast %1217 : f32 to vector<16x16xf32>
    %1219 = arith.mulf %1218, %1198 : vector<16x16xf32>
    %1220 = arith.addf %1184, %1219 : vector<16x16xf32>
    %c130_387 = arith.constant 130 : index
    %1221 = memref.load %arg3[%c130_387] : memref<144xf32, #tpu.memory_space<smem>>
    %1222 = vector.broadcast %1221 : f32 to vector<16x16xf32>
    %1223 = arith.mulf %1222, %1200 : vector<16x16xf32>
    %1224 = arith.addf %1188, %1223 : vector<16x16xf32>
    %c131 = arith.constant 131 : index
    %1225 = memref.load %arg1[%c131] : memref<144xf32, #tpu.memory_space<smem>>
    %1226 = vector.broadcast %1225 : f32 to vector<16x16xf32>
    %1227 = arith.mulf %1226, %1198 : vector<16x16xf32>
    %1228 = arith.addf %1192, %1227 : vector<16x16xf32>
    %c131_388 = arith.constant 131 : index
    %1229 = memref.load %arg3[%c131_388] : memref<144xf32, #tpu.memory_space<smem>>
    %1230 = vector.broadcast %1229 : f32 to vector<16x16xf32>
    %1231 = arith.mulf %1230, %1200 : vector<16x16xf32>
    %1232 = arith.addf %1196, %1231 : vector<16x16xf32>
    %c1_389 = arith.constant 1 : index
    %c2_390 = arith.constant 2 : index
    %c2_391 = arith.constant 2 : index
    %1233 = vector.load %arg13[%c1_389, %c2_390, %c2_391] : memref<4x18x18xf32, #tpu.memory_space<vmem>>, vector<1x16x16xf32>
    %1234 = vector.shape_cast %1233 : vector<1x16x16xf32> to vector<16x16xf32>
    %c1_392 = arith.constant 1 : index
    %c2_393 = arith.constant 2 : index
    %c2_394 = arith.constant 2 : index
    %1235 = vector.load %arg14[%c1_392, %c2_393, %c2_394] : memref<4x18x18xf32, #tpu.memory_space<vmem>>, vector<1x16x16xf32>
    %1236 = vector.shape_cast %1235 : vector<1x16x16xf32> to vector<16x16xf32>
    %c132 = arith.constant 132 : index
    %1237 = memref.load %arg1[%c132] : memref<144xf32, #tpu.memory_space<smem>>
    %1238 = vector.broadcast %1237 : f32 to vector<16x16xf32>
    %1239 = arith.mulf %1238, %1234 : vector<16x16xf32>
    %1240 = arith.addf %1204, %1239 : vector<16x16xf32>
    %c132_395 = arith.constant 132 : index
    %1241 = memref.load %arg3[%c132_395] : memref<144xf32, #tpu.memory_space<smem>>
    %1242 = vector.broadcast %1241 : f32 to vector<16x16xf32>
    %1243 = arith.mulf %1242, %1236 : vector<16x16xf32>
    %1244 = arith.addf %1208, %1243 : vector<16x16xf32>
    %c133 = arith.constant 133 : index
    %1245 = memref.load %arg1[%c133] : memref<144xf32, #tpu.memory_space<smem>>
    %1246 = vector.broadcast %1245 : f32 to vector<16x16xf32>
    %1247 = arith.mulf %1246, %1234 : vector<16x16xf32>
    %1248 = arith.addf %1212, %1247 : vector<16x16xf32>
    %c133_396 = arith.constant 133 : index
    %1249 = memref.load %arg3[%c133_396] : memref<144xf32, #tpu.memory_space<smem>>
    %1250 = vector.broadcast %1249 : f32 to vector<16x16xf32>
    %1251 = arith.mulf %1250, %1236 : vector<16x16xf32>
    %1252 = arith.addf %1216, %1251 : vector<16x16xf32>
    %c134 = arith.constant 134 : index
    %1253 = memref.load %arg1[%c134] : memref<144xf32, #tpu.memory_space<smem>>
    %1254 = vector.broadcast %1253 : f32 to vector<16x16xf32>
    %1255 = arith.mulf %1254, %1234 : vector<16x16xf32>
    %1256 = arith.addf %1220, %1255 : vector<16x16xf32>
    %c134_397 = arith.constant 134 : index
    %1257 = memref.load %arg3[%c134_397] : memref<144xf32, #tpu.memory_space<smem>>
    %1258 = vector.broadcast %1257 : f32 to vector<16x16xf32>
    %1259 = arith.mulf %1258, %1236 : vector<16x16xf32>
    %1260 = arith.addf %1224, %1259 : vector<16x16xf32>
    %c135 = arith.constant 135 : index
    %1261 = memref.load %arg1[%c135] : memref<144xf32, #tpu.memory_space<smem>>
    %1262 = vector.broadcast %1261 : f32 to vector<16x16xf32>
    %1263 = arith.mulf %1262, %1234 : vector<16x16xf32>
    %1264 = arith.addf %1228, %1263 : vector<16x16xf32>
    %c135_398 = arith.constant 135 : index
    %1265 = memref.load %arg3[%c135_398] : memref<144xf32, #tpu.memory_space<smem>>
    %1266 = vector.broadcast %1265 : f32 to vector<16x16xf32>
    %1267 = arith.mulf %1266, %1236 : vector<16x16xf32>
    %1268 = arith.addf %1232, %1267 : vector<16x16xf32>
    %c2_399 = arith.constant 2 : index
    %c2_400 = arith.constant 2 : index
    %c2_401 = arith.constant 2 : index
    %1269 = vector.load %arg13[%c2_399, %c2_400, %c2_401] : memref<4x18x18xf32, #tpu.memory_space<vmem>>, vector<1x16x16xf32>
    %1270 = vector.shape_cast %1269 : vector<1x16x16xf32> to vector<16x16xf32>
    %c2_402 = arith.constant 2 : index
    %c2_403 = arith.constant 2 : index
    %c2_404 = arith.constant 2 : index
    %1271 = vector.load %arg14[%c2_402, %c2_403, %c2_404] : memref<4x18x18xf32, #tpu.memory_space<vmem>>, vector<1x16x16xf32>
    %1272 = vector.shape_cast %1271 : vector<1x16x16xf32> to vector<16x16xf32>
    %c136 = arith.constant 136 : index
    %1273 = memref.load %arg1[%c136] : memref<144xf32, #tpu.memory_space<smem>>
    %1274 = vector.broadcast %1273 : f32 to vector<16x16xf32>
    %1275 = arith.mulf %1274, %1270 : vector<16x16xf32>
    %1276 = arith.addf %1240, %1275 : vector<16x16xf32>
    %c136_405 = arith.constant 136 : index
    %1277 = memref.load %arg3[%c136_405] : memref<144xf32, #tpu.memory_space<smem>>
    %1278 = vector.broadcast %1277 : f32 to vector<16x16xf32>
    %1279 = arith.mulf %1278, %1272 : vector<16x16xf32>
    %1280 = arith.addf %1244, %1279 : vector<16x16xf32>
    %c137 = arith.constant 137 : index
    %1281 = memref.load %arg1[%c137] : memref<144xf32, #tpu.memory_space<smem>>
    %1282 = vector.broadcast %1281 : f32 to vector<16x16xf32>
    %1283 = arith.mulf %1282, %1270 : vector<16x16xf32>
    %1284 = arith.addf %1248, %1283 : vector<16x16xf32>
    %c137_406 = arith.constant 137 : index
    %1285 = memref.load %arg3[%c137_406] : memref<144xf32, #tpu.memory_space<smem>>
    %1286 = vector.broadcast %1285 : f32 to vector<16x16xf32>
    %1287 = arith.mulf %1286, %1272 : vector<16x16xf32>
    %1288 = arith.addf %1252, %1287 : vector<16x16xf32>
    %c138 = arith.constant 138 : index
    %1289 = memref.load %arg1[%c138] : memref<144xf32, #tpu.memory_space<smem>>
    %1290 = vector.broadcast %1289 : f32 to vector<16x16xf32>
    %1291 = arith.mulf %1290, %1270 : vector<16x16xf32>
    %1292 = arith.addf %1256, %1291 : vector<16x16xf32>
    %c138_407 = arith.constant 138 : index
    %1293 = memref.load %arg3[%c138_407] : memref<144xf32, #tpu.memory_space<smem>>
    %1294 = vector.broadcast %1293 : f32 to vector<16x16xf32>
    %1295 = arith.mulf %1294, %1272 : vector<16x16xf32>
    %1296 = arith.addf %1260, %1295 : vector<16x16xf32>
    %c139 = arith.constant 139 : index
    %1297 = memref.load %arg1[%c139] : memref<144xf32, #tpu.memory_space<smem>>
    %1298 = vector.broadcast %1297 : f32 to vector<16x16xf32>
    %1299 = arith.mulf %1298, %1270 : vector<16x16xf32>
    %1300 = arith.addf %1264, %1299 : vector<16x16xf32>
    %c139_408 = arith.constant 139 : index
    %1301 = memref.load %arg3[%c139_408] : memref<144xf32, #tpu.memory_space<smem>>
    %1302 = vector.broadcast %1301 : f32 to vector<16x16xf32>
    %1303 = arith.mulf %1302, %1272 : vector<16x16xf32>
    %1304 = arith.addf %1268, %1303 : vector<16x16xf32>
    %c3_409 = arith.constant 3 : index
    %c2_410 = arith.constant 2 : index
    %c2_411 = arith.constant 2 : index
    %1305 = vector.load %arg13[%c3_409, %c2_410, %c2_411] : memref<4x18x18xf32, #tpu.memory_space<vmem>>, vector<1x16x16xf32>
    %1306 = vector.shape_cast %1305 : vector<1x16x16xf32> to vector<16x16xf32>
    %c3_412 = arith.constant 3 : index
    %c2_413 = arith.constant 2 : index
    %c2_414 = arith.constant 2 : index
    %1307 = vector.load %arg14[%c3_412, %c2_413, %c2_414] : memref<4x18x18xf32, #tpu.memory_space<vmem>>, vector<1x16x16xf32>
    %1308 = vector.shape_cast %1307 : vector<1x16x16xf32> to vector<16x16xf32>
    %c140 = arith.constant 140 : index
    %1309 = memref.load %arg1[%c140] : memref<144xf32, #tpu.memory_space<smem>>
    %1310 = vector.broadcast %1309 : f32 to vector<16x16xf32>
    %1311 = arith.mulf %1310, %1306 : vector<16x16xf32>
    %1312 = arith.addf %1276, %1311 : vector<16x16xf32>
    %c140_415 = arith.constant 140 : index
    %1313 = memref.load %arg3[%c140_415] : memref<144xf32, #tpu.memory_space<smem>>
    %1314 = vector.broadcast %1313 : f32 to vector<16x16xf32>
    %1315 = arith.mulf %1314, %1308 : vector<16x16xf32>
    %1316 = arith.addf %1280, %1315 : vector<16x16xf32>
    %c141 = arith.constant 141 : index
    %1317 = memref.load %arg1[%c141] : memref<144xf32, #tpu.memory_space<smem>>
    %1318 = vector.broadcast %1317 : f32 to vector<16x16xf32>
    %1319 = arith.mulf %1318, %1306 : vector<16x16xf32>
    %1320 = arith.addf %1284, %1319 : vector<16x16xf32>
    %c141_416 = arith.constant 141 : index
    %1321 = memref.load %arg3[%c141_416] : memref<144xf32, #tpu.memory_space<smem>>
    %1322 = vector.broadcast %1321 : f32 to vector<16x16xf32>
    %1323 = arith.mulf %1322, %1308 : vector<16x16xf32>
    %1324 = arith.addf %1288, %1323 : vector<16x16xf32>
    %c142 = arith.constant 142 : index
    %1325 = memref.load %arg1[%c142] : memref<144xf32, #tpu.memory_space<smem>>
    %1326 = vector.broadcast %1325 : f32 to vector<16x16xf32>
    %1327 = arith.mulf %1326, %1306 : vector<16x16xf32>
    %1328 = arith.addf %1292, %1327 : vector<16x16xf32>
    %c142_417 = arith.constant 142 : index
    %1329 = memref.load %arg3[%c142_417] : memref<144xf32, #tpu.memory_space<smem>>
    %1330 = vector.broadcast %1329 : f32 to vector<16x16xf32>
    %1331 = arith.mulf %1330, %1308 : vector<16x16xf32>
    %1332 = arith.addf %1296, %1331 : vector<16x16xf32>
    %c143 = arith.constant 143 : index
    %1333 = memref.load %arg1[%c143] : memref<144xf32, #tpu.memory_space<smem>>
    %1334 = vector.broadcast %1333 : f32 to vector<16x16xf32>
    %1335 = arith.mulf %1334, %1306 : vector<16x16xf32>
    %1336 = arith.addf %1300, %1335 : vector<16x16xf32>
    %c143_418 = arith.constant 143 : index
    %1337 = memref.load %arg3[%c143_418] : memref<144xf32, #tpu.memory_space<smem>>
    %1338 = vector.broadcast %1337 : f32 to vector<16x16xf32>
    %1339 = arith.mulf %1338, %1308 : vector<16x16xf32>
    %1340 = arith.addf %1304, %1339 : vector<16x16xf32>
    %c0_419 = arith.constant 0 : index
    %c0_420 = arith.constant 0 : index
    %c0_421 = arith.constant 0 : index
    %c0_422 = arith.constant 0 : index
    %1341 = vector.load %arg6[%c0_419, %c0_420, %c0_421, %c0_422] : memref<1x4x16x16xf32, #tpu.memory_space<vmem>>, vector<1x1x16x16xf32>
    %1342 = vector.shape_cast %1341 : vector<1x1x16x16xf32> to vector<16x16xf32>
    %c0_423 = arith.constant 0 : index
    %c0_424 = arith.constant 0 : index
    %c0_425 = arith.constant 0 : index
    %c0_426 = arith.constant 0 : index
    %1343 = vector.load %arg7[%c0_423, %c0_424, %c0_425, %c0_426] : memref<1x4x16x16xf32, #tpu.memory_space<vmem>>, vector<1x1x16x16xf32>
    %1344 = vector.shape_cast %1343 : vector<1x1x16x16xf32> to vector<16x16xf32>
    %1345 = arith.negf %1312 : vector<16x16xf32>
    %1346 = math.exp %1345 : vector<16x16xf32>
    %cst_427 = arith.constant 1.000000e+00 : f32
    %1347 = vector.broadcast %cst_427 : f32 to vector<16x16xf32>
    %1348 = arith.addf %1347, %1346 : vector<16x16xf32>
    %1349 = arith.divf %1347, %1348 : vector<16x16xf32>
    %1350 = arith.negf %1316 : vector<16x16xf32>
    %1351 = math.exp %1350 : vector<16x16xf32>
    %cst_428 = arith.constant 1.000000e+00 : f32
    %1352 = vector.broadcast %cst_428 : f32 to vector<16x16xf32>
    %1353 = arith.addf %1352, %1351 : vector<16x16xf32>
    %1354 = arith.divf %1352, %1353 : vector<16x16xf32>
    %c0_429 = arith.constant 0 : index
    %c0_430 = arith.constant 0 : index
    %c0_431 = arith.constant 0 : index
    %c0_432 = arith.constant 0 : index
    %1355 = vector.load %arg9[%c0_429, %c0_430, %c0_431, %c0_432] : memref<1x4x16x16xf32, #tpu.memory_space<vmem>>, vector<1x1x16x16xf32>
    %1356 = vector.shape_cast %1355 : vector<1x1x16x16xf32> to vector<16x16xf32>
    %1357 = vector.shape_cast %1349 : vector<16x16xf32> to vector<1x1x16x16xf32>
    tpu.vector_store %arg9[%c0_429, %c0_430, %c0_431, %c0_432], %1357 {strides = array<i32>} : memref<1x4x16x16xf32, #tpu.memory_space<vmem>>, vector<1x1x16x16xf32>,
    %c0_433 = arith.constant 0 : index
    %c0_434 = arith.constant 0 : index
    %c0_435 = arith.constant 0 : index
    %c0_436 = arith.constant 0 : index
    %1358 = vector.load %arg11[%c0_433, %c0_434, %c0_435, %c0_436] : memref<1x4x16x16xf32, #tpu.memory_space<vmem>>, vector<1x1x16x16xf32>
    %1359 = vector.shape_cast %1358 : vector<1x1x16x16xf32> to vector<16x16xf32>
    %1360 = vector.shape_cast %1354 : vector<16x16xf32> to vector<1x1x16x16xf32>
    tpu.vector_store %arg11[%c0_433, %c0_434, %c0_435, %c0_436], %1360 {strides = array<i32>} : memref<1x4x16x16xf32, #tpu.memory_space<vmem>>, vector<1x1x16x16xf32>,
    %1361 = arith.mulf %1349, %1342 : vector<16x16xf32>
    %cst_437 = arith.constant 1.000000e+00 : f32
    %1362 = vector.broadcast %cst_437 : f32 to vector<16x16xf32>
    %1363 = arith.subf %1362, %1349 : vector<16x16xf32>
    %1364 = arith.mulf %1363, %1344 : vector<16x16xf32>
    %1365 = arith.addf %1361, %1364 : vector<16x16xf32>
    %c0_438 = arith.constant 0 : index
    %c0_439 = arith.constant 0 : index
    %c0_440 = arith.constant 0 : index
    %c0_441 = arith.constant 0 : index
    %1366 = vector.load %arg8[%c0_438, %c0_439, %c0_440, %c0_441] : memref<1x4x16x16xf32, #tpu.memory_space<vmem>>, vector<1x1x16x16xf32>
    %1367 = vector.shape_cast %1366 : vector<1x1x16x16xf32> to vector<16x16xf32>
    %1368 = vector.shape_cast %1365 : vector<16x16xf32> to vector<1x1x16x16xf32>
    tpu.vector_store %arg8[%c0_438, %c0_439, %c0_440, %c0_441], %1368 {strides = array<i32>} : memref<1x4x16x16xf32, #tpu.memory_space<vmem>>, vector<1x1x16x16xf32>,
    %1369 = arith.mulf %1354, %1342 : vector<16x16xf32>
    %cst_442 = arith.constant 1.000000e+00 : f32
    %1370 = vector.broadcast %cst_442 : f32 to vector<16x16xf32>
    %1371 = arith.subf %1370, %1354 : vector<16x16xf32>
    %1372 = arith.mulf %1371, %1344 : vector<16x16xf32>
    %1373 = arith.addf %1369, %1372 : vector<16x16xf32>
    %c0_443 = arith.constant 0 : index
    %c0_444 = arith.constant 0 : index
    %c0_445 = arith.constant 0 : index
    %c0_446 = arith.constant 0 : index
    %1374 = vector.load %arg10[%c0_443, %c0_444, %c0_445, %c0_446] : memref<1x4x16x16xf32, #tpu.memory_space<vmem>>, vector<1x1x16x16xf32>
    %1375 = vector.shape_cast %1374 : vector<1x1x16x16xf32> to vector<16x16xf32>
    %1376 = vector.shape_cast %1373 : vector<16x16xf32> to vector<1x1x16x16xf32>
    tpu.vector_store %arg10[%c0_443, %c0_444, %c0_445, %c0_446], %1376 {strides = array<i32>} : memref<1x4x16x16xf32, #tpu.memory_space<vmem>>, vector<1x1x16x16xf32>,
    %c0_447 = arith.constant 0 : index
    %c1_448 = arith.constant 1 : index
    %c0_449 = arith.constant 0 : index
    %c0_450 = arith.constant 0 : index
    %1377 = vector.load %arg6[%c0_447, %c1_448, %c0_449, %c0_450] : memref<1x4x16x16xf32, #tpu.memory_space<vmem>>, vector<1x1x16x16xf32>
    %1378 = vector.shape_cast %1377 : vector<1x1x16x16xf32> to vector<16x16xf32>
    %c0_451 = arith.constant 0 : index
    %c1_452 = arith.constant 1 : index
    %c0_453 = arith.constant 0 : index
    %c0_454 = arith.constant 0 : index
    %1379 = vector.load %arg7[%c0_451, %c1_452, %c0_453, %c0_454] : memref<1x4x16x16xf32, #tpu.memory_space<vmem>>, vector<1x1x16x16xf32>
    %1380 = vector.shape_cast %1379 : vector<1x1x16x16xf32> to vector<16x16xf32>
    %1381 = arith.negf %1320 : vector<16x16xf32>
    %1382 = math.exp %1381 : vector<16x16xf32>
    %cst_455 = arith.constant 1.000000e+00 : f32
    %1383 = vector.broadcast %cst_455 : f32 to vector<16x16xf32>
    %1384 = arith.addf %1383, %1382 : vector<16x16xf32>
    %1385 = arith.divf %1383, %1384 : vector<16x16xf32>
    %1386 = arith.negf %1324 : vector<16x16xf32>
    %1387 = math.exp %1386 : vector<16x16xf32>
    %cst_456 = arith.constant 1.000000e+00 : f32
    %1388 = vector.broadcast %cst_456 : f32 to vector<16x16xf32>
    %1389 = arith.addf %1388, %1387 : vector<16x16xf32>
    %1390 = arith.divf %1388, %1389 : vector<16x16xf32>
    %c0_457 = arith.constant 0 : index
    %c1_458 = arith.constant 1 : index
    %c0_459 = arith.constant 0 : index
    %c0_460 = arith.constant 0 : index
    %1391 = vector.load %arg9[%c0_457, %c1_458, %c0_459, %c0_460] : memref<1x4x16x16xf32, #tpu.memory_space<vmem>>, vector<1x1x16x16xf32>
    %1392 = vector.shape_cast %1391 : vector<1x1x16x16xf32> to vector<16x16xf32>
    %1393 = vector.shape_cast %1385 : vector<16x16xf32> to vector<1x1x16x16xf32>
    tpu.vector_store %arg9[%c0_457, %c1_458, %c0_459, %c0_460], %1393 {strides = array<i32>} : memref<1x4x16x16xf32, #tpu.memory_space<vmem>>, vector<1x1x16x16xf32>,
    %c0_461 = arith.constant 0 : index
    %c1_462 = arith.constant 1 : index
    %c0_463 = arith.constant 0 : index
    %c0_464 = arith.constant 0 : index
    %1394 = vector.load %arg11[%c0_461, %c1_462, %c0_463, %c0_464] : memref<1x4x16x16xf32, #tpu.memory_space<vmem>>, vector<1x1x16x16xf32>
    %1395 = vector.shape_cast %1394 : vector<1x1x16x16xf32> to vector<16x16xf32>
    %1396 = vector.shape_cast %1390 : vector<16x16xf32> to vector<1x1x16x16xf32>
    tpu.vector_store %arg11[%c0_461, %c1_462, %c0_463, %c0_464], %1396 {strides = array<i32>} : memref<1x4x16x16xf32, #tpu.memory_space<vmem>>, vector<1x1x16x16xf32>,
    %1397 = arith.mulf %1385, %1378 : vector<16x16xf32>
    %cst_465 = arith.constant 1.000000e+00 : f32
    %1398 = vector.broadcast %cst_465 : f32 to vector<16x16xf32>
    %1399 = arith.subf %1398, %1385 : vector<16x16xf32>
    %1400 = arith.mulf %1399, %1380 : vector<16x16xf32>
    %1401 = arith.addf %1397, %1400 : vector<16x16xf32>
    %c0_466 = arith.constant 0 : index
    %c1_467 = arith.constant 1 : index
    %c0_468 = arith.constant 0 : index
    %c0_469 = arith.constant 0 : index
    %1402 = vector.load %arg8[%c0_466, %c1_467, %c0_468, %c0_469] : memref<1x4x16x16xf32, #tpu.memory_space<vmem>>, vector<1x1x16x16xf32>
    %1403 = vector.shape_cast %1402 : vector<1x1x16x16xf32> to vector<16x16xf32>
    %1404 = vector.shape_cast %1401 : vector<16x16xf32> to vector<1x1x16x16xf32>
    tpu.vector_store %arg8[%c0_466, %c1_467, %c0_468, %c0_469], %1404 {strides = array<i32>} : memref<1x4x16x16xf32, #tpu.memory_space<vmem>>, vector<1x1x16x16xf32>,
    %1405 = arith.mulf %1390, %1378 : vector<16x16xf32>
    %cst_470 = arith.constant 1.000000e+00 : f32
    %1406 = vector.broadcast %cst_470 : f32 to vector<16x16xf32>
    %1407 = arith.subf %1406, %1390 : vector<16x16xf32>
    %1408 = arith.mulf %1407, %1380 : vector<16x16xf32>
    %1409 = arith.addf %1405, %1408 : vector<16x16xf32>
    %c0_471 = arith.constant 0 : index
    %c1_472 = arith.constant 1 : index
    %c0_473 = arith.constant 0 : index
    %c0_474 = arith.constant 0 : index
    %1410 = vector.load %arg10[%c0_471, %c1_472, %c0_473, %c0_474] : memref<1x4x16x16xf32, #tpu.memory_space<vmem>>, vector<1x1x16x16xf32>
    %1411 = vector.shape_cast %1410 : vector<1x1x16x16xf32> to vector<16x16xf32>
    %1412 = vector.shape_cast %1409 : vector<16x16xf32> to vector<1x1x16x16xf32>
    tpu.vector_store %arg10[%c0_471, %c1_472, %c0_473, %c0_474], %1412 {strides = array<i32>} : memref<1x4x16x16xf32, #tpu.memory_space<vmem>>, vector<1x1x16x16xf32>,
    %c0_475 = arith.constant 0 : index
    %c2_476 = arith.constant 2 : index
    %c0_477 = arith.constant 0 : index
    %c0_478 = arith.constant 0 : index
    %1413 = vector.load %arg6[%c0_475, %c2_476, %c0_477, %c0_478] : memref<1x4x16x16xf32, #tpu.memory_space<vmem>>, vector<1x1x16x16xf32>
    %1414 = vector.shape_cast %1413 : vector<1x1x16x16xf32> to vector<16x16xf32>
    %c0_479 = arith.constant 0 : index
    %c2_480 = arith.constant 2 : index
    %c0_481 = arith.constant 0 : index
    %c0_482 = arith.constant 0 : index
    %1415 = vector.load %arg7[%c0_479, %c2_480, %c0_481, %c0_482] : memref<1x4x16x16xf32, #tpu.memory_space<vmem>>, vector<1x1x16x16xf32>
    %1416 = vector.shape_cast %1415 : vector<1x1x16x16xf32> to vector<16x16xf32>
    %1417 = arith.negf %1328 : vector<16x16xf32>
    %1418 = math.exp %1417 : vector<16x16xf32>
    %cst_483 = arith.constant 1.000000e+00 : f32
    %1419 = vector.broadcast %cst_483 : f32 to vector<16x16xf32>
    %1420 = arith.addf %1419, %1418 : vector<16x16xf32>
    %1421 = arith.divf %1419, %1420 : vector<16x16xf32>
    %1422 = arith.negf %1332 : vector<16x16xf32>
    %1423 = math.exp %1422 : vector<16x16xf32>
    %cst_484 = arith.constant 1.000000e+00 : f32
    %1424 = vector.broadcast %cst_484 : f32 to vector<16x16xf32>
    %1425 = arith.addf %1424, %1423 : vector<16x16xf32>
    %1426 = arith.divf %1424, %1425 : vector<16x16xf32>
    %c0_485 = arith.constant 0 : index
    %c2_486 = arith.constant 2 : index
    %c0_487 = arith.constant 0 : index
    %c0_488 = arith.constant 0 : index
    %1427 = vector.load %arg9[%c0_485, %c2_486, %c0_487, %c0_488] : memref<1x4x16x16xf32, #tpu.memory_space<vmem>>, vector<1x1x16x16xf32>
    %1428 = vector.shape_cast %1427 : vector<1x1x16x16xf32> to vector<16x16xf32>
    %1429 = vector.shape_cast %1421 : vector<16x16xf32> to vector<1x1x16x16xf32>
    tpu.vector_store %arg9[%c0_485, %c2_486, %c0_487, %c0_488], %1429 {strides = array<i32>} : memref<1x4x16x16xf32, #tpu.memory_space<vmem>>, vector<1x1x16x16xf32>,
    %c0_489 = arith.constant 0 : index
    %c2_490 = arith.constant 2 : index
    %c0_491 = arith.constant 0 : index
    %c0_492 = arith.constant 0 : index
    %1430 = vector.load %arg11[%c0_489, %c2_490, %c0_491, %c0_492] : memref<1x4x16x16xf32, #tpu.memory_space<vmem>>, vector<1x1x16x16xf32>
    %1431 = vector.shape_cast %1430 : vector<1x1x16x16xf32> to vector<16x16xf32>
    %1432 = vector.shape_cast %1426 : vector<16x16xf32> to vector<1x1x16x16xf32>
    tpu.vector_store %arg11[%c0_489, %c2_490, %c0_491, %c0_492], %1432 {strides = array<i32>} : memref<1x4x16x16xf32, #tpu.memory_space<vmem>>, vector<1x1x16x16xf32>,
    %1433 = arith.mulf %1421, %1414 : vector<16x16xf32>
    %cst_493 = arith.constant 1.000000e+00 : f32
    %1434 = vector.broadcast %cst_493 : f32 to vector<16x16xf32>
    %1435 = arith.subf %1434, %1421 : vector<16x16xf32>
    %1436 = arith.mulf %1435, %1416 : vector<16x16xf32>
    %1437 = arith.addf %1433, %1436 : vector<16x16xf32>
    %c0_494 = arith.constant 0 : index
    %c2_495 = arith.constant 2 : index
    %c0_496 = arith.constant 0 : index
    %c0_497 = arith.constant 0 : index
    %1438 = vector.load %arg8[%c0_494, %c2_495, %c0_496, %c0_497] : memref<1x4x16x16xf32, #tpu.memory_space<vmem>>, vector<1x1x16x16xf32>
    %1439 = vector.shape_cast %1438 : vector<1x1x16x16xf32> to vector<16x16xf32>
    %1440 = vector.shape_cast %1437 : vector<16x16xf32> to vector<1x1x16x16xf32>
    tpu.vector_store %arg8[%c0_494, %c2_495, %c0_496, %c0_497], %1440 {strides = array<i32>} : memref<1x4x16x16xf32, #tpu.memory_space<vmem>>, vector<1x1x16x16xf32>,
    %1441 = arith.mulf %1426, %1414 : vector<16x16xf32>
    %cst_498 = arith.constant 1.000000e+00 : f32
    %1442 = vector.broadcast %cst_498 : f32 to vector<16x16xf32>
    %1443 = arith.subf %1442, %1426 : vector<16x16xf32>
    %1444 = arith.mulf %1443, %1416 : vector<16x16xf32>
    %1445 = arith.addf %1441, %1444 : vector<16x16xf32>
    %c0_499 = arith.constant 0 : index
    %c2_500 = arith.constant 2 : index
    %c0_501 = arith.constant 0 : index
    %c0_502 = arith.constant 0 : index
    %1446 = vector.load %arg10[%c0_499, %c2_500, %c0_501, %c0_502] : memref<1x4x16x16xf32, #tpu.memory_space<vmem>>, vector<1x1x16x16xf32>
    %1447 = vector.shape_cast %1446 : vector<1x1x16x16xf32> to vector<16x16xf32>
    %1448 = vector.shape_cast %1445 : vector<16x16xf32> to vector<1x1x16x16xf32>
    tpu.vector_store %arg10[%c0_499, %c2_500, %c0_501, %c0_502], %1448 {strides = array<i32>} : memref<1x4x16x16xf32, #tpu.memory_space<vmem>>, vector<1x1x16x16xf32>,
    %c0_503 = arith.constant 0 : index
    %c3_504 = arith.constant 3 : index
    %c0_505 = arith.constant 0 : index
    %c0_506 = arith.constant 0 : index
    %1449 = vector.load %arg6[%c0_503, %c3_504, %c0_505, %c0_506] : memref<1x4x16x16xf32, #tpu.memory_space<vmem>>, vector<1x1x16x16xf32>
    %1450 = vector.shape_cast %1449 : vector<1x1x16x16xf32> to vector<16x16xf32>
    %c0_507 = arith.constant 0 : index
    %c3_508 = arith.constant 3 : index
    %c0_509 = arith.constant 0 : index
    %c0_510 = arith.constant 0 : index
    %1451 = vector.load %arg7[%c0_507, %c3_508, %c0_509, %c0_510] : memref<1x4x16x16xf32, #tpu.memory_space<vmem>>, vector<1x1x16x16xf32>
    %1452 = vector.shape_cast %1451 : vector<1x1x16x16xf32> to vector<16x16xf32>
    %1453 = arith.negf %1336 : vector<16x16xf32>
    %1454 = math.exp %1453 : vector<16x16xf32>
    %cst_511 = arith.constant 1.000000e+00 : f32
    %1455 = vector.broadcast %cst_511 : f32 to vector<16x16xf32>
    %1456 = arith.addf %1455, %1454 : vector<16x16xf32>
    %1457 = arith.divf %1455, %1456 : vector<16x16xf32>
    %1458 = arith.negf %1340 : vector<16x16xf32>
    %1459 = math.exp %1458 : vector<16x16xf32>
    %cst_512 = arith.constant 1.000000e+00 : f32
    %1460 = vector.broadcast %cst_512 : f32 to vector<16x16xf32>
    %1461 = arith.addf %1460, %1459 : vector<16x16xf32>
    %1462 = arith.divf %1460, %1461 : vector<16x16xf32>
    %c0_513 = arith.constant 0 : index
    %c3_514 = arith.constant 3 : index
    %c0_515 = arith.constant 0 : index
    %c0_516 = arith.constant 0 : index
    %1463 = vector.load %arg9[%c0_513, %c3_514, %c0_515, %c0_516] : memref<1x4x16x16xf32, #tpu.memory_space<vmem>>, vector<1x1x16x16xf32>
    %1464 = vector.shape_cast %1463 : vector<1x1x16x16xf32> to vector<16x16xf32>
    %1465 = vector.shape_cast %1457 : vector<16x16xf32> to vector<1x1x16x16xf32>
    tpu.vector_store %arg9[%c0_513, %c3_514, %c0_515, %c0_516], %1465 {strides = array<i32>} : memref<1x4x16x16xf32, #tpu.memory_space<vmem>>, vector<1x1x16x16xf32>,
    %c0_517 = arith.constant 0 : index
    %c3_518 = arith.constant 3 : index
    %c0_519 = arith.constant 0 : index
    %c0_520 = arith.constant 0 : index
    %1466 = vector.load %arg11[%c0_517, %c3_518, %c0_519, %c0_520] : memref<1x4x16x16xf32, #tpu.memory_space<vmem>>, vector<1x1x16x16xf32>
    %1467 = vector.shape_cast %1466 : vector<1x1x16x16xf32> to vector<16x16xf32>
    %1468 = vector.shape_cast %1462 : vector<16x16xf32> to vector<1x1x16x16xf32>
    tpu.vector_store %arg11[%c0_517, %c3_518, %c0_519, %c0_520], %1468 {strides = array<i32>} : memref<1x4x16x16xf32, #tpu.memory_space<vmem>>, vector<1x1x16x16xf32>,
    %1469 = arith.mulf %1457, %1450 : vector<16x16xf32>
    %cst_521 = arith.constant 1.000000e+00 : f32
    %1470 = vector.broadcast %cst_521 : f32 to vector<16x16xf32>
    %1471 = arith.subf %1470, %1457 : vector<16x16xf32>
    %1472 = arith.mulf %1471, %1452 : vector<16x16xf32>
    %1473 = arith.addf %1469, %1472 : vector<16x16xf32>
    %c0_522 = arith.constant 0 : index
    %c3_523 = arith.constant 3 : index
    %c0_524 = arith.constant 0 : index
    %c0_525 = arith.constant 0 : index
    %1474 = vector.load %arg8[%c0_522, %c3_523, %c0_524, %c0_525] : memref<1x4x16x16xf32, #tpu.memory_space<vmem>>, vector<1x1x16x16xf32>
    %1475 = vector.shape_cast %1474 : vector<1x1x16x16xf32> to vector<16x16xf32>
    %1476 = vector.shape_cast %1473 : vector<16x16xf32> to vector<1x1x16x16xf32>
    tpu.vector_store %arg8[%c0_522, %c3_523, %c0_524, %c0_525], %1476 {strides = array<i32>} : memref<1x4x16x16xf32, #tpu.memory_space<vmem>>, vector<1x1x16x16xf32>,
    %1477 = arith.mulf %1462, %1450 : vector<16x16xf32>
    %cst_526 = arith.constant 1.000000e+00 : f32
    %1478 = vector.broadcast %cst_526 : f32 to vector<16x16xf32>
    %1479 = arith.subf %1478, %1462 : vector<16x16xf32>
    %1480 = arith.mulf %1479, %1452 : vector<16x16xf32>
    %1481 = arith.addf %1477, %1480 : vector<16x16xf32>
    %c0_527 = arith.constant 0 : index
    %c3_528 = arith.constant 3 : index
    %c0_529 = arith.constant 0 : index
    %c0_530 = arith.constant 0 : index
    %1482 = vector.load %arg10[%c0_527, %c3_528, %c0_529, %c0_530] : memref<1x4x16x16xf32, #tpu.memory_space<vmem>>, vector<1x1x16x16xf32>
    %1483 = vector.shape_cast %1482 : vector<1x1x16x16xf32> to vector<16x16xf32>
    %1484 = vector.shape_cast %1481 : vector<16x16xf32> to vector<1x1x16x16xf32>
    tpu.vector_store %arg10[%c0_527, %c3_528, %c0_529, %c0_530], %1484 {strides = array<i32>} : memref<1x4x16x16xf32, #tpu.memory_space<vmem>>, vector<1x1x16x16xf32>,
    return
  }
  func.func @transform_0(%arg0: i32) -> i32 {
    %c0_i32 = arith.constant 0 : i32
    %c0_i32_0 = arith.constant 0 : i32
    return %c0_i32 : i32
  }
  func.func @transform_1(%arg0: i32) -> i32 {
    %c0_i32 = arith.constant 0 : i32
    %c0_i32_0 = arith.constant 0 : i32
    return %c0_i32 : i32
  }
  func.func @transform_2(%arg0: i32) -> i32 {
    %c0_i32 = arith.constant 0 : i32
    %c0_i32_0 = arith.constant 0 : i32
    return %c0_i32 : i32
  }
  func.func @transform_3(%arg0: i32) -> i32 {
    %c0_i32 = arith.constant 0 : i32
    %c0_i32_0 = arith.constant 0 : i32
    return %c0_i32 : i32
  }
  func.func @transform_4(%arg0: i32) -> (i32, i32, i32, i32) {
    %c0_i32 = arith.constant 0 : i32
    %c0_i32_0 = arith.constant 0 : i32
    %c0_i32_1 = arith.constant 0 : i32
    %c0_i32_2 = arith.constant 0 : i32
    return %arg0, %c0_i32, %c0_i32_0, %c0_i32_1 : i32, i32, i32, i32
  }
  func.func @transform_5(%arg0: i32) -> (i32, i32, i32, i32) {
    %c0_i32 = arith.constant 0 : i32
    %c0_i32_0 = arith.constant 0 : i32
    %c0_i32_1 = arith.constant 0 : i32
    %c0_i32_2 = arith.constant 0 : i32
    return %arg0, %c0_i32, %c0_i32_0, %c0_i32_1 : i32, i32, i32, i32
  }
  func.func @transform_6(%arg0: i32) -> (i32, i32, i32, i32) {
    %c0_i32 = arith.constant 0 : i32
    %c0_i32_0 = arith.constant 0 : i32
    %c0_i32_1 = arith.constant 0 : i32
    %c0_i32_2 = arith.constant 0 : i32
    return %arg0, %c0_i32, %c0_i32_0, %c0_i32_1 : i32, i32, i32, i32
  }
  func.func @transform_7(%arg0: i32) -> (i32, i32, i32, i32) {
    %c0_i32 = arith.constant 0 : i32
    %c0_i32_0 = arith.constant 0 : i32
    %c0_i32_1 = arith.constant 0 : i32
    %c0_i32_2 = arith.constant 0 : i32
    return %arg0, %c0_i32, %c0_i32_0, %c0_i32_1 : i32, i32, i32, i32
  }
  func.func @transform_8(%arg0: i32) -> (i32, i32, i32, i32) {
    %c0_i32 = arith.constant 0 : i32
    %c0_i32_0 = arith.constant 0 : i32
    %c0_i32_1 = arith.constant 0 : i32
    %c0_i32_2 = arith.constant 0 : i32
    return %arg0, %c0_i32, %c0_i32_0, %c0_i32_1 : i32, i32, i32, i32
  }
  func.func @transform_9(%arg0: i32) -> (i32, i32, i32, i32) {
    %c0_i32 = arith.constant 0 : i32
    %c0_i32_0 = arith.constant 0 : i32
    %c0_i32_1 = arith.constant 0 : i32
    %c0_i32_2 = arith.constant 0 : i32
    return %arg0, %c0_i32, %c0_i32_0, %c0_i32_1 : i32, i32, i32, i32
  }
  func.func @transform_10(%arg0: i32) -> (i32, i32, i32, i32) {
    %c0_i32 = arith.constant 0 : i32
    %c0_i32_0 = arith.constant 0 : i32
    %c0_i32_1 = arith.constant 0 : i32
    %c0_i32_2 = arith.constant 0 : i32
    return %arg0, %c0_i32, %c0_i32_0, %c0_i32_1 : i32, i32, i32, i32
  }
}

</mosaic_0001>

<llo_original>
// kernel: final_atten_forward.1
$region0: #{final_atten_forward.1}
  #allocation0 [shape = 'u32[]', space=smem, size = 0x4, offset = 0x4, fixed_abs, tag = 'smem constant byte address 0x4 - core index']
  #allocation1 [shape = 'u32[144,128]{1,0:T(1,128)}', space=vmem, size = 0x12000, scoped, tag = 'internal scratch']
  #allocation2 [shape = 'f32[4,18,18]{2,1,0:T(8,128)}', space=vmem, size = 0xc000, scoped, tag = 'scratch operand']
  #allocation3 [shape = 'f32[4,18,18]{2,1,0:T(8,128)}', space=vmem, size = 0xc000, scoped, tag = 'scratch operand']
  #allocation4 [shape = 'f32[4,18,18]{2,1,0:T(8,128)}', space=vmem, size = 0xc000, scoped, tag = 'scratch operand']
  %s0 = inlined_call_operand.vmem [shape: f32[144], index: 0, kind: input, shape index: {}]
  %s1 = inlined_call_operand.vmem [shape: f32[4], index: 1, kind: input, shape index: {}]
  %s2 = inlined_call_operand.vmem [shape: f32[144], index: 2, kind: input, shape index: {}]
  %s3 = inlined_call_operand.vmem [shape: f32[4], index: 3, kind: input, shape index: {}]
  %s4 = inlined_call_operand.vmem [shape: f32[2,4,16,16], index: 4, kind: input, shape index: {}]
  %s5 = inlined_call_operand.hbm [shape: f32[2,4,16,16], index: 5, kind: input, shape index: {}]
  %s6 = inlined_call_operand.hbm [shape: f32[2,4,16,16], index: 6, kind: input, shape index: {}]
  %s7 = inlined_call_operand.hbm [shape: f32[2,4,16,16], index: 7, kind: output, shape index: {0}]
  %s8 = inlined_call_operand.hbm [shape: f32[2,4,16,16], index: 8, kind: output, shape index: {1}]
  %s9 = inlined_call_operand.hbm [shape: f32[2,4,16,16], index: 9, kind: output, shape index: {2}]
  %s10 = inlined_call_operand.hbm [shape: f32[2,4,16,16], index: 10, kind: output, shape index: {3}]
  %11 = xla_tuple %s7, %s8, %s9, %s10
  %s12 = sld [smem:[#allocation0]]
  $region109: #{final_atten_forward.1} parent=0
    _
  %s14 = ssub.s32 1, %s12
  %s15 = scalar_select 0, %s14, %s12
  $region1: #{final_atten_forward.1} parent=0
    #allocation5 [shape = 'u8[1024]{0}', space=smem, size = 0x400, scoped, tag = 'input window, operand 0, single buffered']
    #allocation6 [shape = 's32[2]{0}', space=sflag, size = 0x8, scoped, tag = 'scoped memory for final_atten_forward.1']
    #allocation7 [shape = 's32[2]{0}', space=sflag, size = 0x8, scoped, tag = 'scoped memory for final_atten_forward.1']
    #allocation8 [shape = 's32[2]{0}', space=sflag, size = 0x8, scoped, tag = 'scoped memory for final_atten_forward.1']
    #allocation9 [shape = 'u8[512]{0}', space=smem, size = 0x200, scoped, tag = 'input window, operand 1, single buffered']
    #allocation10 [shape = 's32[1]{0}', space=sflag, size = 0x4, scoped, tag = 'scoped memory for final_atten_forward.1']
    #allocation11 [shape = 'u8[1024]{0}', space=smem, size = 0x400, scoped, tag = 'input window, operand 2, single buffered']
    #allocation12 [shape = 'u8[512]{0}', space=smem, size = 0x200, scoped, tag = 'input window, operand 3, single buffered']
    #allocation13 [shape = 's32[1]{0}', space=sflag, size = 0x4, scoped, tag = 'scoped memory for final_atten_forward.1']
    #allocation14 [shape = 'u8[65536]{0}', space=vmem, size = 0x10000, scoped, tag = 'input window, operand 5']
    #allocation15 [shape = 'u8[65536]{0}', space=vmem, size = 0x10000, scoped, tag = 'input window, operand 6']
    #allocation16 [shape = 's32[2]{0}', space=sflag, size = 0x8, scoped, tag = 'scoped memory for final_atten_forward.1']
    #allocation17 [shape = 'u8[65536]{0}', space=vmem, size = 0x10000, scoped, tag = 'output window, operand 0']
    #allocation18 [shape = 'u8[65536]{0}', space=vmem, size = 0x10000, scoped, tag = 'output window, operand 1']
    #allocation19 [shape = 's32[2]{0}', space=sflag, size = 0x8, scoped, tag = 'scoped memory for final_atten_forward.1']
    #allocation20 [shape = 'u8[65536]{0}', space=vmem, size = 0x10000, scoped, tag = 'output window, operand 2']
    #allocation21 [shape = 'u8[65536]{0}', space=vmem, size = 0x10000, scoped, tag = 'output window, operand 3']
    #allocation22 [shape = 's32[2]{0}', space=sflag, size = 0x8, scoped, tag = 'scoped memory for final_atten_forward.1']
    %16 = vsyncpa [#allocation8], 0
    %17 = vsyncpa [#allocation10], 0
    %18 = vsyncpa [#allocation13], 0
    %19 = vsyncpa [#allocation6], 0
    %s20 = scalar_lea.sflag [#allocation6], 1
    %21 = vsyncpa %s20, 0
    %22 = vsyncpa [#allocation16], 0
    %s23 = scalar_lea.sflag [#allocation16], 1
    %24 = vsyncpa %s23, 0
    %25 = vsyncpa [#allocation7], 0
    %s26 = scalar_lea.sflag [#allocation7], 1
    %27 = vsyncpa %s26, 0
    %28 = vsyncpa [#allocation19], 0
    %s29 = scalar_lea.sflag [#allocation19], 1
    %30 = vsyncpa %s29, 0
    %31 = vsyncpa [#allocation22], 0
    %s32 = scalar_lea.sflag [#allocation22], 1
    %33 = vsyncpa %s32, 0
    loop: start=0, step=1, limit=4
    $region2: #{final_atten_forward.1} parent=1 // loop_pre_header
      _
    $region3: #{final_atten_forward.1} parent=1 // loop_header
      %s35 = sphi 0, %s39
      %p36 = scmp.ge.s32.totalorder %s35, 4
      %s43 = sphi 0, %s43
      %s45 = sphi 0, %s43
      %s46 = sphi 0, %s45
      %s60 = sphi 0, %s46
      %s64 = sphi 0, %s64
      %s66 = sphi 0, %s64
      %s67 = sphi 0, %s66
      %s81 = sphi 0, %s67
      %s85 = sphi 0, %s85
      %s87 = sphi 0, %s85
      %s88 = sphi 0, %s87
      %s102 = sphi 0, %s88
      %s106 = sphi 0, %s106
      %s108 = sphi 0, %s106
      %s109 = sphi 0, %s108
      %s123 = sphi 0, %s109
      %s129 = sphi 0, %s131
      %s132 = sphi 0, %s129
      %s133 = sphi 0, %s132
      %s149 = sphi 0, %s133
      %s155 = sphi 0, %s157
      %s158 = sphi 0, %s155
      %s159 = sphi 0, %s158
      %s175 = sphi 0, %s159
      %s181 = sphi 0, %s183
      %s184 = sphi 0, %s181
      %s185 = sphi 0, %s184
      %s201 = sphi 0, %s185
      %s207 = sphi 0, %s209
      %s210 = sphi 0, %s207
      %s211 = sphi 0, %s210
      %s227 = sphi 0, %s211
      %s233 = sphi 0, %s235
      %s236 = sphi 0, %s233
      %s237 = sphi 0, %s236
      %s253 = sphi 0, %s237
      %s259 = sphi 0, %s261
      %s262 = sphi 0, %s259
      %s263 = sphi 0, %s262
      %s279 = sphi 0, %s263
      %s285 = sphi 0, %s287
      %s288 = sphi 0, %s285
      %s289 = sphi 0, %s288
      %s305 = sphi 0, %s289
    $region4: #{final_atten_forward.1} parent=1 // loop_header_branch
      %38 = sbr.rel (%p36) target = $region8
    $region5: #{final_atten_forward.1} parent=1 // loop_body
      %s40 = ssub.s32 %s35, 1
      %s41 = ssub.s32 %s35, 2
      %s42 = sadd.s32 %s35, 1
      %s44 = sadd.s32 %s43, 1
      %p47 = scmp.eq.s32.totalorder %s35, 1
      %p48 = scmp.ne.s32.totalorder %s43, %s45
      %p49 = scmp.eq.s32.totalorder %s35, 0
      %p50 = por %p48, %p49
      %p51 = scmp.ne.s32.totalorder %s43, %s45
      %p52 = scmp.eq.s32.totalorder %s40, 1
      %p53 = por %p51, %p52
      %p54 = scmp.ne.s32.totalorder %s45, %s46
      %p55 = scmp.eq.s32.totalorder %s40, 0
      %p56 = por %p54, %p55
      %p57 = scmp.ne.s32.totalorder %s45, %s46
      %p58 = scmp.eq.s32.totalorder %s41, 1
      %p59 = por %p57, %p58
      %p61 = scmp.ne.s32.totalorder %s46, %s60
      %p62 = scmp.eq.s32.totalorder %s41, 0
      %p63 = por %p61, %p62
      %s65 = sadd.s32 %s64, 1
      %p68 = scmp.eq.s32.totalorder %s35, 1
      %p69 = scmp.ne.s32.totalorder %s64, %s66
      %p70 = scmp.eq.s32.totalorder %s35, 0
      %p71 = por %p69, %p70
      %p72 = scmp.ne.s32.totalorder %s64, %s66
      %p73 = scmp.eq.s32.totalorder %s40, 1
      %p74 = por %p72, %p73
      %p75 = scmp.ne.s32.totalorder %s66, %s67
      %p76 = scmp.eq.s32.totalorder %s40, 0
      %p77 = por %p75, %p76
      %p78 = scmp.ne.s32.totalorder %s66, %s67
      %p79 = scmp.eq.s32.totalorder %s41, 1
      %p80 = por %p78, %p79
      %p82 = scmp.ne.s32.totalorder %s67, %s81
      %p83 = scmp.eq.s32.totalorder %s41, 0
      %p84 = por %p82, %p83
      %s86 = sadd.s32 %s85, 1
      %p89 = scmp.eq.s32.totalorder %s35, 1
      %p90 = scmp.ne.s32.totalorder %s85, %s87
      %p91 = scmp.eq.s32.totalorder %s35, 0
      %p92 = por %p90, %p91
      %p93 = scmp.ne.s32.totalorder %s85, %s87
      %p94 = scmp.eq.s32.totalorder %s40, 1
      %p95 = por %p93, %p94
      %p96 = scmp.ne.s32.totalorder %s87, %s88
      %p97 = scmp.eq.s32.totalorder %s40, 0
      %p98 = por %p96, %p97
      %p99 = scmp.ne.s32.totalorder %s87, %s88
      %p100 = scmp.eq.s32.totalorder %s41, 1
      %p101 = por %p99, %p100
      %p103 = scmp.ne.s32.totalorder %s88, %s102
      %p104 = scmp.eq.s32.totalorder %s41, 0
      %p105 = por %p103, %p104
      %s107 = sadd.s32 %s106, 1
      %p110 = scmp.eq.s32.totalorder %s35, 1
      %p111 = scmp.ne.s32.totalorder %s106, %s108
      %p112 = scmp.eq.s32.totalorder %s35, 0
      %p113 = por %p111, %p112
      %p114 = scmp.ne.s32.totalorder %s106, %s108
      %p115 = scmp.eq.s32.totalorder %s40, 1
      %p116 = por %p114, %p115
      %p117 = scmp.ne.s32.totalorder %s108, %s109
      %p118 = scmp.eq.s32.totalorder %s40, 0
      %p119 = por %p117, %p118
      %p120 = scmp.ne.s32.totalorder %s108, %s109
      %p121 = scmp.eq.s32.totalorder %s41, 1
      %p122 = por %p120, %p121
      %p124 = scmp.ne.s32.totalorder %s109, %s123
      %p125 = scmp.eq.s32.totalorder %s41, 0
      %p126 = por %p124, %p125
      %s127 = ssub.s32 %s35, %s42
      %p128 = scmp.eq.s32.totalorder %s127, 0
      %s130 = sadd.s32 %s129, 1
      %s131 = scalar_select %p128, %s129, %s130
      %p134 = pneg %p128
      %p135 = scmp.eq.s32.totalorder %s35, 1
      %p136 = por %p134, %p135
      %p137 = scmp.ne.s32.totalorder %s129, %s132
      %p138 = scmp.eq.s32.totalorder %s35, 0
      %p139 = por %p137, %p138
      %p140 = scmp.ne.s32.totalorder %s129, %s132
      %p141 = scmp.eq.s32.totalorder %s40, 1
      %p142 = por %p140, %p141
      %p143 = scmp.ne.s32.totalorder %s132, %s133
      %p144 = scmp.eq.s32.totalorder %s40, 0
      %p145 = por %p143, %p144
      %p146 = scmp.ne.s32.totalorder %s132, %s133
      %p147 = scmp.eq.s32.totalorder %s41, 1
      %p148 = por %p146, %p147
      %p150 = scmp.ne.s32.totalorder %s133, %s149
      %p151 = scmp.eq.s32.totalorder %s41, 0
      %p152 = por %p150, %p151
      %s153 = ssub.s32 %s35, %s42
      %p154 = scmp.eq.s32.totalorder %s153, 0
      %s156 = sadd.s32 %s155, 1
      %s157 = scalar_select %p154, %s155, %s156
      %p160 = pneg %p154
      %p161 = scmp.eq.s32.totalorder %s35, 1
      %p162 = por %p160, %p161
      %p163 = scmp.ne.s32.totalorder %s155, %s158
      %p164 = scmp.eq.s32.totalorder %s35, 0
      %p165 = por %p163, %p164
      %p166 = scmp.ne.s32.totalorder %s155, %s158
      %p167 = scmp.eq.s32.totalorder %s40, 1
      %p168 = por %p166, %p167
      %p169 = scmp.ne.s32.totalorder %s158, %s159
      %p170 = scmp.eq.s32.totalorder %s40, 0
      %p171 = por %p169, %p170
      %p172 = scmp.ne.s32.totalorder %s158, %s159
      %p173 = scmp.eq.s32.totalorder %s41, 1
      %p174 = por %p172, %p173
      %p176 = scmp.ne.s32.totalorder %s159, %s175
      %p177 = scmp.eq.s32.totalorder %s41, 0
      %p178 = por %p176, %p177
      %s179 = ssub.s32 %s35, %s42
      %p180 = scmp.eq.s32.totalorder %s179, 0
      %s182 = sadd.s32 %s181, 1
      %s183 = scalar_select %p180, %s181, %s182
      %p186 = pneg %p180
      %p187 = scmp.eq.s32.totalorder %s35, 1
      %p188 = por %p186, %p187
      %p189 = scmp.ne.s32.totalorder %s181, %s184
      %p190 = scmp.eq.s32.totalorder %s35, 0
      %p191 = por %p189, %p190
      %p192 = scmp.ne.s32.totalorder %s181, %s184
      %p193 = scmp.eq.s32.totalorder %s40, 1
      %p194 = por %p192, %p193
      %p195 = scmp.ne.s32.totalorder %s184, %s185
      %p196 = scmp.eq.s32.totalorder %s40, 0
      %p197 = por %p195, %p196
      %p198 = scmp.ne.s32.totalorder %s184, %s185
      %p199 = scmp.eq.s32.totalorder %s41, 1
      %p200 = por %p198, %p199
      %p202 = scmp.ne.s32.totalorder %s185, %s201
      %p203 = scmp.eq.s32.totalorder %s41, 0
      %p204 = por %p202, %p203
      %s205 = ssub.s32 %s35, %s42
      %p206 = scmp.eq.s32.totalorder %s205, 0
      %s208 = sadd.s32 %s207, 1
      %s209 = scalar_select %p206, %s207, %s208
      %p212 = pneg %p206
      %p213 = scmp.eq.s32.totalorder %s35, 1
      %p214 = por %p212, %p213
      %p215 = scmp.ne.s32.totalorder %s207, %s210
      %p216 = scmp.eq.s32.totalorder %s35, 0
      %p217 = por %p215, %p216
      %p218 = scmp.ne.s32.totalorder %s207, %s210
      %p219 = scmp.eq.s32.totalorder %s40, 1
      %p220 = por %p218, %p219
      %p221 = scmp.ne.s32.totalorder %s210, %s211
      %p222 = scmp.eq.s32.totalorder %s40, 0
      %p223 = por %p221, %p222
      %p224 = scmp.ne.s32.totalorder %s210, %s211
      %p225 = scmp.eq.s32.totalorder %s41, 1
      %p226 = por %p224, %p225
      %p228 = scmp.ne.s32.totalorder %s211, %s227
      %p229 = scmp.eq.s32.totalorder %s41, 0
      %p230 = por %p228, %p229
      %s231 = ssub.s32 %s35, %s42
      %p232 = scmp.eq.s32.totalorder %s231, 0
      %s234 = sadd.s32 %s233, 1
      %s235 = scalar_select %p232, %s233, %s234
      %p238 = pneg %p232
      %p239 = scmp.eq.s32.totalorder %s35, 1
      %p240 = por %p238, %p239
      %p241 = scmp.ne.s32.totalorder %s233, %s236
      %p242 = scmp.eq.s32.totalorder %s35, 0
      %p243 = por %p241, %p242
      %p244 = scmp.ne.s32.totalorder %s233, %s236
      %p245 = scmp.eq.s32.totalorder %s40, 1
      %p246 = por %p244, %p245
      %p247 = scmp.ne.s32.totalorder %s236, %s237
      %p248 = scmp.eq.s32.totalorder %s40, 0
      %p249 = por %p247, %p248
      %p250 = scmp.ne.s32.totalorder %s236, %s237
      %p251 = scmp.eq.s32.totalorder %s41, 1
      %p252 = por %p250, %p251
      %p254 = scmp.ne.s32.totalorder %s237, %s253
      %p255 = scmp.eq.s32.totalorder %s41, 0
      %p256 = por %p254, %p255
      %s257 = ssub.s32 %s35, %s42
      %p258 = scmp.eq.s32.totalorder %s257, 0
      %s260 = sadd.s32 %s259, 1
      %s261 = scalar_select %p258, %s259, %s260
      %p264 = pneg %p258
      %p265 = scmp.eq.s32.totalorder %s35, 1
      %p266 = por %p264, %p265
      %p267 = scmp.ne.s32.totalorder %s259, %s262
      %p268 = scmp.eq.s32.totalorder %s35, 0
      %p269 = por %p267, %p268
      %p270 = scmp.ne.s32.totalorder %s259, %s262
      %p271 = scmp.eq.s32.totalorder %s40, 1
      %p272 = por %p270, %p271
      %p273 = scmp.ne.s32.totalorder %s262, %s263
      %p274 = scmp.eq.s32.totalorder %s40, 0
      %p275 = por %p273, %p274
      %p276 = scmp.ne.s32.totalorder %s262, %s263
      %p277 = scmp.eq.s32.totalorder %s41, 1
      %p278 = por %p276, %p277
      %p280 = scmp.ne.s32.totalorder %s263, %s279
      %p281 = scmp.eq.s32.totalorder %s41, 0
      %p282 = por %p280, %p281
      %s283 = ssub.s32 %s35, %s42
      %p284 = scmp.eq.s32.totalorder %s283, 0
      %s286 = sadd.s32 %s285, 1
      %s287 = scalar_select %p284, %s285, %s286
      %p290 = pneg %p284
      %p291 = scmp.eq.s32.totalorder %s35, 1
      %p292 = por %p290, %p291
      %p293 = scmp.ne.s32.totalorder %s285, %s288
      %p294 = scmp.eq.s32.totalorder %s35, 0
      %p295 = por %p293, %p294
      %p296 = scmp.ne.s32.totalorder %s285, %s288
      %p297 = scmp.eq.s32.totalorder %s40, 1
      %p298 = por %p296, %p297
      %p299 = scmp.ne.s32.totalorder %s288, %s289
      %p300 = scmp.eq.s32.totalorder %s40, 0
      %p301 = por %p299, %p300
      %p302 = scmp.ne.s32.totalorder %s288, %s289
      %p303 = scmp.eq.s32.totalorder %s41, 1
      %p304 = por %p302, %p303
      %p306 = scmp.ne.s32.totalorder %s289, %s305
      %p307 = scmp.eq.s32.totalorder %s41, 0
      %p308 = por %p306, %p307
      %p309 = scmp.le.s32.totalorder 1, %s35
      %p310 = scmp.lt.s32.totalorder %s35, 3
      %p311 = pnand %p309, %p310
      %p312 = pneg %p311
      // Predicated region
      $region9: #{final_atten_forward.1} parent=5 // pred_check
        _
      $region10: #{final_atten_forward.1} parent=5 // pred_check_branch
        %314 = sbr.rel (%p311) target = $region12
      $region11: #{final_atten_forward.1} parent=5 // pred_region
        %s315 = ssub.s32 %s35, 1
        // Predicated region
        $region13: #{final_atten_forward.1} parent=11 // pred_check
          %p316 = pneg %p56
        $region14: #{final_atten_forward.1} parent=11 // pred_check_branch
          %318 = sbr.rel (%p316) target = $region16
        $region15: #{final_atten_forward.1} parent=11 // pred_region
          %s320 = ssub.s32 32, 32
          %321 = vsyncadd [#allocation8], %s320
          %s323 = sshll.u32 %s0, 4
          %s324 = int_to_ptr.vmem [resolvable:$true] %s323
          %326 = dma.vmem_to_smem %s324, 32, [#allocation5], [#allocation8]
        $region16: #{final_atten_forward.1} parent=11 // pred_fallthru
          _
        // Predicated region
        $region17: #{final_atten_forward.1} parent=11 // pred_check
          %p327 = pneg %p77
        $region18: #{final_atten_forward.1} parent=11 // pred_check_branch
          %329 = sbr.rel (%p327) target = $region20
        $region19: #{final_atten_forward.1} parent=11 // pred_region
          %s331 = ssub.s32 16, 16
          %332 = vsyncadd [#allocation10], %s331
          %s334 = sshll.u32 %s1, 4
          %s335 = int_to_ptr.vmem [resolvable:$true] %s334
          %337 = dma.vmem_to_smem %s335, 16, [#allocation9], [#allocation10]
        $region20: #{final_atten_forward.1} parent=11 // pred_fallthru
          _
        // Predicated region
        $region21: #{final_atten_forward.1} parent=11 // pred_check
          %p338 = pneg %p98
        $region22: #{final_atten_forward.1} parent=11 // pred_check_branch
          %340 = sbr.rel (%p338) target = $region24
        $region23: #{final_atten_forward.1} parent=11 // pred_region
          %s342 = ssub.s32 32, 32
          %343 = vsyncadd [#allocation10], %s342
          %s345 = sshll.u32 %s2, 4
          %s346 = int_to_ptr.vmem [resolvable:$true] %s345
          %348 = dma.vmem_to_smem %s346, 32, [#allocation11], [#allocation10]
        $region24: #{final_atten_forward.1} parent=11 // pred_fallthru
          _
        // Predicated region
        $region25: #{final_atten_forward.1} parent=11 // pred_check
          %p349 = pneg %p119
        $region26: #{final_atten_forward.1} parent=11 // pred_check_branch
          %351 = sbr.rel (%p349) target = $region28
        $region27: #{final_atten_forward.1} parent=11 // pred_region
          %s353 = ssub.s32 16, 16
          %354 = vsyncadd [#allocation13], %s353
          %s356 = sshll.u32 %s3, 4
          %s357 = int_to_ptr.vmem [resolvable:$true] %s356
          %359 = dma.vmem_to_smem %s357, 16, [#allocation12], [#allocation13]
        $region28: #{final_atten_forward.1} parent=11 // pred_fallthru
          _
      $region12: #{final_atten_forward.1} parent=5 // pred_fallthru
        _
      %p360 = scmp.lt.s32.totalorder %s35, 2
      // Predicated region
      $region29: #{final_atten_forward.1} parent=5 // pred_check
        %p361 = pneg %p360
      $region30: #{final_atten_forward.1} parent=5 // pred_check_branch
        %363 = sbr.rel (%p361) target = $region32
      $region31: #{final_atten_forward.1} parent=5 // pred_region
        // Predicated region
        $region33: #{final_atten_forward.1} parent=31 // pred_check
          %p364 = pneg %p139
        $region34: #{final_atten_forward.1} parent=31 // pred_check_branch
          %366 = sbr.rel (%p364) target = $region36
        $region35: #{final_atten_forward.1} parent=31 // pred_region
          %p367 = scmp.lt.s32.totalorder %s35, 1
          %s368 = scalar_select %p367, %s35, 1
          %s369 = smul.addr %s368, 8
          %s370 = smul.addr %s369, 8
          %s371 = scalar_lea.vmem %s4, %s370
        $region36: #{final_atten_forward.1} parent=31 // pred_fallthru
          _
        // Predicated region
        $region37: #{final_atten_forward.1} parent=31 // pred_check
          %p372 = pneg %p165
        $region38: #{final_atten_forward.1} parent=31 // pred_check_branch
          %374 = sbr.rel (%p372) target = $region40
        $region39: #{final_atten_forward.1} parent=31 // pred_region
          %s375 = sand.u32 %s155, 1
          %s376 = scalar_lea.sflag [#allocation6], %s375
          %s377 = sand.u32 %s155, 1
          %s378 = smul.addr %s377, 64
          %s379 = scalar_lea.vmem [#allocation14], %s378
          %s381 = ssub.s32 1024, 1024
          %382 = vsyncadd %s376, %s381
          %s383 = smul.addr %s35, 8
          %s384 = smul.addr %s383, 128
          %s385 = scalar_lea.hbm %s5, %s384
          %s386 = sshll.u32 %s379, 4
          %s387 = int_to_ptr.vmem [resolvable:$true] %s386
          %392 = dma.hbm_to_vmem [thread:$0]  %s385, 1024, %s387, %s376, 128, 128, 8
        $region40: #{final_atten_forward.1} parent=31 // pred_fallthru
          _
        // Predicated region
        $region41: #{final_atten_forward.1} parent=31 // pred_check
          %p393 = pneg %p191
        $region42: #{final_atten_forward.1} parent=31 // pred_check_branch
          %395 = sbr.rel (%p393) target = $region44
        $region43: #{final_atten_forward.1} parent=31 // pred_region
          %s396 = sand.u32 %s181, 1
          %s397 = scalar_lea.sflag [#allocation16], %s396
          %s398 = sand.u32 %s181, 1
          %s399 = smul.addr %s398, 64
          %s400 = scalar_lea.vmem [#allocation15], %s399
          %s402 = ssub.s32 1024, 1024
          %403 = vsyncadd %s397, %s402
          %s404 = smul.addr %s35, 8
          %s405 = smul.addr %s404, 128
          %s406 = scalar_lea.hbm %s6, %s405
          %s407 = sshll.u32 %s400, 4
          %s408 = int_to_ptr.vmem [resolvable:$true] %s407
          %413 = dma.hbm_to_vmem [thread:$0]  %s406, 1024, %s408, %s397, 128, 128, 8
        $region44: #{final_atten_forward.1} parent=31 // pred_fallthru
          _
      $region32: #{final_atten_forward.1} parent=5 // pred_fallthru
        _
      %p414 = scmp.le.s32.totalorder 1, %s35
      %p415 = scmp.lt.s32.totalorder %s35, 3
      %p416 = pnand %p414, %p415
      %p417 = pneg %p416
      // Predicated region
      $region45: #{final_atten_forward.1} parent=5 // pred_check
        _
      $region46: #{final_atten_forward.1} parent=5 // pred_check_branch
        %419 = sbr.rel (%p416) target = $region48
      $region47: #{final_atten_forward.1} parent=5 // pred_region
        %s420 = ssub.s32 %s35, 1
        // Predicated region
        $region49: #{final_atten_forward.1} parent=47 // pred_check
          %p421 = pneg %p56
        $region50: #{final_atten_forward.1} parent=47 // pred_check_branch
          %423 = sbr.rel (%p421) target = $region52
        $region51: #{final_atten_forward.1} parent=47 // pred_region
          %424 = dma.done [#allocation8], 32
        $region52: #{final_atten_forward.1} parent=47 // pred_fallthru
          _
        // Predicated region
        $region53: #{final_atten_forward.1} parent=47 // pred_check
          %p425 = pneg %p77
        $region54: #{final_atten_forward.1} parent=47 // pred_check_branch
          %427 = sbr.rel (%p425) target = $region56
        $region55: #{final_atten_forward.1} parent=47 // pred_region
          %428 = dma.done [#allocation10], 16
        $region56: #{final_atten_forward.1} parent=47 // pred_fallthru
          _
        // Predicated region
        $region57: #{final_atten_forward.1} parent=47 // pred_check
          %p429 = pneg %p98
        $region58: #{final_atten_forward.1} parent=47 // pred_check_branch
          %431 = sbr.rel (%p429) target = $region60
        $region59: #{final_atten_forward.1} parent=47 // pred_region
          %432 = dma.done [#allocation10], 32
        $region60: #{final_atten_forward.1} parent=47 // pred_fallthru
          _
        // Predicated region
        $region61: #{final_atten_forward.1} parent=47 // pred_check
          %p433 = pneg %p119
        $region62: #{final_atten_forward.1} parent=47 // pred_check_branch
          %435 = sbr.rel (%p433) target = $region64
        $region63: #{final_atten_forward.1} parent=47 // pred_region
          %436 = dma.done [#allocation13], 16
        $region64: #{final_atten_forward.1} parent=47 // pred_fallthru
          _
        %s437 = sand.u32 %s158, 1
        %s438 = scalar_lea.sflag [#allocation6], %s437
        %s439 = sand.u32 %s158, 1
        %s440 = smul.addr %s439, 64
        %s441 = scalar_lea.vmem [#allocation14], %s440
        // Predicated region
        $region65: #{final_atten_forward.1} parent=47 // pred_check
          %p442 = pneg %p171
        $region66: #{final_atten_forward.1} parent=47 // pred_check_branch
          %444 = sbr.rel (%p442) target = $region68
        $region67: #{final_atten_forward.1} parent=47 // pred_region
          %445 = dma.done %s438, 1024
        $region68: #{final_atten_forward.1} parent=47 // pred_fallthru
          _
        %s446 = sand.u32 %s184, 1
        %s447 = scalar_lea.sflag [#allocation16], %s446
        %s448 = sand.u32 %s184, 1
        %s449 = smul.addr %s448, 64
        %s450 = scalar_lea.vmem [#allocation15], %s449
        // Predicated region
        $region69: #{final_atten_forward.1} parent=47 // pred_check
          %p451 = pneg %p197
        $region70: #{final_atten_forward.1} parent=47 // pred_check_branch
          %453 = sbr.rel (%p451) target = $region72
        $region71: #{final_atten_forward.1} parent=47 // pred_region
          %454 = dma.done %s447, 1024
        $region72: #{final_atten_forward.1} parent=47 // pred_fallthru
          _
        %455 = sfence
        %p456 = pneg %p56
        %p457 = pneg %p53
        %p458 = pneg %p77
        %p459 = pneg %p74
        %p460 = pneg %p98
        %p461 = pneg %p95
        %p462 = pneg %p119
        %p463 = pneg %p116
        %p464 = scmp.lt.s32.totalorder %s40, 1
        %s465 = scalar_select %p464, %s40, 1
        %s466 = smul.addr %s465, 8
        %s467 = smul.addr %s466, 8
        %s468 = scalar_lea.vmem %s4, %s467
        %p469 = pneg %p145
        %p470 = pneg %p142
        %s471 = sand.u32 %s158, 1
        %s472 = scalar_lea.sflag [#allocation6], %s471
        %s473 = sand.u32 %s158, 1
        %s474 = smul.addr %s473, 64
        %s475 = scalar_lea.vmem [#allocation14], %s474
        %p476 = pneg %p171
        %p477 = pneg %p168
        %s478 = sand.u32 %s184, 1
        %s479 = scalar_lea.sflag [#allocation16], %s478
        %s480 = sand.u32 %s184, 1
        %s481 = smul.addr %s480, 64
        %s482 = scalar_lea.vmem [#allocation15], %s481
        %p483 = pneg %p197
        %p484 = pneg %p194
        %p485 = pneg %p223
        %p486 = pneg %p220
        %s487 = sand.u32 %s210, 1
        %s488 = scalar_lea.sflag [#allocation7], %s487
        %s489 = sand.u32 %s210, 1
        %s490 = smul.addr %s489, 64
        %s491 = scalar_lea.vmem [#allocation17], %s490
        %p492 = pneg %p249
        %p493 = pneg %p246
        %s494 = sand.u32 %s40, 1
        %s495 = scalar_lea.sflag [#allocation19], %s494
        %s496 = sand.u32 %s236, 1
        %s497 = smul.addr %s496, 64
        %s498 = scalar_lea.vmem [#allocation18], %s497
        %p499 = pneg %p275
        %p500 = pneg %p272
        %s501 = sand.u32 %s40, 1
        %s502 = scalar_lea.sflag [#allocation19], %s501
        %s503 = sand.u32 %s262, 1
        %s504 = smul.addr %s503, 64
        %s505 = scalar_lea.vmem [#allocation20], %s504
        %p506 = pneg %p301
        %p507 = pneg %p298
        %s508 = sand.u32 %s288, 1
        %s509 = scalar_lea.sflag [#allocation22], %s508
        %s510 = sand.u32 %s288, 1
        %s511 = smul.addr %s510, 64
        %s512 = scalar_lea.vmem [#allocation21], %s511
        %p513 = scmp.lt.s32.totalorder %s40, 1
        %s514 = scalar_select %p513, %s40, 1
        %s515 = smul.addr %s514, 8
        %s516 = smul.addr %s515, 8
        %s517 = scalar_lea.vmem %s4, %s516
        %v518 = vld [vmem:[%s517] sm:$0xff]
        %v519 = vld [vmem:[%s517 + $0x8] sm:$0xff]
        %v520 = vld [vmem:[%s517 + $0x10] sm:$0xff]
        %v521 = vld [vmem:[%s517 + $0x18] sm:$0xff]
        %v522 = vld [vmem:[%s517 + $0x20] sm:$0xff]
        %v523 = vld [vmem:[%s517 + $0x28] sm:$0xff]
        %v524 = vld [vmem:[%s517 + $0x30] sm:$0xff]
        %v525 = vld [vmem:[%s517 + $0x38] sm:$0xff]
        %vm526 = vcmask 146432
        %527 = vst.msk [vmem:[#allocation2] sm:$0xff] %vm526, inf
        %528 = vst.msk [vmem:[#allocation2 + $0x8] sm:$0xff] %vm526, inf
        %vm529 = vcmask 140288
        %530 = vst.msk [vmem:[#allocation2 + $0x10] sm:$0x3] %vm529, inf
        %531 = vst.msk [vmem:[#allocation2 + $0x18] sm:$0xff] %vm526, inf
        %532 = vst.msk [vmem:[#allocation2 + $0x20] sm:$0xff] %vm526, inf
        %533 = vst.msk [vmem:[#allocation2 + $0x28] sm:$0x3] %vm529, inf
        %534 = vst.msk [vmem:[#allocation2 + $0x30] sm:$0xff] %vm526, inf
        %535 = vst.msk [vmem:[#allocation2 + $0x38] sm:$0xff] %vm526, inf
        %536 = vst.msk [vmem:[#allocation2 + $0x40] sm:$0x3] %vm529, inf
        %537 = vst.msk [vmem:[#allocation2 + $0x48] sm:$0xff] %vm526, inf
        %538 = vst.msk [vmem:[#allocation2 + $0x50] sm:$0xff] %vm526, inf
        %539 = vst.msk [vmem:[#allocation2 + $0x58] sm:$0x3] %vm529, inf
        %548 = vrot.lane.b32.xlu0 %v518, 1
        %v549 = vpop.permute.xlu0 %548
        %550 = vrot.lane.b32.xlu0 %v519, 1
        %v551 = vpop.permute.xlu0 %550
        %552 = vrot.lane.b32.xlu0 %v520, 1
        %v553 = vpop.permute.xlu0 %552
        %554 = vrot.lane.b32.xlu0 %v521, 1
        %v555 = vpop.permute.xlu0 %554
        %556 = vrot.lane.b32.xlu0 %v522, 1
        %v557 = vpop.permute.xlu0 %556
        %558 = vrot.lane.b32.xlu0 %v523, 1
        %v559 = vpop.permute.xlu0 %558
        %560 = vrot.lane.b32.xlu0 %v524, 1
        %v561 = vpop.permute.xlu0 %560
        %562 = vrot.lane.b32.xlu0 %v525, 1
        %v563 = vpop.permute.xlu0 %562
        %vm572 = vcmask 138248
        %573 = vst.msk [vmem:[#allocation2 + $0x1] sm:$0xff] %vm572, %v549
        %574 = vst.msk [vmem:[#allocation2 + $0x9] sm:$0xff] %vm572, %v551
        %575 = vst.msk [vmem:[#allocation2 + $0x19] sm:$0xff] %vm572, %v553
        %576 = vst.msk [vmem:[#allocation2 + $0x21] sm:$0xff] %vm572, %v555
        %577 = vst.msk [vmem:[#allocation2 + $0x31] sm:$0xff] %vm572, %v557
        %578 = vst.msk [vmem:[#allocation2 + $0x39] sm:$0xff] %vm572, %v559
        %579 = vst.msk [vmem:[#allocation2 + $0x49] sm:$0xff] %vm572, %v561
        %580 = vst.msk [vmem:[#allocation2 + $0x51] sm:$0xff] %vm572, %v563
        %v581 = vld [vmem:[#allocation2] sm:$0xff]
        %v582 = vld [vmem:[#allocation2 + $0x8] sm:$0xff]
        %v583 = vld [vmem:[#allocation2 + $0x18] sm:$0xff]
        %v584 = vld [vmem:[#allocation2 + $0x20] sm:$0xff]
        %v585 = vld [vmem:[#allocation2 + $0x30] sm:$0xff]
        %v586 = vld [vmem:[#allocation2 + $0x38] sm:$0xff]
        %v587 = vld [vmem:[#allocation2 + $0x48] sm:$0xff]
        %v588 = vld [vmem:[#allocation2 + $0x50] sm:$0xff]
        %597 = vrot.lane.b32.xlu0 %v581, 127
        %v598 = vpop.permute.xlu0 %597
        %599 = vrot.lane.b32.xlu0 %v582, 127
        %v600 = vpop.permute.xlu0 %599
        %601 = vrot.lane.b32.xlu0 %v583, 127
        %v602 = vpop.permute.xlu0 %601
        %603 = vrot.lane.b32.xlu0 %v584, 127
        %v604 = vpop.permute.xlu0 %603
        %605 = vrot.lane.b32.xlu0 %v585, 127
        %v606 = vpop.permute.xlu0 %605
        %607 = vrot.lane.b32.xlu0 %v586, 127
        %v608 = vpop.permute.xlu0 %607
        %609 = vrot.lane.b32.xlu0 %v587, 127
        %v610 = vpop.permute.xlu0 %609
        %611 = vrot.lane.b32.xlu0 %v588, 127
        %v612 = vpop.permute.xlu0 %611
        %v621 = vmin.f32 %v581, %v598
        %v622 = vmin.f32 %v582, %v600
        %v623 = vmin.f32 %v583, %v602
        %v624 = vmin.f32 %v584, %v604
        %v625 = vmin.f32 %v585, %v606
        %v626 = vmin.f32 %v586, %v608
        %v627 = vmin.f32 %v587, %v610
        %v628 = vmin.f32 %v588, %v612
        %629 = vrot.lane.b32.xlu0 %v581, 126
        %v630 = vpop.permute.xlu0 %629
        %631 = vrot.lane.b32.xlu0 %v582, 126
        %v632 = vpop.permute.xlu0 %631
        %633 = vrot.lane.b32.xlu0 %v583, 126
        %v634 = vpop.permute.xlu0 %633
        %635 = vrot.lane.b32.xlu0 %v584, 126
        %v636 = vpop.permute.xlu0 %635
        %637 = vrot.lane.b32.xlu0 %v585, 126
        %v638 = vpop.permute.xlu0 %637
        %639 = vrot.lane.b32.xlu0 %v586, 126
        %v640 = vpop.permute.xlu0 %639
        %641 = vrot.lane.b32.xlu0 %v587, 126
        %v642 = vpop.permute.xlu0 %641
        %643 = vrot.lane.b32.xlu0 %v588, 126
        %v644 = vpop.permute.xlu0 %643
        %v653 = vmin.f32 %v621, %v630
        %v654 = vmin.f32 %v622, %v632
        %v655 = vmin.f32 %v623, %v634
        %v656 = vmin.f32 %v624, %v636
        %v657 = vmin.f32 %v625, %v638
        %v658 = vmin.f32 %v626, %v640
        %v659 = vmin.f32 %v627, %v642
        %v660 = vmin.f32 %v628, %v644
        %v661 = vld [vmem:[#allocation2 + $0x1] sm:$0xff]
        %v662 = vld [vmem:[#allocation2 + $0x9] sm:$0xff]
        %v663 = vld [vmem:[#allocation2 + $0x19] sm:$0xff]
        %v664 = vld [vmem:[#allocation2 + $0x21] sm:$0xff]
        %v665 = vld [vmem:[#allocation2 + $0x31] sm:$0xff]
        %v666 = vld [vmem:[#allocation2 + $0x39] sm:$0xff]
        %v667 = vld [vmem:[#allocation2 + $0x49] sm:$0xff]
        %v668 = vld [vmem:[#allocation2 + $0x51] sm:$0xff]
        %v669 = vmin.f32 %v653, %v661
        %v670 = vmin.f32 %v654, %v662
        %v671 = vmin.f32 %v655, %v663
        %v672 = vmin.f32 %v656, %v664
        %v673 = vmin.f32 %v657, %v665
        %v674 = vmin.f32 %v658, %v666
        %v675 = vmin.f32 %v659, %v667
        %v676 = vmin.f32 %v660, %v668
        %685 = vrot.lane.b32.xlu0 %v661, 127
        %v686 = vpop.permute.xlu0 %685
        %687 = vrot.lane.b32.xlu0 %v662, 127
        %v688 = vpop.permute.xlu0 %687
        %689 = vrot.lane.b32.xlu0 %v663, 127
        %v690 = vpop.permute.xlu0 %689
        %691 = vrot.lane.b32.xlu0 %v664, 127
        %v692 = vpop.permute.xlu0 %691
        %693 = vrot.lane.b32.xlu0 %v665, 127
        %v694 = vpop.permute.xlu0 %693
        %695 = vrot.lane.b32.xlu0 %v666, 127
        %v696 = vpop.permute.xlu0 %695
        %697 = vrot.lane.b32.xlu0 %v667, 127
        %v698 = vpop.permute.xlu0 %697
        %699 = vrot.lane.b32.xlu0 %v668, 127
        %v700 = vpop.permute.xlu0 %699
        %v709 = vmin.f32 %v669, %v686
        %v710 = vmin.f32 %v670, %v688
        %v711 = vmin.f32 %v671, %v690
        %v712 = vmin.f32 %v672, %v692
        %v713 = vmin.f32 %v673, %v694
        %v714 = vmin.f32 %v674, %v696
        %v715 = vmin.f32 %v675, %v698
        %v716 = vmin.f32 %v676, %v700
        %717 = vrot.lane.b32.xlu0 %v661, 126
        %v718 = vpop.permute.xlu0 %717
        %719 = vrot.lane.b32.xlu0 %v662, 126
        %v720 = vpop.permute.xlu0 %719
        %721 = vrot.lane.b32.xlu0 %v663, 126
        %v722 = vpop.permute.xlu0 %721
        %723 = vrot.lane.b32.xlu0 %v664, 126
        %v724 = vpop.permute.xlu0 %723
        %725 = vrot.lane.b32.xlu0 %v665, 126
        %v726 = vpop.permute.xlu0 %725
        %727 = vrot.lane.b32.xlu0 %v666, 126
        %v728 = vpop.permute.xlu0 %727
        %729 = vrot.lane.b32.xlu0 %v667, 126
        %v730 = vpop.permute.xlu0 %729
        %731 = vrot.lane.b32.xlu0 %v668, 126
        %v732 = vpop.permute.xlu0 %731
        %v741 = vmin.f32 %v709, %v718
        %v742 = vmin.f32 %v710, %v720
        %v743 = vmin.f32 %v711, %v722
        %v744 = vmin.f32 %v712, %v724
        %v745 = vmin.f32 %v713, %v726
        %v746 = vmin.f32 %v714, %v728
        %v747 = vmin.f32 %v715, %v730
        %v748 = vmin.f32 %v716, %v732
        %v749 = vld [vmem:[#allocation2 + $0x2] sm:$0xff]
        %v750 = vld [vmem:[#allocation2 + $0xa] sm:$0xff]
        %v751 = vld [vmem:[#allocation2 + $0x1a] sm:$0xff]
        %v752 = vld [vmem:[#allocation2 + $0x22] sm:$0xff]
        %v753 = vld [vmem:[#allocation2 + $0x32] sm:$0xff]
        %v754 = vld [vmem:[#allocation2 + $0x3a] sm:$0xff]
        %v755 = vld [vmem:[#allocation2 + $0x4a] sm:$0xff]
        %v756 = vld [vmem:[#allocation2 + $0x52] sm:$0xff]
        %v757 = vmin.f32 %v741, %v749
        %v758 = vmin.f32 %v742, %v750
        %v759 = vmin.f32 %v743, %v751
        %v760 = vmin.f32 %v744, %v752
        %v761 = vmin.f32 %v745, %v753
        %v762 = vmin.f32 %v746, %v754
        %v763 = vmin.f32 %v747, %v755
        %v764 = vmin.f32 %v748, %v756
        %773 = vrot.lane.b32.xlu0 %v749, 127
        %v774 = vpop.permute.xlu0 %773
        %775 = vrot.lane.b32.xlu0 %v750, 127
        %v776 = vpop.permute.xlu0 %775
        %777 = vrot.lane.b32.xlu0 %v751, 127
        %v778 = vpop.permute.xlu0 %777
        %779 = vrot.lane.b32.xlu0 %v752, 127
        %v780 = vpop.permute.xlu0 %779
        %781 = vrot.lane.b32.xlu0 %v753, 127
        %v782 = vpop.permute.xlu0 %781
        %783 = vrot.lane.b32.xlu0 %v754, 127
        %v784 = vpop.permute.xlu0 %783
        %785 = vrot.lane.b32.xlu0 %v755, 127
        %v786 = vpop.permute.xlu0 %785
        %787 = vrot.lane.b32.xlu0 %v756, 127
        %v788 = vpop.permute.xlu0 %787
        %v797 = vmin.f32 %v757, %v774
        %v798 = vmin.f32 %v758, %v776
        %v799 = vmin.f32 %v759, %v778
        %v800 = vmin.f32 %v760, %v780
        %v801 = vmin.f32 %v761, %v782
        %v802 = vmin.f32 %v762, %v784
        %v803 = vmin.f32 %v763, %v786
        %v804 = vmin.f32 %v764, %v788
        %805 = vrot.lane.b32.xlu0 %v749, 126
        %v806 = vpop.permute.xlu0 %805
        %807 = vrot.lane.b32.xlu0 %v750, 126
        %v808 = vpop.permute.xlu0 %807
        %809 = vrot.lane.b32.xlu0 %v751, 126
        %v810 = vpop.permute.xlu0 %809
        %811 = vrot.lane.b32.xlu0 %v752, 126
        %v812 = vpop.permute.xlu0 %811
        %813 = vrot.lane.b32.xlu0 %v753, 126
        %v814 = vpop.permute.xlu0 %813
        %815 = vrot.lane.b32.xlu0 %v754, 126
        %v816 = vpop.permute.xlu0 %815
        %817 = vrot.lane.b32.xlu0 %v755, 126
        %v818 = vpop.permute.xlu0 %817
        %819 = vrot.lane.b32.xlu0 %v756, 126
        %v820 = vpop.permute.xlu0 %819
        %v829 = vmin.f32 %v797, %v806
        %v830 = vmin.f32 %v798, %v808
        %v831 = vmin.f32 %v799, %v810
        %v832 = vmin.f32 %v800, %v812
        %v833 = vmin.f32 %v801, %v814
        %v834 = vmin.f32 %v802, %v816
        %v835 = vmin.f32 %v803, %v818
        %v836 = vmin.f32 %v804, %v820
        %v837 = vsub.f32 %v518, %v829
        %v838 = vsub.f32 %v519, %v830
        %v839 = vsub.f32 %v520, %v831
        %v840 = vsub.f32 %v521, %v832
        %v841 = vsub.f32 %v522, %v833
        %v842 = vsub.f32 %v523, %v834
        %v843 = vsub.f32 %v524, %v835
        %v844 = vsub.f32 %v525, %v836
        %845 = vst.msk [vmem:[#allocation3] sm:$0xff] %vm526, 0.0
        %846 = vst.msk [vmem:[#allocation3 + $0x8] sm:$0xff] %vm526, 0.0
        %847 = vst.msk [vmem:[#allocation3 + $0x10] sm:$0x3] %vm529, 0.0
        %848 = vst.msk [vmem:[#allocation3 + $0x18] sm:$0xff] %vm526, 0.0
        %849 = vst.msk [vmem:[#allocation3 + $0x20] sm:$0xff] %vm526, 0.0
        %850 = vst.msk [vmem:[#allocation3 + $0x28] sm:$0x3] %vm529, 0.0
        %851 = vst.msk [vmem:[#allocation3 + $0x30] sm:$0xff] %vm526, 0.0
        %852 = vst.msk [vmem:[#allocation3 + $0x38] sm:$0xff] %vm526, 0.0
        %853 = vst.msk [vmem:[#allocation3 + $0x40] sm:$0x3] %vm529, 0.0
        %854 = vst.msk [vmem:[#allocation3 + $0x48] sm:$0xff] %vm526, 0.0
        %855 = vst.msk [vmem:[#allocation3 + $0x50] sm:$0xff] %vm526, 0.0
        %856 = vst.msk [vmem:[#allocation3 + $0x58] sm:$0x3] %vm529, 0.0
        %857 = vst.msk [vmem:[#allocation4] sm:$0xff] %vm526, 0.0
        %858 = vst.msk [vmem:[#allocation4 + $0x8] sm:$0xff] %vm526, 0.0
        %859 = vst.msk [vmem:[#allocation4 + $0x10] sm:$0x3] %vm529, 0.0
        %860 = vst.msk [vmem:[#allocation4 + $0x18] sm:$0xff] %vm526, 0.0
        %861 = vst.msk [vmem:[#allocation4 + $0x20] sm:$0xff] %vm526, 0.0
        %862 = vst.msk [vmem:[#allocation4 + $0x28] sm:$0x3] %vm529, 0.0
        %863 = vst.msk [vmem:[#allocation4 + $0x30] sm:$0xff] %vm526, 0.0
        %864 = vst.msk [vmem:[#allocation4 + $0x38] sm:$0xff] %vm526, 0.0
        %865 = vst.msk [vmem:[#allocation4 + $0x40] sm:$0x3] %vm529, 0.0
        %866 = vst.msk [vmem:[#allocation4 + $0x48] sm:$0xff] %vm526, 0.0
        %867 = vst.msk [vmem:[#allocation4 + $0x50] sm:$0xff] %vm526, 0.0
        %868 = vst.msk [vmem:[#allocation4 + $0x58] sm:$0x3] %vm529, 0.0
        %877 = vrot.lane.b32.xlu0 %v837, 1
        %v878 = vpop.permute.xlu0 %877
        %879 = vrot.lane.b32.xlu0 %v838, 1
        %v880 = vpop.permute.xlu0 %879
        %881 = vrot.lane.b32.xlu0 %v839, 1
        %v882 = vpop.permute.xlu0 %881
        %883 = vrot.lane.b32.xlu0 %v840, 1
        %v884 = vpop.permute.xlu0 %883
        %885 = vrot.lane.b32.xlu0 %v841, 1
        %v886 = vpop.permute.xlu0 %885
        %887 = vrot.lane.b32.xlu0 %v842, 1
        %v888 = vpop.permute.xlu0 %887
        %889 = vrot.lane.b32.xlu0 %v843, 1
        %v890 = vpop.permute.xlu0 %889
        %891 = vrot.lane.b32.xlu0 %v844, 1
        %v892 = vpop.permute.xlu0 %891
        %901 = vst.msk [vmem:[#allocation3 + $0x1] sm:$0xff] %vm572, %v878
        %902 = vst.msk [vmem:[#allocation3 + $0x9] sm:$0xff] %vm572, %v880
        %903 = vst.msk [vmem:[#allocation3 + $0x19] sm:$0xff] %vm572, %v882
        %904 = vst.msk [vmem:[#allocation3 + $0x21] sm:$0xff] %vm572, %v884
        %905 = vst.msk [vmem:[#allocation3 + $0x31] sm:$0xff] %vm572, %v886
        %906 = vst.msk [vmem:[#allocation3 + $0x39] sm:$0xff] %vm572, %v888
        %907 = vst.msk [vmem:[#allocation3 + $0x49] sm:$0xff] %vm572, %v890
        %908 = vst.msk [vmem:[#allocation3 + $0x51] sm:$0xff] %vm572, %v892
        %917 = vrot.lane.b32.xlu0 %v829, 1
        %v918 = vpop.permute.xlu0 %917
        %919 = vrot.lane.b32.xlu0 %v830, 1
        %v920 = vpop.permute.xlu0 %919
        %921 = vrot.lane.b32.xlu0 %v831, 1
        %v922 = vpop.permute.xlu0 %921
        %923 = vrot.lane.b32.xlu0 %v832, 1
        %v924 = vpop.permute.xlu0 %923
        %925 = vrot.lane.b32.xlu0 %v833, 1
        %v926 = vpop.permute.xlu0 %925
        %927 = vrot.lane.b32.xlu0 %v834, 1
        %v928 = vpop.permute.xlu0 %927
        %929 = vrot.lane.b32.xlu0 %v835, 1
        %v930 = vpop.permute.xlu0 %929
        %931 = vrot.lane.b32.xlu0 %v836, 1
        %v932 = vpop.permute.xlu0 %931
        %941 = vst.msk [vmem:[#allocation4 + $0x1] sm:$0xff] %vm572, %v918
        %942 = vst.msk [vmem:[#allocation4 + $0x9] sm:$0xff] %vm572, %v920
        %943 = vst.msk [vmem:[#allocation4 + $0x19] sm:$0xff] %vm572, %v922
        %944 = vst.msk [vmem:[#allocation4 + $0x21] sm:$0xff] %vm572, %v924
        %945 = vst.msk [vmem:[#allocation4 + $0x31] sm:$0xff] %vm572, %v926
        %946 = vst.msk [vmem:[#allocation4 + $0x39] sm:$0xff] %vm572, %v928
        %947 = vst.msk [vmem:[#allocation4 + $0x49] sm:$0xff] %vm572, %v930
        %948 = vst.msk [vmem:[#allocation4 + $0x51] sm:$0xff] %vm572, %v932
        %s949 = sld [smem:[#allocation9]]
        %v950 = vstv %s949
        %s951 = sld [smem:[#allocation9 + $0x1]]
        %v952 = vstv %s951
        %s953 = sld [smem:[#allocation9 + $0x2]]
        %v954 = vstv %s953
        %s955 = sld [smem:[#allocation9 + $0x3]]
        %v956 = vstv %s955
        %s957 = sld [smem:[#allocation12]]
        %v958 = vstv %s957
        %s959 = sld [smem:[#allocation12 + $0x1]]
        %v960 = vstv %s959
        %s961 = sld [smem:[#allocation12 + $0x2]]
        %v962 = vstv %s961
        %s963 = sld [smem:[#allocation12 + $0x3]]
        %v964 = vstv %s963
        %v965 = vld [vmem:[#allocation3] sm:$0xff]
        %v966 = vld [vmem:[#allocation3 + $0x8] sm:$0xff]
        %v967 = vld [vmem:[#allocation4] sm:$0xff]
        %v968 = vld [vmem:[#allocation4 + $0x8] sm:$0xff]
        %s969 = sld [smem:[#allocation5]]
        %v970 = vstv %s969
        %v971 = vmul.f32 %v970, %v965
        %v972 = vmul.f32 %v970, %v966
        %v973 = vadd.f32 %v950, %v971
        %v974 = vadd.f32 %v950, %v972
        %s975 = sld [smem:[#allocation11]]
        %v976 = vstv %s975
        %v977 = vmul.f32 %v976, %v967
        %v978 = vmul.f32 %v976, %v968
        %v979 = vadd.f32 %v958, %v977
        %v980 = vadd.f32 %v958, %v978
        %s981 = sld [smem:[#allocation5 + $0x1]]
        %v982 = vstv %s981
        %v983 = vmul.f32 %v982, %v965
        %v984 = vmul.f32 %v982, %v966
        %v985 = vadd.f32 %v952, %v983
        %v986 = vadd.f32 %v952, %v984
        %s987 = sld [smem:[#allocation11 + $0x1]]
        %v988 = vstv %s987
        %v989 = vmul.f32 %v988, %v967
        %v990 = vmul.f32 %v988, %v968
        %v991 = vadd.f32 %v960, %v989
        %v992 = vadd.f32 %v960, %v990
        %s993 = sld [smem:[#allocation5 + $0x2]]
        %v994 = vstv %s993
        %v995 = vmul.f32 %v994, %v965
        %v996 = vmul.f32 %v994, %v966
        %v997 = vadd.f32 %v954, %v995
        %v998 = vadd.f32 %v954, %v996
        %s999 = sld [smem:[#allocation11 + $0x2]]
        %v1000 = vstv %s999
        %v1001 = vmul.f32 %v1000, %v967
        %v1002 = vmul.f32 %v1000, %v968
        %v1003 = vadd.f32 %v962, %v1001
        %v1004 = vadd.f32 %v962, %v1002
        %s1005 = sld [smem:[#allocation5 + $0x3]]
        %v1006 = vstv %s1005
        %v1007 = vmul.f32 %v1006, %v965
        %v1008 = vmul.f32 %v1006, %v966
        %v1009 = vadd.f32 %v956, %v1007
        %v1010 = vadd.f32 %v956, %v1008
        %s1011 = sld [smem:[#allocation11 + $0x3]]
        %v1012 = vstv %s1011
        %v1013 = vmul.f32 %v1012, %v967
        %v1014 = vmul.f32 %v1012, %v968
        %v1015 = vadd.f32 %v964, %v1013
        %v1016 = vadd.f32 %v964, %v1014
        %s1017 = scalar_lea.vmem [#allocation3], 24
        %v1018 = vld [vmem:[%s1017] sm:$0xff]
        %v1019 = vld [vmem:[%s1017 + $0x8] sm:$0xff]
        %s1020 = scalar_lea.vmem [#allocation4], 24
        %v1021 = vld [vmem:[%s1020] sm:$0xff]
        %v1022 = vld [vmem:[%s1020 + $0x8] sm:$0xff]
        %s1023 = sld [smem:[#allocation5 + $0x4]]
        %v1024 = vstv %s1023
        %v1025 = vmul.f32 %v1024, %v1018
        %v1026 = vmul.f32 %v1024, %v1019
        %v1027 = vadd.f32 %v973, %v1025
        %v1028 = vadd.f32 %v974, %v1026
        %s1029 = sld [smem:[#allocation11 + $0x4]]
        %v1030 = vstv %s1029
        %v1031 = vmul.f32 %v1030, %v1021
        %v1032 = vmul.f32 %v1030, %v1022
        %v1033 = vadd.f32 %v979, %v1031
        %v1034 = vadd.f32 %v980, %v1032
        %s1035 = sld [smem:[#allocation5 + $0x5]]
        %v1036 = vstv %s1035
        %v1037 = vmul.f32 %v1036, %v1018
        %v1038 = vmul.f32 %v1036, %v1019
        %v1039 = vadd.f32 %v985, %v1037
        %v1040 = vadd.f32 %v986, %v1038
        %s1041 = sld [smem:[#allocation11 + $0x5]]
        %v1042 = vstv %s1041
        %v1043 = vmul.f32 %v1042, %v1021
        %v1044 = vmul.f32 %v1042, %v1022
        %v1045 = vadd.f32 %v991, %v1043
        %v1046 = vadd.f32 %v992, %v1044
        %s1047 = sld [smem:[#allocation5 + $0x6]]
        %v1048 = vstv %s1047
        %v1049 = vmul.f32 %v1048, %v1018
        %v1050 = vmul.f32 %v1048, %v1019
        %v1051 = vadd.f32 %v997, %v1049
        %v1052 = vadd.f32 %v998, %v1050
        %s1053 = sld [smem:[#allocation11 + $0x6]]
        %v1054 = vstv %s1053
        %v1055 = vmul.f32 %v1054, %v1021
        %v1056 = vmul.f32 %v1054, %v1022
        %v1057 = vadd.f32 %v1003, %v1055
        %v1058 = vadd.f32 %v1004, %v1056
        %s1059 = sld [smem:[#allocation5 + $0x7]]
        %v1060 = vstv %s1059
        %v1061 = vmul.f32 %v1060, %v1018
        %v1062 = vmul.f32 %v1060, %v1019
        %v1063 = vadd.f32 %v1009, %v1061
        %v1064 = vadd.f32 %v1010, %v1062
        %s1065 = sld [smem:[#allocation11 + $0x7]]
        %v1066 = vstv %s1065
        %v1067 = vmul.f32 %v1066, %v1021
        %v1068 = vmul.f32 %v1066, %v1022
        %v1069 = vadd.f32 %v1015, %v1067
        %v1070 = vadd.f32 %v1016, %v1068
        %s1071 = scalar_lea.vmem [#allocation3], 48
        %v1072 = vld [vmem:[%s1071] sm:$0xff]
        %v1073 = vld [vmem:[%s1071 + $0x8] sm:$0xff]
        %s1074 = scalar_lea.vmem [#allocation4], 48
        %v1075 = vld [vmem:[%s1074] sm:$0xff]
        %v1076 = vld [vmem:[%s1074 + $0x8] sm:$0xff]
        %s1077 = sld [smem:[#allocation5 + $0x8]]
        %v1078 = vstv %s1077
        %v1079 = vmul.f32 %v1078, %v1072
        %v1080 = vmul.f32 %v1078, %v1073
        %v1081 = vadd.f32 %v1027, %v1079
        %v1082 = vadd.f32 %v1028, %v1080
        %s1083 = sld [smem:[#allocation11 + $0x8]]
        %v1084 = vstv %s1083
        %v1085 = vmul.f32 %v1084, %v1075
        %v1086 = vmul.f32 %v1084, %v1076
        %v1087 = vadd.f32 %v1033, %v1085
        %v1088 = vadd.f32 %v1034, %v1086
        %s1089 = sld [smem:[#allocation5 + $0x9]]
        %v1090 = vstv %s1089
        %v1091 = vmul.f32 %v1090, %v1072
        %v1092 = vmul.f32 %v1090, %v1073
        %v1093 = vadd.f32 %v1039, %v1091
        %v1094 = vadd.f32 %v1040, %v1092
        %s1095 = sld [smem:[#allocation11 + $0x9]]
        %v1096 = vstv %s1095
        %v1097 = vmul.f32 %v1096, %v1075
        %v1098 = vmul.f32 %v1096, %v1076
        %v1099 = vadd.f32 %v1045, %v1097
        %v1100 = vadd.f32 %v1046, %v1098
        %s1101 = sld [smem:[#allocation5 + $0xa]]
        %v1102 = vstv %s1101
        %v1103 = vmul.f32 %v1102, %v1072
        %v1104 = vmul.f32 %v1102, %v1073
        %v1105 = vadd.f32 %v1051, %v1103
        %v1106 = vadd.f32 %v1052, %v1104
        %s1107 = sld [smem:[#allocation11 + $0xa]]
        %v1108 = vstv %s1107
        %v1109 = vmul.f32 %v1108, %v1075
        %v1110 = vmul.f32 %v1108, %v1076
        %v1111 = vadd.f32 %v1057, %v1109
        %v1112 = vadd.f32 %v1058, %v1110
        %s1113 = sld [smem:[#allocation5 + $0xb]]
        %v1114 = vstv %s1113
        %v1115 = vmul.f32 %v1114, %v1072
        %v1116 = vmul.f32 %v1114, %v1073
        %v1117 = vadd.f32 %v1063, %v1115
        %v1118 = vadd.f32 %v1064, %v1116
        %s1119 = sld [smem:[#allocation11 + $0xb]]
        %v1120 = vstv %s1119
        %v1121 = vmul.f32 %v1120, %v1075
        %v1122 = vmul.f32 %v1120, %v1076
        %v1123 = vadd.f32 %v1069, %v1121
        %v1124 = vadd.f32 %v1070, %v1122
        %s1125 = scalar_lea.vmem [#allocation3], 72
        %v1126 = vld [vmem:[%s1125] sm:$0xff]
        %v1127 = vld [vmem:[%s1125 + $0x8] sm:$0xff]
        %s1128 = scalar_lea.vmem [#allocation4], 72
        %v1129 = vld [vmem:[%s1128] sm:$0xff]
        %v1130 = vld [vmem:[%s1128 + $0x8] sm:$0xff]
        %s1131 = sld [smem:[#allocation5 + $0xc]]
        %v1132 = vstv %s1131
        %v1133 = vmul.f32 %v1132, %v1126
        %v1134 = vmul.f32 %v1132, %v1127
        %v1135 = vadd.f32 %v1081, %v1133
        %v1136 = vadd.f32 %v1082, %v1134
        %s1137 = sld [smem:[#allocation11 + $0xc]]
        %v1138 = vstv %s1137
        %v1139 = vmul.f32 %v1138, %v1129
        %v1140 = vmul.f32 %v1138, %v1130
        %v1141 = vadd.f32 %v1087, %v1139
        %v1142 = vadd.f32 %v1088, %v1140
        %s1143 = sld [smem:[#allocation5 + $0xd]]
        %v1144 = vstv %s1143
        %v1145 = vmul.f32 %v1144, %v1126
        %v1146 = vmul.f32 %v1144, %v1127
        %v1147 = vadd.f32 %v1093, %v1145
        %v1148 = vadd.f32 %v1094, %v1146
        %s1149 = sld [smem:[#allocation11 + $0xd]]
        %v1150 = vstv %s1149
        %v1151 = vmul.f32 %v1150, %v1129
        %v1152 = vmul.f32 %v1150, %v1130
        %v1153 = vadd.f32 %v1099, %v1151
        %v1154 = vadd.f32 %v1100, %v1152
        %s1155 = sld [smem:[#allocation5 + $0xe]]
        %v1156 = vstv %s1155
        %v1157 = vmul.f32 %v1156, %v1126
        %v1158 = vmul.f32 %v1156, %v1127
        %v1159 = vadd.f32 %v1105, %v1157
        %v1160 = vadd.f32 %v1106, %v1158
        %s1161 = sld [smem:[#allocation11 + $0xe]]
        %v1162 = vstv %s1161
        %v1163 = vmul.f32 %v1162, %v1129
        %v1164 = vmul.f32 %v1162, %v1130
        %v1165 = vadd.f32 %v1111, %v1163
        %v1166 = vadd.f32 %v1112, %v1164
        %s1167 = sld [smem:[#allocation5 + $0xf]]
        %v1168 = vstv %s1167
        %v1169 = vmul.f32 %v1168, %v1126
        %v1170 = vmul.f32 %v1168, %v1127
        %v1171 = vadd.f32 %v1117, %v1169
        %v1172 = vadd.f32 %v1118, %v1170
        %s1173 = sld [smem:[#allocation11 + $0xf]]
        %v1174 = vstv %s1173
        %v1175 = vmul.f32 %v1174, %v1129
        %v1176 = vmul.f32 %v1174, %v1130
        %v1177 = vadd.f32 %v1123, %v1175
        %v1178 = vadd.f32 %v1124, %v1176
        %s1179 = sld [smem:[#allocation5 + $0x10]]
        %v1180 = vstv %s1179
        %v1181 = vmul.f32 %v1180, %v965
        %v1182 = vmul.f32 %v1180, %v966
        %1185 = vrot.lane.b32.xlu0 %v1181, 127
        %v1186 = vpop.permute.xlu0 %1185
        %1187 = vrot.lane.b32.xlu0 %v1182, 127
        %v1188 = vpop.permute.xlu0 %1187
        %v1191 = vadd.f32 %v1135, %v1186
        %v1192 = vadd.f32 %v1136, %v1188
        %s1193 = sld [smem:[#allocation11 + $0x10]]
        %v1194 = vstv %s1193
        %v1195 = vmul.f32 %v1194, %v967
        %v1196 = vmul.f32 %v1194, %v968
        %1199 = vrot.lane.b32.xlu0 %v1195, 127
        %v1200 = vpop.permute.xlu0 %1199
        %1201 = vrot.lane.b32.xlu0 %v1196, 127
        %v1202 = vpop.permute.xlu0 %1201
        %v1205 = vadd.f32 %v1141, %v1200
        %v1206 = vadd.f32 %v1142, %v1202
        %s1207 = sld [smem:[#allocation5 + $0x11]]
        %v1208 = vstv %s1207
        %v1209 = vmul.f32 %v1208, %v965
        %v1210 = vmul.f32 %v1208, %v966
        %1213 = vrot.lane.b32.xlu0 %v1209, 127
        %v1214 = vpop.permute.xlu0 %1213
        %1215 = vrot.lane.b32.xlu0 %v1210, 127
        %v1216 = vpop.permute.xlu0 %1215
        %v1219 = vadd.f32 %v1147, %v1214
        %v1220 = vadd.f32 %v1148, %v1216
        %s1221 = sld [smem:[#allocation11 + $0x11]]
        %v1222 = vstv %s1221
        %v1223 = vmul.f32 %v1222, %v967
        %v1224 = vmul.f32 %v1222, %v968
        %1227 = vrot.lane.b32.xlu0 %v1223, 127
        %v1228 = vpop.permute.xlu0 %1227
        %1229 = vrot.lane.b32.xlu0 %v1224, 127
        %v1230 = vpop.permute.xlu0 %1229
        %v1233 = vadd.f32 %v1153, %v1228
        %v1234 = vadd.f32 %v1154, %v1230
        %s1235 = sld [smem:[#allocation5 + $0x12]]
        %v1236 = vstv %s1235
        %v1237 = vmul.f32 %v1236, %v965
        %v1238 = vmul.f32 %v1236, %v966
        %1241 = vrot.lane.b32.xlu0 %v1237, 127
        %v1242 = vpop.permute.xlu0 %1241
        %1243 = vrot.lane.b32.xlu0 %v1238, 127
        %v1244 = vpop.permute.xlu0 %1243
        %v1247 = vadd.f32 %v1159, %v1242
        %v1248 = vadd.f32 %v1160, %v1244
        %s1249 = sld [smem:[#allocation11 + $0x12]]
        %v1250 = vstv %s1249
        %v1251 = vmul.f32 %v1250, %v967
        %v1252 = vmul.f32 %v1250, %v968
        %1255 = vrot.lane.b32.xlu0 %v1251, 127
        %v1256 = vpop.permute.xlu0 %1255
        %1257 = vrot.lane.b32.xlu0 %v1252, 127
        %v1258 = vpop.permute.xlu0 %1257
        %v1261 = vadd.f32 %v1165, %v1256
        %v1262 = vadd.f32 %v1166, %v1258
        %s1263 = sld [smem:[#allocation5 + $0x13]]
        %v1264 = vstv %s1263
        %v1265 = vmul.f32 %v1264, %v965
        %v1266 = vmul.f32 %v1264, %v966
        %1269 = vrot.lane.b32.xlu0 %v1265, 127
        %v1270 = vpop.permute.xlu0 %1269
        %1271 = vrot.lane.b32.xlu0 %v1266, 127
        %v1272 = vpop.permute.xlu0 %1271
        %v1275 = vadd.f32 %v1171, %v1270
        %v1276 = vadd.f32 %v1172, %v1272
        %s1277 = sld [smem:[#allocation11 + $0x13]]
        %v1278 = vstv %s1277
        %v1279 = vmul.f32 %v1278, %v967
        %v1280 = vmul.f32 %v1278, %v968
        %1283 = vrot.lane.b32.xlu0 %v1279, 127
        %v1284 = vpop.permute.xlu0 %1283
        %1285 = vrot.lane.b32.xlu0 %v1280, 127
        %v1286 = vpop.permute.xlu0 %1285
        %v1289 = vadd.f32 %v1177, %v1284
        %v1290 = vadd.f32 %v1178, %v1286
        %s1291 = sld [smem:[#allocation5 + $0x14]]
        %v1292 = vstv %s1291
        %v1293 = vmul.f32 %v1292, %v1018
        %v1294 = vmul.f32 %v1292, %v1019
        %1297 = vrot.lane.b32.xlu0 %v1293, 127
        %v1298 = vpop.permute.xlu0 %1297
        %1299 = vrot.lane.b32.xlu0 %v1294, 127
        %v1300 = vpop.permute.xlu0 %1299
        %v1303 = vadd.f32 %v1191, %v1298
        %v1304 = vadd.f32 %v1192, %v1300
        %s1305 = sld [smem:[#allocation11 + $0x14]]
        %v1306 = vstv %s1305
        %v1307 = vmul.f32 %v1306, %v1021
        %v1308 = vmul.f32 %v1306, %v1022
        %1311 = vrot.lane.b32.xlu0 %v1307, 127
        %v1312 = vpop.permute.xlu0 %1311
        %1313 = vrot.lane.b32.xlu0 %v1308, 127
        %v1314 = vpop.permute.xlu0 %1313
        %v1317 = vadd.f32 %v1205, %v1312
        %v1318 = vadd.f32 %v1206, %v1314
        %s1319 = sld [smem:[#allocation5 + $0x15]]
        %v1320 = vstv %s1319
        %v1321 = vmul.f32 %v1320, %v1018
        %v1322 = vmul.f32 %v1320, %v1019
        %1325 = vrot.lane.b32.xlu0 %v1321, 127
        %v1326 = vpop.permute.xlu0 %1325
        %1327 = vrot.lane.b32.xlu0 %v1322, 127
        %v1328 = vpop.permute.xlu0 %1327
        %v1331 = vadd.f32 %v1219, %v1326
        %v1332 = vadd.f32 %v1220, %v1328
        %s1333 = sld [smem:[#allocation11 + $0x15]]
        %v1334 = vstv %s1333
        %v1335 = vmul.f32 %v1334, %v1021
        %v1336 = vmul.f32 %v1334, %v1022
        %1339 = vrot.lane.b32.xlu0 %v1335, 127
        %v1340 = vpop.permute.xlu0 %1339
        %1341 = vrot.lane.b32.xlu0 %v1336, 127
        %v1342 = vpop.permute.xlu0 %1341
        %v1345 = vadd.f32 %v1233, %v1340
        %v1346 = vadd.f32 %v1234, %v1342
        %s1347 = sld [smem:[#allocation5 + $0x16]]
        %v1348 = vstv %s1347
        %v1349 = vmul.f32 %v1348, %v1018
        %v1350 = vmul.f32 %v1348, %v1019
        %1353 = vrot.lane.b32.xlu0 %v1349, 127
        %v1354 = vpop.permute.xlu0 %1353
        %1355 = vrot.lane.b32.xlu0 %v1350, 127
        %v1356 = vpop.permute.xlu0 %1355
        %v1359 = vadd.f32 %v1247, %v1354
        %v1360 = vadd.f32 %v1248, %v1356
        %s1361 = sld [smem:[#allocation11 + $0x16]]
        %v1362 = vstv %s1361
        %v1363 = vmul.f32 %v1362, %v1021
        %v1364 = vmul.f32 %v1362, %v1022
        %1367 = vrot.lane.b32.xlu0 %v1363, 127
        %v1368 = vpop.permute.xlu0 %1367
        %1369 = vrot.lane.b32.xlu0 %v1364, 127
        %v1370 = vpop.permute.xlu0 %1369
        %v1373 = vadd.f32 %v1261, %v1368
        %v1374 = vadd.f32 %v1262, %v1370
        %s1375 = sld [smem:[#allocation5 + $0x17]]
        %v1376 = vstv %s1375
        %v1377 = vmul.f32 %v1376, %v1018
        %v1378 = vmul.f32 %v1376, %v1019
        %1381 = vrot.lane.b32.xlu0 %v1377, 127
        %v1382 = vpop.permute.xlu0 %1381
        %1383 = vrot.lane.b32.xlu0 %v1378, 127
        %v1384 = vpop.permute.xlu0 %1383
        %v1387 = vadd.f32 %v1275, %v1382
        %v1388 = vadd.f32 %v1276, %v1384
        %s1389 = sld [smem:[#allocation11 + $0x17]]
        %v1390 = vstv %s1389
        %v1391 = vmul.f32 %v1390, %v1021
        %v1392 = vmul.f32 %v1390, %v1022
        %1395 = vrot.lane.b32.xlu0 %v1391, 127
        %v1396 = vpop.permute.xlu0 %1395
        %1397 = vrot.lane.b32.xlu0 %v1392, 127
        %v1398 = vpop.permute.xlu0 %1397
        %v1401 = vadd.f32 %v1289, %v1396
        %v1402 = vadd.f32 %v1290, %v1398
        %s1403 = sld [smem:[#allocation5 + $0x18]]
        %v1404 = vstv %s1403
        %v1405 = vmul.f32 %v1404, %v1072
        %v1406 = vmul.f32 %v1404, %v1073
        %1409 = vrot.lane.b32.xlu0 %v1405, 127
        %v1410 = vpop.permute.xlu0 %1409
        %1411 = vrot.lane.b32.xlu0 %v1406, 127
        %v1412 = vpop.permute.xlu0 %1411
        %v1415 = vadd.f32 %v1303, %v1410
        %v1416 = vadd.f32 %v1304, %v1412
        %s1417 = sld [smem:[#allocation11 + $0x18]]
        %v1418 = vstv %s1417
        %v1419 = vmul.f32 %v1418, %v1075
        %v1420 = vmul.f32 %v1418, %v1076
        %1423 = vrot.lane.b32.xlu0 %v1419, 127
        %v1424 = vpop.permute.xlu0 %1423
        %1425 = vrot.lane.b32.xlu0 %v1420, 127
        %v1426 = vpop.permute.xlu0 %1425
        %v1429 = vadd.f32 %v1317, %v1424
        %v1430 = vadd.f32 %v1318, %v1426
        %s1431 = sld [smem:[#allocation5 + $0x19]]
        %v1432 = vstv %s1431
        %v1433 = vmul.f32 %v1432, %v1072
        %v1434 = vmul.f32 %v1432, %v1073
        %1437 = vrot.lane.b32.xlu0 %v1433, 127
        %v1438 = vpop.permute.xlu0 %1437
        %1439 = vrot.lane.b32.xlu0 %v1434, 127
        %v1440 = vpop.permute.xlu0 %1439
        %v1443 = vadd.f32 %v1331, %v1438
        %v1444 = vadd.f32 %v1332, %v1440
        %s1445 = sld [smem:[#allocation11 + $0x19]]
        %v1446 = vstv %s1445
        %v1447 = vmul.f32 %v1446, %v1075
        %v1448 = vmul.f32 %v1446, %v1076
        %1451 = vrot.lane.b32.xlu0 %v1447, 127
        %v1452 = vpop.permute.xlu0 %1451
        %1453 = vrot.lane.b32.xlu0 %v1448, 127
        %v1454 = vpop.permute.xlu0 %1453
        %v1457 = vadd.f32 %v1345, %v1452
        %v1458 = vadd.f32 %v1346, %v1454
        %s1459 = sld [smem:[#allocation5 + $0x1a]]
        %v1460 = vstv %s1459
        %v1461 = vmul.f32 %v1460, %v1072
        %v1462 = vmul.f32 %v1460, %v1073
        %1465 = vrot.lane.b32.xlu0 %v1461, 127
        %v1466 = vpop.permute.xlu0 %1465
        %1467 = vrot.lane.b32.xlu0 %v1462, 127
        %v1468 = vpop.permute.xlu0 %1467
        %v1471 = vadd.f32 %v1359, %v1466
        %v1472 = vadd.f32 %v1360, %v1468
        %s1473 = sld [smem:[#allocation11 + $0x1a]]
        %v1474 = vstv %s1473
        %v1475 = vmul.f32 %v1474, %v1075
        %v1476 = vmul.f32 %v1474, %v1076
        %1479 = vrot.lane.b32.xlu0 %v1475, 127
        %v1480 = vpop.permute.xlu0 %1479
        %1481 = vrot.lane.b32.xlu0 %v1476, 127
        %v1482 = vpop.permute.xlu0 %1481
        %v1485 = vadd.f32 %v1373, %v1480
        %v1486 = vadd.f32 %v1374, %v1482
        %s1487 = sld [smem:[#allocation5 + $0x1b]]
        %v1488 = vstv %s1487
        %v1489 = vmul.f32 %v1488, %v1072
        %v1490 = vmul.f32 %v1488, %v1073
        %1493 = vrot.lane.b32.xlu0 %v1489, 127
        %v1494 = vpop.permute.xlu0 %1493
        %1495 = vrot.lane.b32.xlu0 %v1490, 127
        %v1496 = vpop.permute.xlu0 %1495
        %v1499 = vadd.f32 %v1387, %v1494
        %v1500 = vadd.f32 %v1388, %v1496
        %s1501 = sld [smem:[#allocation11 + $0x1b]]
        %v1502 = vstv %s1501
        %v1503 = vmul.f32 %v1502, %v1075
        %v1504 = vmul.f32 %v1502, %v1076
        %1507 = vrot.lane.b32.xlu0 %v1503, 127
        %v1508 = vpop.permute.xlu0 %1507
        %1509 = vrot.lane.b32.xlu0 %v1504, 127
        %v1510 = vpop.permute.xlu0 %1509
        %v1513 = vadd.f32 %v1401, %v1508
        %v1514 = vadd.f32 %v1402, %v1510
        %s1515 = sld [smem:[#allocation5 + $0x1c]]
        %v1516 = vstv %s1515
        %v1517 = vmul.f32 %v1516, %v1126
        %v1518 = vmul.f32 %v1516, %v1127
        %1521 = vrot.lane.b32.xlu0 %v1517, 127
        %v1522 = vpop.permute.xlu0 %1521
        %1523 = vrot.lane.b32.xlu0 %v1518, 127
        %v1524 = vpop.permute.xlu0 %1523
        %v1527 = vadd.f32 %v1415, %v1522
        %v1528 = vadd.f32 %v1416, %v1524
        %s1529 = sld [smem:[#allocation11 + $0x1c]]
        %v1530 = vstv %s1529
        %v1531 = vmul.f32 %v1530, %v1129
        %v1532 = vmul.f32 %v1530, %v1130
        %1535 = vrot.lane.b32.xlu0 %v1531, 127
        %v1536 = vpop.permute.xlu0 %1535
        %1537 = vrot.lane.b32.xlu0 %v1532, 127
        %v1538 = vpop.permute.xlu0 %1537
        %v1541 = vadd.f32 %v1429, %v1536
        %v1542 = vadd.f32 %v1430, %v1538
        %s1543 = sld [smem:[#allocation5 + $0x1d]]
        %v1544 = vstv %s1543
        %v1545 = vmul.f32 %v1544, %v1126
        %v1546 = vmul.f32 %v1544, %v1127
        %1549 = vrot.lane.b32.xlu0 %v1545, 127
        %v1550 = vpop.permute.xlu0 %1549
        %1551 = vrot.lane.b32.xlu0 %v1546, 127
        %v1552 = vpop.permute.xlu0 %1551
        %v1555 = vadd.f32 %v1443, %v1550
        %v1556 = vadd.f32 %v1444, %v1552
        %s1557 = sld [smem:[#allocation11 + $0x1d]]
        %v1558 = vstv %s1557
        %v1559 = vmul.f32 %v1558, %v1129
        %v1560 = vmul.f32 %v1558, %v1130
        %1563 = vrot.lane.b32.xlu0 %v1559, 127
        %v1564 = vpop.permute.xlu0 %1563
        %1565 = vrot.lane.b32.xlu0 %v1560, 127
        %v1566 = vpop.permute.xlu0 %1565
        %v1569 = vadd.f32 %v1457, %v1564
        %v1570 = vadd.f32 %v1458, %v1566
        %s1571 = sld [smem:[#allocation5 + $0x1e]]
        %v1572 = vstv %s1571
        %v1573 = vmul.f32 %v1572, %v1126
        %v1574 = vmul.f32 %v1572, %v1127
        %1577 = vrot.lane.b32.xlu0 %v1573, 127
        %v1578 = vpop.permute.xlu0 %1577
        %1579 = vrot.lane.b32.xlu0 %v1574, 127
        %v1580 = vpop.permute.xlu0 %1579
        %v1583 = vadd.f32 %v1471, %v1578
        %v1584 = vadd.f32 %v1472, %v1580
        %s1585 = sld [smem:[#allocation11 + $0x1e]]
        %v1586 = vstv %s1585
        %v1587 = vmul.f32 %v1586, %v1129
        %v1588 = vmul.f32 %v1586, %v1130
        %1591 = vrot.lane.b32.xlu0 %v1587, 127
        %v1592 = vpop.permute.xlu0 %1591
        %1593 = vrot.lane.b32.xlu0 %v1588, 127
        %v1594 = vpop.permute.xlu0 %1593
        %v1597 = vadd.f32 %v1485, %v1592
        %v1598 = vadd.f32 %v1486, %v1594
        %s1599 = sld [smem:[#allocation5 + $0x1f]]
        %v1600 = vstv %s1599
        %v1601 = vmul.f32 %v1600, %v1126
        %v1602 = vmul.f32 %v1600, %v1127
        %1605 = vrot.lane.b32.xlu0 %v1601, 127
        %v1606 = vpop.permute.xlu0 %1605
        %1607 = vrot.lane.b32.xlu0 %v1602, 127
        %v1608 = vpop.permute.xlu0 %1607
        %v1611 = vadd.f32 %v1499, %v1606
        %v1612 = vadd.f32 %v1500, %v1608
        %s1613 = sld [smem:[#allocation11 + $0x1f]]
        %v1614 = vstv %s1613
        %v1615 = vmul.f32 %v1614, %v1129
        %v1616 = vmul.f32 %v1614, %v1130
        %1619 = vrot.lane.b32.xlu0 %v1615, 127
        %v1620 = vpop.permute.xlu0 %1619
        %1621 = vrot.lane.b32.xlu0 %v1616, 127
        %v1622 = vpop.permute.xlu0 %1621
        %v1625 = vadd.f32 %v1513, %v1620
        %v1626 = vadd.f32 %v1514, %v1622
        %s1627 = sld [smem:[#allocation5 + $0x20]]
        %v1628 = vstv %s1627
        %v1629 = vmul.f32 %v1628, %v965
        %v1630 = vmul.f32 %v1628, %v966
        %1633 = vrot.lane.b32.xlu0 %v1629, 126
        %v1634 = vpop.permute.xlu0 %1633
        %1635 = vrot.lane.b32.xlu0 %v1630, 126
        %v1636 = vpop.permute.xlu0 %1635
        %v1639 = vadd.f32 %v1527, %v1634
        %v1640 = vadd.f32 %v1528, %v1636
        %s1641 = sld [smem:[#allocation11 + $0x20]]
        %v1642 = vstv %s1641
        %v1643 = vmul.f32 %v1642, %v967
        %v1644 = vmul.f32 %v1642, %v968
        %1647 = vrot.lane.b32.xlu0 %v1643, 126
        %v1648 = vpop.permute.xlu0 %1647
        %1649 = vrot.lane.b32.xlu0 %v1644, 126
        %v1650 = vpop.permute.xlu0 %1649
        %v1653 = vadd.f32 %v1541, %v1648
        %v1654 = vadd.f32 %v1542, %v1650
        %s1655 = sld [smem:[#allocation5 + $0x21]]
        %v1656 = vstv %s1655
        %v1657 = vmul.f32 %v1656, %v965
        %v1658 = vmul.f32 %v1656, %v966
        %1661 = vrot.lane.b32.xlu0 %v1657, 126
        %v1662 = vpop.permute.xlu0 %1661
        %1663 = vrot.lane.b32.xlu0 %v1658, 126
        %v1664 = vpop.permute.xlu0 %1663
        %v1667 = vadd.f32 %v1555, %v1662
        %v1668 = vadd.f32 %v1556, %v1664
        %s1669 = sld [smem:[#allocation11 + $0x21]]
        %v1670 = vstv %s1669
        %v1671 = vmul.f32 %v1670, %v967
        %v1672 = vmul.f32 %v1670, %v968
        %1675 = vrot.lane.b32.xlu0 %v1671, 126
        %v1676 = vpop.permute.xlu0 %1675
        %1677 = vrot.lane.b32.xlu0 %v1672, 126
        %v1678 = vpop.permute.xlu0 %1677
        %v1681 = vadd.f32 %v1569, %v1676
        %v1682 = vadd.f32 %v1570, %v1678
        %s1683 = sld [smem:[#allocation5 + $0x22]]
        %v1684 = vstv %s1683
        %v1685 = vmul.f32 %v1684, %v965
        %v1686 = vmul.f32 %v1684, %v966
        %1689 = vrot.lane.b32.xlu0 %v1685, 126
        %v1690 = vpop.permute.xlu0 %1689
        %1691 = vrot.lane.b32.xlu0 %v1686, 126
        %v1692 = vpop.permute.xlu0 %1691
        %v1695 = vadd.f32 %v1583, %v1690
        %v1696 = vadd.f32 %v1584, %v1692
        %s1697 = sld [smem:[#allocation11 + $0x22]]
        %v1698 = vstv %s1697
        %v1699 = vmul.f32 %v1698, %v967
        %v1700 = vmul.f32 %v1698, %v968
        %1703 = vrot.lane.b32.xlu0 %v1699, 126
        %v1704 = vpop.permute.xlu0 %1703
        %1705 = vrot.lane.b32.xlu0 %v1700, 126
        %v1706 = vpop.permute.xlu0 %1705
        %v1709 = vadd.f32 %v1597, %v1704
        %v1710 = vadd.f32 %v1598, %v1706
        %s1711 = sld [smem:[#allocation5 + $0x23]]
        %v1712 = vstv %s1711
        %v1713 = vmul.f32 %v1712, %v965
        %v1714 = vmul.f32 %v1712, %v966
        %1717 = vrot.lane.b32.xlu0 %v1713, 126
        %v1718 = vpop.permute.xlu0 %1717
        %1719 = vrot.lane.b32.xlu0 %v1714, 126
        %v1720 = vpop.permute.xlu0 %1719
        %v1723 = vadd.f32 %v1611, %v1718
        %v1724 = vadd.f32 %v1612, %v1720
        %s1725 = sld [smem:[#allocation11 + $0x23]]
        %v1726 = vstv %s1725
        %v1727 = vmul.f32 %v1726, %v967
        %v1728 = vmul.f32 %v1726, %v968
        %1731 = vrot.lane.b32.xlu0 %v1727, 126
        %v1732 = vpop.permute.xlu0 %1731
        %1733 = vrot.lane.b32.xlu0 %v1728, 126
        %v1734 = vpop.permute.xlu0 %1733
        %v1737 = vadd.f32 %v1625, %v1732
        %v1738 = vadd.f32 %v1626, %v1734
        %s1739 = sld [smem:[#allocation5 + $0x24]]
        %v1740 = vstv %s1739
        %v1741 = vmul.f32 %v1740, %v1018
        %v1742 = vmul.f32 %v1740, %v1019
        %1745 = vrot.lane.b32.xlu0 %v1741, 126
        %v1746 = vpop.permute.xlu0 %1745
        %1747 = vrot.lane.b32.xlu0 %v1742, 126
        %v1748 = vpop.permute.xlu0 %1747
        %v1751 = vadd.f32 %v1639, %v1746
        %v1752 = vadd.f32 %v1640, %v1748
        %s1753 = sld [smem:[#allocation11 + $0x24]]
        %v1754 = vstv %s1753
        %v1755 = vmul.f32 %v1754, %v1021
        %v1756 = vmul.f32 %v1754, %v1022
        %1759 = vrot.lane.b32.xlu0 %v1755, 126
        %v1760 = vpop.permute.xlu0 %1759
        %1761 = vrot.lane.b32.xlu0 %v1756, 126
        %v1762 = vpop.permute.xlu0 %1761
        %v1765 = vadd.f32 %v1653, %v1760
        %v1766 = vadd.f32 %v1654, %v1762
        %s1767 = sld [smem:[#allocation5 + $0x25]]
        %v1768 = vstv %s1767
        %v1769 = vmul.f32 %v1768, %v1018
        %v1770 = vmul.f32 %v1768, %v1019
        %1773 = vrot.lane.b32.xlu0 %v1769, 126
        %v1774 = vpop.permute.xlu0 %1773
        %1775 = vrot.lane.b32.xlu0 %v1770, 126
        %v1776 = vpop.permute.xlu0 %1775
        %v1779 = vadd.f32 %v1667, %v1774
        %v1780 = vadd.f32 %v1668, %v1776
        %s1781 = sld [smem:[#allocation11 + $0x25]]
        %v1782 = vstv %s1781
        %v1783 = vmul.f32 %v1782, %v1021
        %v1784 = vmul.f32 %v1782, %v1022
        %1787 = vrot.lane.b32.xlu0 %v1783, 126
        %v1788 = vpop.permute.xlu0 %1787
        %1789 = vrot.lane.b32.xlu0 %v1784, 126
        %v1790 = vpop.permute.xlu0 %1789
        %v1793 = vadd.f32 %v1681, %v1788
        %v1794 = vadd.f32 %v1682, %v1790
        %s1795 = sld [smem:[#allocation5 + $0x26]]
        %v1796 = vstv %s1795
        %v1797 = vmul.f32 %v1796, %v1018
        %v1798 = vmul.f32 %v1796, %v1019
        %1801 = vrot.lane.b32.xlu0 %v1797, 126
        %v1802 = vpop.permute.xlu0 %1801
        %1803 = vrot.lane.b32.xlu0 %v1798, 126
        %v1804 = vpop.permute.xlu0 %1803
        %v1807 = vadd.f32 %v1695, %v1802
        %v1808 = vadd.f32 %v1696, %v1804
        %s1809 = sld [smem:[#allocation11 + $0x26]]
        %v1810 = vstv %s1809
        %v1811 = vmul.f32 %v1810, %v1021
        %v1812 = vmul.f32 %v1810, %v1022
        %1815 = vrot.lane.b32.xlu0 %v1811, 126
        %v1816 = vpop.permute.xlu0 %1815
        %1817 = vrot.lane.b32.xlu0 %v1812, 126
        %v1818 = vpop.permute.xlu0 %1817
        %v1821 = vadd.f32 %v1709, %v1816
        %v1822 = vadd.f32 %v1710, %v1818
        %s1823 = sld [smem:[#allocation5 + $0x27]]
        %v1824 = vstv %s1823
        %v1825 = vmul.f32 %v1824, %v1018
        %v1826 = vmul.f32 %v1824, %v1019
        %1829 = vrot.lane.b32.xlu0 %v1825, 126
        %v1830 = vpop.permute.xlu0 %1829
        %1831 = vrot.lane.b32.xlu0 %v1826, 126
        %v1832 = vpop.permute.xlu0 %1831
        %v1835 = vadd.f32 %v1723, %v1830
        %v1836 = vadd.f32 %v1724, %v1832
        %s1837 = sld [smem:[#allocation11 + $0x27]]
        %v1838 = vstv %s1837
        %v1839 = vmul.f32 %v1838, %v1021
        %v1840 = vmul.f32 %v1838, %v1022
        %1843 = vrot.lane.b32.xlu0 %v1839, 126
        %v1844 = vpop.permute.xlu0 %1843
        %1845 = vrot.lane.b32.xlu0 %v1840, 126
        %v1846 = vpop.permute.xlu0 %1845
        %v1849 = vadd.f32 %v1737, %v1844
        %v1850 = vadd.f32 %v1738, %v1846
        %s1851 = sld [smem:[#allocation5 + $0x28]]
        %v1852 = vstv %s1851
        %v1853 = vmul.f32 %v1852, %v1072
        %v1854 = vmul.f32 %v1852, %v1073
        %1857 = vrot.lane.b32.xlu0 %v1853, 126
        %v1858 = vpop.permute.xlu0 %1857
        %1859 = vrot.lane.b32.xlu0 %v1854, 126
        %v1860 = vpop.permute.xlu0 %1859
        %v1863 = vadd.f32 %v1751, %v1858
        %v1864 = vadd.f32 %v1752, %v1860
        %s1865 = sld [smem:[#allocation11 + $0x28]]
        %v1866 = vstv %s1865
        %v1867 = vmul.f32 %v1866, %v1075
        %v1868 = vmul.f32 %v1866, %v1076
        %1871 = vrot.lane.b32.xlu0 %v1867, 126
        %v1872 = vpop.permute.xlu0 %1871
        %1873 = vrot.lane.b32.xlu0 %v1868, 126
        %v1874 = vpop.permute.xlu0 %1873
        %v1877 = vadd.f32 %v1765, %v1872
        %v1878 = vadd.f32 %v1766, %v1874
        %s1879 = sld [smem:[#allocation5 + $0x29]]
        %v1880 = vstv %s1879
        %v1881 = vmul.f32 %v1880, %v1072
        %v1882 = vmul.f32 %v1880, %v1073
        %1885 = vrot.lane.b32.xlu0 %v1881, 126
        %v1886 = vpop.permute.xlu0 %1885
        %1887 = vrot.lane.b32.xlu0 %v1882, 126
        %v1888 = vpop.permute.xlu0 %1887
        %v1891 = vadd.f32 %v1779, %v1886
        %v1892 = vadd.f32 %v1780, %v1888
        %s1893 = sld [smem:[#allocation11 + $0x29]]
        %v1894 = vstv %s1893
        %v1895 = vmul.f32 %v1894, %v1075
        %v1896 = vmul.f32 %v1894, %v1076
        %1899 = vrot.lane.b32.xlu0 %v1895, 126
        %v1900 = vpop.permute.xlu0 %1899
        %1901 = vrot.lane.b32.xlu0 %v1896, 126
        %v1902 = vpop.permute.xlu0 %1901
        %v1905 = vadd.f32 %v1793, %v1900
        %v1906 = vadd.f32 %v1794, %v1902
        %s1907 = sld [smem:[#allocation5 + $0x2a]]
        %v1908 = vstv %s1907
        %v1909 = vmul.f32 %v1908, %v1072
        %v1910 = vmul.f32 %v1908, %v1073
        %1913 = vrot.lane.b32.xlu0 %v1909, 126
        %v1914 = vpop.permute.xlu0 %1913
        %1915 = vrot.lane.b32.xlu0 %v1910, 126
        %v1916 = vpop.permute.xlu0 %1915
        %v1919 = vadd.f32 %v1807, %v1914
        %v1920 = vadd.f32 %v1808, %v1916
        %s1921 = sld [smem:[#allocation11 + $0x2a]]
        %v1922 = vstv %s1921
        %v1923 = vmul.f32 %v1922, %v1075
        %v1924 = vmul.f32 %v1922, %v1076
        %1927 = vrot.lane.b32.xlu0 %v1923, 126
        %v1928 = vpop.permute.xlu0 %1927
        %1929 = vrot.lane.b32.xlu0 %v1924, 126
        %v1930 = vpop.permute.xlu0 %1929
        %v1933 = vadd.f32 %v1821, %v1928
        %v1934 = vadd.f32 %v1822, %v1930
        %s1935 = sld [smem:[#allocation5 + $0x2b]]
        %v1936 = vstv %s1935
        %v1937 = vmul.f32 %v1936, %v1072
        %v1938 = vmul.f32 %v1936, %v1073
        %1941 = vrot.lane.b32.xlu0 %v1937, 126
        %v1942 = vpop.permute.xlu0 %1941
        %1943 = vrot.lane.b32.xlu0 %v1938, 126
        %v1944 = vpop.permute.xlu0 %1943
        %v1947 = vadd.f32 %v1835, %v1942
        %v1948 = vadd.f32 %v1836, %v1944
        %s1949 = sld [smem:[#allocation11 + $0x2b]]
        %v1950 = vstv %s1949
        %v1951 = vmul.f32 %v1950, %v1075
        %v1952 = vmul.f32 %v1950, %v1076
        %1955 = vrot.lane.b32.xlu0 %v1951, 126
        %v1956 = vpop.permute.xlu0 %1955
        %1957 = vrot.lane.b32.xlu0 %v1952, 126
        %v1958 = vpop.permute.xlu0 %1957
        %v1961 = vadd.f32 %v1849, %v1956
        %v1962 = vadd.f32 %v1850, %v1958
        %s1963 = sld [smem:[#allocation5 + $0x2c]]
        %v1964 = vstv %s1963
        %v1965 = vmul.f32 %v1964, %v1126
        %v1966 = vmul.f32 %v1964, %v1127
        %1969 = vrot.lane.b32.xlu0 %v1965, 126
        %v1970 = vpop.permute.xlu0 %1969
        %1971 = vrot.lane.b32.xlu0 %v1966, 126
        %v1972 = vpop.permute.xlu0 %1971
        %v1975 = vadd.f32 %v1863, %v1970
        %v1976 = vadd.f32 %v1864, %v1972
        %s1977 = sld [smem:[#allocation11 + $0x2c]]
        %v1978 = vstv %s1977
        %v1979 = vmul.f32 %v1978, %v1129
        %v1980 = vmul.f32 %v1978, %v1130
        %1983 = vrot.lane.b32.xlu0 %v1979, 126
        %v1984 = vpop.permute.xlu0 %1983
        %1985 = vrot.lane.b32.xlu0 %v1980, 126
        %v1986 = vpop.permute.xlu0 %1985
        %v1989 = vadd.f32 %v1877, %v1984
        %v1990 = vadd.f32 %v1878, %v1986
        %s1991 = sld [smem:[#allocation5 + $0x2d]]
        %v1992 = vstv %s1991
        %v1993 = vmul.f32 %v1992, %v1126
        %v1994 = vmul.f32 %v1992, %v1127
        %1997 = vrot.lane.b32.xlu0 %v1993, 126
        %v1998 = vpop.permute.xlu0 %1997
        %1999 = vrot.lane.b32.xlu0 %v1994, 126
        %v2000 = vpop.permute.xlu0 %1999
        %v2003 = vadd.f32 %v1891, %v1998
        %v2004 = vadd.f32 %v1892, %v2000
        %s2005 = sld [smem:[#allocation11 + $0x2d]]
        %v2006 = vstv %s2005
        %v2007 = vmul.f32 %v2006, %v1129
        %v2008 = vmul.f32 %v2006, %v1130
        %2011 = vrot.lane.b32.xlu0 %v2007, 126
        %v2012 = vpop.permute.xlu0 %2011
        %2013 = vrot.lane.b32.xlu0 %v2008, 126
        %v2014 = vpop.permute.xlu0 %2013
        %v2017 = vadd.f32 %v1905, %v2012
        %v2018 = vadd.f32 %v1906, %v2014
        %s2019 = sld [smem:[#allocation5 + $0x2e]]
        %v2020 = vstv %s2019
        %v2021 = vmul.f32 %v2020, %v1126
        %v2022 = vmul.f32 %v2020, %v1127
        %2025 = vrot.lane.b32.xlu0 %v2021, 126
        %v2026 = vpop.permute.xlu0 %2025
        %2027 = vrot.lane.b32.xlu0 %v2022, 126
        %v2028 = vpop.permute.xlu0 %2027
        %v2031 = vadd.f32 %v1919, %v2026
        %v2032 = vadd.f32 %v1920, %v2028
        %s2033 = sld [smem:[#allocation11 + $0x2e]]
        %v2034 = vstv %s2033
        %v2035 = vmul.f32 %v2034, %v1129
        %v2036 = vmul.f32 %v2034, %v1130
        %2039 = vrot.lane.b32.xlu0 %v2035, 126
        %v2040 = vpop.permute.xlu0 %2039
        %2041 = vrot.lane.b32.xlu0 %v2036, 126
        %v2042 = vpop.permute.xlu0 %2041
        %v2045 = vadd.f32 %v1933, %v2040
        %v2046 = vadd.f32 %v1934, %v2042
        %s2047 = sld [smem:[#allocation5 + $0x2f]]
        %v2048 = vstv %s2047
        %v2049 = vmul.f32 %v2048, %v1126
        %v2050 = vmul.f32 %v2048, %v1127
        %2053 = vrot.lane.b32.xlu0 %v2049, 126
        %v2054 = vpop.permute.xlu0 %2053
        %2055 = vrot.lane.b32.xlu0 %v2050, 126
        %v2056 = vpop.permute.xlu0 %2055
        %v2059 = vadd.f32 %v1947, %v2054
        %v2060 = vadd.f32 %v1948, %v2056
        %s2061 = sld [smem:[#allocation11 + $0x2f]]
        %v2062 = vstv %s2061
        %v2063 = vmul.f32 %v2062, %v1129
        %v2064 = vmul.f32 %v2062, %v1130
        %2067 = vrot.lane.b32.xlu0 %v2063, 126
        %v2068 = vpop.permute.xlu0 %2067
        %2069 = vrot.lane.b32.xlu0 %v2064, 126
        %v2070 = vpop.permute.xlu0 %2069
        %v2073 = vadd.f32 %v1961, %v2068
        %v2074 = vadd.f32 %v1962, %v2070
        %v2075 = vld [vmem:[#allocation3 + $0x1] sm:$0xff]
        %v2076 = vld [vmem:[#allocation3 + $0x9] sm:$0xff]
        %v2077 = vld [vmem:[#allocation4 + $0x1] sm:$0xff]
        %v2078 = vld [vmem:[#allocation4 + $0x9] sm:$0xff]
        %s2079 = sld [smem:[#allocation5 + $0x30]]
        %v2080 = vstv %s2079
        %v2081 = vmul.f32 %v2080, %v2075
        %v2082 = vmul.f32 %v2080, %v2076
        %v2083 = vadd.f32 %v1975, %v2081
        %v2084 = vadd.f32 %v1976, %v2082
        %s2085 = sld [smem:[#allocation11 + $0x30]]
        %v2086 = vstv %s2085
        %v2087 = vmul.f32 %v2086, %v2077
        %v2088 = vmul.f32 %v2086, %v2078
        %v2089 = vadd.f32 %v1989, %v2087
        %v2090 = vadd.f32 %v1990, %v2088
        %s2091 = sld [smem:[#allocation5 + $0x31]]
        %v2092 = vstv %s2091
        %v2093 = vmul.f32 %v2092, %v2075
        %v2094 = vmul.f32 %v2092, %v2076
        %v2095 = vadd.f32 %v2003, %v2093
        %v2096 = vadd.f32 %v2004, %v2094
        %s2097 = sld [smem:[#allocation11 + $0x31]]
        %v2098 = vstv %s2097
        %v2099 = vmul.f32 %v2098, %v2077
        %v2100 = vmul.f32 %v2098, %v2078
        %v2101 = vadd.f32 %v2017, %v2099
        %v2102 = vadd.f32 %v2018, %v2100
        %s2103 = sld [smem:[#allocation5 + $0x32]]
        %v2104 = vstv %s2103
        %v2105 = vmul.f32 %v2104, %v2075
        %v2106 = vmul.f32 %v2104, %v2076
        %v2107 = vadd.f32 %v2031, %v2105
        %v2108 = vadd.f32 %v2032, %v2106
        %s2109 = sld [smem:[#allocation11 + $0x32]]
        %v2110 = vstv %s2109
        %v2111 = vmul.f32 %v2110, %v2077
        %v2112 = vmul.f32 %v2110, %v2078
        %v2113 = vadd.f32 %v2045, %v2111
        %v2114 = vadd.f32 %v2046, %v2112
        %s2115 = sld [smem:[#allocation5 + $0x33]]
        %v2116 = vstv %s2115
        %v2117 = vmul.f32 %v2116, %v2075
        %v2118 = vmul.f32 %v2116, %v2076
        %v2119 = vadd.f32 %v2059, %v2117
        %v2120 = vadd.f32 %v2060, %v2118
        %s2121 = sld [smem:[#allocation11 + $0x33]]
        %v2122 = vstv %s2121
        %v2123 = vmul.f32 %v2122, %v2077
        %v2124 = vmul.f32 %v2122, %v2078
        %v2125 = vadd.f32 %v2073, %v2123
        %v2126 = vadd.f32 %v2074, %v2124
        %v2127 = vld [vmem:[%s1017 + $0x1] sm:$0xff]
        %v2128 = vld [vmem:[%s1017 + $0x9] sm:$0xff]
        %v2129 = vld [vmem:[%s1020 + $0x1] sm:$0xff]
        %v2130 = vld [vmem:[%s1020 + $0x9] sm:$0xff]
        %s2131 = sld [smem:[#allocation5 + $0x34]]
        %v2132 = vstv %s2131
        %v2133 = vmul.f32 %v2132, %v2127
        %v2134 = vmul.f32 %v2132, %v2128
        %v2135 = vadd.f32 %v2083, %v2133
        %v2136 = vadd.f32 %v2084, %v2134
        %s2137 = sld [smem:[#allocation11 + $0x34]]
        %v2138 = vstv %s2137
        %v2139 = vmul.f32 %v2138, %v2129
        %v2140 = vmul.f32 %v2138, %v2130
        %v2141 = vadd.f32 %v2089, %v2139
        %v2142 = vadd.f32 %v2090, %v2140
        %s2143 = sld [smem:[#allocation5 + $0x35]]
        %v2144 = vstv %s2143
        %v2145 = vmul.f32 %v2144, %v2127
        %v2146 = vmul.f32 %v2144, %v2128
        %v2147 = vadd.f32 %v2095, %v2145
        %v2148 = vadd.f32 %v2096, %v2146
        %s2149 = sld [smem:[#allocation11 + $0x35]]
        %v2150 = vstv %s2149
        %v2151 = vmul.f32 %v2150, %v2129
        %v2152 = vmul.f32 %v2150, %v2130
        %v2153 = vadd.f32 %v2101, %v2151
        %v2154 = vadd.f32 %v2102, %v2152
        %s2155 = sld [smem:[#allocation5 + $0x36]]
        %v2156 = vstv %s2155
        %v2157 = vmul.f32 %v2156, %v2127
        %v2158 = vmul.f32 %v2156, %v2128
        %v2159 = vadd.f32 %v2107, %v2157
        %v2160 = vadd.f32 %v2108, %v2158
        %s2161 = sld [smem:[#allocation11 + $0x36]]
        %v2162 = vstv %s2161
        %v2163 = vmul.f32 %v2162, %v2129
        %v2164 = vmul.f32 %v2162, %v2130
        %v2165 = vadd.f32 %v2113, %v2163
        %v2166 = vadd.f32 %v2114, %v2164
        %s2167 = sld [smem:[#allocation5 + $0x37]]
        %v2168 = vstv %s2167
        %v2169 = vmul.f32 %v2168, %v2127
        %v2170 = vmul.f32 %v2168, %v2128
        %v2171 = vadd.f32 %v2119, %v2169
        %v2172 = vadd.f32 %v2120, %v2170
        %s2173 = sld [smem:[#allocation11 + $0x37]]
        %v2174 = vstv %s2173
        %v2175 = vmul.f32 %v2174, %v2129
        %v2176 = vmul.f32 %v2174, %v2130
        %v2177 = vadd.f32 %v2125, %v2175
        %v2178 = vadd.f32 %v2126, %v2176
        %v2179 = vld [vmem:[%s1071 + $0x1] sm:$0xff]
        %v2180 = vld [vmem:[%s1071 + $0x9] sm:$0xff]
        %v2181 = vld [vmem:[%s1074 + $0x1] sm:$0xff]
        %v2182 = vld [vmem:[%s1074 + $0x9] sm:$0xff]
        %s2183 = sld [smem:[#allocation5 + $0x38]]
        %v2184 = vstv %s2183
        %v2185 = vmul.f32 %v2184, %v2179
        %v2186 = vmul.f32 %v2184, %v2180
        %v2187 = vadd.f32 %v2135, %v2185
        %v2188 = vadd.f32 %v2136, %v2186
        %s2189 = sld [smem:[#allocation11 + $0x38]]
        %v2190 = vstv %s2189
        %v2191 = vmul.f32 %v2190, %v2181
        %v2192 = vmul.f32 %v2190, %v2182
        %v2193 = vadd.f32 %v2141, %v2191
        %v2194 = vadd.f32 %v2142, %v2192
        %s2195 = sld [smem:[#allocation5 + $0x39]]
        %v2196 = vstv %s2195
        %v2197 = vmul.f32 %v2196, %v2179
        %v2198 = vmul.f32 %v2196, %v2180
        %v2199 = vadd.f32 %v2147, %v2197
        %v2200 = vadd.f32 %v2148, %v2198
        %s2201 = sld [smem:[#allocation11 + $0x39]]
        %v2202 = vstv %s2201
        %v2203 = vmul.f32 %v2202, %v2181
        %v2204 = vmul.f32 %v2202, %v2182
        %v2205 = vadd.f32 %v2153, %v2203
        %v2206 = vadd.f32 %v2154, %v2204
        %s2207 = sld [smem:[#allocation5 + $0x3a]]
        %v2208 = vstv %s2207
        %v2209 = vmul.f32 %v2208, %v2179
        %v2210 = vmul.f32 %v2208, %v2180
        %v2211 = vadd.f32 %v2159, %v2209
        %v2212 = vadd.f32 %v2160, %v2210
        %s2213 = sld [smem:[#allocation11 + $0x3a]]
        %v2214 = vstv %s2213
        %v2215 = vmul.f32 %v2214, %v2181
        %v2216 = vmul.f32 %v2214, %v2182
        %v2217 = vadd.f32 %v2165, %v2215
        %v2218 = vadd.f32 %v2166, %v2216
        %s2219 = sld [smem:[#allocation5 + $0x3b]]
        %v2220 = vstv %s2219
        %v2221 = vmul.f32 %v2220, %v2179
        %v2222 = vmul.f32 %v2220, %v2180
        %v2223 = vadd.f32 %v2171, %v2221
        %v2224 = vadd.f32 %v2172, %v2222
        %s2225 = sld [smem:[#allocation11 + $0x3b]]
        %v2226 = vstv %s2225
        %v2227 = vmul.f32 %v2226, %v2181
        %v2228 = vmul.f32 %v2226, %v2182
        %v2229 = vadd.f32 %v2177, %v2227
        %v2230 = vadd.f32 %v2178, %v2228
        %v2231 = vld [vmem:[%s1125 + $0x1] sm:$0xff]
        %v2232 = vld [vmem:[%s1125 + $0x9] sm:$0xff]
        %v2233 = vld [vmem:[%s1128 + $0x1] sm:$0xff]
        %v2234 = vld [vmem:[%s1128 + $0x9] sm:$0xff]
        %s2235 = sld [smem:[#allocation5 + $0x3c]]
        %v2236 = vstv %s2235
        %v2237 = vmul.f32 %v2236, %v2231
        %v2238 = vmul.f32 %v2236, %v2232
        %v2239 = vadd.f32 %v2187, %v2237
        %v2240 = vadd.f32 %v2188, %v2238
        %s2241 = sld [smem:[#allocation11 + $0x3c]]
        %v2242 = vstv %s2241
        %v2243 = vmul.f32 %v2242, %v2233
        %v2244 = vmul.f32 %v2242, %v2234
        %v2245 = vadd.f32 %v2193, %v2243
        %v2246 = vadd.f32 %v2194, %v2244
        %s2247 = sld [smem:[#allocation5 + $0x3d]]
        %v2248 = vstv %s2247
        %v2249 = vmul.f32 %v2248, %v2231
        %v2250 = vmul.f32 %v2248, %v2232
        %v2251 = vadd.f32 %v2199, %v2249
        %v2252 = vadd.f32 %v2200, %v2250
        %s2253 = sld [smem:[#allocation11 + $0x3d]]
        %v2254 = vstv %s2253
        %v2255 = vmul.f32 %v2254, %v2233
        %v2256 = vmul.f32 %v2254, %v2234
        %v2257 = vadd.f32 %v2205, %v2255
        %v2258 = vadd.f32 %v2206, %v2256
        %s2259 = sld [smem:[#allocation5 + $0x3e]]
        %v2260 = vstv %s2259
        %v2261 = vmul.f32 %v2260, %v2231
        %v2262 = vmul.f32 %v2260, %v2232
        %v2263 = vadd.f32 %v2211, %v2261
        %v2264 = vadd.f32 %v2212, %v2262
        %s2265 = sld [smem:[#allocation11 + $0x3e]]
        %v2266 = vstv %s2265
        %v2267 = vmul.f32 %v2266, %v2233
        %v2268 = vmul.f32 %v2266, %v2234
        %v2269 = vadd.f32 %v2217, %v2267
        %v2270 = vadd.f32 %v2218, %v2268
        %s2271 = sld [smem:[#allocation5 + $0x3f]]
        %v2272 = vstv %s2271
        %v2273 = vmul.f32 %v2272, %v2231
        %v2274 = vmul.f32 %v2272, %v2232
        %v2275 = vadd.f32 %v2223, %v2273
        %v2276 = vadd.f32 %v2224, %v2274
        %s2277 = sld [smem:[#allocation11 + $0x3f]]
        %v2278 = vstv %s2277
        %v2279 = vmul.f32 %v2278, %v2233
        %v2280 = vmul.f32 %v2278, %v2234
        %v2281 = vadd.f32 %v2229, %v2279
        %v2282 = vadd.f32 %v2230, %v2280
        %s2283 = sld [smem:[#allocation5 + $0x40]]
        %v2284 = vstv %s2283
        %v2285 = vmul.f32 %v2284, %v2075
        %v2286 = vmul.f32 %v2284, %v2076
        %2289 = vrot.lane.b32.xlu0 %v2285, 127
        %v2290 = vpop.permute.xlu0 %2289
        %2291 = vrot.lane.b32.xlu0 %v2286, 127
        %v2292 = vpop.permute.xlu0 %2291
        %v2295 = vadd.f32 %v2239, %v2290
        %v2296 = vadd.f32 %v2240, %v2292
        %s2297 = sld [smem:[#allocation11 + $0x40]]
        %v2298 = vstv %s2297
        %v2299 = vmul.f32 %v2298, %v2077
        %v2300 = vmul.f32 %v2298, %v2078
        %2303 = vrot.lane.b32.xlu0 %v2299, 127
        %v2304 = vpop.permute.xlu0 %2303
        %2305 = vrot.lane.b32.xlu0 %v2300, 127
        %v2306 = vpop.permute.xlu0 %2305
        %v2309 = vadd.f32 %v2245, %v2304
        %v2310 = vadd.f32 %v2246, %v2306
        %s2311 = sld [smem:[#allocation5 + $0x41]]
        %v2312 = vstv %s2311
        %v2313 = vmul.f32 %v2312, %v2075
        %v2314 = vmul.f32 %v2312, %v2076
        %2317 = vrot.lane.b32.xlu0 %v2313, 127
        %v2318 = vpop.permute.xlu0 %2317
        %2319 = vrot.lane.b32.xlu0 %v2314, 127
        %v2320 = vpop.permute.xlu0 %2319
        %v2323 = vadd.f32 %v2251, %v2318
        %v2324 = vadd.f32 %v2252, %v2320
        %s2325 = sld [smem:[#allocation11 + $0x41]]
        %v2326 = vstv %s2325
        %v2327 = vmul.f32 %v2326, %v2077
        %v2328 = vmul.f32 %v2326, %v2078
        %2331 = vrot.lane.b32.xlu0 %v2327, 127
        %v2332 = vpop.permute.xlu0 %2331
        %2333 = vrot.lane.b32.xlu0 %v2328, 127
        %v2334 = vpop.permute.xlu0 %2333
        %v2337 = vadd.f32 %v2257, %v2332
        %v2338 = vadd.f32 %v2258, %v2334
        %s2339 = sld [smem:[#allocation5 + $0x42]]
        %v2340 = vstv %s2339
        %v2341 = vmul.f32 %v2340, %v2075
        %v2342 = vmul.f32 %v2340, %v2076
        %2345 = vrot.lane.b32.xlu0 %v2341, 127
        %v2346 = vpop.permute.xlu0 %2345
        %2347 = vrot.lane.b32.xlu0 %v2342, 127
        %v2348 = vpop.permute.xlu0 %2347
        %v2351 = vadd.f32 %v2263, %v2346
        %v2352 = vadd.f32 %v2264, %v2348
        %s2353 = sld [smem:[#allocation11 + $0x42]]
        %v2354 = vstv %s2353
        %v2355 = vmul.f32 %v2354, %v2077
        %v2356 = vmul.f32 %v2354, %v2078
        %2359 = vrot.lane.b32.xlu0 %v2355, 127
        %v2360 = vpop.permute.xlu0 %2359
        %2361 = vrot.lane.b32.xlu0 %v2356, 127
        %v2362 = vpop.permute.xlu0 %2361
        %v2365 = vadd.f32 %v2269, %v2360
        %v2366 = vadd.f32 %v2270, %v2362
        %s2367 = sld [smem:[#allocation5 + $0x43]]
        %v2368 = vstv %s2367
        %v2369 = vmul.f32 %v2368, %v2075
        %v2370 = vmul.f32 %v2368, %v2076
        %2373 = vrot.lane.b32.xlu0 %v2369, 127
        %v2374 = vpop.permute.xlu0 %2373
        %2375 = vrot.lane.b32.xlu0 %v2370, 127
        %v2376 = vpop.permute.xlu0 %2375
        %v2379 = vadd.f32 %v2275, %v2374
        %v2380 = vadd.f32 %v2276, %v2376
        %s2381 = sld [smem:[#allocation11 + $0x43]]
        %v2382 = vstv %s2381
        %v2383 = vmul.f32 %v2382, %v2077
        %v2384 = vmul.f32 %v2382, %v2078
        %2387 = vrot.lane.b32.xlu0 %v2383, 127
        %v2388 = vpop.permute.xlu0 %2387
        %2389 = vrot.lane.b32.xlu0 %v2384, 127
        %v2390 = vpop.permute.xlu0 %2389
        %v2393 = vadd.f32 %v2281, %v2388
        %v2394 = vadd.f32 %v2282, %v2390
        %s2395 = sld [smem:[#allocation5 + $0x44]]
        %v2396 = vstv %s2395
        %v2397 = vmul.f32 %v2396, %v2127
        %v2398 = vmul.f32 %v2396, %v2128
        %2401 = vrot.lane.b32.xlu0 %v2397, 127
        %v2402 = vpop.permute.xlu0 %2401
        %2403 = vrot.lane.b32.xlu0 %v2398, 127
        %v2404 = vpop.permute.xlu0 %2403
        %v2407 = vadd.f32 %v2295, %v2402
        %v2408 = vadd.f32 %v2296, %v2404
        %s2409 = sld [smem:[#allocation11 + $0x44]]
        %v2410 = vstv %s2409
        %v2411 = vmul.f32 %v2410, %v2129
        %v2412 = vmul.f32 %v2410, %v2130
        %2415 = vrot.lane.b32.xlu0 %v2411, 127
        %v2416 = vpop.permute.xlu0 %2415
        %2417 = vrot.lane.b32.xlu0 %v2412, 127
        %v2418 = vpop.permute.xlu0 %2417
        %v2421 = vadd.f32 %v2309, %v2416
        %v2422 = vadd.f32 %v2310, %v2418
        %s2423 = sld [smem:[#allocation5 + $0x45]]
        %v2424 = vstv %s2423
        %v2425 = vmul.f32 %v2424, %v2127
        %v2426 = vmul.f32 %v2424, %v2128
        %2429 = vrot.lane.b32.xlu0 %v2425, 127
        %v2430 = vpop.permute.xlu0 %2429
        %2431 = vrot.lane.b32.xlu0 %v2426, 127
        %v2432 = vpop.permute.xlu0 %2431
        %v2435 = vadd.f32 %v2323, %v2430
        %v2436 = vadd.f32 %v2324, %v2432
        %s2437 = sld [smem:[#allocation11 + $0x45]]
        %v2438 = vstv %s2437
        %v2439 = vmul.f32 %v2438, %v2129
        %v2440 = vmul.f32 %v2438, %v2130
        %2443 = vrot.lane.b32.xlu0 %v2439, 127
        %v2444 = vpop.permute.xlu0 %2443
        %2445 = vrot.lane.b32.xlu0 %v2440, 127
        %v2446 = vpop.permute.xlu0 %2445
        %v2449 = vadd.f32 %v2337, %v2444
        %v2450 = vadd.f32 %v2338, %v2446
        %s2451 = sld [smem:[#allocation5 + $0x46]]
        %v2452 = vstv %s2451
        %v2453 = vmul.f32 %v2452, %v2127
        %v2454 = vmul.f32 %v2452, %v2128
        %2457 = vrot.lane.b32.xlu0 %v2453, 127
        %v2458 = vpop.permute.xlu0 %2457
        %2459 = vrot.lane.b32.xlu0 %v2454, 127
        %v2460 = vpop.permute.xlu0 %2459
        %v2463 = vadd.f32 %v2351, %v2458
        %v2464 = vadd.f32 %v2352, %v2460
        %s2465 = sld [smem:[#allocation11 + $0x46]]
        %v2466 = vstv %s2465
        %v2467 = vmul.f32 %v2466, %v2129
        %v2468 = vmul.f32 %v2466, %v2130
        %2471 = vrot.lane.b32.xlu0 %v2467, 127
        %v2472 = vpop.permute.xlu0 %2471
        %2473 = vrot.lane.b32.xlu0 %v2468, 127
        %v2474 = vpop.permute.xlu0 %2473
        %v2477 = vadd.f32 %v2365, %v2472
        %v2478 = vadd.f32 %v2366, %v2474
        %s2479 = sld [smem:[#allocation5 + $0x47]]
        %v2480 = vstv %s2479
        %v2481 = vmul.f32 %v2480, %v2127
        %v2482 = vmul.f32 %v2480, %v2128
        %2485 = vrot.lane.b32.xlu0 %v2481, 127
        %v2486 = vpop.permute.xlu0 %2485
        %2487 = vrot.lane.b32.xlu0 %v2482, 127
        %v2488 = vpop.permute.xlu0 %2487
        %v2491 = vadd.f32 %v2379, %v2486
        %v2492 = vadd.f32 %v2380, %v2488
        %s2493 = sld [smem:[#allocation11 + $0x47]]
        %v2494 = vstv %s2493
        %v2495 = vmul.f32 %v2494, %v2129
        %v2496 = vmul.f32 %v2494, %v2130
        %2499 = vrot.lane.b32.xlu0 %v2495, 127
        %v2500 = vpop.permute.xlu0 %2499
        %2501 = vrot.lane.b32.xlu0 %v2496, 127
        %v2502 = vpop.permute.xlu0 %2501
        %v2505 = vadd.f32 %v2393, %v2500
        %v2506 = vadd.f32 %v2394, %v2502
        %s2507 = sld [smem:[#allocation5 + $0x48]]
        %v2508 = vstv %s2507
        %v2509 = vmul.f32 %v2508, %v2179
        %v2510 = vmul.f32 %v2508, %v2180
        %2513 = vrot.lane.b32.xlu0 %v2509, 127
        %v2514 = vpop.permute.xlu0 %2513
        %2515 = vrot.lane.b32.xlu0 %v2510, 127
        %v2516 = vpop.permute.xlu0 %2515
        %v2519 = vadd.f32 %v2407, %v2514
        %v2520 = vadd.f32 %v2408, %v2516
        %s2521 = sld [smem:[#allocation11 + $0x48]]
        %v2522 = vstv %s2521
        %v2523 = vmul.f32 %v2522, %v2181
        %v2524 = vmul.f32 %v2522, %v2182
        %2527 = vrot.lane.b32.xlu0 %v2523, 127
        %v2528 = vpop.permute.xlu0 %2527
        %2529 = vrot.lane.b32.xlu0 %v2524, 127
        %v2530 = vpop.permute.xlu0 %2529
        %v2533 = vadd.f32 %v2421, %v2528
        %v2534 = vadd.f32 %v2422, %v2530
        %s2535 = sld [smem:[#allocation5 + $0x49]]
        %v2536 = vstv %s2535
        %v2537 = vmul.f32 %v2536, %v2179
        %v2538 = vmul.f32 %v2536, %v2180
        %2541 = vrot.lane.b32.xlu0 %v2537, 127
        %v2542 = vpop.permute.xlu0 %2541
        %2543 = vrot.lane.b32.xlu0 %v2538, 127
        %v2544 = vpop.permute.xlu0 %2543
        %v2547 = vadd.f32 %v2435, %v2542
        %v2548 = vadd.f32 %v2436, %v2544
        %s2549 = sld [smem:[#allocation11 + $0x49]]
        %v2550 = vstv %s2549
        %v2551 = vmul.f32 %v2550, %v2181
        %v2552 = vmul.f32 %v2550, %v2182
        %2555 = vrot.lane.b32.xlu0 %v2551, 127
        %v2556 = vpop.permute.xlu0 %2555
        %2557 = vrot.lane.b32.xlu0 %v2552, 127
        %v2558 = vpop.permute.xlu0 %2557
        %v2561 = vadd.f32 %v2449, %v2556
        %v2562 = vadd.f32 %v2450, %v2558
        %s2563 = sld [smem:[#allocation5 + $0x4a]]
        %v2564 = vstv %s2563
        %v2565 = vmul.f32 %v2564, %v2179
        %v2566 = vmul.f32 %v2564, %v2180
        %2569 = vrot.lane.b32.xlu0 %v2565, 127
        %v2570 = vpop.permute.xlu0 %2569
        %2571 = vrot.lane.b32.xlu0 %v2566, 127
        %v2572 = vpop.permute.xlu0 %2571
        %v2575 = vadd.f32 %v2463, %v2570
        %v2576 = vadd.f32 %v2464, %v2572
        %s2577 = sld [smem:[#allocation11 + $0x4a]]
        %v2578 = vstv %s2577
        %v2579 = vmul.f32 %v2578, %v2181
        %v2580 = vmul.f32 %v2578, %v2182
        %2583 = vrot.lane.b32.xlu0 %v2579, 127
        %v2584 = vpop.permute.xlu0 %2583
        %2585 = vrot.lane.b32.xlu0 %v2580, 127
        %v2586 = vpop.permute.xlu0 %2585
        %v2589 = vadd.f32 %v2477, %v2584
        %v2590 = vadd.f32 %v2478, %v2586
        %s2591 = sld [smem:[#allocation5 + $0x4b]]
        %v2592 = vstv %s2591
        %v2593 = vmul.f32 %v2592, %v2179
        %v2594 = vmul.f32 %v2592, %v2180
        %2597 = vrot.lane.b32.xlu0 %v2593, 127
        %v2598 = vpop.permute.xlu0 %2597
        %2599 = vrot.lane.b32.xlu0 %v2594, 127
        %v2600 = vpop.permute.xlu0 %2599
        %v2603 = vadd.f32 %v2491, %v2598
        %v2604 = vadd.f32 %v2492, %v2600
        %s2605 = sld [smem:[#allocation11 + $0x4b]]
        %v2606 = vstv %s2605
        %v2607 = vmul.f32 %v2606, %v2181
        %v2608 = vmul.f32 %v2606, %v2182
        %2611 = vrot.lane.b32.xlu0 %v2607, 127
        %v2612 = vpop.permute.xlu0 %2611
        %2613 = vrot.lane.b32.xlu0 %v2608, 127
        %v2614 = vpop.permute.xlu0 %2613
        %v2617 = vadd.f32 %v2505, %v2612
        %v2618 = vadd.f32 %v2506, %v2614
        %s2619 = sld [smem:[#allocation5 + $0x4c]]
        %v2620 = vstv %s2619
        %v2621 = vmul.f32 %v2620, %v2231
        %v2622 = vmul.f32 %v2620, %v2232
        %2625 = vrot.lane.b32.xlu0 %v2621, 127
        %v2626 = vpop.permute.xlu0 %2625
        %2627 = vrot.lane.b32.xlu0 %v2622, 127
        %v2628 = vpop.permute.xlu0 %2627
        %v2631 = vadd.f32 %v2519, %v2626
        %v2632 = vadd.f32 %v2520, %v2628
        %s2633 = sld [smem:[#allocation11 + $0x4c]]
        %v2634 = vstv %s2633
        %v2635 = vmul.f32 %v2634, %v2233
        %v2636 = vmul.f32 %v2634, %v2234
        %2639 = vrot.lane.b32.xlu0 %v2635, 127
        %v2640 = vpop.permute.xlu0 %2639
        %2641 = vrot.lane.b32.xlu0 %v2636, 127
        %v2642 = vpop.permute.xlu0 %2641
        %v2645 = vadd.f32 %v2533, %v2640
        %v2646 = vadd.f32 %v2534, %v2642
        %s2647 = sld [smem:[#allocation5 + $0x4d]]
        %v2648 = vstv %s2647
        %v2649 = vmul.f32 %v2648, %v2231
        %v2650 = vmul.f32 %v2648, %v2232
        %2653 = vrot.lane.b32.xlu0 %v2649, 127
        %v2654 = vpop.permute.xlu0 %2653
        %2655 = vrot.lane.b32.xlu0 %v2650, 127
        %v2656 = vpop.permute.xlu0 %2655
        %v2659 = vadd.f32 %v2547, %v2654
        %v2660 = vadd.f32 %v2548, %v2656
        %s2661 = sld [smem:[#allocation11 + $0x4d]]
        %v2662 = vstv %s2661
        %v2663 = vmul.f32 %v2662, %v2233
        %v2664 = vmul.f32 %v2662, %v2234
        %2667 = vrot.lane.b32.xlu0 %v2663, 127
        %v2668 = vpop.permute.xlu0 %2667
        %2669 = vrot.lane.b32.xlu0 %v2664, 127
        %v2670 = vpop.permute.xlu0 %2669
        %v2673 = vadd.f32 %v2561, %v2668
        %v2674 = vadd.f32 %v2562, %v2670
        %s2675 = sld [smem:[#allocation5 + $0x4e]]
        %v2676 = vstv %s2675
        %v2677 = vmul.f32 %v2676, %v2231
        %v2678 = vmul.f32 %v2676, %v2232
        %2681 = vrot.lane.b32.xlu0 %v2677, 127
        %v2682 = vpop.permute.xlu0 %2681
        %2683 = vrot.lane.b32.xlu0 %v2678, 127
        %v2684 = vpop.permute.xlu0 %2683
        %v2687 = vadd.f32 %v2575, %v2682
        %v2688 = vadd.f32 %v2576, %v2684
        %s2689 = sld [smem:[#allocation11 + $0x4e]]
        %v2690 = vstv %s2689
        %v2691 = vmul.f32 %v2690, %v2233
        %v2692 = vmul.f32 %v2690, %v2234
        %2695 = vrot.lane.b32.xlu0 %v2691, 127
        %v2696 = vpop.permute.xlu0 %2695
        %2697 = vrot.lane.b32.xlu0 %v2692, 127
        %v2698 = vpop.permute.xlu0 %2697
        %v2701 = vadd.f32 %v2589, %v2696
        %v2702 = vadd.f32 %v2590, %v2698
        %s2703 = sld [smem:[#allocation5 + $0x4f]]
        %v2704 = vstv %s2703
        %v2705 = vmul.f32 %v2704, %v2231
        %v2706 = vmul.f32 %v2704, %v2232
        %2709 = vrot.lane.b32.xlu0 %v2705, 127
        %v2710 = vpop.permute.xlu0 %2709
        %2711 = vrot.lane.b32.xlu0 %v2706, 127
        %v2712 = vpop.permute.xlu0 %2711
        %v2715 = vadd.f32 %v2603, %v2710
        %v2716 = vadd.f32 %v2604, %v2712
        %s2717 = sld [smem:[#allocation11 + $0x4f]]
        %v2718 = vstv %s2717
        %v2719 = vmul.f32 %v2718, %v2233
        %v2720 = vmul.f32 %v2718, %v2234
        %2723 = vrot.lane.b32.xlu0 %v2719, 127
        %v2724 = vpop.permute.xlu0 %2723
        %2725 = vrot.lane.b32.xlu0 %v2720, 127
        %v2726 = vpop.permute.xlu0 %2725
        %v2729 = vadd.f32 %v2617, %v2724
        %v2730 = vadd.f32 %v2618, %v2726
        %s2731 = sld [smem:[#allocation5 + $0x50]]
        %v2732 = vstv %s2731
        %v2733 = vmul.f32 %v2732, %v2075
        %v2734 = vmul.f32 %v2732, %v2076
        %2737 = vrot.lane.b32.xlu0 %v2733, 126
        %v2738 = vpop.permute.xlu0 %2737
        %2739 = vrot.lane.b32.xlu0 %v2734, 126
        %v2740 = vpop.permute.xlu0 %2739
        %v2743 = vadd.f32 %v2631, %v2738
        %v2744 = vadd.f32 %v2632, %v2740
        %s2745 = sld [smem:[#allocation11 + $0x50]]
        %v2746 = vstv %s2745
        %v2747 = vmul.f32 %v2746, %v2077
        %v2748 = vmul.f32 %v2746, %v2078
        %2751 = vrot.lane.b32.xlu0 %v2747, 126
        %v2752 = vpop.permute.xlu0 %2751
        %2753 = vrot.lane.b32.xlu0 %v2748, 126
        %v2754 = vpop.permute.xlu0 %2753
        %v2757 = vadd.f32 %v2645, %v2752
        %v2758 = vadd.f32 %v2646, %v2754
        %s2759 = sld [smem:[#allocation5 + $0x51]]
        %v2760 = vstv %s2759
        %v2761 = vmul.f32 %v2760, %v2075
        %v2762 = vmul.f32 %v2760, %v2076
        %2765 = vrot.lane.b32.xlu0 %v2761, 126
        %v2766 = vpop.permute.xlu0 %2765
        %2767 = vrot.lane.b32.xlu0 %v2762, 126
        %v2768 = vpop.permute.xlu0 %2767
        %v2771 = vadd.f32 %v2659, %v2766
        %v2772 = vadd.f32 %v2660, %v2768
        %s2773 = sld [smem:[#allocation11 + $0x51]]
        %v2774 = vstv %s2773
        %v2775 = vmul.f32 %v2774, %v2077
        %v2776 = vmul.f32 %v2774, %v2078
        %2779 = vrot.lane.b32.xlu0 %v2775, 126
        %v2780 = vpop.permute.xlu0 %2779
        %2781 = vrot.lane.b32.xlu0 %v2776, 126
        %v2782 = vpop.permute.xlu0 %2781
        %v2785 = vadd.f32 %v2673, %v2780
        %v2786 = vadd.f32 %v2674, %v2782
        %s2787 = sld [smem:[#allocation5 + $0x52]]
        %v2788 = vstv %s2787
        %v2789 = vmul.f32 %v2788, %v2075
        %v2790 = vmul.f32 %v2788, %v2076
        %2793 = vrot.lane.b32.xlu0 %v2789, 126
        %v2794 = vpop.permute.xlu0 %2793
        %2795 = vrot.lane.b32.xlu0 %v2790, 126
        %v2796 = vpop.permute.xlu0 %2795
        %v2799 = vadd.f32 %v2687, %v2794
        %v2800 = vadd.f32 %v2688, %v2796
        %s2801 = sld [smem:[#allocation11 + $0x52]]
        %v2802 = vstv %s2801
        %v2803 = vmul.f32 %v2802, %v2077
        %v2804 = vmul.f32 %v2802, %v2078
        %2807 = vrot.lane.b32.xlu0 %v2803, 126
        %v2808 = vpop.permute.xlu0 %2807
        %2809 = vrot.lane.b32.xlu0 %v2804, 126
        %v2810 = vpop.permute.xlu0 %2809
        %v2813 = vadd.f32 %v2701, %v2808
        %v2814 = vadd.f32 %v2702, %v2810
        %s2815 = sld [smem:[#allocation5 + $0x53]]
        %v2816 = vstv %s2815
        %v2817 = vmul.f32 %v2816, %v2075
        %v2818 = vmul.f32 %v2816, %v2076
        %2821 = vrot.lane.b32.xlu0 %v2817, 126
        %v2822 = vpop.permute.xlu0 %2821
        %2823 = vrot.lane.b32.xlu0 %v2818, 126
        %v2824 = vpop.permute.xlu0 %2823
        %v2827 = vadd.f32 %v2715, %v2822
        %v2828 = vadd.f32 %v2716, %v2824
        %s2829 = sld [smem:[#allocation11 + $0x53]]
        %v2830 = vstv %s2829
        %v2831 = vmul.f32 %v2830, %v2077
        %v2832 = vmul.f32 %v2830, %v2078
        %2835 = vrot.lane.b32.xlu0 %v2831, 126
        %v2836 = vpop.permute.xlu0 %2835
        %2837 = vrot.lane.b32.xlu0 %v2832, 126
        %v2838 = vpop.permute.xlu0 %2837
        %v2841 = vadd.f32 %v2729, %v2836
        %v2842 = vadd.f32 %v2730, %v2838
        %s2843 = sld [smem:[#allocation5 + $0x54]]
        %v2844 = vstv %s2843
        %v2845 = vmul.f32 %v2844, %v2127
        %v2846 = vmul.f32 %v2844, %v2128
        %2849 = vrot.lane.b32.xlu0 %v2845, 126
        %v2850 = vpop.permute.xlu0 %2849
        %2851 = vrot.lane.b32.xlu0 %v2846, 126
        %v2852 = vpop.permute.xlu0 %2851
        %v2855 = vadd.f32 %v2743, %v2850
        %v2856 = vadd.f32 %v2744, %v2852
        %s2857 = sld [smem:[#allocation11 + $0x54]]
        %v2858 = vstv %s2857
        %v2859 = vmul.f32 %v2858, %v2129
        %v2860 = vmul.f32 %v2858, %v2130
        %2863 = vrot.lane.b32.xlu0 %v2859, 126
        %v2864 = vpop.permute.xlu0 %2863
        %2865 = vrot.lane.b32.xlu0 %v2860, 126
        %v2866 = vpop.permute.xlu0 %2865
        %v2869 = vadd.f32 %v2757, %v2864
        %v2870 = vadd.f32 %v2758, %v2866
        %s2871 = sld [smem:[#allocation5 + $0x55]]
        %v2872 = vstv %s2871
        %v2873 = vmul.f32 %v2872, %v2127
        %v2874 = vmul.f32 %v2872, %v2128
        %2877 = vrot.lane.b32.xlu0 %v2873, 126
        %v2878 = vpop.permute.xlu0 %2877
        %2879 = vrot.lane.b32.xlu0 %v2874, 126
        %v2880 = vpop.permute.xlu0 %2879
        %v2883 = vadd.f32 %v2771, %v2878
        %v2884 = vadd.f32 %v2772, %v2880
        %s2885 = sld [smem:[#allocation11 + $0x55]]
        %v2886 = vstv %s2885
        %v2887 = vmul.f32 %v2886, %v2129
        %v2888 = vmul.f32 %v2886, %v2130
        %2891 = vrot.lane.b32.xlu0 %v2887, 126
        %v2892 = vpop.permute.xlu0 %2891
        %2893 = vrot.lane.b32.xlu0 %v2888, 126
        %v2894 = vpop.permute.xlu0 %2893
        %v2897 = vadd.f32 %v2785, %v2892
        %v2898 = vadd.f32 %v2786, %v2894
        %s2899 = sld [smem:[#allocation5 + $0x56]]
        %v2900 = vstv %s2899
        %v2901 = vmul.f32 %v2900, %v2127
        %v2902 = vmul.f32 %v2900, %v2128
        %2905 = vrot.lane.b32.xlu0 %v2901, 126
        %v2906 = vpop.permute.xlu0 %2905
        %2907 = vrot.lane.b32.xlu0 %v2902, 126
        %v2908 = vpop.permute.xlu0 %2907
        %v2911 = vadd.f32 %v2799, %v2906
        %v2912 = vadd.f32 %v2800, %v2908
        %s2913 = sld [smem:[#allocation11 + $0x56]]
        %v2914 = vstv %s2913
        %v2915 = vmul.f32 %v2914, %v2129
        %v2916 = vmul.f32 %v2914, %v2130
        %2919 = vrot.lane.b32.xlu0 %v2915, 126
        %v2920 = vpop.permute.xlu0 %2919
        %2921 = vrot.lane.b32.xlu0 %v2916, 126
        %v2922 = vpop.permute.xlu0 %2921
        %v2925 = vadd.f32 %v2813, %v2920
        %v2926 = vadd.f32 %v2814, %v2922
        %s2927 = sld [smem:[#allocation5 + $0x57]]
        %v2928 = vstv %s2927
        %v2929 = vmul.f32 %v2928, %v2127
        %v2930 = vmul.f32 %v2928, %v2128
        %2933 = vrot.lane.b32.xlu0 %v2929, 126
        %v2934 = vpop.permute.xlu0 %2933
        %2935 = vrot.lane.b32.xlu0 %v2930, 126
        %v2936 = vpop.permute.xlu0 %2935
        %v2939 = vadd.f32 %v2827, %v2934
        %v2940 = vadd.f32 %v2828, %v2936
        %s2941 = sld [smem:[#allocation11 + $0x57]]
        %v2942 = vstv %s2941
        %v2943 = vmul.f32 %v2942, %v2129
        %v2944 = vmul.f32 %v2942, %v2130
        %2947 = vrot.lane.b32.xlu0 %v2943, 126
        %v2948 = vpop.permute.xlu0 %2947
        %2949 = vrot.lane.b32.xlu0 %v2944, 126
        %v2950 = vpop.permute.xlu0 %2949
        %v2953 = vadd.f32 %v2841, %v2948
        %v2954 = vadd.f32 %v2842, %v2950
        %s2955 = sld [smem:[#allocation5 + $0x58]]
        %v2956 = vstv %s2955
        %v2957 = vmul.f32 %v2956, %v2179
        %v2958 = vmul.f32 %v2956, %v2180
        %2961 = vrot.lane.b32.xlu0 %v2957, 126
        %v2962 = vpop.permute.xlu0 %2961
        %2963 = vrot.lane.b32.xlu0 %v2958, 126
        %v2964 = vpop.permute.xlu0 %2963
        %v2967 = vadd.f32 %v2855, %v2962
        %v2968 = vadd.f32 %v2856, %v2964
        %s2969 = sld [smem:[#allocation11 + $0x58]]
        %v2970 = vstv %s2969
        %v2971 = vmul.f32 %v2970, %v2181
        %v2972 = vmul.f32 %v2970, %v2182
        %2975 = vrot.lane.b32.xlu0 %v2971, 126
        %v2976 = vpop.permute.xlu0 %2975
        %2977 = vrot.lane.b32.xlu0 %v2972, 126
        %v2978 = vpop.permute.xlu0 %2977
        %v2981 = vadd.f32 %v2869, %v2976
        %v2982 = vadd.f32 %v2870, %v2978
        %s2983 = sld [smem:[#allocation5 + $0x59]]
        %v2984 = vstv %s2983
        %v2985 = vmul.f32 %v2984, %v2179
        %v2986 = vmul.f32 %v2984, %v2180
        %2989 = vrot.lane.b32.xlu0 %v2985, 126
        %v2990 = vpop.permute.xlu0 %2989
        %2991 = vrot.lane.b32.xlu0 %v2986, 126
        %v2992 = vpop.permute.xlu0 %2991
        %v2995 = vadd.f32 %v2883, %v2990
        %v2996 = vadd.f32 %v2884, %v2992
        %s2997 = sld [smem:[#allocation11 + $0x59]]
        %v2998 = vstv %s2997
        %v2999 = vmul.f32 %v2998, %v2181
        %v3000 = vmul.f32 %v2998, %v2182
        %3003 = vrot.lane.b32.xlu0 %v2999, 126
        %v3004 = vpop.permute.xlu0 %3003
        %3005 = vrot.lane.b32.xlu0 %v3000, 126
        %v3006 = vpop.permute.xlu0 %3005
        %v3009 = vadd.f32 %v2897, %v3004
        %v3010 = vadd.f32 %v2898, %v3006
        %s3011 = sld [smem:[#allocation5 + $0x5a]]
        %v3012 = vstv %s3011
        %v3013 = vmul.f32 %v3012, %v2179
        %v3014 = vmul.f32 %v3012, %v2180
        %3017 = vrot.lane.b32.xlu0 %v3013, 126
        %v3018 = vpop.permute.xlu0 %3017
        %3019 = vrot.lane.b32.xlu0 %v3014, 126
        %v3020 = vpop.permute.xlu0 %3019
        %v3023 = vadd.f32 %v2911, %v3018
        %v3024 = vadd.f32 %v2912, %v3020
        %s3025 = sld [smem:[#allocation11 + $0x5a]]
        %v3026 = vstv %s3025
        %v3027 = vmul.f32 %v3026, %v2181
        %v3028 = vmul.f32 %v3026, %v2182
        %3031 = vrot.lane.b32.xlu0 %v3027, 126
        %v3032 = vpop.permute.xlu0 %3031
        %3033 = vrot.lane.b32.xlu0 %v3028, 126
        %v3034 = vpop.permute.xlu0 %3033
        %v3037 = vadd.f32 %v2925, %v3032
        %v3038 = vadd.f32 %v2926, %v3034
        %s3039 = sld [smem:[#allocation5 + $0x5b]]
        %v3040 = vstv %s3039
        %v3041 = vmul.f32 %v3040, %v2179
        %v3042 = vmul.f32 %v3040, %v2180
        %3045 = vrot.lane.b32.xlu0 %v3041, 126
        %v3046 = vpop.permute.xlu0 %3045
        %3047 = vrot.lane.b32.xlu0 %v3042, 126
        %v3048 = vpop.permute.xlu0 %3047
        %v3051 = vadd.f32 %v2939, %v3046
        %v3052 = vadd.f32 %v2940, %v3048
        %s3053 = sld [smem:[#allocation11 + $0x5b]]
        %v3054 = vstv %s3053
        %v3055 = vmul.f32 %v3054, %v2181
        %v3056 = vmul.f32 %v3054, %v2182
        %3059 = vrot.lane.b32.xlu0 %v3055, 126
        %v3060 = vpop.permute.xlu0 %3059
        %3061 = vrot.lane.b32.xlu0 %v3056, 126
        %v3062 = vpop.permute.xlu0 %3061
        %v3065 = vadd.f32 %v2953, %v3060
        %v3066 = vadd.f32 %v2954, %v3062
        %s3067 = sld [smem:[#allocation5 + $0x5c]]
        %v3068 = vstv %s3067
        %v3069 = vmul.f32 %v3068, %v2231
        %v3070 = vmul.f32 %v3068, %v2232
        %3073 = vrot.lane.b32.xlu0 %v3069, 126
        %v3074 = vpop.permute.xlu0 %3073
        %3075 = vrot.lane.b32.xlu0 %v3070, 126
        %v3076 = vpop.permute.xlu0 %3075
        %v3079 = vadd.f32 %v2967, %v3074
        %v3080 = vadd.f32 %v2968, %v3076
        %s3081 = sld [smem:[#allocation11 + $0x5c]]
        %v3082 = vstv %s3081
        %v3083 = vmul.f32 %v3082, %v2233
        %v3084 = vmul.f32 %v3082, %v2234
        %3087 = vrot.lane.b32.xlu0 %v3083, 126
        %v3088 = vpop.permute.xlu0 %3087
        %3089 = vrot.lane.b32.xlu0 %v3084, 126
        %v3090 = vpop.permute.xlu0 %3089
        %v3093 = vadd.f32 %v2981, %v3088
        %v3094 = vadd.f32 %v2982, %v3090
        %s3095 = sld [smem:[#allocation5 + $0x5d]]
        %v3096 = vstv %s3095
        %v3097 = vmul.f32 %v3096, %v2231
        %v3098 = vmul.f32 %v3096, %v2232
        %3101 = vrot.lane.b32.xlu0 %v3097, 126
        %v3102 = vpop.permute.xlu0 %3101
        %3103 = vrot.lane.b32.xlu0 %v3098, 126
        %v3104 = vpop.permute.xlu0 %3103
        %v3107 = vadd.f32 %v2995, %v3102
        %v3108 = vadd.f32 %v2996, %v3104
        %s3109 = sld [smem:[#allocation11 + $0x5d]]
        %v3110 = vstv %s3109
        %v3111 = vmul.f32 %v3110, %v2233
        %v3112 = vmul.f32 %v3110, %v2234
        %3115 = vrot.lane.b32.xlu0 %v3111, 126
        %v3116 = vpop.permute.xlu0 %3115
        %3117 = vrot.lane.b32.xlu0 %v3112, 126
        %v3118 = vpop.permute.xlu0 %3117
        %v3121 = vadd.f32 %v3009, %v3116
        %v3122 = vadd.f32 %v3010, %v3118
        %s3123 = sld [smem:[#allocation5 + $0x5e]]
        %v3124 = vstv %s3123
        %v3125 = vmul.f32 %v3124, %v2231
        %v3126 = vmul.f32 %v3124, %v2232
        %3129 = vrot.lane.b32.xlu0 %v3125, 126
        %v3130 = vpop.permute.xlu0 %3129
        %3131 = vrot.lane.b32.xlu0 %v3126, 126
        %v3132 = vpop.permute.xlu0 %3131
        %v3135 = vadd.f32 %v3023, %v3130
        %v3136 = vadd.f32 %v3024, %v3132
        %s3137 = sld [smem:[#allocation11 + $0x5e]]
        %v3138 = vstv %s3137
        %v3139 = vmul.f32 %v3138, %v2233
        %v3140 = vmul.f32 %v3138, %v2234
        %3143 = vrot.lane.b32.xlu0 %v3139, 126
        %v3144 = vpop.permute.xlu0 %3143
        %3145 = vrot.lane.b32.xlu0 %v3140, 126
        %v3146 = vpop.permute.xlu0 %3145
        %v3149 = vadd.f32 %v3037, %v3144
        %v3150 = vadd.f32 %v3038, %v3146
        %s3151 = sld [smem:[#allocation5 + $0x5f]]
        %v3152 = vstv %s3151
        %v3153 = vmul.f32 %v3152, %v2231
        %v3154 = vmul.f32 %v3152, %v2232
        %3157 = vrot.lane.b32.xlu0 %v3153, 126
        %v3158 = vpop.permute.xlu0 %3157
        %3159 = vrot.lane.b32.xlu0 %v3154, 126
        %v3160 = vpop.permute.xlu0 %3159
        %v3163 = vadd.f32 %v3051, %v3158
        %v3164 = vadd.f32 %v3052, %v3160
        %s3165 = sld [smem:[#allocation11 + $0x5f]]
        %v3166 = vstv %s3165
        %v3167 = vmul.f32 %v3166, %v2233
        %v3168 = vmul.f32 %v3166, %v2234
        %3171 = vrot.lane.b32.xlu0 %v3167, 126
        %v3172 = vpop.permute.xlu0 %3171
        %3173 = vrot.lane.b32.xlu0 %v3168, 126
        %v3174 = vpop.permute.xlu0 %3173
        %v3177 = vadd.f32 %v3065, %v3172
        %v3178 = vadd.f32 %v3066, %v3174
        %v3179 = vld [vmem:[#allocation3 + $0x2] sm:$0xff]
        %v3180 = vld [vmem:[#allocation3 + $0xa] sm:$0xff]
        %v3181 = vld [vmem:[#allocation4 + $0x2] sm:$0xff]
        %v3182 = vld [vmem:[#allocation4 + $0xa] sm:$0xff]
        %s3183 = sld [smem:[#allocation5 + $0x60]]
        %v3184 = vstv %s3183
        %v3185 = vmul.f32 %v3184, %v3179
        %v3186 = vmul.f32 %v3184, %v3180
        %v3187 = vadd.f32 %v3079, %v3185
        %v3188 = vadd.f32 %v3080, %v3186
        %s3189 = sld [smem:[#allocation11 + $0x60]]
        %v3190 = vstv %s3189
        %v3191 = vmul.f32 %v3190, %v3181
        %v3192 = vmul.f32 %v3190, %v3182
        %v3193 = vadd.f32 %v3093, %v3191
        %v3194 = vadd.f32 %v3094, %v3192
        %s3195 = sld [smem:[#allocation5 + $0x61]]
        %v3196 = vstv %s3195
        %v3197 = vmul.f32 %v3196, %v3179
        %v3198 = vmul.f32 %v3196, %v3180
        %v3199 = vadd.f32 %v3107, %v3197
        %v3200 = vadd.f32 %v3108, %v3198
        %s3201 = sld [smem:[#allocation11 + $0x61]]
        %v3202 = vstv %s3201
        %v3203 = vmul.f32 %v3202, %v3181
        %v3204 = vmul.f32 %v3202, %v3182
        %v3205 = vadd.f32 %v3121, %v3203
        %v3206 = vadd.f32 %v3122, %v3204
        %s3207 = sld [smem:[#allocation5 + $0x62]]
        %v3208 = vstv %s3207
        %v3209 = vmul.f32 %v3208, %v3179
        %v3210 = vmul.f32 %v3208, %v3180
        %v3211 = vadd.f32 %v3135, %v3209
        %v3212 = vadd.f32 %v3136, %v3210
        %s3213 = sld [smem:[#allocation11 + $0x62]]
        %v3214 = vstv %s3213
        %v3215 = vmul.f32 %v3214, %v3181
        %v3216 = vmul.f32 %v3214, %v3182
        %v3217 = vadd.f32 %v3149, %v3215
        %v3218 = vadd.f32 %v3150, %v3216
        %s3219 = sld [smem:[#allocation5 + $0x63]]
        %v3220 = vstv %s3219
        %v3221 = vmul.f32 %v3220, %v3179
        %v3222 = vmul.f32 %v3220, %v3180
        %v3223 = vadd.f32 %v3163, %v3221
        %v3224 = vadd.f32 %v3164, %v3222
        %s3225 = sld [smem:[#allocation11 + $0x63]]
        %v3226 = vstv %s3225
        %v3227 = vmul.f32 %v3226, %v3181
        %v3228 = vmul.f32 %v3226, %v3182
        %v3229 = vadd.f32 %v3177, %v3227
        %v3230 = vadd.f32 %v3178, %v3228
        %v3231 = vld [vmem:[%s1017 + $0x2] sm:$0xff]
        %v3232 = vld [vmem:[%s1017 + $0xa] sm:$0xff]
        %v3233 = vld [vmem:[%s1020 + $0x2] sm:$0xff]
        %v3234 = vld [vmem:[%s1020 + $0xa] sm:$0xff]
        %s3235 = sld [smem:[#allocation5 + $0x64]]
        %v3236 = vstv %s3235
        %v3237 = vmul.f32 %v3236, %v3231
        %v3238 = vmul.f32 %v3236, %v3232
        %v3239 = vadd.f32 %v3187, %v3237
        %v3240 = vadd.f32 %v3188, %v3238
        %s3241 = sld [smem:[#allocation11 + $0x64]]
        %v3242 = vstv %s3241
        %v3243 = vmul.f32 %v3242, %v3233
        %v3244 = vmul.f32 %v3242, %v3234
        %v3245 = vadd.f32 %v3193, %v3243
        %v3246 = vadd.f32 %v3194, %v3244
        %s3247 = sld [smem:[#allocation5 + $0x65]]
        %v3248 = vstv %s3247
        %v3249 = vmul.f32 %v3248, %v3231
        %v3250 = vmul.f32 %v3248, %v3232
        %v3251 = vadd.f32 %v3199, %v3249
        %v3252 = vadd.f32 %v3200, %v3250
        %s3253 = sld [smem:[#allocation11 + $0x65]]
        %v3254 = vstv %s3253
        %v3255 = vmul.f32 %v3254, %v3233
        %v3256 = vmul.f32 %v3254, %v3234
        %v3257 = vadd.f32 %v3205, %v3255
        %v3258 = vadd.f32 %v3206, %v3256
        %s3259 = sld [smem:[#allocation5 + $0x66]]
        %v3260 = vstv %s3259
        %v3261 = vmul.f32 %v3260, %v3231
        %v3262 = vmul.f32 %v3260, %v3232
        %v3263 = vadd.f32 %v3211, %v3261
        %v3264 = vadd.f32 %v3212, %v3262
        %s3265 = sld [smem:[#allocation11 + $0x66]]
        %v3266 = vstv %s3265
        %v3267 = vmul.f32 %v3266, %v3233
        %v3268 = vmul.f32 %v3266, %v3234
        %v3269 = vadd.f32 %v3217, %v3267
        %v3270 = vadd.f32 %v3218, %v3268
        %s3271 = sld [smem:[#allocation5 + $0x67]]
        %v3272 = vstv %s3271
        %v3273 = vmul.f32 %v3272, %v3231
        %v3274 = vmul.f32 %v3272, %v3232
        %v3275 = vadd.f32 %v3223, %v3273
        %v3276 = vadd.f32 %v3224, %v3274
        %s3277 = sld [smem:[#allocation11 + $0x67]]
        %v3278 = vstv %s3277
        %v3279 = vmul.f32 %v3278, %v3233
        %v3280 = vmul.f32 %v3278, %v3234
        %v3281 = vadd.f32 %v3229, %v3279
        %v3282 = vadd.f32 %v3230, %v3280
        %v3283 = vld [vmem:[%s1071 + $0x2] sm:$0xff]
        %v3284 = vld [vmem:[%s1071 + $0xa] sm:$0xff]
        %v3285 = vld [vmem:[%s1074 + $0x2] sm:$0xff]
        %v3286 = vld [vmem:[%s1074 + $0xa] sm:$0xff]
        %s3287 = sld [smem:[#allocation5 + $0x68]]
        %v3288 = vstv %s3287
        %v3289 = vmul.f32 %v3288, %v3283
        %v3290 = vmul.f32 %v3288, %v3284
        %v3291 = vadd.f32 %v3239, %v3289
        %v3292 = vadd.f32 %v3240, %v3290
        %s3293 = sld [smem:[#allocation11 + $0x68]]
        %v3294 = vstv %s3293
        %v3295 = vmul.f32 %v3294, %v3285
        %v3296 = vmul.f32 %v3294, %v3286
        %v3297 = vadd.f32 %v3245, %v3295
        %v3298 = vadd.f32 %v3246, %v3296
        %s3299 = sld [smem:[#allocation5 + $0x69]]
        %v3300 = vstv %s3299
        %v3301 = vmul.f32 %v3300, %v3283
        %v3302 = vmul.f32 %v3300, %v3284
        %v3303 = vadd.f32 %v3251, %v3301
        %v3304 = vadd.f32 %v3252, %v3302
        %s3305 = sld [smem:[#allocation11 + $0x69]]
        %v3306 = vstv %s3305
        %v3307 = vmul.f32 %v3306, %v3285
        %v3308 = vmul.f32 %v3306, %v3286
        %v3309 = vadd.f32 %v3257, %v3307
        %v3310 = vadd.f32 %v3258, %v3308
        %s3311 = sld [smem:[#allocation5 + $0x6a]]
        %v3312 = vstv %s3311
        %v3313 = vmul.f32 %v3312, %v3283
        %v3314 = vmul.f32 %v3312, %v3284
        %v3315 = vadd.f32 %v3263, %v3313
        %v3316 = vadd.f32 %v3264, %v3314
        %s3317 = sld [smem:[#allocation11 + $0x6a]]
        %v3318 = vstv %s3317
        %v3319 = vmul.f32 %v3318, %v3285
        %v3320 = vmul.f32 %v3318, %v3286
        %v3321 = vadd.f32 %v3269, %v3319
        %v3322 = vadd.f32 %v3270, %v3320
        %s3323 = sld [smem:[#allocation5 + $0x6b]]
        %v3324 = vstv %s3323
        %v3325 = vmul.f32 %v3324, %v3283
        %v3326 = vmul.f32 %v3324, %v3284
        %v3327 = vadd.f32 %v3275, %v3325
        %v3328 = vadd.f32 %v3276, %v3326
        %s3329 = sld [smem:[#allocation11 + $0x6b]]
        %v3330 = vstv %s3329
        %v3331 = vmul.f32 %v3330, %v3285
        %v3332 = vmul.f32 %v3330, %v3286
        %v3333 = vadd.f32 %v3281, %v3331
        %v3334 = vadd.f32 %v3282, %v3332
        %v3335 = vld [vmem:[%s1125 + $0x2] sm:$0xff]
        %v3336 = vld [vmem:[%s1125 + $0xa] sm:$0xff]
        %v3337 = vld [vmem:[%s1128 + $0x2] sm:$0xff]
        %v3338 = vld [vmem:[%s1128 + $0xa] sm:$0xff]
        %s3339 = sld [smem:[#allocation5 + $0x6c]]
        %v3340 = vstv %s3339
        %v3341 = vmul.f32 %v3340, %v3335
        %v3342 = vmul.f32 %v3340, %v3336
        %v3343 = vadd.f32 %v3291, %v3341
        %v3344 = vadd.f32 %v3292, %v3342
        %s3345 = sld [smem:[#allocation11 + $0x6c]]
        %v3346 = vstv %s3345
        %v3347 = vmul.f32 %v3346, %v3337
        %v3348 = vmul.f32 %v3346, %v3338
        %v3349 = vadd.f32 %v3297, %v3347
        %v3350 = vadd.f32 %v3298, %v3348
        %s3351 = sld [smem:[#allocation5 + $0x6d]]
        %v3352 = vstv %s3351
        %v3353 = vmul.f32 %v3352, %v3335
        %v3354 = vmul.f32 %v3352, %v3336
        %v3355 = vadd.f32 %v3303, %v3353
        %v3356 = vadd.f32 %v3304, %v3354
        %s3357 = sld [smem:[#allocation11 + $0x6d]]
        %v3358 = vstv %s3357
        %v3359 = vmul.f32 %v3358, %v3337
        %v3360 = vmul.f32 %v3358, %v3338
        %v3361 = vadd.f32 %v3309, %v3359
        %v3362 = vadd.f32 %v3310, %v3360
        %s3363 = sld [smem:[#allocation5 + $0x6e]]
        %v3364 = vstv %s3363
        %v3365 = vmul.f32 %v3364, %v3335
        %v3366 = vmul.f32 %v3364, %v3336
        %v3367 = vadd.f32 %v3315, %v3365
        %v3368 = vadd.f32 %v3316, %v3366
        %s3369 = sld [smem:[#allocation11 + $0x6e]]
        %v3370 = vstv %s3369
        %v3371 = vmul.f32 %v3370, %v3337
        %v3372 = vmul.f32 %v3370, %v3338
        %v3373 = vadd.f32 %v3321, %v3371
        %v3374 = vadd.f32 %v3322, %v3372
        %s3375 = sld [smem:[#allocation5 + $0x6f]]
        %v3376 = vstv %s3375
        %v3377 = vmul.f32 %v3376, %v3335
        %v3378 = vmul.f32 %v3376, %v3336
        %v3379 = vadd.f32 %v3327, %v3377
        %v3380 = vadd.f32 %v3328, %v3378
        %s3381 = sld [smem:[#allocation11 + $0x6f]]
        %v3382 = vstv %s3381
        %v3383 = vmul.f32 %v3382, %v3337
        %v3384 = vmul.f32 %v3382, %v3338
        %v3385 = vadd.f32 %v3333, %v3383
        %v3386 = vadd.f32 %v3334, %v3384
        %s3387 = sld [smem:[#allocation5 + $0x70]]
        %v3388 = vstv %s3387
        %v3389 = vmul.f32 %v3388, %v3179
        %v3390 = vmul.f32 %v3388, %v3180
        %3393 = vrot.lane.b32.xlu0 %v3389, 127
        %v3394 = vpop.permute.xlu0 %3393
        %3395 = vrot.lane.b32.xlu0 %v3390, 127
        %v3396 = vpop.permute.xlu0 %3395
        %v3399 = vadd.f32 %v3343, %v3394
        %v3400 = vadd.f32 %v3344, %v3396
        %s3401 = sld [smem:[#allocation11 + $0x70]]
        %v3402 = vstv %s3401
        %v3403 = vmul.f32 %v3402, %v3181
        %v3404 = vmul.f32 %v3402, %v3182
        %3407 = vrot.lane.b32.xlu0 %v3403, 127
        %v3408 = vpop.permute.xlu0 %3407
        %3409 = vrot.lane.b32.xlu0 %v3404, 127
        %v3410 = vpop.permute.xlu0 %3409
        %v3413 = vadd.f32 %v3349, %v3408
        %v3414 = vadd.f32 %v3350, %v3410
        %s3415 = sld [smem:[#allocation5 + $0x71]]
        %v3416 = vstv %s3415
        %v3417 = vmul.f32 %v3416, %v3179
        %v3418 = vmul.f32 %v3416, %v3180
        %3421 = vrot.lane.b32.xlu0 %v3417, 127
        %v3422 = vpop.permute.xlu0 %3421
        %3423 = vrot.lane.b32.xlu0 %v3418, 127
        %v3424 = vpop.permute.xlu0 %3423
        %v3427 = vadd.f32 %v3355, %v3422
        %v3428 = vadd.f32 %v3356, %v3424
        %s3429 = sld [smem:[#allocation11 + $0x71]]
        %v3430 = vstv %s3429
        %v3431 = vmul.f32 %v3430, %v3181
        %v3432 = vmul.f32 %v3430, %v3182
        %3435 = vrot.lane.b32.xlu0 %v3431, 127
        %v3436 = vpop.permute.xlu0 %3435
        %3437 = vrot.lane.b32.xlu0 %v3432, 127
        %v3438 = vpop.permute.xlu0 %3437
        %v3441 = vadd.f32 %v3361, %v3436
        %v3442 = vadd.f32 %v3362, %v3438
        %s3443 = sld [smem:[#allocation5 + $0x72]]
        %v3444 = vstv %s3443
        %v3445 = vmul.f32 %v3444, %v3179
        %v3446 = vmul.f32 %v3444, %v3180
        %3449 = vrot.lane.b32.xlu0 %v3445, 127
        %v3450 = vpop.permute.xlu0 %3449
        %3451 = vrot.lane.b32.xlu0 %v3446, 127
        %v3452 = vpop.permute.xlu0 %3451
        %v3455 = vadd.f32 %v3367, %v3450
        %v3456 = vadd.f32 %v3368, %v3452
        %s3457 = sld [smem:[#allocation11 + $0x72]]
        %v3458 = vstv %s3457
        %v3459 = vmul.f32 %v3458, %v3181
        %v3460 = vmul.f32 %v3458, %v3182
        %3463 = vrot.lane.b32.xlu0 %v3459, 127
        %v3464 = vpop.permute.xlu0 %3463
        %3465 = vrot.lane.b32.xlu0 %v3460, 127
        %v3466 = vpop.permute.xlu0 %3465
        %v3469 = vadd.f32 %v3373, %v3464
        %v3470 = vadd.f32 %v3374, %v3466
        %s3471 = sld [smem:[#allocation5 + $0x73]]
        %v3472 = vstv %s3471
        %v3473 = vmul.f32 %v3472, %v3179
        %v3474 = vmul.f32 %v3472, %v3180
        %3477 = vrot.lane.b32.xlu0 %v3473, 127
        %v3478 = vpop.permute.xlu0 %3477
        %3479 = vrot.lane.b32.xlu0 %v3474, 127
        %v3480 = vpop.permute.xlu0 %3479
        %v3483 = vadd.f32 %v3379, %v3478
        %v3484 = vadd.f32 %v3380, %v3480
        %s3485 = sld [smem:[#allocation11 + $0x73]]
        %v3486 = vstv %s3485
        %v3487 = vmul.f32 %v3486, %v3181
        %v3488 = vmul.f32 %v3486, %v3182
        %3491 = vrot.lane.b32.xlu0 %v3487, 127
        %v3492 = vpop.permute.xlu0 %3491
        %3493 = vrot.lane.b32.xlu0 %v3488, 127
        %v3494 = vpop.permute.xlu0 %3493
        %v3497 = vadd.f32 %v3385, %v3492
        %v3498 = vadd.f32 %v3386, %v3494
        %s3499 = sld [smem:[#allocation5 + $0x74]]
        %v3500 = vstv %s3499
        %v3501 = vmul.f32 %v3500, %v3231
        %v3502 = vmul.f32 %v3500, %v3232
        %3505 = vrot.lane.b32.xlu0 %v3501, 127
        %v3506 = vpop.permute.xlu0 %3505
        %3507 = vrot.lane.b32.xlu0 %v3502, 127
        %v3508 = vpop.permute.xlu0 %3507
        %v3511 = vadd.f32 %v3399, %v3506
        %v3512 = vadd.f32 %v3400, %v3508
        %s3513 = sld [smem:[#allocation11 + $0x74]]
        %v3514 = vstv %s3513
        %v3515 = vmul.f32 %v3514, %v3233
        %v3516 = vmul.f32 %v3514, %v3234
        %3519 = vrot.lane.b32.xlu0 %v3515, 127
        %v3520 = vpop.permute.xlu0 %3519
        %3521 = vrot.lane.b32.xlu0 %v3516, 127
        %v3522 = vpop.permute.xlu0 %3521
        %v3525 = vadd.f32 %v3413, %v3520
        %v3526 = vadd.f32 %v3414, %v3522
        %s3527 = sld [smem:[#allocation5 + $0x75]]
        %v3528 = vstv %s3527
        %v3529 = vmul.f32 %v3528, %v3231
        %v3530 = vmul.f32 %v3528, %v3232
        %3533 = vrot.lane.b32.xlu0 %v3529, 127
        %v3534 = vpop.permute.xlu0 %3533
        %3535 = vrot.lane.b32.xlu0 %v3530, 127
        %v3536 = vpop.permute.xlu0 %3535
        %v3539 = vadd.f32 %v3427, %v3534
        %v3540 = vadd.f32 %v3428, %v3536
        %s3541 = sld [smem:[#allocation11 + $0x75]]
        %v3542 = vstv %s3541
        %v3543 = vmul.f32 %v3542, %v3233
        %v3544 = vmul.f32 %v3542, %v3234
        %3547 = vrot.lane.b32.xlu0 %v3543, 127
        %v3548 = vpop.permute.xlu0 %3547
        %3549 = vrot.lane.b32.xlu0 %v3544, 127
        %v3550 = vpop.permute.xlu0 %3549
        %v3553 = vadd.f32 %v3441, %v3548
        %v3554 = vadd.f32 %v3442, %v3550
        %s3555 = sld [smem:[#allocation5 + $0x76]]
        %v3556 = vstv %s3555
        %v3557 = vmul.f32 %v3556, %v3231
        %v3558 = vmul.f32 %v3556, %v3232
        %3561 = vrot.lane.b32.xlu0 %v3557, 127
        %v3562 = vpop.permute.xlu0 %3561
        %3563 = vrot.lane.b32.xlu0 %v3558, 127
        %v3564 = vpop.permute.xlu0 %3563
        %v3567 = vadd.f32 %v3455, %v3562
        %v3568 = vadd.f32 %v3456, %v3564
        %s3569 = sld [smem:[#allocation11 + $0x76]]
        %v3570 = vstv %s3569
        %v3571 = vmul.f32 %v3570, %v3233
        %v3572 = vmul.f32 %v3570, %v3234
        %3575 = vrot.lane.b32.xlu0 %v3571, 127
        %v3576 = vpop.permute.xlu0 %3575
        %3577 = vrot.lane.b32.xlu0 %v3572, 127
        %v3578 = vpop.permute.xlu0 %3577
        %v3581 = vadd.f32 %v3469, %v3576
        %v3582 = vadd.f32 %v3470, %v3578
        %s3583 = sld [smem:[#allocation5 + $0x77]]
        %v3584 = vstv %s3583
        %v3585 = vmul.f32 %v3584, %v3231
        %v3586 = vmul.f32 %v3584, %v3232
        %3589 = vrot.lane.b32.xlu0 %v3585, 127
        %v3590 = vpop.permute.xlu0 %3589
        %3591 = vrot.lane.b32.xlu0 %v3586, 127
        %v3592 = vpop.permute.xlu0 %3591
        %v3595 = vadd.f32 %v3483, %v3590
        %v3596 = vadd.f32 %v3484, %v3592
        %s3597 = sld [smem:[#allocation11 + $0x77]]
        %v3598 = vstv %s3597
        %v3599 = vmul.f32 %v3598, %v3233
        %v3600 = vmul.f32 %v3598, %v3234
        %3603 = vrot.lane.b32.xlu0 %v3599, 127
        %v3604 = vpop.permute.xlu0 %3603
        %3605 = vrot.lane.b32.xlu0 %v3600, 127
        %v3606 = vpop.permute.xlu0 %3605
        %v3609 = vadd.f32 %v3497, %v3604
        %v3610 = vadd.f32 %v3498, %v3606
        %s3611 = sld [smem:[#allocation5 + $0x78]]
        %v3612 = vstv %s3611
        %v3613 = vmul.f32 %v3612, %v3283
        %v3614 = vmul.f32 %v3612, %v3284
        %3617 = vrot.lane.b32.xlu0 %v3613, 127
        %v3618 = vpop.permute.xlu0 %3617
        %3619 = vrot.lane.b32.xlu0 %v3614, 127
        %v3620 = vpop.permute.xlu0 %3619
        %v3623 = vadd.f32 %v3511, %v3618
        %v3624 = vadd.f32 %v3512, %v3620
        %s3625 = sld [smem:[#allocation11 + $0x78]]
        %v3626 = vstv %s3625
        %v3627 = vmul.f32 %v3626, %v3285
        %v3628 = vmul.f32 %v3626, %v3286
        %3631 = vrot.lane.b32.xlu0 %v3627, 127
        %v3632 = vpop.permute.xlu0 %3631
        %3633 = vrot.lane.b32.xlu0 %v3628, 127
        %v3634 = vpop.permute.xlu0 %3633
        %v3637 = vadd.f32 %v3525, %v3632
        %v3638 = vadd.f32 %v3526, %v3634
        %s3639 = sld [smem:[#allocation5 + $0x79]]
        %v3640 = vstv %s3639
        %v3641 = vmul.f32 %v3640, %v3283
        %v3642 = vmul.f32 %v3640, %v3284
        %3645 = vrot.lane.b32.xlu0 %v3641, 127
        %v3646 = vpop.permute.xlu0 %3645
        %3647 = vrot.lane.b32.xlu0 %v3642, 127
        %v3648 = vpop.permute.xlu0 %3647
        %v3651 = vadd.f32 %v3539, %v3646
        %v3652 = vadd.f32 %v3540, %v3648
        %s3653 = sld [smem:[#allocation11 + $0x79]]
        %v3654 = vstv %s3653
        %v3655 = vmul.f32 %v3654, %v3285
        %v3656 = vmul.f32 %v3654, %v3286
        %3659 = vrot.lane.b32.xlu0 %v3655, 127
        %v3660 = vpop.permute.xlu0 %3659
        %3661 = vrot.lane.b32.xlu0 %v3656, 127
        %v3662 = vpop.permute.xlu0 %3661
        %v3665 = vadd.f32 %v3553, %v3660
        %v3666 = vadd.f32 %v3554, %v3662
        %s3667 = sld [smem:[#allocation5 + $0x7a]]
        %v3668 = vstv %s3667
        %v3669 = vmul.f32 %v3668, %v3283
        %v3670 = vmul.f32 %v3668, %v3284
        %3673 = vrot.lane.b32.xlu0 %v3669, 127
        %v3674 = vpop.permute.xlu0 %3673
        %3675 = vrot.lane.b32.xlu0 %v3670, 127
        %v3676 = vpop.permute.xlu0 %3675
        %v3679 = vadd.f32 %v3567, %v3674
        %v3680 = vadd.f32 %v3568, %v3676
        %s3681 = sld [smem:[#allocation11 + $0x7a]]
        %v3682 = vstv %s3681
        %v3683 = vmul.f32 %v3682, %v3285
        %v3684 = vmul.f32 %v3682, %v3286
        %3687 = vrot.lane.b32.xlu0 %v3683, 127
        %v3688 = vpop.permute.xlu0 %3687
        %3689 = vrot.lane.b32.xlu0 %v3684, 127
        %v3690 = vpop.permute.xlu0 %3689
        %v3693 = vadd.f32 %v3581, %v3688
        %v3694 = vadd.f32 %v3582, %v3690
        %s3695 = sld [smem:[#allocation5 + $0x7b]]
        %v3696 = vstv %s3695
        %v3697 = vmul.f32 %v3696, %v3283
        %v3698 = vmul.f32 %v3696, %v3284
        %3701 = vrot.lane.b32.xlu0 %v3697, 127
        %v3702 = vpop.permute.xlu0 %3701
        %3703 = vrot.lane.b32.xlu0 %v3698, 127
        %v3704 = vpop.permute.xlu0 %3703
        %v3707 = vadd.f32 %v3595, %v3702
        %v3708 = vadd.f32 %v3596, %v3704
        %s3709 = sld [smem:[#allocation11 + $0x7b]]
        %v3710 = vstv %s3709
        %v3711 = vmul.f32 %v3710, %v3285
        %v3712 = vmul.f32 %v3710, %v3286
        %3715 = vrot.lane.b32.xlu0 %v3711, 127
        %v3716 = vpop.permute.xlu0 %3715
        %3717 = vrot.lane.b32.xlu0 %v3712, 127
        %v3718 = vpop.permute.xlu0 %3717
        %v3721 = vadd.f32 %v3609, %v3716
        %v3722 = vadd.f32 %v3610, %v3718
        %s3723 = sld [smem:[#allocation5 + $0x7c]]
        %v3724 = vstv %s3723
        %v3725 = vmul.f32 %v3724, %v3335
        %v3726 = vmul.f32 %v3724, %v3336
        %3729 = vrot.lane.b32.xlu0 %v3725, 127
        %v3730 = vpop.permute.xlu0 %3729
        %3731 = vrot.lane.b32.xlu0 %v3726, 127
        %v3732 = vpop.permute.xlu0 %3731
        %v3735 = vadd.f32 %v3623, %v3730
        %v3736 = vadd.f32 %v3624, %v3732
        %s3737 = sld [smem:[#allocation11 + $0x7c]]
        %v3738 = vstv %s3737
        %v3739 = vmul.f32 %v3738, %v3337
        %v3740 = vmul.f32 %v3738, %v3338
        %3743 = vrot.lane.b32.xlu0 %v3739, 127
        %v3744 = vpop.permute.xlu0 %3743
        %3745 = vrot.lane.b32.xlu0 %v3740, 127
        %v3746 = vpop.permute.xlu0 %3745
        %v3749 = vadd.f32 %v3637, %v3744
        %v3750 = vadd.f32 %v3638, %v3746
        %s3751 = sld [smem:[#allocation5 + $0x7d]]
        %v3752 = vstv %s3751
        %v3753 = vmul.f32 %v3752, %v3335
        %v3754 = vmul.f32 %v3752, %v3336
        %3757 = vrot.lane.b32.xlu0 %v3753, 127
        %v3758 = vpop.permute.xlu0 %3757
        %3759 = vrot.lane.b32.xlu0 %v3754, 127
        %v3760 = vpop.permute.xlu0 %3759
        %v3763 = vadd.f32 %v3651, %v3758
        %v3764 = vadd.f32 %v3652, %v3760
        %s3765 = sld [smem:[#allocation11 + $0x7d]]
        %v3766 = vstv %s3765
        %v3767 = vmul.f32 %v3766, %v3337
        %v3768 = vmul.f32 %v3766, %v3338
        %3771 = vrot.lane.b32.xlu0 %v3767, 127
        %v3772 = vpop.permute.xlu0 %3771
        %3773 = vrot.lane.b32.xlu0 %v3768, 127
        %v3774 = vpop.permute.xlu0 %3773
        %v3777 = vadd.f32 %v3665, %v3772
        %v3778 = vadd.f32 %v3666, %v3774
        %s3779 = sld [smem:[#allocation5 + $0x7e]]
        %v3780 = vstv %s3779
        %v3781 = vmul.f32 %v3780, %v3335
        %v3782 = vmul.f32 %v3780, %v3336
        %3785 = vrot.lane.b32.xlu0 %v3781, 127
        %v3786 = vpop.permute.xlu0 %3785
        %3787 = vrot.lane.b32.xlu0 %v3782, 127
        %v3788 = vpop.permute.xlu0 %3787
        %v3791 = vadd.f32 %v3679, %v3786
        %v3792 = vadd.f32 %v3680, %v3788
        %s3793 = sld [smem:[#allocation11 + $0x7e]]
        %v3794 = vstv %s3793
        %v3795 = vmul.f32 %v3794, %v3337
        %v3796 = vmul.f32 %v3794, %v3338
        %3799 = vrot.lane.b32.xlu0 %v3795, 127
        %v3800 = vpop.permute.xlu0 %3799
        %3801 = vrot.lane.b32.xlu0 %v3796, 127
        %v3802 = vpop.permute.xlu0 %3801
        %v3805 = vadd.f32 %v3693, %v3800
        %v3806 = vadd.f32 %v3694, %v3802
        %s3807 = sld [smem:[#allocation5 + $0x7f]]
        %v3808 = vstv %s3807
        %v3809 = vmul.f32 %v3808, %v3335
        %v3810 = vmul.f32 %v3808, %v3336
        %3813 = vrot.lane.b32.xlu0 %v3809, 127
        %v3814 = vpop.permute.xlu0 %3813
        %3815 = vrot.lane.b32.xlu0 %v3810, 127
        %v3816 = vpop.permute.xlu0 %3815
        %v3819 = vadd.f32 %v3707, %v3814
        %v3820 = vadd.f32 %v3708, %v3816
        %s3821 = sld [smem:[#allocation11 + $0x7f]]
        %v3822 = vstv %s3821
        %v3823 = vmul.f32 %v3822, %v3337
        %v3824 = vmul.f32 %v3822, %v3338
        %3827 = vrot.lane.b32.xlu0 %v3823, 127
        %v3828 = vpop.permute.xlu0 %3827
        %3829 = vrot.lane.b32.xlu0 %v3824, 127
        %v3830 = vpop.permute.xlu0 %3829
        %v3833 = vadd.f32 %v3721, %v3828
        %v3834 = vadd.f32 %v3722, %v3830
        %s3835 = sld [smem:[#allocation5 + $0x80]]
        %v3836 = vstv %s3835
        %v3837 = vmul.f32 %v3836, %v3179
        %v3838 = vmul.f32 %v3836, %v3180
        %3841 = vrot.lane.b32.xlu0 %v3837, 126
        %v3842 = vpop.permute.xlu0 %3841
        %3843 = vrot.lane.b32.xlu0 %v3838, 126
        %v3844 = vpop.permute.xlu0 %3843
        %v3847 = vadd.f32 %v3735, %v3842
        %v3848 = vadd.f32 %v3736, %v3844
        %s3849 = sld [smem:[#allocation11 + $0x80]]
        %v3850 = vstv %s3849
        %v3851 = vmul.f32 %v3850, %v3181
        %v3852 = vmul.f32 %v3850, %v3182
        %3855 = vrot.lane.b32.xlu0 %v3851, 126
        %v3856 = vpop.permute.xlu0 %3855
        %3857 = vrot.lane.b32.xlu0 %v3852, 126
        %v3858 = vpop.permute.xlu0 %3857
        %v3861 = vadd.f32 %v3749, %v3856
        %v3862 = vadd.f32 %v3750, %v3858
        %s3863 = sld [smem:[#allocation5 + $0x81]]
        %v3864 = vstv %s3863
        %v3865 = vmul.f32 %v3864, %v3179
        %v3866 = vmul.f32 %v3864, %v3180
        %3869 = vrot.lane.b32.xlu0 %v3865, 126
        %v3870 = vpop.permute.xlu0 %3869
        %3871 = vrot.lane.b32.xlu0 %v3866, 126
        %v3872 = vpop.permute.xlu0 %3871
        %v3875 = vadd.f32 %v3763, %v3870
        %v3876 = vadd.f32 %v3764, %v3872
        %s3877 = sld [smem:[#allocation11 + $0x81]]
        %v3878 = vstv %s3877
        %v3879 = vmul.f32 %v3878, %v3181
        %v3880 = vmul.f32 %v3878, %v3182
        %3883 = vrot.lane.b32.xlu0 %v3879, 126
        %v3884 = vpop.permute.xlu0 %3883
        %3885 = vrot.lane.b32.xlu0 %v3880, 126
        %v3886 = vpop.permute.xlu0 %3885
        %v3889 = vadd.f32 %v3777, %v3884
        %v3890 = vadd.f32 %v3778, %v3886
        %s3891 = sld [smem:[#allocation5 + $0x82]]
        %v3892 = vstv %s3891
        %v3893 = vmul.f32 %v3892, %v3179
        %v3894 = vmul.f32 %v3892, %v3180
        %3897 = vrot.lane.b32.xlu0 %v3893, 126
        %v3898 = vpop.permute.xlu0 %3897
        %3899 = vrot.lane.b32.xlu0 %v3894, 126
        %v3900 = vpop.permute.xlu0 %3899
        %v3903 = vadd.f32 %v3791, %v3898
        %v3904 = vadd.f32 %v3792, %v3900
        %s3905 = sld [smem:[#allocation11 + $0x82]]
        %v3906 = vstv %s3905
        %v3907 = vmul.f32 %v3906, %v3181
        %v3908 = vmul.f32 %v3906, %v3182
        %3911 = vrot.lane.b32.xlu0 %v3907, 126
        %v3912 = vpop.permute.xlu0 %3911
        %3913 = vrot.lane.b32.xlu0 %v3908, 126
        %v3914 = vpop.permute.xlu0 %3913
        %v3917 = vadd.f32 %v3805, %v3912
        %v3918 = vadd.f32 %v3806, %v3914
        %s3919 = sld [smem:[#allocation5 + $0x83]]
        %v3920 = vstv %s3919
        %v3921 = vmul.f32 %v3920, %v3179
        %v3922 = vmul.f32 %v3920, %v3180
        %3925 = vrot.lane.b32.xlu0 %v3921, 126
        %v3926 = vpop.permute.xlu0 %3925
        %3927 = vrot.lane.b32.xlu0 %v3922, 126
        %v3928 = vpop.permute.xlu0 %3927
        %v3931 = vadd.f32 %v3819, %v3926
        %v3932 = vadd.f32 %v3820, %v3928
        %s3933 = sld [smem:[#allocation11 + $0x83]]
        %v3934 = vstv %s3933
        %v3935 = vmul.f32 %v3934, %v3181
        %v3936 = vmul.f32 %v3934, %v3182
        %3939 = vrot.lane.b32.xlu0 %v3935, 126
        %v3940 = vpop.permute.xlu0 %3939
        %3941 = vrot.lane.b32.xlu0 %v3936, 126
        %v3942 = vpop.permute.xlu0 %3941
        %v3945 = vadd.f32 %v3833, %v3940
        %v3946 = vadd.f32 %v3834, %v3942
        %s3947 = sld [smem:[#allocation5 + $0x84]]
        %v3948 = vstv %s3947
        %v3949 = vmul.f32 %v3948, %v3231
        %v3950 = vmul.f32 %v3948, %v3232
        %3953 = vrot.lane.b32.xlu0 %v3949, 126
        %v3954 = vpop.permute.xlu0 %3953
        %3955 = vrot.lane.b32.xlu0 %v3950, 126
        %v3956 = vpop.permute.xlu0 %3955
        %v3959 = vadd.f32 %v3847, %v3954
        %v3960 = vadd.f32 %v3848, %v3956
        %s3961 = sld [smem:[#allocation11 + $0x84]]
        %v3962 = vstv %s3961
        %v3963 = vmul.f32 %v3962, %v3233
        %v3964 = vmul.f32 %v3962, %v3234
        %3967 = vrot.lane.b32.xlu0 %v3963, 126
        %v3968 = vpop.permute.xlu0 %3967
        %3969 = vrot.lane.b32.xlu0 %v3964, 126
        %v3970 = vpop.permute.xlu0 %3969
        %v3973 = vadd.f32 %v3861, %v3968
        %v3974 = vadd.f32 %v3862, %v3970
        %s3975 = sld [smem:[#allocation5 + $0x85]]
        %v3976 = vstv %s3975
        %v3977 = vmul.f32 %v3976, %v3231
        %v3978 = vmul.f32 %v3976, %v3232
        %3981 = vrot.lane.b32.xlu0 %v3977, 126
        %v3982 = vpop.permute.xlu0 %3981
        %3983 = vrot.lane.b32.xlu0 %v3978, 126
        %v3984 = vpop.permute.xlu0 %3983
        %v3987 = vadd.f32 %v3875, %v3982
        %v3988 = vadd.f32 %v3876, %v3984
        %s3989 = sld [smem:[#allocation11 + $0x85]]
        %v3990 = vstv %s3989
        %v3991 = vmul.f32 %v3990, %v3233
        %v3992 = vmul.f32 %v3990, %v3234
        %3995 = vrot.lane.b32.xlu0 %v3991, 126
        %v3996 = vpop.permute.xlu0 %3995
        %3997 = vrot.lane.b32.xlu0 %v3992, 126
        %v3998 = vpop.permute.xlu0 %3997
        %v4001 = vadd.f32 %v3889, %v3996
        %v4002 = vadd.f32 %v3890, %v3998
        %s4003 = sld [smem:[#allocation5 + $0x86]]
        %v4004 = vstv %s4003
        %v4005 = vmul.f32 %v4004, %v3231
        %v4006 = vmul.f32 %v4004, %v3232
        %4009 = vrot.lane.b32.xlu0 %v4005, 126
        %v4010 = vpop.permute.xlu0 %4009
        %4011 = vrot.lane.b32.xlu0 %v4006, 126
        %v4012 = vpop.permute.xlu0 %4011
        %v4015 = vadd.f32 %v3903, %v4010
        %v4016 = vadd.f32 %v3904, %v4012
        %s4017 = sld [smem:[#allocation11 + $0x86]]
        %v4018 = vstv %s4017
        %v4019 = vmul.f32 %v4018, %v3233
        %v4020 = vmul.f32 %v4018, %v3234
        %4023 = vrot.lane.b32.xlu0 %v4019, 126
        %v4024 = vpop.permute.xlu0 %4023
        %4025 = vrot.lane.b32.xlu0 %v4020, 126
        %v4026 = vpop.permute.xlu0 %4025
        %v4029 = vadd.f32 %v3917, %v4024
        %v4030 = vadd.f32 %v3918, %v4026
        %s4031 = sld [smem:[#allocation5 + $0x87]]
        %v4032 = vstv %s4031
        %v4033 = vmul.f32 %v4032, %v3231
        %v4034 = vmul.f32 %v4032, %v3232
        %4037 = vrot.lane.b32.xlu0 %v4033, 126
        %v4038 = vpop.permute.xlu0 %4037
        %4039 = vrot.lane.b32.xlu0 %v4034, 126
        %v4040 = vpop.permute.xlu0 %4039
        %v4043 = vadd.f32 %v3931, %v4038
        %v4044 = vadd.f32 %v3932, %v4040
        %s4045 = sld [smem:[#allocation11 + $0x87]]
        %v4046 = vstv %s4045
        %v4047 = vmul.f32 %v4046, %v3233
        %v4048 = vmul.f32 %v4046, %v3234
        %4051 = vrot.lane.b32.xlu0 %v4047, 126
        %v4052 = vpop.permute.xlu0 %4051
        %4053 = vrot.lane.b32.xlu0 %v4048, 126
        %v4054 = vpop.permute.xlu0 %4053
        %v4057 = vadd.f32 %v3945, %v4052
        %v4058 = vadd.f32 %v3946, %v4054
        %s4059 = sld [smem:[#allocation5 + $0x88]]
        %v4060 = vstv %s4059
        %v4061 = vmul.f32 %v4060, %v3283
        %v4062 = vmul.f32 %v4060, %v3284
        %4065 = vrot.lane.b32.xlu0 %v4061, 126
        %v4066 = vpop.permute.xlu0 %4065
        %4067 = vrot.lane.b32.xlu0 %v4062, 126
        %v4068 = vpop.permute.xlu0 %4067
        %v4071 = vadd.f32 %v3959, %v4066
        %v4072 = vadd.f32 %v3960, %v4068
        %s4073 = sld [smem:[#allocation11 + $0x88]]
        %v4074 = vstv %s4073
        %v4075 = vmul.f32 %v4074, %v3285
        %v4076 = vmul.f32 %v4074, %v3286
        %4079 = vrot.lane.b32.xlu0 %v4075, 126
        %v4080 = vpop.permute.xlu0 %4079
        %4081 = vrot.lane.b32.xlu0 %v4076, 126
        %v4082 = vpop.permute.xlu0 %4081
        %v4085 = vadd.f32 %v3973, %v4080
        %v4086 = vadd.f32 %v3974, %v4082
        %s4087 = sld [smem:[#allocation5 + $0x89]]
        %v4088 = vstv %s4087
        %v4089 = vmul.f32 %v4088, %v3283
        %v4090 = vmul.f32 %v4088, %v3284
        %4093 = vrot.lane.b32.xlu0 %v4089, 126
        %v4094 = vpop.permute.xlu0 %4093
        %4095 = vrot.lane.b32.xlu0 %v4090, 126
        %v4096 = vpop.permute.xlu0 %4095
        %v4099 = vadd.f32 %v3987, %v4094
        %v4100 = vadd.f32 %v3988, %v4096
        %s4101 = sld [smem:[#allocation11 + $0x89]]
        %v4102 = vstv %s4101
        %v4103 = vmul.f32 %v4102, %v3285
        %v4104 = vmul.f32 %v4102, %v3286
        %4107 = vrot.lane.b32.xlu0 %v4103, 126
        %v4108 = vpop.permute.xlu0 %4107
        %4109 = vrot.lane.b32.xlu0 %v4104, 126
        %v4110 = vpop.permute.xlu0 %4109
        %v4113 = vadd.f32 %v4001, %v4108
        %v4114 = vadd.f32 %v4002, %v4110
        %s4115 = sld [smem:[#allocation5 + $0x8a]]
        %v4116 = vstv %s4115
        %v4117 = vmul.f32 %v4116, %v3283
        %v4118 = vmul.f32 %v4116, %v3284
        %4121 = vrot.lane.b32.xlu0 %v4117, 126
        %v4122 = vpop.permute.xlu0 %4121
        %4123 = vrot.lane.b32.xlu0 %v4118, 126
        %v4124 = vpop.permute.xlu0 %4123
        %v4127 = vadd.f32 %v4015, %v4122
        %v4128 = vadd.f32 %v4016, %v4124
        %s4129 = sld [smem:[#allocation11 + $0x8a]]
        %v4130 = vstv %s4129
        %v4131 = vmul.f32 %v4130, %v3285
        %v4132 = vmul.f32 %v4130, %v3286
        %4135 = vrot.lane.b32.xlu0 %v4131, 126
        %v4136 = vpop.permute.xlu0 %4135
        %4137 = vrot.lane.b32.xlu0 %v4132, 126
        %v4138 = vpop.permute.xlu0 %4137
        %v4141 = vadd.f32 %v4029, %v4136
        %v4142 = vadd.f32 %v4030, %v4138
        %s4143 = sld [smem:[#allocation5 + $0x8b]]
        %v4144 = vstv %s4143
        %v4145 = vmul.f32 %v4144, %v3283
        %v4146 = vmul.f32 %v4144, %v3284
        %4149 = vrot.lane.b32.xlu0 %v4145, 126
        %v4150 = vpop.permute.xlu0 %4149
        %4151 = vrot.lane.b32.xlu0 %v4146, 126
        %v4152 = vpop.permute.xlu0 %4151
        %v4155 = vadd.f32 %v4043, %v4150
        %v4156 = vadd.f32 %v4044, %v4152
        %s4157 = sld [smem:[#allocation11 + $0x8b]]
        %v4158 = vstv %s4157
        %v4159 = vmul.f32 %v4158, %v3285
        %v4160 = vmul.f32 %v4158, %v3286
        %4163 = vrot.lane.b32.xlu0 %v4159, 126
        %v4164 = vpop.permute.xlu0 %4163
        %4165 = vrot.lane.b32.xlu0 %v4160, 126
        %v4166 = vpop.permute.xlu0 %4165
        %v4169 = vadd.f32 %v4057, %v4164
        %v4170 = vadd.f32 %v4058, %v4166
        %s4171 = sld [smem:[#allocation5 + $0x8c]]
        %v4172 = vstv %s4171
        %v4173 = vmul.f32 %v4172, %v3335
        %v4174 = vmul.f32 %v4172, %v3336
        %4177 = vrot.lane.b32.xlu0 %v4173, 126
        %v4178 = vpop.permute.xlu0 %4177
        %4179 = vrot.lane.b32.xlu0 %v4174, 126
        %v4180 = vpop.permute.xlu0 %4179
        %v4183 = vadd.f32 %v4071, %v4178
        %v4184 = vadd.f32 %v4072, %v4180
        %s4185 = sld [smem:[#allocation11 + $0x8c]]
        %v4186 = vstv %s4185
        %v4187 = vmul.f32 %v4186, %v3337
        %v4188 = vmul.f32 %v4186, %v3338
        %4191 = vrot.lane.b32.xlu0 %v4187, 126
        %v4192 = vpop.permute.xlu0 %4191
        %4193 = vrot.lane.b32.xlu0 %v4188, 126
        %v4194 = vpop.permute.xlu0 %4193
        %v4197 = vadd.f32 %v4085, %v4192
        %v4198 = vadd.f32 %v4086, %v4194
        %s4199 = sld [smem:[#allocation5 + $0x8d]]
        %v4200 = vstv %s4199
        %v4201 = vmul.f32 %v4200, %v3335
        %v4202 = vmul.f32 %v4200, %v3336
        %4205 = vrot.lane.b32.xlu0 %v4201, 126
        %v4206 = vpop.permute.xlu0 %4205
        %4207 = vrot.lane.b32.xlu0 %v4202, 126
        %v4208 = vpop.permute.xlu0 %4207
        %v4211 = vadd.f32 %v4099, %v4206
        %v4212 = vadd.f32 %v4100, %v4208
        %s4213 = sld [smem:[#allocation11 + $0x8d]]
        %v4214 = vstv %s4213
        %v4215 = vmul.f32 %v4214, %v3337
        %v4216 = vmul.f32 %v4214, %v3338
        %4219 = vrot.lane.b32.xlu0 %v4215, 126
        %v4220 = vpop.permute.xlu0 %4219
        %4221 = vrot.lane.b32.xlu0 %v4216, 126
        %v4222 = vpop.permute.xlu0 %4221
        %v4225 = vadd.f32 %v4113, %v4220
        %v4226 = vadd.f32 %v4114, %v4222
        %s4227 = sld [smem:[#allocation5 + $0x8e]]
        %v4228 = vstv %s4227
        %v4229 = vmul.f32 %v4228, %v3335
        %v4230 = vmul.f32 %v4228, %v3336
        %4233 = vrot.lane.b32.xlu0 %v4229, 126
        %v4234 = vpop.permute.xlu0 %4233
        %4235 = vrot.lane.b32.xlu0 %v4230, 126
        %v4236 = vpop.permute.xlu0 %4235
        %v4239 = vadd.f32 %v4127, %v4234
        %v4240 = vadd.f32 %v4128, %v4236
        %s4241 = sld [smem:[#allocation11 + $0x8e]]
        %v4242 = vstv %s4241
        %v4243 = vmul.f32 %v4242, %v3337
        %v4244 = vmul.f32 %v4242, %v3338
        %4247 = vrot.lane.b32.xlu0 %v4243, 126
        %v4248 = vpop.permute.xlu0 %4247
        %4249 = vrot.lane.b32.xlu0 %v4244, 126
        %v4250 = vpop.permute.xlu0 %4249
        %v4253 = vadd.f32 %v4141, %v4248
        %v4254 = vadd.f32 %v4142, %v4250
        %s4255 = sld [smem:[#allocation5 + $0x8f]]
        %v4256 = vstv %s4255
        %v4257 = vmul.f32 %v4256, %v3335
        %v4258 = vmul.f32 %v4256, %v3336
        %4261 = vrot.lane.b32.xlu0 %v4257, 126
        %v4262 = vpop.permute.xlu0 %4261
        %4263 = vrot.lane.b32.xlu0 %v4258, 126
        %v4264 = vpop.permute.xlu0 %4263
        %v4267 = vadd.f32 %v4155, %v4262
        %v4268 = vadd.f32 %v4156, %v4264
        %s4269 = sld [smem:[#allocation11 + $0x8f]]
        %v4270 = vstv %s4269
        %v4271 = vmul.f32 %v4270, %v3337
        %v4272 = vmul.f32 %v4270, %v3338
        %4275 = vrot.lane.b32.xlu0 %v4271, 126
        %v4276 = vpop.permute.xlu0 %4275
        %4277 = vrot.lane.b32.xlu0 %v4272, 126
        %v4278 = vpop.permute.xlu0 %4277
        %v4281 = vadd.f32 %v4169, %v4276
        %v4282 = vadd.f32 %v4170, %v4278
        %v4283 = vld [vmem:[%s441] sm:$0xff]
        %v4284 = vld [vmem:[%s441 + $0x8] sm:$0xff]
        %v4285 = vld [vmem:[%s450] sm:$0xff]
        %v4286 = vld [vmem:[%s450 + $0x8] sm:$0xff]
        %v4287 = vxor.u32 %v4183, 2147483648
        %v4288 = vxor.u32 %v4184, 2147483648
        %v4289 = vmul.f32 %v4287, 1.442695
        %v4290 = vpow.pop %v4289
        %v4291 = vmul.f32 %v4288, 1.442695
        %v4292 = vpow.pop %v4291
        %v4293 = vadd.f32 %v4290, 1.0
        %v4294 = vadd.f32 %v4292, 1.0
        %v4295 = vrcp.pop %v4293
        %v4296 = vmul.f32 1.0, %v4295
        %v4297 = vrcp.pop %v4294
        %v4298 = vmul.f32 1.0, %v4297
        %v4299 = vxor.u32 %v4197, 2147483648
        %v4300 = vxor.u32 %v4198, 2147483648
        %v4301 = vmul.f32 %v4299, 1.442695
        %v4302 = vpow.pop %v4301
        %v4303 = vmul.f32 %v4300, 1.442695
        %v4304 = vpow.pop %v4303
        %v4305 = vadd.f32 %v4302, 1.0
        %v4306 = vadd.f32 %v4304, 1.0
        %v4307 = vrcp.pop %v4305
        %v4308 = vmul.f32 1.0, %v4307
        %v4309 = vrcp.pop %v4306
        %v4310 = vmul.f32 1.0, %v4309
        %vm4311 = vcmask 130048
        %4312 = vst.msk [vmem:[%s498] sm:$0xff] %vm4311, %v4296
        %4313 = vst.msk [vmem:[%s498 + $0x8] sm:$0xff] %vm4311, %v4298
        %4314 = vst.msk [vmem:[%s512] sm:$0xff] %vm4311, %v4308
        %4315 = vst.msk [vmem:[%s512 + $0x8] sm:$0xff] %vm4311, %v4310
        %v4316 = vmul.f32 %v4296, %v4283
        %v4317 = vmul.f32 %v4298, %v4284
        %v4318 = vsub.f32 1.0, %v4296
        %v4319 = vsub.f32 1.0, %v4298
        %v4320 = vmul.f32 %v4318, %v4285
        %v4321 = vmul.f32 %v4319, %v4286
        %v4322 = vadd.f32 %v4316, %v4320
        %v4323 = vadd.f32 %v4317, %v4321
        %4324 = vst.msk [vmem:[%s491] sm:$0xff] %vm4311, %v4322
        %4325 = vst.msk [vmem:[%s491 + $0x8] sm:$0xff] %vm4311, %v4323
        %v4326 = vmul.f32 %v4308, %v4283
        %v4327 = vmul.f32 %v4310, %v4284
        %v4328 = vsub.f32 1.0, %v4308
        %v4329 = vsub.f32 1.0, %v4310
        %v4330 = vmul.f32 %v4328, %v4285
        %v4331 = vmul.f32 %v4329, %v4286
        %v4332 = vadd.f32 %v4326, %v4330
        %v4333 = vadd.f32 %v4327, %v4331
        %4334 = vst.msk [vmem:[%s505] sm:$0xff] %vm4311, %v4332
        %4335 = vst.msk [vmem:[%s505 + $0x8] sm:$0xff] %vm4311, %v4333
        %s4336 = scalar_lea.vmem %s441, 16 [#allocation14]
        %v4337 = vld [vmem:[%s4336] sm:$0xff]
        %v4338 = vld [vmem:[%s4336 + $0x8] sm:$0xff]
        %s4339 = scalar_lea.vmem %s450, 16 [#allocation15]
        %v4340 = vld [vmem:[%s4339] sm:$0xff]
        %v4341 = vld [vmem:[%s4339 + $0x8] sm:$0xff]
        %v4342 = vxor.u32 %v4211, 2147483648
        %v4343 = vxor.u32 %v4212, 2147483648
        %v4344 = vmul.f32 %v4342, 1.442695
        %v4345 = vpow.pop %v4344
        %v4346 = vmul.f32 %v4343, 1.442695
        %v4347 = vpow.pop %v4346
        %v4348 = vadd.f32 %v4345, 1.0
        %v4349 = vadd.f32 %v4347, 1.0
        %v4350 = vrcp.pop %v4348
        %v4351 = vmul.f32 1.0, %v4350
        %v4352 = vrcp.pop %v4349
        %v4353 = vmul.f32 1.0, %v4352
        %v4354 = vxor.u32 %v4225, 2147483648
        %v4355 = vxor.u32 %v4226, 2147483648
        %v4356 = vmul.f32 %v4354, 1.442695
        %v4357 = vpow.pop %v4356
        %v4358 = vmul.f32 %v4355, 1.442695
        %v4359 = vpow.pop %v4358
        %v4360 = vadd.f32 %v4357, 1.0
        %v4361 = vadd.f32 %v4359, 1.0
        %v4362 = vrcp.pop %v4360
        %v4363 = vmul.f32 1.0, %v4362
        %v4364 = vrcp.pop %v4361
        %v4365 = vmul.f32 1.0, %v4364
        %s4366 = scalar_lea.vmem %s498, 16 [#allocation18]
        %4367 = vst.msk [vmem:[%s4366] sm:$0xff] %vm4311, %v4351
        %4368 = vst.msk [vmem:[%s4366 + $0x8] sm:$0xff] %vm4311, %v4353
        %s4369 = scalar_lea.vmem %s512, 16 [#allocation21]
        %4370 = vst.msk [vmem:[%s4369] sm:$0xff] %vm4311, %v4363
        %4371 = vst.msk [vmem:[%s4369 + $0x8] sm:$0xff] %vm4311, %v4365
        %v4372 = vmul.f32 %v4351, %v4337
        %v4373 = vmul.f32 %v4353, %v4338
        %v4374 = vsub.f32 1.0, %v4351
        %v4375 = vsub.f32 1.0, %v4353
        %v4376 = vmul.f32 %v4374, %v4340
        %v4377 = vmul.f32 %v4375, %v4341
        %v4378 = vadd.f32 %v4372, %v4376
        %v4379 = vadd.f32 %v4373, %v4377
        %s4380 = scalar_lea.vmem %s491, 16 [#allocation17]
        %4381 = vst.msk [vmem:[%s4380] sm:$0xff] %vm4311, %v4378
        %4382 = vst.msk [vmem:[%s4380 + $0x8] sm:$0xff] %vm4311, %v4379
        %v4383 = vmul.f32 %v4363, %v4337
        %v4384 = vmul.f32 %v4365, %v4338
        %v4385 = vsub.f32 1.0, %v4363
        %v4386 = vsub.f32 1.0, %v4365
        %v4387 = vmul.f32 %v4385, %v4340
        %v4388 = vmul.f32 %v4386, %v4341
        %v4389 = vadd.f32 %v4383, %v4387
        %v4390 = vadd.f32 %v4384, %v4388
        %s4391 = scalar_lea.vmem %s505, 16 [#allocation20]
        %4392 = vst.msk [vmem:[%s4391] sm:$0xff] %vm4311, %v4389
        %4393 = vst.msk [vmem:[%s4391 + $0x8] sm:$0xff] %vm4311, %v4390
        %s4394 = scalar_lea.vmem %s441, 32 [#allocation14]
        %v4395 = vld [vmem:[%s4394] sm:$0xff]
        %v4396 = vld [vmem:[%s4394 + $0x8] sm:$0xff]
        %s4397 = scalar_lea.vmem %s450, 32 [#allocation15]
        %v4398 = vld [vmem:[%s4397] sm:$0xff]
        %v4399 = vld [vmem:[%s4397 + $0x8] sm:$0xff]
        %v4400 = vxor.u32 %v4239, 2147483648
        %v4401 = vxor.u32 %v4240, 2147483648
        %v4402 = vmul.f32 %v4400, 1.442695
        %v4403 = vpow.pop %v4402
        %v4404 = vmul.f32 %v4401, 1.442695
        %v4405 = vpow.pop %v4404
        %v4406 = vadd.f32 %v4403, 1.0
        %v4407 = vadd.f32 %v4405, 1.0
        %v4408 = vrcp.pop %v4406
        %v4409 = vmul.f32 1.0, %v4408
        %v4410 = vrcp.pop %v4407
        %v4411 = vmul.f32 1.0, %v4410
        %v4412 = vxor.u32 %v4253, 2147483648
        %v4413 = vxor.u32 %v4254, 2147483648
        %v4414 = vmul.f32 %v4412, 1.442695
        %v4415 = vpow.pop %v4414
        %v4416 = vmul.f32 %v4413, 1.442695
        %v4417 = vpow.pop %v4416
        %v4418 = vadd.f32 %v4415, 1.0
        %v4419 = vadd.f32 %v4417, 1.0
        %v4420 = vrcp.pop %v4418
        %v4421 = vmul.f32 1.0, %v4420
        %v4422 = vrcp.pop %v4419
        %v4423 = vmul.f32 1.0, %v4422
        %s4424 = scalar_lea.vmem %s498, 32 [#allocation18]
        %4425 = vst.msk [vmem:[%s4424] sm:$0xff] %vm4311, %v4409
        %4426 = vst.msk [vmem:[%s4424 + $0x8] sm:$0xff] %vm4311, %v4411
        %s4427 = scalar_lea.vmem %s512, 32 [#allocation21]
        %4428 = vst.msk [vmem:[%s4427] sm:$0xff] %vm4311, %v4421
        %4429 = vst.msk [vmem:[%s4427 + $0x8] sm:$0xff] %vm4311, %v4423
        %v4430 = vmul.f32 %v4409, %v4395
        %v4431 = vmul.f32 %v4411, %v4396
        %v4432 = vsub.f32 1.0, %v4409
        %v4433 = vsub.f32 1.0, %v4411
        %v4434 = vmul.f32 %v4432, %v4398
        %v4435 = vmul.f32 %v4433, %v4399
        %v4436 = vadd.f32 %v4430, %v4434
        %v4437 = vadd.f32 %v4431, %v4435
        %s4438 = scalar_lea.vmem %s491, 32 [#allocation17]
        %4439 = vst.msk [vmem:[%s4438] sm:$0xff] %vm4311, %v4436
        %4440 = vst.msk [vmem:[%s4438 + $0x8] sm:$0xff] %vm4311, %v4437
        %v4441 = vmul.f32 %v4421, %v4395
        %v4442 = vmul.f32 %v4423, %v4396
        %v4443 = vsub.f32 1.0, %v4421
        %v4444 = vsub.f32 1.0, %v4423
        %v4445 = vmul.f32 %v4443, %v4398
        %v4446 = vmul.f32 %v4444, %v4399
        %v4447 = vadd.f32 %v4441, %v4445
        %v4448 = vadd.f32 %v4442, %v4446
        %s4449 = scalar_lea.vmem %s505, 32 [#allocation20]
        %4450 = vst.msk [vmem:[%s4449] sm:$0xff] %vm4311, %v4447
        %4451 = vst.msk [vmem:[%s4449 + $0x8] sm:$0xff] %vm4311, %v4448
        %s4452 = scalar_lea.vmem %s441, 48 [#allocation14]
        %v4453 = vld [vmem:[%s4452] sm:$0xff]
        %v4454 = vld [vmem:[%s4452 + $0x8] sm:$0xff]
        %s4455 = scalar_lea.vmem %s450, 48 [#allocation15]
        %v4456 = vld [vmem:[%s4455] sm:$0xff]
        %v4457 = vld [vmem:[%s4455 + $0x8] sm:$0xff]
        %v4458 = vxor.u32 %v4267, 2147483648
        %v4459 = vxor.u32 %v4268, 2147483648
        %v4460 = vmul.f32 %v4458, 1.442695
        %v4461 = vpow.pop %v4460
        %v4462 = vmul.f32 %v4459, 1.442695
        %v4463 = vpow.pop %v4462
        %v4464 = vadd.f32 %v4461, 1.0
        %v4465 = vadd.f32 %v4463, 1.0
        %v4466 = vrcp.pop %v4464
        %v4467 = vmul.f32 1.0, %v4466
        %v4468 = vrcp.pop %v4465
        %v4469 = vmul.f32 1.0, %v4468
        %v4470 = vxor.u32 %v4281, 2147483648
        %v4471 = vxor.u32 %v4282, 2147483648
        %v4472 = vmul.f32 %v4470, 1.442695
        %v4473 = vpow.pop %v4472
        %v4474 = vmul.f32 %v4471, 1.442695
        %v4475 = vpow.pop %v4474
        %v4476 = vadd.f32 %v4473, 1.0
        %v4477 = vadd.f32 %v4475, 1.0
        %v4478 = vrcp.pop %v4476
        %v4479 = vmul.f32 1.0, %v4478
        %v4480 = vrcp.pop %v4477
        %v4481 = vmul.f32 1.0, %v4480
        %s4482 = scalar_lea.vmem %s498, 48 [#allocation18]
        %4483 = vst.msk [vmem:[%s4482] sm:$0xff] %vm4311, %v4467
        %4484 = vst.msk [vmem:[%s4482 + $0x8] sm:$0xff] %vm4311, %v4469
        %s4485 = scalar_lea.vmem %s512, 48 [#allocation21]
        %4486 = vst.msk [vmem:[%s4485] sm:$0xff] %vm4311, %v4479
        %4487 = vst.msk [vmem:[%s4485 + $0x8] sm:$0xff] %vm4311, %v4481
        %v4488 = vmul.f32 %v4467, %v4453
        %v4489 = vmul.f32 %v4469, %v4454
        %v4490 = vsub.f32 1.0, %v4467
        %v4491 = vsub.f32 1.0, %v4469
        %v4492 = vmul.f32 %v4490, %v4456
        %v4493 = vmul.f32 %v4491, %v4457
        %v4494 = vadd.f32 %v4488, %v4492
        %v4495 = vadd.f32 %v4489, %v4493
        %s4496 = scalar_lea.vmem %s491, 48 [#allocation17]
        %4497 = vst.msk [vmem:[%s4496] sm:$0xff] %vm4311, %v4494
        %4498 = vst.msk [vmem:[%s4496 + $0x8] sm:$0xff] %vm4311, %v4495
        %v4499 = vmul.f32 %v4479, %v4453
        %v4500 = vmul.f32 %v4481, %v4454
        %v4501 = vsub.f32 1.0, %v4479
        %v4502 = vsub.f32 1.0, %v4481
        %v4503 = vmul.f32 %v4501, %v4456
        %v4504 = vmul.f32 %v4502, %v4457
        %v4505 = vadd.f32 %v4499, %v4503
        %v4506 = vadd.f32 %v4500, %v4504
        %s4507 = scalar_lea.vmem %s505, 48 [#allocation20]
        %4508 = vst.msk [vmem:[%s4507] sm:$0xff] %vm4311, %v4505
        %4509 = vst.msk [vmem:[%s4507 + $0x8] sm:$0xff] %vm4311, %v4506
        %s4510 = sand.u32 %s210, 1
        %s4511 = scalar_lea.sflag [#allocation7], %s4510
        %s4512 = sand.u32 %s210, 1
        %s4513 = smul.addr %s4512, 64
        %s4514 = scalar_lea.vmem [#allocation17], %s4513
        %s4515 = sand.u32 %s40, 1
        %s4516 = scalar_lea.sflag [#allocation19], %s4515
        %s4517 = sand.u32 %s236, 1
        %s4518 = smul.addr %s4517, 64
        %s4519 = scalar_lea.vmem [#allocation18], %s4518
        %s4520 = sand.u32 %s40, 1
        %s4521 = scalar_lea.sflag [#allocation19], %s4520
        %s4522 = sand.u32 %s262, 1
        %s4523 = smul.addr %s4522, 64
        %s4524 = scalar_lea.vmem [#allocation20], %s4523
        %s4525 = sand.u32 %s288, 1
        %s4526 = scalar_lea.sflag [#allocation22], %s4525
        %s4527 = sand.u32 %s288, 1
        %s4528 = smul.addr %s4527, 64
        %s4529 = scalar_lea.vmem [#allocation21], %s4528
        // Predicated region
        $region73: #{final_atten_forward.1} parent=47 // pred_check
          %p4530 = pneg %p220
        $region74: #{final_atten_forward.1} parent=47 // pred_check_branch
          %4532 = sbr.rel (%p4530) target = $region76
        $region75: #{final_atten_forward.1} parent=47 // pred_region
          %s4534 = ssub.s32 1024, 1024
          %4535 = vsyncadd %s4511, %s4534
          %s4536 = smul.addr %s40, 8
          %s4537 = smul.addr %s4536, 128
          %s4538 = scalar_lea.hbm %s7, %s4537
          %s4539 = sshll.u32 %s4514, 4
          %s4540 = int_to_ptr.vmem [resolvable:$true] %s4539
          %4545 = dma.vmem_to_hbm [thread:$0]  %s4540, 1024, %s4538, %s4511, 128, 128, 8
        $region76: #{final_atten_forward.1} parent=47 // pred_fallthru
          _
        // Predicated region
        $region77: #{final_atten_forward.1} parent=47 // pred_check
          %p4546 = pneg %p246
        $region78: #{final_atten_forward.1} parent=47 // pred_check_branch
          %4548 = sbr.rel (%p4546) target = $region80
        $region79: #{final_atten_forward.1} parent=47 // pred_region
          %s4550 = ssub.s32 1024, 1024
          %4551 = vsyncadd %s4516, %s4550
          %s4552 = smul.addr %s40, 8
          %s4553 = smul.addr %s4552, 128
          %s4554 = scalar_lea.hbm %s8, %s4553
          %s4555 = sshll.u32 %s4519, 4
          %s4556 = int_to_ptr.vmem [resolvable:$true] %s4555
          %4561 = dma.vmem_to_hbm [thread:$0]  %s4556, 1024, %s4554, %s4516, 128, 128, 8
        $region80: #{final_atten_forward.1} parent=47 // pred_fallthru
          _
        // Predicated region
        $region81: #{final_atten_forward.1} parent=47 // pred_check
          %p4562 = pneg %p272
        $region82: #{final_atten_forward.1} parent=47 // pred_check_branch
          %4564 = sbr.rel (%p4562) target = $region84
        $region83: #{final_atten_forward.1} parent=47 // pred_region
          %s4566 = ssub.s32 1024, 1024
          %4567 = vsyncadd %s4521, %s4566
          %s4568 = smul.addr %s40, 8
          %s4569 = smul.addr %s4568, 128
          %s4570 = scalar_lea.hbm %s9, %s4569
          %s4571 = sshll.u32 %s4524, 4
          %s4572 = int_to_ptr.vmem [resolvable:$true] %s4571
          %4577 = dma.vmem_to_hbm [thread:$0]  %s4572, 1024, %s4570, %s4521, 128, 128, 8
        $region84: #{final_atten_forward.1} parent=47 // pred_fallthru
          _
        // Predicated region
        $region85: #{final_atten_forward.1} parent=47 // pred_check
          %p4578 = pneg %p298
        $region86: #{final_atten_forward.1} parent=47 // pred_check_branch
          %4580 = sbr.rel (%p4578) target = $region88
        $region87: #{final_atten_forward.1} parent=47 // pred_region
          %s4582 = ssub.s32 1024, 1024
          %4583 = vsyncadd %s4526, %s4582
          %s4584 = smul.addr %s40, 8
          %s4585 = smul.addr %s4584, 128
          %s4586 = scalar_lea.hbm %s10, %s4585
          %s4587 = sshll.u32 %s4529, 4
          %s4588 = int_to_ptr.vmem [resolvable:$true] %s4587
          %4593 = dma.vmem_to_hbm [thread:$0]  %s4588, 1024, %s4586, %s4526, 128, 128, 8
        $region88: #{final_atten_forward.1} parent=47 // pred_fallthru
          _
      $region48: #{final_atten_forward.1} parent=5 // pred_fallthru
        _
      %p4594 = scmp.le.s32.totalorder 2, %s35
      // Predicated region
      $region89: #{final_atten_forward.1} parent=5 // pred_check
        %p4595 = pneg %p4594
      $region90: #{final_atten_forward.1} parent=5 // pred_check_branch
        %4597 = sbr.rel (%p4595) target = $region92
      $region91: #{final_atten_forward.1} parent=5 // pred_region
        %s4598 = ssub.s32 %s35, 2
        // Predicated region
        $region93: #{final_atten_forward.1} parent=91 // pred_check
          %p4599 = pneg %p226
        $region94: #{final_atten_forward.1} parent=91 // pred_check_branch
          %4601 = sbr.rel (%p4599) target = $region96
        $region95: #{final_atten_forward.1} parent=91 // pred_region
          %s4602 = sand.u32 %s211, 1
          %s4603 = scalar_lea.sflag [#allocation7], %s4602
          %s4604 = sand.u32 %s211, 1
          %s4605 = smul.addr %s4604, 64
          %s4606 = scalar_lea.vmem [#allocation17], %s4605
          %4607 = dma.done %s4603, 1024
        $region96: #{final_atten_forward.1} parent=91 // pred_fallthru
          _
        // Predicated region
        $region97: #{final_atten_forward.1} parent=91 // pred_check
          %p4608 = pneg %p252
        $region98: #{final_atten_forward.1} parent=91 // pred_check_branch
          %4610 = sbr.rel (%p4608) target = $region100
        $region99: #{final_atten_forward.1} parent=91 // pred_region
          %s4611 = sand.u32 %s41, 1
          %s4612 = scalar_lea.sflag [#allocation19], %s4611
          %s4613 = sand.u32 %s237, 1
          %s4614 = smul.addr %s4613, 64
          %s4615 = scalar_lea.vmem [#allocation18], %s4614
          %4616 = dma.done %s4612, 1024
        $region100: #{final_atten_forward.1} parent=91 // pred_fallthru
          _
        // Predicated region
        $region101: #{final_atten_forward.1} parent=91 // pred_check
          %p4617 = pneg %p278
        $region102: #{final_atten_forward.1} parent=91 // pred_check_branch
          %4619 = sbr.rel (%p4617) target = $region104
        $region103: #{final_atten_forward.1} parent=91 // pred_region
          %s4620 = sand.u32 %s41, 1
          %s4621 = scalar_lea.sflag [#allocation19], %s4620
          %s4622 = sand.u32 %s263, 1
          %s4623 = smul.addr %s4622, 64
          %s4624 = scalar_lea.vmem [#allocation20], %s4623
          %4625 = dma.done %s4621, 1024
        $region104: #{final_atten_forward.1} parent=91 // pred_fallthru
          _
        // Predicated region
        $region105: #{final_atten_forward.1} parent=91 // pred_check
          %p4626 = pneg %p304
        $region106: #{final_atten_forward.1} parent=91 // pred_check_branch
          %4628 = sbr.rel (%p4626) target = $region108
        $region107: #{final_atten_forward.1} parent=91 // pred_region
          %s4629 = sand.u32 %s289, 1
          %s4630 = scalar_lea.sflag [#allocation22], %s4629
          %s4631 = sand.u32 %s289, 1
          %s4632 = smul.addr %s4631, 64
          %s4633 = scalar_lea.vmem [#allocation21], %s4632
          %4634 = dma.done %s4630, 1024
        $region108: #{final_atten_forward.1} parent=91 // pred_fallthru
          _
      $region92: #{final_atten_forward.1} parent=5 // pred_fallthru
        _
    $region6: #{final_atten_forward.1} parent=1 // loop_footer
      %s39 = sadd.s32 1, %s35
    $region7: #{final_atten_forward.1} parent=1 // loop_footer_branch
      %34 = sbr.rel target = $region3
    $region8: #{final_atten_forward.1} parent=1 // loop_exit
      _
    %4635 = vsyncpa [#allocation6], 1
    %s4636 = scalar_lea.sflag [#allocation6], 1
    %4637 = vsyncpa %s4636, 1
    %4638 = vsyncpa [#allocation16], 1
    %s4639 = scalar_lea.sflag [#allocation16], 1
    %4640 = vsyncpa %s4639, 1
    %4641 = vsyncpa [#allocation7], 1
    %s4642 = scalar_lea.sflag [#allocation7], 1
    %4643 = vsyncpa %s4642, 1
    %4644 = vsyncpa [#allocation19], 1
    %s4645 = scalar_lea.sflag [#allocation19], 1
    %4646 = vsyncpa %s4645, 1
    %4647 = vsyncpa [#allocation22], 1
    %s4648 = scalar_lea.sflag [#allocation22], 1
    %4649 = vsyncpa %s4648, 1
    %4650 = vsyncpa [#allocation8], 1
    %s4651 = scalar_lea.sflag [#allocation8], 1
    %4652 = vsyncpa %s4651, 1
    %4653 = vsyncpa [#allocation10], 1
    %4654 = vsyncpa [#allocation13], 1

</llo_original>
